<compile_context>
chip_gen: v5e
topology: v5e:2x2
jax: 0.10.0
libtpu: 0.0.40
codegen_flags: <defaults>
</compile_context>

<pallas_src>
import math
import functools

import jax
import jax.numpy as jnp
from jax.experimental import pallas as pl
from jax.experimental.pallas import tpu as pltpu


# ---------------------------------------------------------------------------
# Single fused Pallas kernel: whole encoder + decoder stack for one batch row
# ---------------------------------------------------------------------------

def _transformer_kernel(n_layers, h,
                        # activations / masks (batch-blocked, leading dim 1)
                        x_src_ref, x_tgt_ref, src_mask_ref, tgt_mask_ref,
                        # encoder weights, stacked over layers (leading dim n_layers)
                        e_ln1a_ref, e_ln1b_ref, e_wqkv_ref, e_bqkv_ref,
                        e_wo_ref, e_bo_ref, e_ln2a_ref, e_ln2b_ref,
                        e_w1_ref, e_b1_ref, e_w2_ref, e_b2_ref,
                        enc_na_ref, enc_nb_ref,
                        # decoder weights, stacked over layers
                        d_ln1a_ref, d_ln1b_ref, d_wqkv_ref, d_bqkv_ref,
                        d_wo1_ref, d_bo1_ref,
                        d_ln2a_ref, d_ln2b_ref, d_wq_ref, d_bq_ref,
                        d_wkv_ref, d_bkv_ref, d_wo2_ref, d_bo2_ref,
                        d_ln3a_ref, d_ln3b_ref,
                        d_w1_ref, d_b1_ref, d_w2_ref, d_b2_ref,
                        dec_na_ref, dec_nb_ref,
                        # output
                        out_ref):
    _, Ls, d = x_src_ref.shape          # batch-block of 1 (grid axis over batch)
    Lt = x_tgt_ref.shape[1]
    dk = d // h
    eps = 1e-6
    f32, bf16 = jnp.float32, jnp.bfloat16

    def layer_norm(x2d, a, b):
        # Annotated Transformer LayerNorm: a * (x - mean) / (std + eps) + b,
        # std is the unbiased (ddof=1) std, matching torch.Tensor.std default.
        mean = jnp.mean(x2d, axis=-1, keepdims=True)
        diff = x2d - mean
        var = jnp.sum(diff * diff, axis=-1, keepdims=True) * (1.0 / (d - 1))
        inv = pl.reciprocal(jnp.sqrt(var) + eps)      # exact; rides the EUP slot
        return a * (diff * inv) + b

    def split_heads(x2d):
        # (L, h*dk) -> (h, L, dk): heads become a cheap untiled leading dim so the
        # attention core runs as head-batched dot_generals (no per-head einsum loop).
        return jnp.stack([x2d[:, i * dk:(i + 1) * dk] for i in range(h)], axis=0)

    def mha_core(q, k, v, bias, wo_h, bo):
        # q: (h, Lq, dk), k/v: (h, Lk, dk). 1/sqrt(dk) is folded into Q weights.
        s = jnp.einsum("hqd,hkd->hqk", q.astype(bf16), k.astype(bf16),
                       preferred_element_type=f32)
        s = s + bias                                   # additive mask bias (f32)
        s = s - jnp.max(s, axis=-1, keepdims=True)
        p = jnp.exp(s)
        p = p * pl.reciprocal(jnp.sum(p, axis=-1, keepdims=True))   # exact softmax
        ctx = jnp.einsum("hqk,hkd->hqd", p.astype(bf16), v.astype(bf16),
                         preferred_element_type=f32)   # (h, Lq, dk)
        # Head merge folded into the output projection (no lane-dim concatenate):
        # wo_h is (h, dk, d) -> batched per-head projection, then sum over heads.
        proj = jnp.einsum("hqe,hed->hqd", ctx.astype(bf16), wo_h,
                          preferred_element_type=f32)
        return jnp.sum(proj, axis=0) + bo

    def mha_self(x2d, bias, wqkv, bqkv, wo_h, bo):
        # fused QKV projection: one (d, 3d) bf16 matmul, f32 accumulation
        qkv = jnp.dot(x2d.astype(bf16), wqkv, preferred_element_type=f32) + bqkv
        return mha_core(split_heads(qkv[:, :d]),
                        split_heads(qkv[:, d:2 * d]),
                        split_heads(qkv[:, 2 * d:]), bias, wo_h, bo)

    def mha_cross(xq, mem, bias, wq, bq, wkv, bkv, wo_h, bo):
        # fused KV projection on the encoder memory
        q = jnp.dot(xq.astype(bf16), wq, preferred_element_type=f32) + bq
        kv = jnp.dot(mem.astype(bf16), wkv, preferred_element_type=f32) + bkv
        return mha_core(split_heads(q),
                        split_heads(kv[:, :d]),
                        split_heads(kv[:, d:]), bias, wo_h, bo)

    def ffn(x2d, w1, b1, w2, b2):
        hid = jnp.dot(x2d.astype(bf16), w1, preferred_element_type=f32) + b1
        hid = jnp.maximum(hid, 0.0)
        return jnp.dot(hid.astype(bf16), w2, preferred_element_type=f32) + b2

    # Compact masks -> additive biases, formed once in-kernel (1 = keep, 0 = masked).
    src_bias = ((src_mask_ref[0] - 1.0) * 1e9)[None]   # (1, 1, Ls)
    tgt_bias = ((tgt_mask_ref[0] - 1.0) * 1e9)[None]   # (1, Lt, Lt)

    # ------------------------------ encoder -------------------------------
    x = x_src_ref[0]                                   # (Ls, d) f32, no redundant cast
    for l in range(n_layers):                          # static unroll over layers
        y = layer_norm(x, e_ln1a_ref[l], e_ln1b_ref[l])
        x = x + mha_self(y, src_bias, e_wqkv_ref[l], e_bqkv_ref[l],
                         e_wo_ref[l], e_bo_ref[l])
        y = layer_norm(x, e_ln2a_ref[l], e_ln2b_ref[l])
        x = x + ffn(y, e_w1_ref[l], e_b1_ref[l], e_w2_ref[l], e_b2_ref[l])
    memory = layer_norm(x, enc_na_ref[...], enc_nb_ref[...])

    # ------------------------------ decoder -------------------------------
    t = x_tgt_ref[0]                                   # (Lt, d) f32
    for l in range(n_layers):
        y = layer_norm(t, d_ln1a_ref[l], d_ln1b_ref[l])
        t = t + mha_self(y, tgt_bias, d_wqkv_ref[l], d_bqkv_ref[l],
                         d_wo1_ref[l], d_bo1_ref[l])
        y = layer_norm(t, d_ln2a_ref[l], d_ln2b_ref[l])
        t = t + mha_cross(y, memory, src_bias,
                          d_wq_ref[l], d_bq_ref[l], d_wkv_ref[l], d_bkv_ref[l],
                          d_wo2_ref[l], d_bo2_ref[l])
        y = layer_norm(t, d_ln3a_ref[l], d_ln3b_ref[l])
        t = t + ffn(y, d_w1_ref[l], d_b1_ref[l], d_w2_ref[l], d_b2_ref[l])
    out = layer_norm(t, dec_na_ref[...], dec_nb_ref[...])

    out_ref[0] = out.astype(out_ref.dtype)


# ---------------------------------------------------------------------------
# Wrapper: embeddings in XLA, then one fused pallas_call gridded over batch
# ---------------------------------------------------------------------------

def encoder_decoder_forward(params, src, tgt, src_mask, tgt_mask,
                            *, d_model, h, n_layers):
    B, Ls = src.shape
    Lt = tgt.shape[1]
    d_ff = params["e_w1"].shape[-1]

    # TODO(synk): the data-dependent token-embedding gather + sinusoidal positional
    # encoding stay in plain XLA (single tiny gather); everything else is in-kernel.
    x_src = (jnp.take(params["src_emb"], src, axis=0) * math.sqrt(d_model)
             + params["pe"][None, :Ls, :])
    x_tgt = (jnp.take(params["tgt_emb"], tgt, axis=0) * math.sqrt(d_model)
             + params["pe"][None, :Lt, :])

    # Masks stay compact (no (B, Lq, Lk) f32 pre-broadcast in XLA); additive biases
    # are formed in-kernel where they ride otherwise-free VPU slots.
    src_mask = src_mask.astype(jnp.float32)            # (B, 1, Ls)
    tgt_mask = tgt_mask.astype(jnp.float32)            # (B, Lt, Lt)

    w = params
    args = [
        x_src, x_tgt, src_mask, tgt_mask,
        w["e_ln1a"], w["e_ln1b"], w["e_wqkv"], w["e_bqkv"],
        w["e_wo"], w["e_bo"], w["e_ln2a"], w["e_ln2b"],
        w["e_w1"], w["e_b1"], w["e_w2"], w["e_b2"],
        w["enc_na"], w["enc_nb"],
        w["d_ln1a"], w["d_ln1b"], w["d_wqkv"], w["d_bqkv"],
        w["d_wo1"], w["d_bo1"],
        w["d_ln2a"], w["d_ln2b"], w["d_wq"], w["d_bq"],
        w["d_wkv"], w["d_bkv"], w["d_wo2"], w["d_bo2"],
        w["d_ln3a"], w["d_ln3b"],
        w["d_w1"], w["d_b1"], w["d_w2"], w["d_b2"],
        w["dec_na"], w["dec_nb"],
    ]

    # Batch-blocked specs for activations/masks/output; full-resident specs (block
    # index constant across the grid, so DMA'd once) for all weights.
    def batch_spec(a):
        rest = a.ndim - 1
        return pl.BlockSpec((1,) + a.shape[1:],
                            lambda b, _r=rest: (b,) + (0,) * _r)

    def full_spec(a):
        nd = a.ndim
        return pl.BlockSpec(a.shape, lambda b, _n=nd: (0,) * _n)

    in_specs = [batch_spec(a) for a in args[:4]] + [full_spec(a) for a in args[4:]]
    out_spec = pl.BlockSpec((1, Lt, d_model), lambda b: (b, 0, 0))

    # Rough cost hint so XLA schedules the tiny embedding gather around the kernel.
    def mm(m, k, n):
        return 2 * m * k * n
    enc_layer = (mm(Ls, d_model, 3 * d_model) + 2 * 2 * Ls * Ls * d_model
                 + mm(Ls, d_model, d_model)
                 + mm(Ls, d_model, d_ff) + mm(Ls, d_ff, d_model))
    dec_layer = (mm(Lt, d_model, 3 * d_model) + 2 * 2 * Lt * Lt * d_model
                 + mm(Lt, d_model, d_model)
                 + mm(Lt, d_model, d_model) + mm(Ls, d_model, 2 * d_model)
                 + 2 * 2 * Lt * Ls * d_model + mm(Lt, d_model, d_model)
                 + mm(Lt, d_model, d_ff) + mm(Lt, d_ff, d_model))
    flops = B * n_layers * (enc_layer + dec_layer)
    transcendentals = B * n_layers * h * (Ls * Ls + Lt * Lt + Lt * Ls)
    bytes_accessed = (sum(int(a.size) * a.dtype.itemsize for a in args)
                      + B * Lt * d_model * 4)

    # TODO(synk): at real Annotated-Transformer sizes (d_model=512, d_ff=2048, 6
    # layers) the full weight set no longer fits VMEM (esp. v7x's 64 MiB / v5e's
    # 16 MiB default scoped limit); restructure with an 'arbitrary' grid axis over
    # layers, per-layer weight BlockSpecs (lambda l: (l, 0, 0)) and the residual
    # stream in a VMEM scratch accumulator (pl.when init / final write-out).
    return pl.pallas_call(
        functools.partial(_transformer_kernel, n_layers, h),
        out_shape=jax.ShapeDtypeStruct((B, Lt, d_model), jnp.float32),
        grid=(B,),                      # "parallel" -> both TensorCores on v7x
        in_specs=in_specs,
        out_specs=out_spec,
        compiler_params=pltpu.CompilerParams(
            dimension_semantics=("parallel",),
            vmem_limit_bytes=32 * 1024 * 1024),   # explicit: safe on v5e/v6e/v7x
        cost_estimate=pl.CostEstimate(
            flops=int(flops),
            transcendentals=int(transcendentals),
            bytes_accessed=int(bytes_accessed)),
    )(*args)

    # NOTE: self.generator (Linear + log_softmax) exists in __init__ but is not
    # invoked by EncoderDecoder.forward, so it is intentionally not applied.


# ---------------------------------------------------------------------------
# Deterministic parameter init (weights pre-fused / stacked per layer, bf16 mats)
# ---------------------------------------------------------------------------

def positional_encoding(max_len, d_model):
    pos = jnp.arange(max_len, dtype=jnp.float32)[:, None]
    div = jnp.exp(jnp.arange(0, d_model, 2, dtype=jnp.float32)
                  * (-math.log(10000.0) / d_model))
    pe = jnp.zeros((max_len, d_model), jnp.float32)
    pe = pe.at[:, 0::2].set(jnp.sin(pos * div))
    pe = pe.at[:, 1::2].set(jnp.cos(pos * div))
    return pe


def init_params(key, *, d_model, d_ff, h, n_layers, src_vocab, tgt_vocab,
                max_len=64):
    keys = iter(jax.random.split(key, 256))
    dk = d_model // h
    scale = 1.0 / math.sqrt(dk)

    def dense(din, dout):
        return (jax.random.normal(next(keys), (din, dout), jnp.float32)
                / math.sqrt(din))

    def stack(make):
        return jnp.stack([make() for _ in range(n_layers)], axis=0)

    def bf(x):  # matrix storage dtype: bf16 (half the DMA/VMEM; MXU-native v6e/v7x)
        return x.astype(jnp.bfloat16)

    def fused_qkv():
        w = dense(d_model, 3 * d_model)
        # fold the 1/sqrt(dk) attention scale into the Q columns (weight transform);
        # the matching Q bias is zero so it needs no rescale.
        return w.at[:, :d_model].multiply(scale)

    def wo_heads():
        # output projection stored head-major (h, dk, d) so the head merge folds
        # into a batched per-head matmul + sum (no lane-dim concatenate in-kernel)
        return dense(d_model, d_model).reshape(h, dk, d_model)

    ones_ln = jnp.ones((n_layers, 1, d_model), jnp.float32)
    zeros_ln = jnp.zeros((n_layers, 1, d_model), jnp.float32)

    return dict(
        src_emb=jax.random.normal(next(keys), (src_vocab, d_model), jnp.float32) * 0.1,
        tgt_emb=jax.random.normal(next(keys), (tgt_vocab, d_model), jnp.float32) * 0.1,
        pe=positional_encoding(max_len, d_model),

        # encoder (stacked over layers); QKV projections pre-fused into (d, 3d)
        e_ln1a=ones_ln, e_ln1b=zeros_ln,
        e_wqkv=bf(stack(fused_qkv)),
        e_bqkv=jnp.zeros((n_layers, 1, 3 * d_model), jnp.float32),
        e_wo=bf(stack(wo_heads)),
        e_bo=jnp.zeros((n_layers, 1, d_model), jnp.float32),
        e_ln2a=ones_ln, e_ln2b=zeros_ln,
        e_w1=bf(stack(lambda: dense(d_model, d_ff))),
        e_b1=jnp.zeros((n_layers, 1, d_ff), jnp.float32),
        e_w2=bf(stack(lambda: dense(d_ff, d_model))),
        e_b2=jnp.zeros((n_layers, 1, d_model), jnp.float32),
        enc_na=jnp.ones((1, d_model), jnp.float32),
        enc_nb=jnp.zeros((1, d_model), jnp.float32),

        # decoder (stacked over layers); self-attn QKV fused, cross-attn KV fused
        d_ln1a=ones_ln, d_ln1b=zeros_ln,
        d_wqkv=bf(stack(fused_qkv)),
        d_bqkv=jnp.zeros((n_layers, 1, 3 * d_model), jnp.float32),
        d_wo1=bf(stack(wo_heads)),
        d_bo1=jnp.zeros((n_layers, 1, d_model), jnp.float32),
        d_ln2a=ones_ln, d_ln2b=zeros_ln,
        d_wq=bf(stack(lambda: dense(d_model, d_model) * scale)),  # scale folded in Q
        d_bq=jnp.zeros((n_layers, 1, d_model), jnp.float32),
        d_wkv=bf(stack(lambda: dense(d_model, 2 * d_model))),
        d_bkv=jnp.zeros((n_layers, 1, 2 * d_model), jnp.float32),
        d_wo2=bf(stack(wo_heads)),
        d_bo2=jnp.zeros((n_layers, 1, d_model), jnp.float32),
        d_ln3a=ones_ln, d_ln3b=zeros_ln,
        d_w1=bf(stack(lambda: dense(d_model, d_ff))),
        d_b1=jnp.zeros((n_layers, 1, d_ff), jnp.float32),
        d_w2=bf(stack(lambda: dense(d_ff, d_model))),
        d_b2=jnp.zeros((n_layers, 1, d_model), jnp.float32),
        dec_na=jnp.ones((1, d_model), jnp.float32),
        dec_nb=jnp.zeros((1, d_model), jnp.float32),
    )


# ---------------------------------------------------------------------------
# Main
# ---------------------------------------------------------------------------

if __name__ == "__main__":
    key = jax.random.PRNGKey(0)
    k_params, k_src, k_tgt = jax.random.split(key, 3)

    B, Ls, Lt = 2, 8, 8
    # NOTE: d_model=32 fills only 32 of 128 lanes; at real sizes (d_model>=128) the
    # lane-dense layout concern resolves itself.
    d_model, d_ff, h, n_layers, vocab = 32, 64, 4, 2, 16

    params = init_params(k_params, d_model=d_model, d_ff=d_ff, h=h,
                         n_layers=n_layers, src_vocab=vocab, tgt_vocab=vocab,
                         max_len=64)

    src = jax.random.randint(k_src, (B, Ls), 0, vocab, dtype=jnp.int32)
    tgt = jax.random.randint(k_tgt, (B, Lt), 0, vocab, dtype=jnp.int32)

    # src_mask: (B, 1, Ls) padding mask; batch 1 has two padded positions.
    src_mask = jnp.ones((B, 1, Ls), jnp.float32).at[1, 0, 6:].set(0.0)
    # tgt_mask: (B, Lt, Lt) subsequent (causal) mask.
    tgt_mask = jnp.broadcast_to(jnp.tril(jnp.ones((Lt, Lt), jnp.float32)),
                                (B, Lt, Lt))

    # Static config bound via partial (Python ints -> no tracer leaks into math.sqrt).
    fwd = jax.jit(functools.partial(encoder_decoder_forward,
                                    d_model=d_model, h=h, n_layers=n_layers))
    out = fwd(params, src, tgt, src_mask, tgt_mask)
    out = jax.block_until_ready(out)

    assert out.shape == (B, Lt, d_model), out.shape
    assert bool(jnp.all(jnp.isfinite(out)))
    print("KERNEL_OK")
</pallas_src>

<mosaic_0001>
module attributes {stable_mosaic.version = 11 : i64} {
  func.func @_transformer_kernel(%arg0: i32, %arg1: memref<1x8x32xf32, #tpu.memory_space<vmem>>, %arg2: memref<1x8x32xf32, #tpu.memory_space<vmem>>, %arg3: memref<1x1x8xf32, #tpu.memory_space<vmem>>, %arg4: memref<1x8x8xf32, #tpu.memory_space<vmem>>, %arg5: memref<2x1x32xf32, #tpu.memory_space<vmem>>, %arg6: memref<2x1x32xf32, #tpu.memory_space<vmem>>, %arg7: memref<2x32x96xbf16, #tpu.memory_space<vmem>>, %arg8: memref<2x1x96xf32, #tpu.memory_space<vmem>>, %arg9: memref<2x4x8x32xbf16, #tpu.memory_space<vmem>>, %arg10: memref<2x1x32xf32, #tpu.memory_space<vmem>>, %arg11: memref<2x1x32xf32, #tpu.memory_space<vmem>>, %arg12: memref<2x1x32xf32, #tpu.memory_space<vmem>>, %arg13: memref<2x32x64xbf16, #tpu.memory_space<vmem>>, %arg14: memref<2x1x64xf32, #tpu.memory_space<vmem>>, %arg15: memref<2x64x32xbf16, #tpu.memory_space<vmem>>, %arg16: memref<2x1x32xf32, #tpu.memory_space<vmem>>, %arg17: memref<1x32xf32, #tpu.memory_space<vmem>>, %arg18: memref<1x32xf32, #tpu.memory_space<vmem>>, %arg19: memref<2x1x32xf32, #tpu.memory_space<vmem>>, %arg20: memref<2x1x32xf32, #tpu.memory_space<vmem>>, %arg21: memref<2x32x96xbf16, #tpu.memory_space<vmem>>, %arg22: memref<2x1x96xf32, #tpu.memory_space<vmem>>, %arg23: memref<2x4x8x32xbf16, #tpu.memory_space<vmem>>, %arg24: memref<2x1x32xf32, #tpu.memory_space<vmem>>, %arg25: memref<2x1x32xf32, #tpu.memory_space<vmem>>, %arg26: memref<2x1x32xf32, #tpu.memory_space<vmem>>, %arg27: memref<2x32x32xbf16, #tpu.memory_space<vmem>>, %arg28: memref<2x1x32xf32, #tpu.memory_space<vmem>>, %arg29: memref<2x32x64xbf16, #tpu.memory_space<vmem>>, %arg30: memref<2x1x64xf32, #tpu.memory_space<vmem>>, %arg31: memref<2x4x8x32xbf16, #tpu.memory_space<vmem>>, %arg32: memref<2x1x32xf32, #tpu.memory_space<vmem>>, %arg33: memref<2x1x32xf32, #tpu.memory_space<vmem>>, %arg34: memref<2x1x32xf32, #tpu.memory_space<vmem>>, %arg35: memref<2x32x64xbf16, #tpu.memory_space<vmem>>, %arg36: memref<2x1x64xf32, #tpu.memory_space<vmem>>, %arg37: memref<2x64x32xbf16, #tpu.memory_space<vmem>>, %arg38: memref<2x1x32xf32, #tpu.memory_space<vmem>>, %arg39: memref<1x32xf32, #tpu.memory_space<vmem>>, %arg40: memref<1x32xf32, #tpu.memory_space<vmem>>, %arg41: memref<1x8x32xf32, #tpu.memory_space<vmem>>) attributes {dimension_semantics = [#tpu.dimension_semantics<parallel>], iteration_bounds = array<i64: 2>, scalar_prefetch = 0 : i64, scratch_operands = 0 : i64, tpu.core_type = #tpu.core_type<tc>, window_params = [{transform_indices = @transform_0, window_bounds = array<i64: 1, 8, 32>}, {transform_indices = @transform_1, window_bounds = array<i64: 1, 8, 32>}, {transform_indices = @transform_2, window_bounds = array<i64: 1, 1, 8>}, {transform_indices = @transform_3, window_bounds = array<i64: 1, 8, 8>}, {pipeline_mode = #tpu.pipeline_mode<synchronous>, transform_indices = @transform_4, window_bounds = array<i64: 2, 1, 32>}, {pipeline_mode = #tpu.pipeline_mode<synchronous>, transform_indices = @transform_5, window_bounds = array<i64: 2, 1, 32>}, {pipeline_mode = #tpu.pipeline_mode<synchronous>, transform_indices = @transform_6, window_bounds = array<i64: 2, 32, 96>}, {pipeline_mode = #tpu.pipeline_mode<synchronous>, transform_indices = @transform_7, window_bounds = array<i64: 2, 1, 96>}, {pipeline_mode = #tpu.pipeline_mode<synchronous>, transform_indices = @transform_8, window_bounds = array<i64: 2, 4, 8, 32>}, {pipeline_mode = #tpu.pipeline_mode<synchronous>, transform_indices = @transform_9, window_bounds = array<i64: 2, 1, 32>}, {pipeline_mode = #tpu.pipeline_mode<synchronous>, transform_indices = @transform_10, window_bounds = array<i64: 2, 1, 32>}, {pipeline_mode = #tpu.pipeline_mode<synchronous>, transform_indices = @transform_11, window_bounds = array<i64: 2, 1, 32>}, {pipeline_mode = #tpu.pipeline_mode<synchronous>, transform_indices = @transform_12, window_bounds = array<i64: 2, 32, 64>}, {pipeline_mode = #tpu.pipeline_mode<synchronous>, transform_indices = @transform_13, window_bounds = array<i64: 2, 1, 64>}, {pipeline_mode = #tpu.pipeline_mode<synchronous>, transform_indices = @transform_14, window_bounds = array<i64: 2, 64, 32>}, {pipeline_mode = #tpu.pipeline_mode<synchronous>, transform_indices = @transform_15, window_bounds = array<i64: 2, 1, 32>}, {pipeline_mode = #tpu.pipeline_mode<synchronous>, transform_indices = @transform_16, window_bounds = array<i64: 1, 32>}, {pipeline_mode = #tpu.pipeline_mode<synchronous>, transform_indices = @transform_17, window_bounds = array<i64: 1, 32>}, {pipeline_mode = #tpu.pipeline_mode<synchronous>, transform_indices = @transform_18, window_bounds = array<i64: 2, 1, 32>}, {pipeline_mode = #tpu.pipeline_mode<synchronous>, transform_indices = @transform_19, window_bounds = array<i64: 2, 1, 32>}, {pipeline_mode = #tpu.pipeline_mode<synchronous>, transform_indices = @transform_20, window_bounds = array<i64: 2, 32, 96>}, {pipeline_mode = #tpu.pipeline_mode<synchronous>, transform_indices = @transform_21, window_bounds = array<i64: 2, 1, 96>}, {pipeline_mode = #tpu.pipeline_mode<synchronous>, transform_indices = @transform_22, window_bounds = array<i64: 2, 4, 8, 32>}, {pipeline_mode = #tpu.pipeline_mode<synchronous>, transform_indices = @transform_23, window_bounds = array<i64: 2, 1, 32>}, {pipeline_mode = #tpu.pipeline_mode<synchronous>, transform_indices = @transform_24, window_bounds = array<i64: 2, 1, 32>}, {pipeline_mode = #tpu.pipeline_mode<synchronous>, transform_indices = @transform_25, window_bounds = array<i64: 2, 1, 32>}, {pipeline_mode = #tpu.pipeline_mode<synchronous>, transform_indices = @transform_26, window_bounds = array<i64: 2, 32, 32>}, {pipeline_mode = #tpu.pipeline_mode<synchronous>, transform_indices = @transform_27, window_bounds = array<i64: 2, 1, 32>}, {pipeline_mode = #tpu.pipeline_mode<synchronous>, transform_indices = @transform_28, window_bounds = array<i64: 2, 32, 64>}, {pipeline_mode = #tpu.pipeline_mode<synchronous>, transform_indices = @transform_29, window_bounds = array<i64: 2, 1, 64>}, {pipeline_mode = #tpu.pipeline_mode<synchronous>, transform_indices = @transform_30, window_bounds = array<i64: 2, 4, 8, 32>}, {pipeline_mode = #tpu.pipeline_mode<synchronous>, transform_indices = @transform_31, window_bounds = array<i64: 2, 1, 32>}, {pipeline_mode = #tpu.pipeline_mode<synchronous>, transform_indices = @transform_32, window_bounds = array<i64: 2, 1, 32>}, {pipeline_mode = #tpu.pipeline_mode<synchronous>, transform_indices = @transform_33, window_bounds = array<i64: 2, 1, 32>}, {pipeline_mode = #tpu.pipeline_mode<synchronous>, transform_indices = @transform_34, window_bounds = array<i64: 2, 32, 64>}, {pipeline_mode = #tpu.pipeline_mode<synchronous>, transform_indices = @transform_35, window_bounds = array<i64: 2, 1, 64>}, {pipeline_mode = #tpu.pipeline_mode<synchronous>, transform_indices = @transform_36, window_bounds = array<i64: 2, 64, 32>}, {pipeline_mode = #tpu.pipeline_mode<synchronous>, transform_indices = @transform_37, window_bounds = array<i64: 2, 1, 32>}, {pipeline_mode = #tpu.pipeline_mode<synchronous>, transform_indices = @transform_38, window_bounds = array<i64: 1, 32>}, {pipeline_mode = #tpu.pipeline_mode<synchronous>, transform_indices = @transform_39, window_bounds = array<i64: 1, 32>}, {transform_indices = @transform_40, window_bounds = array<i64: 1, 8, 32>}]} {
    %c0 = arith.constant 0 : index
    %c0_0 = arith.constant 0 : index
    %c0_1 = arith.constant 0 : index
    %0 = vector.load %arg3[%c0, %c0_0, %c0_1] : memref<1x1x8xf32, #tpu.memory_space<vmem>>, vector<1x1x8xf32>
    %1 = vector.shape_cast %0 : vector<1x1x8xf32> to vector<1x8xf32>
    %cst = arith.constant 1.000000e+00 : f32
    %2 = vector.broadcast %cst : f32 to vector<1x8xf32>
    %3 = arith.subf %1, %2 : vector<1x8xf32>
    %cst_2 = arith.constant 1.000000e+09 : f32
    %4 = vector.broadcast %cst_2 : f32 to vector<1x8xf32>
    %5 = arith.mulf %3, %4 : vector<1x8xf32>
    %6 = vector.shape_cast %5 : vector<1x8xf32> to vector<1x1x8xf32>
    %c0_3 = arith.constant 0 : index
    %c0_4 = arith.constant 0 : index
    %c0_5 = arith.constant 0 : index
    %7 = vector.load %arg4[%c0_3, %c0_4, %c0_5] : memref<1x8x8xf32, #tpu.memory_space<vmem>>, vector<1x8x8xf32>
    %8 = vector.shape_cast %7 : vector<1x8x8xf32> to vector<8x8xf32>
    %cst_6 = arith.constant 1.000000e+00 : f32
    %9 = vector.broadcast %cst_6 : f32 to vector<8x8xf32>
    %10 = arith.subf %8, %9 : vector<8x8xf32>
    %cst_7 = arith.constant 1.000000e+09 : f32
    %11 = vector.broadcast %cst_7 : f32 to vector<8x8xf32>
    %12 = arith.mulf %10, %11 : vector<8x8xf32>
    %13 = vector.shape_cast %12 : vector<8x8xf32> to vector<1x8x8xf32>
    %c0_8 = arith.constant 0 : index
    %c0_9 = arith.constant 0 : index
    %c0_10 = arith.constant 0 : index
    %14 = vector.load %arg1[%c0_8, %c0_9, %c0_10] : memref<1x8x32xf32, #tpu.memory_space<vmem>>, vector<1x8x32xf32>
    %15 = vector.shape_cast %14 : vector<1x8x32xf32> to vector<8x32xf32>
    %c0_11 = arith.constant 0 : index
    %c0_12 = arith.constant 0 : index
    %c0_13 = arith.constant 0 : index
    %16 = vector.load %arg5[%c0_11, %c0_12, %c0_13] : memref<2x1x32xf32, #tpu.memory_space<vmem>>, vector<1x1x32xf32>
    %17 = vector.shape_cast %16 : vector<1x1x32xf32> to vector<1x32xf32>
    %c0_14 = arith.constant 0 : index
    %c0_15 = arith.constant 0 : index
    %c0_16 = arith.constant 0 : index
    %18 = vector.load %arg6[%c0_14, %c0_15, %c0_16] : memref<2x1x32xf32, #tpu.memory_space<vmem>>, vector<1x1x32xf32>
    %19 = vector.shape_cast %18 : vector<1x1x32xf32> to vector<1x32xf32>
    %cst_17 = arith.constant dense<0.000000e+00> : vector<8xf32>
    %20 = vector.multi_reduction <add>, %15, %cst_17 [1] : vector<8x32xf32> to vector<8xf32>
    %21 = vector.shape_cast %20 : vector<8xf32> to vector<8x1xf32>
    %cst_18 = arith.constant 3.200000e+01 : f32
    %22 = vector.broadcast %cst_18 : f32 to vector<8x1xf32>
    %23 = arith.divf %21, %22 : vector<8x1xf32>
    %24 = vector.broadcast %23 : vector<8x1xf32> to vector<8x32xf32>
    %25 = arith.subf %15, %24 : vector<8x32xf32>
    %26 = arith.mulf %25, %25 : vector<8x32xf32>
    %cst_19 = arith.constant dense<0.000000e+00> : vector<8xf32>
    %27 = vector.multi_reduction <add>, %26, %cst_19 [1] : vector<8x32xf32> to vector<8xf32>
    %28 = vector.shape_cast %27 : vector<8xf32> to vector<8x1xf32>
    %cst_20 = arith.constant 0.0322580636 : f32
    %29 = vector.broadcast %cst_20 : f32 to vector<8x1xf32>
    %30 = arith.mulf %28, %29 : vector<8x1xf32>
    %31 = math.sqrt %30 : vector<8x1xf32>
    %cst_21 = arith.constant 9.99999997E-7 : f32
    %32 = vector.broadcast %cst_21 : f32 to vector<8x1xf32>
    %33 = arith.addf %31, %32 : vector<8x1xf32>
    %34 = tpu.reciprocal %33 : vector<8x1xf32> -> vector<8x1xf32>
    %35 = vector.broadcast %34 : vector<8x1xf32> to vector<8x32xf32>
    %36 = arith.mulf %25, %35 : vector<8x32xf32>
    %37 = vector.broadcast %17 : vector<1x32xf32> to vector<8x32xf32>
    %38 = arith.mulf %37, %36 : vector<8x32xf32>
    %39 = vector.broadcast %19 : vector<1x32xf32> to vector<8x32xf32>
    %40 = arith.addf %38, %39 : vector<8x32xf32>
    %c0_22 = arith.constant 0 : index
    %c0_23 = arith.constant 0 : index
    %c0_24 = arith.constant 0 : index
    %41 = vector.load %arg7[%c0_22, %c0_23, %c0_24] : memref<2x32x96xbf16, #tpu.memory_space<vmem>>, vector<1x32x96xbf16>
    %42 = vector.shape_cast %41 : vector<1x32x96xbf16> to vector<32x96xbf16>
    %c0_25 = arith.constant 0 : index
    %c0_26 = arith.constant 0 : index
    %c0_27 = arith.constant 0 : index
    %43 = vector.load %arg8[%c0_25, %c0_26, %c0_27] : memref<2x1x96xf32, #tpu.memory_space<vmem>>, vector<1x1x96xf32>
    %44 = vector.shape_cast %43 : vector<1x1x96xf32> to vector<1x96xf32>
    %c0_28 = arith.constant 0 : index
    %c0_29 = arith.constant 0 : index
    %c0_30 = arith.constant 0 : index
    %c0_31 = arith.constant 0 : index
    %45 = vector.load %arg9[%c0_28, %c0_29, %c0_30, %c0_31] : memref<2x4x8x32xbf16, #tpu.memory_space<vmem>>, vector<1x4x8x32xbf16>
    %46 = vector.shape_cast %45 : vector<1x4x8x32xbf16> to vector<4x8x32xbf16>
    %c0_32 = arith.constant 0 : index
    %c0_33 = arith.constant 0 : index
    %c0_34 = arith.constant 0 : index
    %47 = vector.load %arg10[%c0_32, %c0_33, %c0_34] : memref<2x1x32xf32, #tpu.memory_space<vmem>>, vector<1x1x32xf32>
    %48 = vector.shape_cast %47 : vector<1x1x32xf32> to vector<1x32xf32>
    %49 = arith.truncf %40 : vector<8x32xf32> to vector<8x32xbf16>
    %cst_35 = arith.constant dense<0.000000e+00> : vector<8x96xf32>
    %50 = tpu.matmul %49, %42, %cst_35 {dimension_numbers = #tpu.dot_dimension_numbers<[1], [0], [0], [1], [0, 0, 1, 1], [], []>} : vector<8x32xbf16>, vector<32x96xbf16>, vector<8x96xf32> -> vector<8x96xf32>
    %51 = vector.broadcast %44 : vector<1x96xf32> to vector<8x96xf32>
    %52 = arith.addf %50, %51 : vector<8x96xf32>
    %53 = vector.extract_strided_slice %52 {offsets = [0, 0], sizes = [8, 32], strides = [1, 1]} : vector<8x96xf32> to vector<8x32xf32>
    %54 = vector.extract_strided_slice %53 {offsets = [0, 0], sizes = [8, 8], strides = [1, 1]} : vector<8x32xf32> to vector<8x8xf32>
    %55 = vector.extract_strided_slice %53 {offsets = [0, 8], sizes = [8, 8], strides = [1, 1]} : vector<8x32xf32> to vector<8x8xf32>
    %56 = vector.extract_strided_slice %53 {offsets = [0, 16], sizes = [8, 8], strides = [1, 1]} : vector<8x32xf32> to vector<8x8xf32>
    %57 = vector.extract_strided_slice %53 {offsets = [0, 24], sizes = [8, 8], strides = [1, 1]} : vector<8x32xf32> to vector<8x8xf32>
    %58 = vector.shape_cast %54 : vector<8x8xf32> to vector<1x8x8xf32>
    %59 = vector.shape_cast %55 : vector<8x8xf32> to vector<1x8x8xf32>
    %60 = vector.shape_cast %56 : vector<8x8xf32> to vector<1x8x8xf32>
    %61 = vector.shape_cast %57 : vector<8x8xf32> to vector<1x8x8xf32>
    %62 = tpu.concatenate %58, %59, %60, %61 in 0 : vector<1x8x8xf32>, vector<1x8x8xf32>, vector<1x8x8xf32>, vector<1x8x8xf32> -> vector<4x8x8xf32>
    %63 = vector.extract_strided_slice %52 {offsets = [0, 32], sizes = [8, 32], strides = [1, 1]} : vector<8x96xf32> to vector<8x32xf32>
    %64 = vector.extract_strided_slice %63 {offsets = [0, 0], sizes = [8, 8], strides = [1, 1]} : vector<8x32xf32> to vector<8x8xf32>
    %65 = vector.extract_strided_slice %63 {offsets = [0, 8], sizes = [8, 8], strides = [1, 1]} : vector<8x32xf32> to vector<8x8xf32>
    %66 = vector.extract_strided_slice %63 {offsets = [0, 16], sizes = [8, 8], strides = [1, 1]} : vector<8x32xf32> to vector<8x8xf32>
    %67 = vector.extract_strided_slice %63 {offsets = [0, 24], sizes = [8, 8], strides = [1, 1]} : vector<8x32xf32> to vector<8x8xf32>
    %68 = vector.shape_cast %64 : vector<8x8xf32> to vector<1x8x8xf32>
    %69 = vector.shape_cast %65 : vector<8x8xf32> to vector<1x8x8xf32>
    %70 = vector.shape_cast %66 : vector<8x8xf32> to vector<1x8x8xf32>
    %71 = vector.shape_cast %67 : vector<8x8xf32> to vector<1x8x8xf32>
    %72 = tpu.concatenate %68, %69, %70, %71 in 0 : vector<1x8x8xf32>, vector<1x8x8xf32>, vector<1x8x8xf32>, vector<1x8x8xf32> -> vector<4x8x8xf32>
    %73 = vector.extract_strided_slice %52 {offsets = [0, 64], sizes = [8, 32], strides = [1, 1]} : vector<8x96xf32> to vector<8x32xf32>
    %74 = vector.extract_strided_slice %73 {offsets = [0, 0], sizes = [8, 8], strides = [1, 1]} : vector<8x32xf32> to vector<8x8xf32>
    %75 = vector.extract_strided_slice %73 {offsets = [0, 8], sizes = [8, 8], strides = [1, 1]} : vector<8x32xf32> to vector<8x8xf32>
    %76 = vector.extract_strided_slice %73 {offsets = [0, 16], sizes = [8, 8], strides = [1, 1]} : vector<8x32xf32> to vector<8x8xf32>
    %77 = vector.extract_strided_slice %73 {offsets = [0, 24], sizes = [8, 8], strides = [1, 1]} : vector<8x32xf32> to vector<8x8xf32>
    %78 = vector.shape_cast %74 : vector<8x8xf32> to vector<1x8x8xf32>
    %79 = vector.shape_cast %75 : vector<8x8xf32> to vector<1x8x8xf32>
    %80 = vector.shape_cast %76 : vector<8x8xf32> to vector<1x8x8xf32>
    %81 = vector.shape_cast %77 : vector<8x8xf32> to vector<1x8x8xf32>
    %82 = tpu.concatenate %78, %79, %80, %81 in 0 : vector<1x8x8xf32>, vector<1x8x8xf32>, vector<1x8x8xf32>, vector<1x8x8xf32> -> vector<4x8x8xf32>
    %83 = arith.truncf %62 : vector<4x8x8xf32> to vector<4x8x8xbf16>
    %84 = arith.truncf %72 : vector<4x8x8xf32> to vector<4x8x8xbf16>
    "tpu.trace_start"() <{level = 10 : i32, message = "hqd,hkd->hqk"}> : () -> ()
    %cst_36 = arith.constant dense<0.000000e+00> : vector<4x8x8xf32>
    %85 = tpu.matmul %83, %84, %cst_36 {dimension_numbers = #tpu.dot_dimension_numbers<[2], [2], [1], [1], [0, 0, 0, 1, 1, 1], [0], [0]>} : vector<4x8x8xbf16>, vector<4x8x8xbf16>, vector<4x8x8xf32> -> vector<4x8x8xf32>
    "tpu.trace_stop"() : () -> ()
    %86 = vector.broadcast %6 : vector<1x1x8xf32> to vector<4x8x8xf32>
    %87 = arith.addf %85, %86 : vector<4x8x8xf32>
    %cst_37 = arith.constant dense<0xFF800000> : vector<4x8xf32>
    %88 = vector.multi_reduction <maximumf>, %87, %cst_37 [2] : vector<4x8x8xf32> to vector<4x8xf32>
    %89 = vector.shape_cast %88 : vector<4x8xf32> to vector<4x8x1xf32>
    %90 = vector.broadcast %89 : vector<4x8x1xf32> to vector<4x8x8xf32>
    %91 = arith.subf %87, %90 : vector<4x8x8xf32>
    %92 = math.exp %91 : vector<4x8x8xf32>
    %cst_38 = arith.constant dense<0.000000e+00> : vector<4x8xf32>
    %93 = vector.multi_reduction <add>, %92, %cst_38 [2] : vector<4x8x8xf32> to vector<4x8xf32>
    %94 = vector.shape_cast %93 : vector<4x8xf32> to vector<4x8x1xf32>
    %95 = tpu.reciprocal %94 : vector<4x8x1xf32> -> vector<4x8x1xf32>
    %96 = vector.broadcast %95 : vector<4x8x1xf32> to vector<4x8x8xf32>
    %97 = arith.mulf %92, %96 : vector<4x8x8xf32>
    %98 = arith.truncf %97 : vector<4x8x8xf32> to vector<4x8x8xbf16>
    %99 = arith.truncf %82 : vector<4x8x8xf32> to vector<4x8x8xbf16>
    "tpu.trace_start"() <{level = 10 : i32, message = "hqk,hkd->hqd"}> : () -> ()
    %cst_39 = arith.constant dense<0.000000e+00> : vector<4x8x8xf32>
    %100 = tpu.matmul %98, %99, %cst_39 {dimension_numbers = #tpu.dot_dimension_numbers<[2], [1], [1], [2], [0, 0, 0, 1, 1, 2], [0], [0]>} : vector<4x8x8xbf16>, vector<4x8x8xbf16>, vector<4x8x8xf32> -> vector<4x8x8xf32>
    "tpu.trace_stop"() : () -> ()
    %101 = arith.truncf %100 : vector<4x8x8xf32> to vector<4x8x8xbf16>
    "tpu.trace_start"() <{level = 10 : i32, message = "hqe,hed->hqd"}> : () -> ()
    %cst_40 = arith.constant dense<0.000000e+00> : vector<4x8x32xf32>
    %102 = tpu.matmul %101, %46, %cst_40 {dimension_numbers = #tpu.dot_dimension_numbers<[2], [1], [1], [2], [0, 0, 0, 1, 1, 2], [0], [0]>} : vector<4x8x8xbf16>, vector<4x8x32xbf16>, vector<4x8x32xf32> -> vector<4x8x32xf32>
    "tpu.trace_stop"() : () -> ()
    %cst_41 = arith.constant dense<0.000000e+00> : vector<8x32xf32>
    %103 = vector.multi_reduction <add>, %102, %cst_41 [0] : vector<4x8x32xf32> to vector<8x32xf32>
    %104 = vector.broadcast %48 : vector<1x32xf32> to vector<8x32xf32>
    %105 = arith.addf %103, %104 : vector<8x32xf32>
    %106 = arith.addf %15, %105 : vector<8x32xf32>
    %c0_42 = arith.constant 0 : index
    %c0_43 = arith.constant 0 : index
    %c0_44 = arith.constant 0 : index
    %107 = vector.load %arg11[%c0_42, %c0_43, %c0_44] : memref<2x1x32xf32, #tpu.memory_space<vmem>>, vector<1x1x32xf32>
    %108 = vector.shape_cast %107 : vector<1x1x32xf32> to vector<1x32xf32>
    %c0_45 = arith.constant 0 : index
    %c0_46 = arith.constant 0 : index
    %c0_47 = arith.constant 0 : index
    %109 = vector.load %arg12[%c0_45, %c0_46, %c0_47] : memref<2x1x32xf32, #tpu.memory_space<vmem>>, vector<1x1x32xf32>
    %110 = vector.shape_cast %109 : vector<1x1x32xf32> to vector<1x32xf32>
    %cst_48 = arith.constant dense<0.000000e+00> : vector<8xf32>
    %111 = vector.multi_reduction <add>, %106, %cst_48 [1] : vector<8x32xf32> to vector<8xf32>
    %112 = vector.shape_cast %111 : vector<8xf32> to vector<8x1xf32>
    %cst_49 = arith.constant 3.200000e+01 : f32
    %113 = vector.broadcast %cst_49 : f32 to vector<8x1xf32>
    %114 = arith.divf %112, %113 : vector<8x1xf32>
    %115 = vector.broadcast %114 : vector<8x1xf32> to vector<8x32xf32>
    %116 = arith.subf %106, %115 : vector<8x32xf32>
    %117 = arith.mulf %116, %116 : vector<8x32xf32>
    %cst_50 = arith.constant dense<0.000000e+00> : vector<8xf32>
    %118 = vector.multi_reduction <add>, %117, %cst_50 [1] : vector<8x32xf32> to vector<8xf32>
    %119 = vector.shape_cast %118 : vector<8xf32> to vector<8x1xf32>
    %cst_51 = arith.constant 0.0322580636 : f32
    %120 = vector.broadcast %cst_51 : f32 to vector<8x1xf32>
    %121 = arith.mulf %119, %120 : vector<8x1xf32>
    %122 = math.sqrt %121 : vector<8x1xf32>
    %cst_52 = arith.constant 9.99999997E-7 : f32
    %123 = vector.broadcast %cst_52 : f32 to vector<8x1xf32>
    %124 = arith.addf %122, %123 : vector<8x1xf32>
    %125 = tpu.reciprocal %124 : vector<8x1xf32> -> vector<8x1xf32>
    %126 = vector.broadcast %125 : vector<8x1xf32> to vector<8x32xf32>
    %127 = arith.mulf %116, %126 : vector<8x32xf32>
    %128 = vector.broadcast %108 : vector<1x32xf32> to vector<8x32xf32>
    %129 = arith.mulf %128, %127 : vector<8x32xf32>
    %130 = vector.broadcast %110 : vector<1x32xf32> to vector<8x32xf32>
    %131 = arith.addf %129, %130 : vector<8x32xf32>
    %c0_53 = arith.constant 0 : index
    %c0_54 = arith.constant 0 : index
    %c0_55 = arith.constant 0 : index
    %132 = vector.load %arg13[%c0_53, %c0_54, %c0_55] : memref<2x32x64xbf16, #tpu.memory_space<vmem>>, vector<1x32x64xbf16>
    %133 = vector.shape_cast %132 : vector<1x32x64xbf16> to vector<32x64xbf16>
    %c0_56 = arith.constant 0 : index
    %c0_57 = arith.constant 0 : index
    %c0_58 = arith.constant 0 : index
    %134 = vector.load %arg14[%c0_56, %c0_57, %c0_58] : memref<2x1x64xf32, #tpu.memory_space<vmem>>, vector<1x1x64xf32>
    %135 = vector.shape_cast %134 : vector<1x1x64xf32> to vector<1x64xf32>
    %c0_59 = arith.constant 0 : index
    %c0_60 = arith.constant 0 : index
    %c0_61 = arith.constant 0 : index
    %136 = vector.load %arg15[%c0_59, %c0_60, %c0_61] : memref<2x64x32xbf16, #tpu.memory_space<vmem>>, vector<1x64x32xbf16>
    %137 = vector.shape_cast %136 : vector<1x64x32xbf16> to vector<64x32xbf16>
    %c0_62 = arith.constant 0 : index
    %c0_63 = arith.constant 0 : index
    %c0_64 = arith.constant 0 : index
    %138 = vector.load %arg16[%c0_62, %c0_63, %c0_64] : memref<2x1x32xf32, #tpu.memory_space<vmem>>, vector<1x1x32xf32>
    %139 = vector.shape_cast %138 : vector<1x1x32xf32> to vector<1x32xf32>
    %140 = arith.truncf %131 : vector<8x32xf32> to vector<8x32xbf16>
    %cst_65 = arith.constant dense<0.000000e+00> : vector<8x64xf32>
    %141 = tpu.matmul %140, %133, %cst_65 {dimension_numbers = #tpu.dot_dimension_numbers<[1], [0], [0], [1], [0, 0, 1, 1], [], []>} : vector<8x32xbf16>, vector<32x64xbf16>, vector<8x64xf32> -> vector<8x64xf32>
    %142 = vector.broadcast %135 : vector<1x64xf32> to vector<8x64xf32>
    %143 = arith.addf %141, %142 : vector<8x64xf32>
    %cst_66 = arith.constant 0.000000e+00 : f32
    %144 = vector.broadcast %cst_66 : f32 to vector<8x64xf32>
    %145 = arith.maximumf %143, %144 : vector<8x64xf32>
    %146 = arith.truncf %145 : vector<8x64xf32> to vector<8x64xbf16>
    %cst_67 = arith.constant dense<0.000000e+00> : vector<8x32xf32>
    %147 = tpu.matmul %146, %137, %cst_67 {dimension_numbers = #tpu.dot_dimension_numbers<[1], [0], [0], [1], [0, 0, 1, 1], [], []>} : vector<8x64xbf16>, vector<64x32xbf16>, vector<8x32xf32> -> vector<8x32xf32>
    %148 = vector.broadcast %139 : vector<1x32xf32> to vector<8x32xf32>
    %149 = arith.addf %147, %148 : vector<8x32xf32>
    %150 = arith.addf %106, %149 : vector<8x32xf32>
    %c1 = arith.constant 1 : index
    %c0_68 = arith.constant 0 : index
    %c0_69 = arith.constant 0 : index
    %151 = vector.load %arg5[%c1, %c0_68, %c0_69] : memref<2x1x32xf32, #tpu.memory_space<vmem>>, vector<1x1x32xf32>
    %152 = vector.shape_cast %151 : vector<1x1x32xf32> to vector<1x32xf32>
    %c1_70 = arith.constant 1 : index
    %c0_71 = arith.constant 0 : index
    %c0_72 = arith.constant 0 : index
    %153 = vector.load %arg6[%c1_70, %c0_71, %c0_72] : memref<2x1x32xf32, #tpu.memory_space<vmem>>, vector<1x1x32xf32>
    %154 = vector.shape_cast %153 : vector<1x1x32xf32> to vector<1x32xf32>
    %cst_73 = arith.constant dense<0.000000e+00> : vector<8xf32>
    %155 = vector.multi_reduction <add>, %150, %cst_73 [1] : vector<8x32xf32> to vector<8xf32>
    %156 = vector.shape_cast %155 : vector<8xf32> to vector<8x1xf32>
    %cst_74 = arith.constant 3.200000e+01 : f32
    %157 = vector.broadcast %cst_74 : f32 to vector<8x1xf32>
    %158 = arith.divf %156, %157 : vector<8x1xf32>
    %159 = vector.broadcast %158 : vector<8x1xf32> to vector<8x32xf32>
    %160 = arith.subf %150, %159 : vector<8x32xf32>
    %161 = arith.mulf %160, %160 : vector<8x32xf32>
    %cst_75 = arith.constant dense<0.000000e+00> : vector<8xf32>
    %162 = vector.multi_reduction <add>, %161, %cst_75 [1] : vector<8x32xf32> to vector<8xf32>
    %163 = vector.shape_cast %162 : vector<8xf32> to vector<8x1xf32>
    %cst_76 = arith.constant 0.0322580636 : f32
    %164 = vector.broadcast %cst_76 : f32 to vector<8x1xf32>
    %165 = arith.mulf %163, %164 : vector<8x1xf32>
    %166 = math.sqrt %165 : vector<8x1xf32>
    %cst_77 = arith.constant 9.99999997E-7 : f32
    %167 = vector.broadcast %cst_77 : f32 to vector<8x1xf32>
    %168 = arith.addf %166, %167 : vector<8x1xf32>
    %169 = tpu.reciprocal %168 : vector<8x1xf32> -> vector<8x1xf32>
    %170 = vector.broadcast %169 : vector<8x1xf32> to vector<8x32xf32>
    %171 = arith.mulf %160, %170 : vector<8x32xf32>
    %172 = vector.broadcast %152 : vector<1x32xf32> to vector<8x32xf32>
    %173 = arith.mulf %172, %171 : vector<8x32xf32>
    %174 = vector.broadcast %154 : vector<1x32xf32> to vector<8x32xf32>
    %175 = arith.addf %173, %174 : vector<8x32xf32>
    %c1_78 = arith.constant 1 : index
    %c0_79 = arith.constant 0 : index
    %c0_80 = arith.constant 0 : index
    %176 = vector.load %arg7[%c1_78, %c0_79, %c0_80] : memref<2x32x96xbf16, #tpu.memory_space<vmem>>, vector<1x32x96xbf16>
    %177 = vector.shape_cast %176 : vector<1x32x96xbf16> to vector<32x96xbf16>
    %c1_81 = arith.constant 1 : index
    %c0_82 = arith.constant 0 : index
    %c0_83 = arith.constant 0 : index
    %178 = vector.load %arg8[%c1_81, %c0_82, %c0_83] : memref<2x1x96xf32, #tpu.memory_space<vmem>>, vector<1x1x96xf32>
    %179 = vector.shape_cast %178 : vector<1x1x96xf32> to vector<1x96xf32>
    %c1_84 = arith.constant 1 : index
    %c0_85 = arith.constant 0 : index
    %c0_86 = arith.constant 0 : index
    %c0_87 = arith.constant 0 : index
    %180 = vector.load %arg9[%c1_84, %c0_85, %c0_86, %c0_87] : memref<2x4x8x32xbf16, #tpu.memory_space<vmem>>, vector<1x4x8x32xbf16>
    %181 = vector.shape_cast %180 : vector<1x4x8x32xbf16> to vector<4x8x32xbf16>
    %c1_88 = arith.constant 1 : index
    %c0_89 = arith.constant 0 : index
    %c0_90 = arith.constant 0 : index
    %182 = vector.load %arg10[%c1_88, %c0_89, %c0_90] : memref<2x1x32xf32, #tpu.memory_space<vmem>>, vector<1x1x32xf32>
    %183 = vector.shape_cast %182 : vector<1x1x32xf32> to vector<1x32xf32>
    %184 = arith.truncf %175 : vector<8x32xf32> to vector<8x32xbf16>
    %cst_91 = arith.constant dense<0.000000e+00> : vector<8x96xf32>
    %185 = tpu.matmul %184, %177, %cst_91 {dimension_numbers = #tpu.dot_dimension_numbers<[1], [0], [0], [1], [0, 0, 1, 1], [], []>} : vector<8x32xbf16>, vector<32x96xbf16>, vector<8x96xf32> -> vector<8x96xf32>
    %186 = vector.broadcast %179 : vector<1x96xf32> to vector<8x96xf32>
    %187 = arith.addf %185, %186 : vector<8x96xf32>
    %188 = vector.extract_strided_slice %187 {offsets = [0, 0], sizes = [8, 32], strides = [1, 1]} : vector<8x96xf32> to vector<8x32xf32>
    %189 = vector.extract_strided_slice %188 {offsets = [0, 0], sizes = [8, 8], strides = [1, 1]} : vector<8x32xf32> to vector<8x8xf32>
    %190 = vector.extract_strided_slice %188 {offsets = [0, 8], sizes = [8, 8], strides = [1, 1]} : vector<8x32xf32> to vector<8x8xf32>
    %191 = vector.extract_strided_slice %188 {offsets = [0, 16], sizes = [8, 8], strides = [1, 1]} : vector<8x32xf32> to vector<8x8xf32>
    %192 = vector.extract_strided_slice %188 {offsets = [0, 24], sizes = [8, 8], strides = [1, 1]} : vector<8x32xf32> to vector<8x8xf32>
    %193 = vector.shape_cast %189 : vector<8x8xf32> to vector<1x8x8xf32>
    %194 = vector.shape_cast %190 : vector<8x8xf32> to vector<1x8x8xf32>
    %195 = vector.shape_cast %191 : vector<8x8xf32> to vector<1x8x8xf32>
    %196 = vector.shape_cast %192 : vector<8x8xf32> to vector<1x8x8xf32>
    %197 = tpu.concatenate %193, %194, %195, %196 in 0 : vector<1x8x8xf32>, vector<1x8x8xf32>, vector<1x8x8xf32>, vector<1x8x8xf32> -> vector<4x8x8xf32>
    %198 = vector.extract_strided_slice %187 {offsets = [0, 32], sizes = [8, 32], strides = [1, 1]} : vector<8x96xf32> to vector<8x32xf32>
    %199 = vector.extract_strided_slice %198 {offsets = [0, 0], sizes = [8, 8], strides = [1, 1]} : vector<8x32xf32> to vector<8x8xf32>
    %200 = vector.extract_strided_slice %198 {offsets = [0, 8], sizes = [8, 8], strides = [1, 1]} : vector<8x32xf32> to vector<8x8xf32>
    %201 = vector.extract_strided_slice %198 {offsets = [0, 16], sizes = [8, 8], strides = [1, 1]} : vector<8x32xf32> to vector<8x8xf32>
    %202 = vector.extract_strided_slice %198 {offsets = [0, 24], sizes = [8, 8], strides = [1, 1]} : vector<8x32xf32> to vector<8x8xf32>
    %203 = vector.shape_cast %199 : vector<8x8xf32> to vector<1x8x8xf32>
    %204 = vector.shape_cast %200 : vector<8x8xf32> to vector<1x8x8xf32>
    %205 = vector.shape_cast %201 : vector<8x8xf32> to vector<1x8x8xf32>
    %206 = vector.shape_cast %202 : vector<8x8xf32> to vector<1x8x8xf32>
    %207 = tpu.concatenate %203, %204, %205, %206 in 0 : vector<1x8x8xf32>, vector<1x8x8xf32>, vector<1x8x8xf32>, vector<1x8x8xf32> -> vector<4x8x8xf32>
    %208 = vector.extract_strided_slice %187 {offsets = [0, 64], sizes = [8, 32], strides = [1, 1]} : vector<8x96xf32> to vector<8x32xf32>
    %209 = vector.extract_strided_slice %208 {offsets = [0, 0], sizes = [8, 8], strides = [1, 1]} : vector<8x32xf32> to vector<8x8xf32>
    %210 = vector.extract_strided_slice %208 {offsets = [0, 8], sizes = [8, 8], strides = [1, 1]} : vector<8x32xf32> to vector<8x8xf32>
    %211 = vector.extract_strided_slice %208 {offsets = [0, 16], sizes = [8, 8], strides = [1, 1]} : vector<8x32xf32> to vector<8x8xf32>
    %212 = vector.extract_strided_slice %208 {offsets = [0, 24], sizes = [8, 8], strides = [1, 1]} : vector<8x32xf32> to vector<8x8xf32>
    %213 = vector.shape_cast %209 : vector<8x8xf32> to vector<1x8x8xf32>
    %214 = vector.shape_cast %210 : vector<8x8xf32> to vector<1x8x8xf32>
    %215 = vector.shape_cast %211 : vector<8x8xf32> to vector<1x8x8xf32>
    %216 = vector.shape_cast %212 : vector<8x8xf32> to vector<1x8x8xf32>
    %217 = tpu.concatenate %213, %214, %215, %216 in 0 : vector<1x8x8xf32>, vector<1x8x8xf32>, vector<1x8x8xf32>, vector<1x8x8xf32> -> vector<4x8x8xf32>
    %218 = arith.truncf %197 : vector<4x8x8xf32> to vector<4x8x8xbf16>
    %219 = arith.truncf %207 : vector<4x8x8xf32> to vector<4x8x8xbf16>
    "tpu.trace_start"() <{level = 10 : i32, message = "hqd,hkd->hqk"}> : () -> ()
    %cst_92 = arith.constant dense<0.000000e+00> : vector<4x8x8xf32>
    %220 = tpu.matmul %218, %219, %cst_92 {dimension_numbers = #tpu.dot_dimension_numbers<[2], [2], [1], [1], [0, 0, 0, 1, 1, 1], [0], [0]>} : vector<4x8x8xbf16>, vector<4x8x8xbf16>, vector<4x8x8xf32> -> vector<4x8x8xf32>
    "tpu.trace_stop"() : () -> ()
    %221 = vector.broadcast %6 : vector<1x1x8xf32> to vector<4x8x8xf32>
    %222 = arith.addf %220, %221 : vector<4x8x8xf32>
    %cst_93 = arith.constant dense<0xFF800000> : vector<4x8xf32>
    %223 = vector.multi_reduction <maximumf>, %222, %cst_93 [2] : vector<4x8x8xf32> to vector<4x8xf32>
    %224 = vector.shape_cast %223 : vector<4x8xf32> to vector<4x8x1xf32>
    %225 = vector.broadcast %224 : vector<4x8x1xf32> to vector<4x8x8xf32>
    %226 = arith.subf %222, %225 : vector<4x8x8xf32>
    %227 = math.exp %226 : vector<4x8x8xf32>
    %cst_94 = arith.constant dense<0.000000e+00> : vector<4x8xf32>
    %228 = vector.multi_reduction <add>, %227, %cst_94 [2] : vector<4x8x8xf32> to vector<4x8xf32>
    %229 = vector.shape_cast %228 : vector<4x8xf32> to vector<4x8x1xf32>
    %230 = tpu.reciprocal %229 : vector<4x8x1xf32> -> vector<4x8x1xf32>
    %231 = vector.broadcast %230 : vector<4x8x1xf32> to vector<4x8x8xf32>
    %232 = arith.mulf %227, %231 : vector<4x8x8xf32>
    %233 = arith.truncf %232 : vector<4x8x8xf32> to vector<4x8x8xbf16>
    %234 = arith.truncf %217 : vector<4x8x8xf32> to vector<4x8x8xbf16>
    "tpu.trace_start"() <{level = 10 : i32, message = "hqk,hkd->hqd"}> : () -> ()
    %cst_95 = arith.constant dense<0.000000e+00> : vector<4x8x8xf32>
    %235 = tpu.matmul %233, %234, %cst_95 {dimension_numbers = #tpu.dot_dimension_numbers<[2], [1], [1], [2], [0, 0, 0, 1, 1, 2], [0], [0]>} : vector<4x8x8xbf16>, vector<4x8x8xbf16>, vector<4x8x8xf32> -> vector<4x8x8xf32>
    "tpu.trace_stop"() : () -> ()
    %236 = arith.truncf %235 : vector<4x8x8xf32> to vector<4x8x8xbf16>
    "tpu.trace_start"() <{level = 10 : i32, message = "hqe,hed->hqd"}> : () -> ()
    %cst_96 = arith.constant dense<0.000000e+00> : vector<4x8x32xf32>
    %237 = tpu.matmul %236, %181, %cst_96 {dimension_numbers = #tpu.dot_dimension_numbers<[2], [1], [1], [2], [0, 0, 0, 1, 1, 2], [0], [0]>} : vector<4x8x8xbf16>, vector<4x8x32xbf16>, vector<4x8x32xf32> -> vector<4x8x32xf32>
    "tpu.trace_stop"() : () -> ()
    %cst_97 = arith.constant dense<0.000000e+00> : vector<8x32xf32>
    %238 = vector.multi_reduction <add>, %237, %cst_97 [0] : vector<4x8x32xf32> to vector<8x32xf32>
    %239 = vector.broadcast %183 : vector<1x32xf32> to vector<8x32xf32>
    %240 = arith.addf %238, %239 : vector<8x32xf32>
    %241 = arith.addf %150, %240 : vector<8x32xf32>
    %c1_98 = arith.constant 1 : index
    %c0_99 = arith.constant 0 : index
    %c0_100 = arith.constant 0 : index
    %242 = vector.load %arg11[%c1_98, %c0_99, %c0_100] : memref<2x1x32xf32, #tpu.memory_space<vmem>>, vector<1x1x32xf32>
    %243 = vector.shape_cast %242 : vector<1x1x32xf32> to vector<1x32xf32>
    %c1_101 = arith.constant 1 : index
    %c0_102 = arith.constant 0 : index
    %c0_103 = arith.constant 0 : index
    %244 = vector.load %arg12[%c1_101, %c0_102, %c0_103] : memref<2x1x32xf32, #tpu.memory_space<vmem>>, vector<1x1x32xf32>
    %245 = vector.shape_cast %244 : vector<1x1x32xf32> to vector<1x32xf32>
    %cst_104 = arith.constant dense<0.000000e+00> : vector<8xf32>
    %246 = vector.multi_reduction <add>, %241, %cst_104 [1] : vector<8x32xf32> to vector<8xf32>
    %247 = vector.shape_cast %246 : vector<8xf32> to vector<8x1xf32>
    %cst_105 = arith.constant 3.200000e+01 : f32
    %248 = vector.broadcast %cst_105 : f32 to vector<8x1xf32>
    %249 = arith.divf %247, %248 : vector<8x1xf32>
    %250 = vector.broadcast %249 : vector<8x1xf32> to vector<8x32xf32>
    %251 = arith.subf %241, %250 : vector<8x32xf32>
    %252 = arith.mulf %251, %251 : vector<8x32xf32>
    %cst_106 = arith.constant dense<0.000000e+00> : vector<8xf32>
    %253 = vector.multi_reduction <add>, %252, %cst_106 [1] : vector<8x32xf32> to vector<8xf32>
    %254 = vector.shape_cast %253 : vector<8xf32> to vector<8x1xf32>
    %cst_107 = arith.constant 0.0322580636 : f32
    %255 = vector.broadcast %cst_107 : f32 to vector<8x1xf32>
    %256 = arith.mulf %254, %255 : vector<8x1xf32>
    %257 = math.sqrt %256 : vector<8x1xf32>
    %cst_108 = arith.constant 9.99999997E-7 : f32
    %258 = vector.broadcast %cst_108 : f32 to vector<8x1xf32>
    %259 = arith.addf %257, %258 : vector<8x1xf32>
    %260 = tpu.reciprocal %259 : vector<8x1xf32> -> vector<8x1xf32>
    %261 = vector.broadcast %260 : vector<8x1xf32> to vector<8x32xf32>
    %262 = arith.mulf %251, %261 : vector<8x32xf32>
    %263 = vector.broadcast %243 : vector<1x32xf32> to vector<8x32xf32>
    %264 = arith.mulf %263, %262 : vector<8x32xf32>
    %265 = vector.broadcast %245 : vector<1x32xf32> to vector<8x32xf32>
    %266 = arith.addf %264, %265 : vector<8x32xf32>
    %c1_109 = arith.constant 1 : index
    %c0_110 = arith.constant 0 : index
    %c0_111 = arith.constant 0 : index
    %267 = vector.load %arg13[%c1_109, %c0_110, %c0_111] : memref<2x32x64xbf16, #tpu.memory_space<vmem>>, vector<1x32x64xbf16>
    %268 = vector.shape_cast %267 : vector<1x32x64xbf16> to vector<32x64xbf16>
    %c1_112 = arith.constant 1 : index
    %c0_113 = arith.constant 0 : index
    %c0_114 = arith.constant 0 : index
    %269 = vector.load %arg14[%c1_112, %c0_113, %c0_114] : memref<2x1x64xf32, #tpu.memory_space<vmem>>, vector<1x1x64xf32>
    %270 = vector.shape_cast %269 : vector<1x1x64xf32> to vector<1x64xf32>
    %c1_115 = arith.constant 1 : index
    %c0_116 = arith.constant 0 : index
    %c0_117 = arith.constant 0 : index
    %271 = vector.load %arg15[%c1_115, %c0_116, %c0_117] : memref<2x64x32xbf16, #tpu.memory_space<vmem>>, vector<1x64x32xbf16>
    %272 = vector.shape_cast %271 : vector<1x64x32xbf16> to vector<64x32xbf16>
    %c1_118 = arith.constant 1 : index
    %c0_119 = arith.constant 0 : index
    %c0_120 = arith.constant 0 : index
    %273 = vector.load %arg16[%c1_118, %c0_119, %c0_120] : memref<2x1x32xf32, #tpu.memory_space<vmem>>, vector<1x1x32xf32>
    %274 = vector.shape_cast %273 : vector<1x1x32xf32> to vector<1x32xf32>
    %275 = arith.truncf %266 : vector<8x32xf32> to vector<8x32xbf16>
    %cst_121 = arith.constant dense<0.000000e+00> : vector<8x64xf32>
    %276 = tpu.matmul %275, %268, %cst_121 {dimension_numbers = #tpu.dot_dimension_numbers<[1], [0], [0], [1], [0, 0, 1, 1], [], []>} : vector<8x32xbf16>, vector<32x64xbf16>, vector<8x64xf32> -> vector<8x64xf32>
    %277 = vector.broadcast %270 : vector<1x64xf32> to vector<8x64xf32>
    %278 = arith.addf %276, %277 : vector<8x64xf32>
    %cst_122 = arith.constant 0.000000e+00 : f32
    %279 = vector.broadcast %cst_122 : f32 to vector<8x64xf32>
    %280 = arith.maximumf %278, %279 : vector<8x64xf32>
    %281 = arith.truncf %280 : vector<8x64xf32> to vector<8x64xbf16>
    %cst_123 = arith.constant dense<0.000000e+00> : vector<8x32xf32>
    %282 = tpu.matmul %281, %272, %cst_123 {dimension_numbers = #tpu.dot_dimension_numbers<[1], [0], [0], [1], [0, 0, 1, 1], [], []>} : vector<8x64xbf16>, vector<64x32xbf16>, vector<8x32xf32> -> vector<8x32xf32>
    %283 = vector.broadcast %274 : vector<1x32xf32> to vector<8x32xf32>
    %284 = arith.addf %282, %283 : vector<8x32xf32>
    %285 = arith.addf %241, %284 : vector<8x32xf32>
    %c0_124 = arith.constant 0 : index
    %c0_125 = arith.constant 0 : index
    %286 = vector.load %arg17[%c0_124, %c0_125] : memref<1x32xf32, #tpu.memory_space<vmem>>, vector<1x32xf32>
    %c0_126 = arith.constant 0 : index
    %c0_127 = arith.constant 0 : index
    %287 = vector.load %arg18[%c0_126, %c0_127] : memref<1x32xf32, #tpu.memory_space<vmem>>, vector<1x32xf32>
    %cst_128 = arith.constant dense<0.000000e+00> : vector<8xf32>
    %288 = vector.multi_reduction <add>, %285, %cst_128 [1] : vector<8x32xf32> to vector<8xf32>
    %289 = vector.shape_cast %288 : vector<8xf32> to vector<8x1xf32>
    %cst_129 = arith.constant 3.200000e+01 : f32
    %290 = vector.broadcast %cst_129 : f32 to vector<8x1xf32>
    %291 = arith.divf %289, %290 : vector<8x1xf32>
    %292 = vector.broadcast %291 : vector<8x1xf32> to vector<8x32xf32>
    %293 = arith.subf %285, %292 : vector<8x32xf32>
    %294 = arith.mulf %293, %293 : vector<8x32xf32>
    %cst_130 = arith.constant dense<0.000000e+00> : vector<8xf32>
    %295 = vector.multi_reduction <add>, %294, %cst_130 [1] : vector<8x32xf32> to vector<8xf32>
    %296 = vector.shape_cast %295 : vector<8xf32> to vector<8x1xf32>
    %cst_131 = arith.constant 0.0322580636 : f32
    %297 = vector.broadcast %cst_131 : f32 to vector<8x1xf32>
    %298 = arith.mulf %296, %297 : vector<8x1xf32>
    %299 = math.sqrt %298 : vector<8x1xf32>
    %cst_132 = arith.constant 9.99999997E-7 : f32
    %300 = vector.broadcast %cst_132 : f32 to vector<8x1xf32>
    %301 = arith.addf %299, %300 : vector<8x1xf32>
    %302 = tpu.reciprocal %301 : vector<8x1xf32> -> vector<8x1xf32>
    %303 = vector.broadcast %302 : vector<8x1xf32> to vector<8x32xf32>
    %304 = arith.mulf %293, %303 : vector<8x32xf32>
    %305 = vector.broadcast %286 : vector<1x32xf32> to vector<8x32xf32>
    %306 = arith.mulf %305, %304 : vector<8x32xf32>
    %307 = vector.broadcast %287 : vector<1x32xf32> to vector<8x32xf32>
    %308 = arith.addf %306, %307 : vector<8x32xf32>
    %c0_133 = arith.constant 0 : index
    %c0_134 = arith.constant 0 : index
    %c0_135 = arith.constant 0 : index
    %309 = vector.load %arg2[%c0_133, %c0_134, %c0_135] : memref<1x8x32xf32, #tpu.memory_space<vmem>>, vector<1x8x32xf32>
    %310 = vector.shape_cast %309 : vector<1x8x32xf32> to vector<8x32xf32>
    %c0_136 = arith.constant 0 : index
    %c0_137 = arith.constant 0 : index
    %c0_138 = arith.constant 0 : index
    %311 = vector.load %arg19[%c0_136, %c0_137, %c0_138] : memref<2x1x32xf32, #tpu.memory_space<vmem>>, vector<1x1x32xf32>
    %312 = vector.shape_cast %311 : vector<1x1x32xf32> to vector<1x32xf32>
    %c0_139 = arith.constant 0 : index
    %c0_140 = arith.constant 0 : index
    %c0_141 = arith.constant 0 : index
    %313 = vector.load %arg20[%c0_139, %c0_140, %c0_141] : memref<2x1x32xf32, #tpu.memory_space<vmem>>, vector<1x1x32xf32>
    %314 = vector.shape_cast %313 : vector<1x1x32xf32> to vector<1x32xf32>
    %cst_142 = arith.constant dense<0.000000e+00> : vector<8xf32>
    %315 = vector.multi_reduction <add>, %310, %cst_142 [1] : vector<8x32xf32> to vector<8xf32>
    %316 = vector.shape_cast %315 : vector<8xf32> to vector<8x1xf32>
    %cst_143 = arith.constant 3.200000e+01 : f32
    %317 = vector.broadcast %cst_143 : f32 to vector<8x1xf32>
    %318 = arith.divf %316, %317 : vector<8x1xf32>
    %319 = vector.broadcast %318 : vector<8x1xf32> to vector<8x32xf32>
    %320 = arith.subf %310, %319 : vector<8x32xf32>
    %321 = arith.mulf %320, %320 : vector<8x32xf32>
    %cst_144 = arith.constant dense<0.000000e+00> : vector<8xf32>
    %322 = vector.multi_reduction <add>, %321, %cst_144 [1] : vector<8x32xf32> to vector<8xf32>
    %323 = vector.shape_cast %322 : vector<8xf32> to vector<8x1xf32>
    %cst_145 = arith.constant 0.0322580636 : f32
    %324 = vector.broadcast %cst_145 : f32 to vector<8x1xf32>
    %325 = arith.mulf %323, %324 : vector<8x1xf32>
    %326 = math.sqrt %325 : vector<8x1xf32>
    %cst_146 = arith.constant 9.99999997E-7 : f32
    %327 = vector.broadcast %cst_146 : f32 to vector<8x1xf32>
    %328 = arith.addf %326, %327 : vector<8x1xf32>
    %329 = tpu.reciprocal %328 : vector<8x1xf32> -> vector<8x1xf32>
    %330 = vector.broadcast %329 : vector<8x1xf32> to vector<8x32xf32>
    %331 = arith.mulf %320, %330 : vector<8x32xf32>
    %332 = vector.broadcast %312 : vector<1x32xf32> to vector<8x32xf32>
    %333 = arith.mulf %332, %331 : vector<8x32xf32>
    %334 = vector.broadcast %314 : vector<1x32xf32> to vector<8x32xf32>
    %335 = arith.addf %333, %334 : vector<8x32xf32>
    %c0_147 = arith.constant 0 : index
    %c0_148 = arith.constant 0 : index
    %c0_149 = arith.constant 0 : index
    %336 = vector.load %arg21[%c0_147, %c0_148, %c0_149] : memref<2x32x96xbf16, #tpu.memory_space<vmem>>, vector<1x32x96xbf16>
    %337 = vector.shape_cast %336 : vector<1x32x96xbf16> to vector<32x96xbf16>
    %c0_150 = arith.constant 0 : index
    %c0_151 = arith.constant 0 : index
    %c0_152 = arith.constant 0 : index
    %338 = vector.load %arg22[%c0_150, %c0_151, %c0_152] : memref<2x1x96xf32, #tpu.memory_space<vmem>>, vector<1x1x96xf32>
    %339 = vector.shape_cast %338 : vector<1x1x96xf32> to vector<1x96xf32>
    %c0_153 = arith.constant 0 : index
    %c0_154 = arith.constant 0 : index
    %c0_155 = arith.constant 0 : index
    %c0_156 = arith.constant 0 : index
    %340 = vector.load %arg23[%c0_153, %c0_154, %c0_155, %c0_156] : memref<2x4x8x32xbf16, #tpu.memory_space<vmem>>, vector<1x4x8x32xbf16>
    %341 = vector.shape_cast %340 : vector<1x4x8x32xbf16> to vector<4x8x32xbf16>
    %c0_157 = arith.constant 0 : index
    %c0_158 = arith.constant 0 : index
    %c0_159 = arith.constant 0 : index
    %342 = vector.load %arg24[%c0_157, %c0_158, %c0_159] : memref<2x1x32xf32, #tpu.memory_space<vmem>>, vector<1x1x32xf32>
    %343 = vector.shape_cast %342 : vector<1x1x32xf32> to vector<1x32xf32>
    %344 = arith.truncf %335 : vector<8x32xf32> to vector<8x32xbf16>
    %cst_160 = arith.constant dense<0.000000e+00> : vector<8x96xf32>
    %345 = tpu.matmul %344, %337, %cst_160 {dimension_numbers = #tpu.dot_dimension_numbers<[1], [0], [0], [1], [0, 0, 1, 1], [], []>} : vector<8x32xbf16>, vector<32x96xbf16>, vector<8x96xf32> -> vector<8x96xf32>
    %346 = vector.broadcast %339 : vector<1x96xf32> to vector<8x96xf32>
    %347 = arith.addf %345, %346 : vector<8x96xf32>
    %348 = vector.extract_strided_slice %347 {offsets = [0, 0], sizes = [8, 32], strides = [1, 1]} : vector<8x96xf32> to vector<8x32xf32>
    %349 = vector.extract_strided_slice %348 {offsets = [0, 0], sizes = [8, 8], strides = [1, 1]} : vector<8x32xf32> to vector<8x8xf32>
    %350 = vector.extract_strided_slice %348 {offsets = [0, 8], sizes = [8, 8], strides = [1, 1]} : vector<8x32xf32> to vector<8x8xf32>
    %351 = vector.extract_strided_slice %348 {offsets = [0, 16], sizes = [8, 8], strides = [1, 1]} : vector<8x32xf32> to vector<8x8xf32>
    %352 = vector.extract_strided_slice %348 {offsets = [0, 24], sizes = [8, 8], strides = [1, 1]} : vector<8x32xf32> to vector<8x8xf32>
    %353 = vector.shape_cast %349 : vector<8x8xf32> to vector<1x8x8xf32>
    %354 = vector.shape_cast %350 : vector<8x8xf32> to vector<1x8x8xf32>
    %355 = vector.shape_cast %351 : vector<8x8xf32> to vector<1x8x8xf32>
    %356 = vector.shape_cast %352 : vector<8x8xf32> to vector<1x8x8xf32>
    %357 = tpu.concatenate %353, %354, %355, %356 in 0 : vector<1x8x8xf32>, vector<1x8x8xf32>, vector<1x8x8xf32>, vector<1x8x8xf32> -> vector<4x8x8xf32>
    %358 = vector.extract_strided_slice %347 {offsets = [0, 32], sizes = [8, 32], strides = [1, 1]} : vector<8x96xf32> to vector<8x32xf32>
    %359 = vector.extract_strided_slice %358 {offsets = [0, 0], sizes = [8, 8], strides = [1, 1]} : vector<8x32xf32> to vector<8x8xf32>
    %360 = vector.extract_strided_slice %358 {offsets = [0, 8], sizes = [8, 8], strides = [1, 1]} : vector<8x32xf32> to vector<8x8xf32>
    %361 = vector.extract_strided_slice %358 {offsets = [0, 16], sizes = [8, 8], strides = [1, 1]} : vector<8x32xf32> to vector<8x8xf32>
    %362 = vector.extract_strided_slice %358 {offsets = [0, 24], sizes = [8, 8], strides = [1, 1]} : vector<8x32xf32> to vector<8x8xf32>
    %363 = vector.shape_cast %359 : vector<8x8xf32> to vector<1x8x8xf32>
    %364 = vector.shape_cast %360 : vector<8x8xf32> to vector<1x8x8xf32>
    %365 = vector.shape_cast %361 : vector<8x8xf32> to vector<1x8x8xf32>
    %366 = vector.shape_cast %362 : vector<8x8xf32> to vector<1x8x8xf32>
    %367 = tpu.concatenate %363, %364, %365, %366 in 0 : vector<1x8x8xf32>, vector<1x8x8xf32>, vector<1x8x8xf32>, vector<1x8x8xf32> -> vector<4x8x8xf32>
    %368 = vector.extract_strided_slice %347 {offsets = [0, 64], sizes = [8, 32], strides = [1, 1]} : vector<8x96xf32> to vector<8x32xf32>
    %369 = vector.extract_strided_slice %368 {offsets = [0, 0], sizes = [8, 8], strides = [1, 1]} : vector<8x32xf32> to vector<8x8xf32>
    %370 = vector.extract_strided_slice %368 {offsets = [0, 8], sizes = [8, 8], strides = [1, 1]} : vector<8x32xf32> to vector<8x8xf32>
    %371 = vector.extract_strided_slice %368 {offsets = [0, 16], sizes = [8, 8], strides = [1, 1]} : vector<8x32xf32> to vector<8x8xf32>
    %372 = vector.extract_strided_slice %368 {offsets = [0, 24], sizes = [8, 8], strides = [1, 1]} : vector<8x32xf32> to vector<8x8xf32>
    %373 = vector.shape_cast %369 : vector<8x8xf32> to vector<1x8x8xf32>
    %374 = vector.shape_cast %370 : vector<8x8xf32> to vector<1x8x8xf32>
    %375 = vector.shape_cast %371 : vector<8x8xf32> to vector<1x8x8xf32>
    %376 = vector.shape_cast %372 : vector<8x8xf32> to vector<1x8x8xf32>
    %377 = tpu.concatenate %373, %374, %375, %376 in 0 : vector<1x8x8xf32>, vector<1x8x8xf32>, vector<1x8x8xf32>, vector<1x8x8xf32> -> vector<4x8x8xf32>
    %378 = arith.truncf %357 : vector<4x8x8xf32> to vector<4x8x8xbf16>
    %379 = arith.truncf %367 : vector<4x8x8xf32> to vector<4x8x8xbf16>
    "tpu.trace_start"() <{level = 10 : i32, message = "hqd,hkd->hqk"}> : () -> ()
    %cst_161 = arith.constant dense<0.000000e+00> : vector<4x8x8xf32>
    %380 = tpu.matmul %378, %379, %cst_161 {dimension_numbers = #tpu.dot_dimension_numbers<[2], [2], [1], [1], [0, 0, 0, 1, 1, 1], [0], [0]>} : vector<4x8x8xbf16>, vector<4x8x8xbf16>, vector<4x8x8xf32> -> vector<4x8x8xf32>
    "tpu.trace_stop"() : () -> ()
    %381 = vector.broadcast %13 : vector<1x8x8xf32> to vector<4x8x8xf32>
    %382 = arith.addf %380, %381 : vector<4x8x8xf32>
    %cst_162 = arith.constant dense<0xFF800000> : vector<4x8xf32>
    %383 = vector.multi_reduction <maximumf>, %382, %cst_162 [2] : vector<4x8x8xf32> to vector<4x8xf32>
    %384 = vector.shape_cast %383 : vector<4x8xf32> to vector<4x8x1xf32>
    %385 = vector.broadcast %384 : vector<4x8x1xf32> to vector<4x8x8xf32>
    %386 = arith.subf %382, %385 : vector<4x8x8xf32>
    %387 = math.exp %386 : vector<4x8x8xf32>
    %cst_163 = arith.constant dense<0.000000e+00> : vector<4x8xf32>
    %388 = vector.multi_reduction <add>, %387, %cst_163 [2] : vector<4x8x8xf32> to vector<4x8xf32>
    %389 = vector.shape_cast %388 : vector<4x8xf32> to vector<4x8x1xf32>
    %390 = tpu.reciprocal %389 : vector<4x8x1xf32> -> vector<4x8x1xf32>
    %391 = vector.broadcast %390 : vector<4x8x1xf32> to vector<4x8x8xf32>
    %392 = arith.mulf %387, %391 : vector<4x8x8xf32>
    %393 = arith.truncf %392 : vector<4x8x8xf32> to vector<4x8x8xbf16>
    %394 = arith.truncf %377 : vector<4x8x8xf32> to vector<4x8x8xbf16>
    "tpu.trace_start"() <{level = 10 : i32, message = "hqk,hkd->hqd"}> : () -> ()
    %cst_164 = arith.constant dense<0.000000e+00> : vector<4x8x8xf32>
    %395 = tpu.matmul %393, %394, %cst_164 {dimension_numbers = #tpu.dot_dimension_numbers<[2], [1], [1], [2], [0, 0, 0, 1, 1, 2], [0], [0]>} : vector<4x8x8xbf16>, vector<4x8x8xbf16>, vector<4x8x8xf32> -> vector<4x8x8xf32>
    "tpu.trace_stop"() : () -> ()
    %396 = arith.truncf %395 : vector<4x8x8xf32> to vector<4x8x8xbf16>
    "tpu.trace_start"() <{level = 10 : i32, message = "hqe,hed->hqd"}> : () -> ()
    %cst_165 = arith.constant dense<0.000000e+00> : vector<4x8x32xf32>
    %397 = tpu.matmul %396, %341, %cst_165 {dimension_numbers = #tpu.dot_dimension_numbers<[2], [1], [1], [2], [0, 0, 0, 1, 1, 2], [0], [0]>} : vector<4x8x8xbf16>, vector<4x8x32xbf16>, vector<4x8x32xf32> -> vector<4x8x32xf32>
    "tpu.trace_stop"() : () -> ()
    %cst_166 = arith.constant dense<0.000000e+00> : vector<8x32xf32>
    %398 = vector.multi_reduction <add>, %397, %cst_166 [0] : vector<4x8x32xf32> to vector<8x32xf32>
    %399 = vector.broadcast %343 : vector<1x32xf32> to vector<8x32xf32>
    %400 = arith.addf %398, %399 : vector<8x32xf32>
    %401 = arith.addf %310, %400 : vector<8x32xf32>
    %c0_167 = arith.constant 0 : index
    %c0_168 = arith.constant 0 : index
    %c0_169 = arith.constant 0 : index
    %402 = vector.load %arg25[%c0_167, %c0_168, %c0_169] : memref<2x1x32xf32, #tpu.memory_space<vmem>>, vector<1x1x32xf32>
    %403 = vector.shape_cast %402 : vector<1x1x32xf32> to vector<1x32xf32>
    %c0_170 = arith.constant 0 : index
    %c0_171 = arith.constant 0 : index
    %c0_172 = arith.constant 0 : index
    %404 = vector.load %arg26[%c0_170, %c0_171, %c0_172] : memref<2x1x32xf32, #tpu.memory_space<vmem>>, vector<1x1x32xf32>
    %405 = vector.shape_cast %404 : vector<1x1x32xf32> to vector<1x32xf32>
    %cst_173 = arith.constant dense<0.000000e+00> : vector<8xf32>
    %406 = vector.multi_reduction <add>, %401, %cst_173 [1] : vector<8x32xf32> to vector<8xf32>
    %407 = vector.shape_cast %406 : vector<8xf32> to vector<8x1xf32>
    %cst_174 = arith.constant 3.200000e+01 : f32
    %408 = vector.broadcast %cst_174 : f32 to vector<8x1xf32>
    %409 = arith.divf %407, %408 : vector<8x1xf32>
    %410 = vector.broadcast %409 : vector<8x1xf32> to vector<8x32xf32>
    %411 = arith.subf %401, %410 : vector<8x32xf32>
    %412 = arith.mulf %411, %411 : vector<8x32xf32>
    %cst_175 = arith.constant dense<0.000000e+00> : vector<8xf32>
    %413 = vector.multi_reduction <add>, %412, %cst_175 [1] : vector<8x32xf32> to vector<8xf32>
    %414 = vector.shape_cast %413 : vector<8xf32> to vector<8x1xf32>
    %cst_176 = arith.constant 0.0322580636 : f32
    %415 = vector.broadcast %cst_176 : f32 to vector<8x1xf32>
    %416 = arith.mulf %414, %415 : vector<8x1xf32>
    %417 = math.sqrt %416 : vector<8x1xf32>
    %cst_177 = arith.constant 9.99999997E-7 : f32
    %418 = vector.broadcast %cst_177 : f32 to vector<8x1xf32>
    %419 = arith.addf %417, %418 : vector<8x1xf32>
    %420 = tpu.reciprocal %419 : vector<8x1xf32> -> vector<8x1xf32>
    %421 = vector.broadcast %420 : vector<8x1xf32> to vector<8x32xf32>
    %422 = arith.mulf %411, %421 : vector<8x32xf32>
    %423 = vector.broadcast %403 : vector<1x32xf32> to vector<8x32xf32>
    %424 = arith.mulf %423, %422 : vector<8x32xf32>
    %425 = vector.broadcast %405 : vector<1x32xf32> to vector<8x32xf32>
    %426 = arith.addf %424, %425 : vector<8x32xf32>
    %c0_178 = arith.constant 0 : index
    %c0_179 = arith.constant 0 : index
    %c0_180 = arith.constant 0 : index
    %427 = vector.load %arg27[%c0_178, %c0_179, %c0_180] : memref<2x32x32xbf16, #tpu.memory_space<vmem>>, vector<1x32x32xbf16>
    %428 = vector.shape_cast %427 : vector<1x32x32xbf16> to vector<32x32xbf16>
    %c0_181 = arith.constant 0 : index
    %c0_182 = arith.constant 0 : index
    %c0_183 = arith.constant 0 : index
    %429 = vector.load %arg28[%c0_181, %c0_182, %c0_183] : memref<2x1x32xf32, #tpu.memory_space<vmem>>, vector<1x1x32xf32>
    %430 = vector.shape_cast %429 : vector<1x1x32xf32> to vector<1x32xf32>
    %c0_184 = arith.constant 0 : index
    %c0_185 = arith.constant 0 : index
    %c0_186 = arith.constant 0 : index
    %431 = vector.load %arg29[%c0_184, %c0_185, %c0_186] : memref<2x32x64xbf16, #tpu.memory_space<vmem>>, vector<1x32x64xbf16>
    %432 = vector.shape_cast %431 : vector<1x32x64xbf16> to vector<32x64xbf16>
    %c0_187 = arith.constant 0 : index
    %c0_188 = arith.constant 0 : index
    %c0_189 = arith.constant 0 : index
    %433 = vector.load %arg30[%c0_187, %c0_188, %c0_189] : memref<2x1x64xf32, #tpu.memory_space<vmem>>, vector<1x1x64xf32>
    %434 = vector.shape_cast %433 : vector<1x1x64xf32> to vector<1x64xf32>
    %c0_190 = arith.constant 0 : index
    %c0_191 = arith.constant 0 : index
    %c0_192 = arith.constant 0 : index
    %c0_193 = arith.constant 0 : index
    %435 = vector.load %arg31[%c0_190, %c0_191, %c0_192, %c0_193] : memref<2x4x8x32xbf16, #tpu.memory_space<vmem>>, vector<1x4x8x32xbf16>
    %436 = vector.shape_cast %435 : vector<1x4x8x32xbf16> to vector<4x8x32xbf16>
    %c0_194 = arith.constant 0 : index
    %c0_195 = arith.constant 0 : index
    %c0_196 = arith.constant 0 : index
    %437 = vector.load %arg32[%c0_194, %c0_195, %c0_196] : memref<2x1x32xf32, #tpu.memory_space<vmem>>, vector<1x1x32xf32>
    %438 = vector.shape_cast %437 : vector<1x1x32xf32> to vector<1x32xf32>
    %439 = arith.truncf %426 : vector<8x32xf32> to vector<8x32xbf16>
    %cst_197 = arith.constant dense<0.000000e+00> : vector<8x32xf32>
    %440 = tpu.matmul %439, %428, %cst_197 {dimension_numbers = #tpu.dot_dimension_numbers<[1], [0], [0], [1], [0, 0, 1, 1], [], []>} : vector<8x32xbf16>, vector<32x32xbf16>, vector<8x32xf32> -> vector<8x32xf32>
    %441 = vector.broadcast %430 : vector<1x32xf32> to vector<8x32xf32>
    %442 = arith.addf %440, %441 : vector<8x32xf32>
    %443 = arith.truncf %308 : vector<8x32xf32> to vector<8x32xbf16>
    %cst_198 = arith.constant dense<0.000000e+00> : vector<8x64xf32>
    %444 = tpu.matmul %443, %432, %cst_198 {dimension_numbers = #tpu.dot_dimension_numbers<[1], [0], [0], [1], [0, 0, 1, 1], [], []>} : vector<8x32xbf16>, vector<32x64xbf16>, vector<8x64xf32> -> vector<8x64xf32>
    %445 = vector.broadcast %434 : vector<1x64xf32> to vector<8x64xf32>
    %446 = arith.addf %444, %445 : vector<8x64xf32>
    %447 = vector.extract_strided_slice %442 {offsets = [0, 0], sizes = [8, 8], strides = [1, 1]} : vector<8x32xf32> to vector<8x8xf32>
    %448 = vector.extract_strided_slice %442 {offsets = [0, 8], sizes = [8, 8], strides = [1, 1]} : vector<8x32xf32> to vector<8x8xf32>
    %449 = vector.extract_strided_slice %442 {offsets = [0, 16], sizes = [8, 8], strides = [1, 1]} : vector<8x32xf32> to vector<8x8xf32>
    %450 = vector.extract_strided_slice %442 {offsets = [0, 24], sizes = [8, 8], strides = [1, 1]} : vector<8x32xf32> to vector<8x8xf32>
    %451 = vector.shape_cast %447 : vector<8x8xf32> to vector<1x8x8xf32>
    %452 = vector.shape_cast %448 : vector<8x8xf32> to vector<1x8x8xf32>
    %453 = vector.shape_cast %449 : vector<8x8xf32> to vector<1x8x8xf32>
    %454 = vector.shape_cast %450 : vector<8x8xf32> to vector<1x8x8xf32>
    %455 = tpu.concatenate %451, %452, %453, %454 in 0 : vector<1x8x8xf32>, vector<1x8x8xf32>, vector<1x8x8xf32>, vector<1x8x8xf32> -> vector<4x8x8xf32>
    %456 = vector.extract_strided_slice %446 {offsets = [0, 0], sizes = [8, 32], strides = [1, 1]} : vector<8x64xf32> to vector<8x32xf32>
    %457 = vector.extract_strided_slice %456 {offsets = [0, 0], sizes = [8, 8], strides = [1, 1]} : vector<8x32xf32> to vector<8x8xf32>
    %458 = vector.extract_strided_slice %456 {offsets = [0, 8], sizes = [8, 8], strides = [1, 1]} : vector<8x32xf32> to vector<8x8xf32>
    %459 = vector.extract_strided_slice %456 {offsets = [0, 16], sizes = [8, 8], strides = [1, 1]} : vector<8x32xf32> to vector<8x8xf32>
    %460 = vector.extract_strided_slice %456 {offsets = [0, 24], sizes = [8, 8], strides = [1, 1]} : vector<8x32xf32> to vector<8x8xf32>
    %461 = vector.shape_cast %457 : vector<8x8xf32> to vector<1x8x8xf32>
    %462 = vector.shape_cast %458 : vector<8x8xf32> to vector<1x8x8xf32>
    %463 = vector.shape_cast %459 : vector<8x8xf32> to vector<1x8x8xf32>
    %464 = vector.shape_cast %460 : vector<8x8xf32> to vector<1x8x8xf32>
    %465 = tpu.concatenate %461, %462, %463, %464 in 0 : vector<1x8x8xf32>, vector<1x8x8xf32>, vector<1x8x8xf32>, vector<1x8x8xf32> -> vector<4x8x8xf32>
    %466 = vector.extract_strided_slice %446 {offsets = [0, 32], sizes = [8, 32], strides = [1, 1]} : vector<8x64xf32> to vector<8x32xf32>
    %467 = vector.extract_strided_slice %466 {offsets = [0, 0], sizes = [8, 8], strides = [1, 1]} : vector<8x32xf32> to vector<8x8xf32>
    %468 = vector.extract_strided_slice %466 {offsets = [0, 8], sizes = [8, 8], strides = [1, 1]} : vector<8x32xf32> to vector<8x8xf32>
    %469 = vector.extract_strided_slice %466 {offsets = [0, 16], sizes = [8, 8], strides = [1, 1]} : vector<8x32xf32> to vector<8x8xf32>
    %470 = vector.extract_strided_slice %466 {offsets = [0, 24], sizes = [8, 8], strides = [1, 1]} : vector<8x32xf32> to vector<8x8xf32>
    %471 = vector.shape_cast %467 : vector<8x8xf32> to vector<1x8x8xf32>
    %472 = vector.shape_cast %468 : vector<8x8xf32> to vector<1x8x8xf32>
    %473 = vector.shape_cast %469 : vector<8x8xf32> to vector<1x8x8xf32>
    %474 = vector.shape_cast %470 : vector<8x8xf32> to vector<1x8x8xf32>
    %475 = tpu.concatenate %471, %472, %473, %474 in 0 : vector<1x8x8xf32>, vector<1x8x8xf32>, vector<1x8x8xf32>, vector<1x8x8xf32> -> vector<4x8x8xf32>
    %476 = arith.truncf %455 : vector<4x8x8xf32> to vector<4x8x8xbf16>
    %477 = arith.truncf %465 : vector<4x8x8xf32> to vector<4x8x8xbf16>
    "tpu.trace_start"() <{level = 10 : i32, message = "hqd,hkd->hqk"}> : () -> ()
    %cst_199 = arith.constant dense<0.000000e+00> : vector<4x8x8xf32>
    %478 = tpu.matmul %476, %477, %cst_199 {dimension_numbers = #tpu.dot_dimension_numbers<[2], [2], [1], [1], [0, 0, 0, 1, 1, 1], [0], [0]>} : vector<4x8x8xbf16>, vector<4x8x8xbf16>, vector<4x8x8xf32> -> vector<4x8x8xf32>
    "tpu.trace_stop"() : () -> ()
    %479 = vector.broadcast %6 : vector<1x1x8xf32> to vector<4x8x8xf32>
    %480 = arith.addf %478, %479 : vector<4x8x8xf32>
    %cst_200 = arith.constant dense<0xFF800000> : vector<4x8xf32>
    %481 = vector.multi_reduction <maximumf>, %480, %cst_200 [2] : vector<4x8x8xf32> to vector<4x8xf32>
    %482 = vector.shape_cast %481 : vector<4x8xf32> to vector<4x8x1xf32>
    %483 = vector.broadcast %482 : vector<4x8x1xf32> to vector<4x8x8xf32>
    %484 = arith.subf %480, %483 : vector<4x8x8xf32>
    %485 = math.exp %484 : vector<4x8x8xf32>
    %cst_201 = arith.constant dense<0.000000e+00> : vector<4x8xf32>
    %486 = vector.multi_reduction <add>, %485, %cst_201 [2] : vector<4x8x8xf32> to vector<4x8xf32>
    %487 = vector.shape_cast %486 : vector<4x8xf32> to vector<4x8x1xf32>
    %488 = tpu.reciprocal %487 : vector<4x8x1xf32> -> vector<4x8x1xf32>
    %489 = vector.broadcast %488 : vector<4x8x1xf32> to vector<4x8x8xf32>
    %490 = arith.mulf %485, %489 : vector<4x8x8xf32>
    %491 = arith.truncf %490 : vector<4x8x8xf32> to vector<4x8x8xbf16>
    %492 = arith.truncf %475 : vector<4x8x8xf32> to vector<4x8x8xbf16>
    "tpu.trace_start"() <{level = 10 : i32, message = "hqk,hkd->hqd"}> : () -> ()
    %cst_202 = arith.constant dense<0.000000e+00> : vector<4x8x8xf32>
    %493 = tpu.matmul %491, %492, %cst_202 {dimension_numbers = #tpu.dot_dimension_numbers<[2], [1], [1], [2], [0, 0, 0, 1, 1, 2], [0], [0]>} : vector<4x8x8xbf16>, vector<4x8x8xbf16>, vector<4x8x8xf32> -> vector<4x8x8xf32>
    "tpu.trace_stop"() : () -> ()
    %494 = arith.truncf %493 : vector<4x8x8xf32> to vector<4x8x8xbf16>
    "tpu.trace_start"() <{level = 10 : i32, message = "hqe,hed->hqd"}> : () -> ()
    %cst_203 = arith.constant dense<0.000000e+00> : vector<4x8x32xf32>
    %495 = tpu.matmul %494, %436, %cst_203 {dimension_numbers = #tpu.dot_dimension_numbers<[2], [1], [1], [2], [0, 0, 0, 1, 1, 2], [0], [0]>} : vector<4x8x8xbf16>, vector<4x8x32xbf16>, vector<4x8x32xf32> -> vector<4x8x32xf32>
    "tpu.trace_stop"() : () -> ()
    %cst_204 = arith.constant dense<0.000000e+00> : vector<8x32xf32>
    %496 = vector.multi_reduction <add>, %495, %cst_204 [0] : vector<4x8x32xf32> to vector<8x32xf32>
    %497 = vector.broadcast %438 : vector<1x32xf32> to vector<8x32xf32>
    %498 = arith.addf %496, %497 : vector<8x32xf32>
    %499 = arith.addf %401, %498 : vector<8x32xf32>
    %c0_205 = arith.constant 0 : index
    %c0_206 = arith.constant 0 : index
    %c0_207 = arith.constant 0 : index
    %500 = vector.load %arg33[%c0_205, %c0_206, %c0_207] : memref<2x1x32xf32, #tpu.memory_space<vmem>>, vector<1x1x32xf32>
    %501 = vector.shape_cast %500 : vector<1x1x32xf32> to vector<1x32xf32>
    %c0_208 = arith.constant 0 : index
    %c0_209 = arith.constant 0 : index
    %c0_210 = arith.constant 0 : index
    %502 = vector.load %arg34[%c0_208, %c0_209, %c0_210] : memref<2x1x32xf32, #tpu.memory_space<vmem>>, vector<1x1x32xf32>
    %503 = vector.shape_cast %502 : vector<1x1x32xf32> to vector<1x32xf32>
    %cst_211 = arith.constant dense<0.000000e+00> : vector<8xf32>
    %504 = vector.multi_reduction <add>, %499, %cst_211 [1] : vector<8x32xf32> to vector<8xf32>
    %505 = vector.shape_cast %504 : vector<8xf32> to vector<8x1xf32>
    %cst_212 = arith.constant 3.200000e+01 : f32
    %506 = vector.broadcast %cst_212 : f32 to vector<8x1xf32>
    %507 = arith.divf %505, %506 : vector<8x1xf32>
    %508 = vector.broadcast %507 : vector<8x1xf32> to vector<8x32xf32>
    %509 = arith.subf %499, %508 : vector<8x32xf32>
    %510 = arith.mulf %509, %509 : vector<8x32xf32>
    %cst_213 = arith.constant dense<0.000000e+00> : vector<8xf32>
    %511 = vector.multi_reduction <add>, %510, %cst_213 [1] : vector<8x32xf32> to vector<8xf32>
    %512 = vector.shape_cast %511 : vector<8xf32> to vector<8x1xf32>
    %cst_214 = arith.constant 0.0322580636 : f32
    %513 = vector.broadcast %cst_214 : f32 to vector<8x1xf32>
    %514 = arith.mulf %512, %513 : vector<8x1xf32>
    %515 = math.sqrt %514 : vector<8x1xf32>
    %cst_215 = arith.constant 9.99999997E-7 : f32
    %516 = vector.broadcast %cst_215 : f32 to vector<8x1xf32>
    %517 = arith.addf %515, %516 : vector<8x1xf32>
    %518 = tpu.reciprocal %517 : vector<8x1xf32> -> vector<8x1xf32>
    %519 = vector.broadcast %518 : vector<8x1xf32> to vector<8x32xf32>
    %520 = arith.mulf %509, %519 : vector<8x32xf32>
    %521 = vector.broadcast %501 : vector<1x32xf32> to vector<8x32xf32>
    %522 = arith.mulf %521, %520 : vector<8x32xf32>
    %523 = vector.broadcast %503 : vector<1x32xf32> to vector<8x32xf32>
    %524 = arith.addf %522, %523 : vector<8x32xf32>
    %c0_216 = arith.constant 0 : index
    %c0_217 = arith.constant 0 : index
    %c0_218 = arith.constant 0 : index
    %525 = vector.load %arg35[%c0_216, %c0_217, %c0_218] : memref<2x32x64xbf16, #tpu.memory_space<vmem>>, vector<1x32x64xbf16>
    %526 = vector.shape_cast %525 : vector<1x32x64xbf16> to vector<32x64xbf16>
    %c0_219 = arith.constant 0 : index
    %c0_220 = arith.constant 0 : index
    %c0_221 = arith.constant 0 : index
    %527 = vector.load %arg36[%c0_219, %c0_220, %c0_221] : memref<2x1x64xf32, #tpu.memory_space<vmem>>, vector<1x1x64xf32>
    %528 = vector.shape_cast %527 : vector<1x1x64xf32> to vector<1x64xf32>
    %c0_222 = arith.constant 0 : index
    %c0_223 = arith.constant 0 : index
    %c0_224 = arith.constant 0 : index
    %529 = vector.load %arg37[%c0_222, %c0_223, %c0_224] : memref<2x64x32xbf16, #tpu.memory_space<vmem>>, vector<1x64x32xbf16>
    %530 = vector.shape_cast %529 : vector<1x64x32xbf16> to vector<64x32xbf16>
    %c0_225 = arith.constant 0 : index
    %c0_226 = arith.constant 0 : index
    %c0_227 = arith.constant 0 : index
    %531 = vector.load %arg38[%c0_225, %c0_226, %c0_227] : memref<2x1x32xf32, #tpu.memory_space<vmem>>, vector<1x1x32xf32>
    %532 = vector.shape_cast %531 : vector<1x1x32xf32> to vector<1x32xf32>
    %533 = arith.truncf %524 : vector<8x32xf32> to vector<8x32xbf16>
    %cst_228 = arith.constant dense<0.000000e+00> : vector<8x64xf32>
    %534 = tpu.matmul %533, %526, %cst_228 {dimension_numbers = #tpu.dot_dimension_numbers<[1], [0], [0], [1], [0, 0, 1, 1], [], []>} : vector<8x32xbf16>, vector<32x64xbf16>, vector<8x64xf32> -> vector<8x64xf32>
    %535 = vector.broadcast %528 : vector<1x64xf32> to vector<8x64xf32>
    %536 = arith.addf %534, %535 : vector<8x64xf32>
    %cst_229 = arith.constant 0.000000e+00 : f32
    %537 = vector.broadcast %cst_229 : f32 to vector<8x64xf32>
    %538 = arith.maximumf %536, %537 : vector<8x64xf32>
    %539 = arith.truncf %538 : vector<8x64xf32> to vector<8x64xbf16>
    %cst_230 = arith.constant dense<0.000000e+00> : vector<8x32xf32>
    %540 = tpu.matmul %539, %530, %cst_230 {dimension_numbers = #tpu.dot_dimension_numbers<[1], [0], [0], [1], [0, 0, 1, 1], [], []>} : vector<8x64xbf16>, vector<64x32xbf16>, vector<8x32xf32> -> vector<8x32xf32>
    %541 = vector.broadcast %532 : vector<1x32xf32> to vector<8x32xf32>
    %542 = arith.addf %540, %541 : vector<8x32xf32>
    %543 = arith.addf %499, %542 : vector<8x32xf32>
    %c1_231 = arith.constant 1 : index
    %c0_232 = arith.constant 0 : index
    %c0_233 = arith.constant 0 : index
    %544 = vector.load %arg19[%c1_231, %c0_232, %c0_233] : memref<2x1x32xf32, #tpu.memory_space<vmem>>, vector<1x1x32xf32>
    %545 = vector.shape_cast %544 : vector<1x1x32xf32> to vector<1x32xf32>
    %c1_234 = arith.constant 1 : index
    %c0_235 = arith.constant 0 : index
    %c0_236 = arith.constant 0 : index
    %546 = vector.load %arg20[%c1_234, %c0_235, %c0_236] : memref<2x1x32xf32, #tpu.memory_space<vmem>>, vector<1x1x32xf32>
    %547 = vector.shape_cast %546 : vector<1x1x32xf32> to vector<1x32xf32>
    %cst_237 = arith.constant dense<0.000000e+00> : vector<8xf32>
    %548 = vector.multi_reduction <add>, %543, %cst_237 [1] : vector<8x32xf32> to vector<8xf32>
    %549 = vector.shape_cast %548 : vector<8xf32> to vector<8x1xf32>
    %cst_238 = arith.constant 3.200000e+01 : f32
    %550 = vector.broadcast %cst_238 : f32 to vector<8x1xf32>
    %551 = arith.divf %549, %550 : vector<8x1xf32>
    %552 = vector.broadcast %551 : vector<8x1xf32> to vector<8x32xf32>
    %553 = arith.subf %543, %552 : vector<8x32xf32>
    %554 = arith.mulf %553, %553 : vector<8x32xf32>
    %cst_239 = arith.constant dense<0.000000e+00> : vector<8xf32>
    %555 = vector.multi_reduction <add>, %554, %cst_239 [1] : vector<8x32xf32> to vector<8xf32>
    %556 = vector.shape_cast %555 : vector<8xf32> to vector<8x1xf32>
    %cst_240 = arith.constant 0.0322580636 : f32
    %557 = vector.broadcast %cst_240 : f32 to vector<8x1xf32>
    %558 = arith.mulf %556, %557 : vector<8x1xf32>
    %559 = math.sqrt %558 : vector<8x1xf32>
    %cst_241 = arith.constant 9.99999997E-7 : f32
    %560 = vector.broadcast %cst_241 : f32 to vector<8x1xf32>
    %561 = arith.addf %559, %560 : vector<8x1xf32>
    %562 = tpu.reciprocal %561 : vector<8x1xf32> -> vector<8x1xf32>
    %563 = vector.broadcast %562 : vector<8x1xf32> to vector<8x32xf32>
    %564 = arith.mulf %553, %563 : vector<8x32xf32>
    %565 = vector.broadcast %545 : vector<1x32xf32> to vector<8x32xf32>
    %566 = arith.mulf %565, %564 : vector<8x32xf32>
    %567 = vector.broadcast %547 : vector<1x32xf32> to vector<8x32xf32>
    %568 = arith.addf %566, %567 : vector<8x32xf32>
    %c1_242 = arith.constant 1 : index
    %c0_243 = arith.constant 0 : index
    %c0_244 = arith.constant 0 : index
    %569 = vector.load %arg21[%c1_242, %c0_243, %c0_244] : memref<2x32x96xbf16, #tpu.memory_space<vmem>>, vector<1x32x96xbf16>
    %570 = vector.shape_cast %569 : vector<1x32x96xbf16> to vector<32x96xbf16>
    %c1_245 = arith.constant 1 : index
    %c0_246 = arith.constant 0 : index
    %c0_247 = arith.constant 0 : index
    %571 = vector.load %arg22[%c1_245, %c0_246, %c0_247] : memref<2x1x96xf32, #tpu.memory_space<vmem>>, vector<1x1x96xf32>
    %572 = vector.shape_cast %571 : vector<1x1x96xf32> to vector<1x96xf32>
    %c1_248 = arith.constant 1 : index
    %c0_249 = arith.constant 0 : index
    %c0_250 = arith.constant 0 : index
    %c0_251 = arith.constant 0 : index
    %573 = vector.load %arg23[%c1_248, %c0_249, %c0_250, %c0_251] : memref<2x4x8x32xbf16, #tpu.memory_space<vmem>>, vector<1x4x8x32xbf16>
    %574 = vector.shape_cast %573 : vector<1x4x8x32xbf16> to vector<4x8x32xbf16>
    %c1_252 = arith.constant 1 : index
    %c0_253 = arith.constant 0 : index
    %c0_254 = arith.constant 0 : index
    %575 = vector.load %arg24[%c1_252, %c0_253, %c0_254] : memref<2x1x32xf32, #tpu.memory_space<vmem>>, vector<1x1x32xf32>
    %576 = vector.shape_cast %575 : vector<1x1x32xf32> to vector<1x32xf32>
    %577 = arith.truncf %568 : vector<8x32xf32> to vector<8x32xbf16>
    %cst_255 = arith.constant dense<0.000000e+00> : vector<8x96xf32>
    %578 = tpu.matmul %577, %570, %cst_255 {dimension_numbers = #tpu.dot_dimension_numbers<[1], [0], [0], [1], [0, 0, 1, 1], [], []>} : vector<8x32xbf16>, vector<32x96xbf16>, vector<8x96xf32> -> vector<8x96xf32>
    %579 = vector.broadcast %572 : vector<1x96xf32> to vector<8x96xf32>
    %580 = arith.addf %578, %579 : vector<8x96xf32>
    %581 = vector.extract_strided_slice %580 {offsets = [0, 0], sizes = [8, 32], strides = [1, 1]} : vector<8x96xf32> to vector<8x32xf32>
    %582 = vector.extract_strided_slice %581 {offsets = [0, 0], sizes = [8, 8], strides = [1, 1]} : vector<8x32xf32> to vector<8x8xf32>
    %583 = vector.extract_strided_slice %581 {offsets = [0, 8], sizes = [8, 8], strides = [1, 1]} : vector<8x32xf32> to vector<8x8xf32>
    %584 = vector.extract_strided_slice %581 {offsets = [0, 16], sizes = [8, 8], strides = [1, 1]} : vector<8x32xf32> to vector<8x8xf32>
    %585 = vector.extract_strided_slice %581 {offsets = [0, 24], sizes = [8, 8], strides = [1, 1]} : vector<8x32xf32> to vector<8x8xf32>
    %586 = vector.shape_cast %582 : vector<8x8xf32> to vector<1x8x8xf32>
    %587 = vector.shape_cast %583 : vector<8x8xf32> to vector<1x8x8xf32>
    %588 = vector.shape_cast %584 : vector<8x8xf32> to vector<1x8x8xf32>
    %589 = vector.shape_cast %585 : vector<8x8xf32> to vector<1x8x8xf32>
    %590 = tpu.concatenate %586, %587, %588, %589 in 0 : vector<1x8x8xf32>, vector<1x8x8xf32>, vector<1x8x8xf32>, vector<1x8x8xf32> -> vector<4x8x8xf32>
    %591 = vector.extract_strided_slice %580 {offsets = [0, 32], sizes = [8, 32], strides = [1, 1]} : vector<8x96xf32> to vector<8x32xf32>
    %592 = vector.extract_strided_slice %591 {offsets = [0, 0], sizes = [8, 8], strides = [1, 1]} : vector<8x32xf32> to vector<8x8xf32>
    %593 = vector.extract_strided_slice %591 {offsets = [0, 8], sizes = [8, 8], strides = [1, 1]} : vector<8x32xf32> to vector<8x8xf32>
    %594 = vector.extract_strided_slice %591 {offsets = [0, 16], sizes = [8, 8], strides = [1, 1]} : vector<8x32xf32> to vector<8x8xf32>
    %595 = vector.extract_strided_slice %591 {offsets = [0, 24], sizes = [8, 8], strides = [1, 1]} : vector<8x32xf32> to vector<8x8xf32>
    %596 = vector.shape_cast %592 : vector<8x8xf32> to vector<1x8x8xf32>
    %597 = vector.shape_cast %593 : vector<8x8xf32> to vector<1x8x8xf32>
    %598 = vector.shape_cast %594 : vector<8x8xf32> to vector<1x8x8xf32>
    %599 = vector.shape_cast %595 : vector<8x8xf32> to vector<1x8x8xf32>
    %600 = tpu.concatenate %596, %597, %598, %599 in 0 : vector<1x8x8xf32>, vector<1x8x8xf32>, vector<1x8x8xf32>, vector<1x8x8xf32> -> vector<4x8x8xf32>
    %601 = vector.extract_strided_slice %580 {offsets = [0, 64], sizes = [8, 32], strides = [1, 1]} : vector<8x96xf32> to vector<8x32xf32>
    %602 = vector.extract_strided_slice %601 {offsets = [0, 0], sizes = [8, 8], strides = [1, 1]} : vector<8x32xf32> to vector<8x8xf32>
    %603 = vector.extract_strided_slice %601 {offsets = [0, 8], sizes = [8, 8], strides = [1, 1]} : vector<8x32xf32> to vector<8x8xf32>
    %604 = vector.extract_strided_slice %601 {offsets = [0, 16], sizes = [8, 8], strides = [1, 1]} : vector<8x32xf32> to vector<8x8xf32>
    %605 = vector.extract_strided_slice %601 {offsets = [0, 24], sizes = [8, 8], strides = [1, 1]} : vector<8x32xf32> to vector<8x8xf32>
    %606 = vector.shape_cast %602 : vector<8x8xf32> to vector<1x8x8xf32>
    %607 = vector.shape_cast %603 : vector<8x8xf32> to vector<1x8x8xf32>
    %608 = vector.shape_cast %604 : vector<8x8xf32> to vector<1x8x8xf32>
    %609 = vector.shape_cast %605 : vector<8x8xf32> to vector<1x8x8xf32>
    %610 = tpu.concatenate %606, %607, %608, %609 in 0 : vector<1x8x8xf32>, vector<1x8x8xf32>, vector<1x8x8xf32>, vector<1x8x8xf32> -> vector<4x8x8xf32>
    %611 = arith.truncf %590 : vector<4x8x8xf32> to vector<4x8x8xbf16>
    %612 = arith.truncf %600 : vector<4x8x8xf32> to vector<4x8x8xbf16>
    "tpu.trace_start"() <{level = 10 : i32, message = "hqd,hkd->hqk"}> : () -> ()
    %cst_256 = arith.constant dense<0.000000e+00> : vector<4x8x8xf32>
    %613 = tpu.matmul %611, %612, %cst_256 {dimension_numbers = #tpu.dot_dimension_numbers<[2], [2], [1], [1], [0, 0, 0, 1, 1, 1], [0], [0]>} : vector<4x8x8xbf16>, vector<4x8x8xbf16>, vector<4x8x8xf32> -> vector<4x8x8xf32>
    "tpu.trace_stop"() : () -> ()
    %614 = vector.broadcast %13 : vector<1x8x8xf32> to vector<4x8x8xf32>
    %615 = arith.addf %613, %614 : vector<4x8x8xf32>
    %cst_257 = arith.constant dense<0xFF800000> : vector<4x8xf32>
    %616 = vector.multi_reduction <maximumf>, %615, %cst_257 [2] : vector<4x8x8xf32> to vector<4x8xf32>
    %617 = vector.shape_cast %616 : vector<4x8xf32> to vector<4x8x1xf32>
    %618 = vector.broadcast %617 : vector<4x8x1xf32> to vector<4x8x8xf32>
    %619 = arith.subf %615, %618 : vector<4x8x8xf32>
    %620 = math.exp %619 : vector<4x8x8xf32>
    %cst_258 = arith.constant dense<0.000000e+00> : vector<4x8xf32>
    %621 = vector.multi_reduction <add>, %620, %cst_258 [2] : vector<4x8x8xf32> to vector<4x8xf32>
    %622 = vector.shape_cast %621 : vector<4x8xf32> to vector<4x8x1xf32>
    %623 = tpu.reciprocal %622 : vector<4x8x1xf32> -> vector<4x8x1xf32>
    %624 = vector.broadcast %623 : vector<4x8x1xf32> to vector<4x8x8xf32>
    %625 = arith.mulf %620, %624 : vector<4x8x8xf32>
    %626 = arith.truncf %625 : vector<4x8x8xf32> to vector<4x8x8xbf16>
    %627 = arith.truncf %610 : vector<4x8x8xf32> to vector<4x8x8xbf16>
    "tpu.trace_start"() <{level = 10 : i32, message = "hqk,hkd->hqd"}> : () -> ()
    %cst_259 = arith.constant dense<0.000000e+00> : vector<4x8x8xf32>
    %628 = tpu.matmul %626, %627, %cst_259 {dimension_numbers = #tpu.dot_dimension_numbers<[2], [1], [1], [2], [0, 0, 0, 1, 1, 2], [0], [0]>} : vector<4x8x8xbf16>, vector<4x8x8xbf16>, vector<4x8x8xf32> -> vector<4x8x8xf32>
    "tpu.trace_stop"() : () -> ()
    %629 = arith.truncf %628 : vector<4x8x8xf32> to vector<4x8x8xbf16>
    "tpu.trace_start"() <{level = 10 : i32, message = "hqe,hed->hqd"}> : () -> ()
    %cst_260 = arith.constant dense<0.000000e+00> : vector<4x8x32xf32>
    %630 = tpu.matmul %629, %574, %cst_260 {dimension_numbers = #tpu.dot_dimension_numbers<[2], [1], [1], [2], [0, 0, 0, 1, 1, 2], [0], [0]>} : vector<4x8x8xbf16>, vector<4x8x32xbf16>, vector<4x8x32xf32> -> vector<4x8x32xf32>
    "tpu.trace_stop"() : () -> ()
    %cst_261 = arith.constant dense<0.000000e+00> : vector<8x32xf32>
    %631 = vector.multi_reduction <add>, %630, %cst_261 [0] : vector<4x8x32xf32> to vector<8x32xf32>
    %632 = vector.broadcast %576 : vector<1x32xf32> to vector<8x32xf32>
    %633 = arith.addf %631, %632 : vector<8x32xf32>
    %634 = arith.addf %543, %633 : vector<8x32xf32>
    %c1_262 = arith.constant 1 : index
    %c0_263 = arith.constant 0 : index
    %c0_264 = arith.constant 0 : index
    %635 = vector.load %arg25[%c1_262, %c0_263, %c0_264] : memref<2x1x32xf32, #tpu.memory_space<vmem>>, vector<1x1x32xf32>
    %636 = vector.shape_cast %635 : vector<1x1x32xf32> to vector<1x32xf32>
    %c1_265 = arith.constant 1 : index
    %c0_266 = arith.constant 0 : index
    %c0_267 = arith.constant 0 : index
    %637 = vector.load %arg26[%c1_265, %c0_266, %c0_267] : memref<2x1x32xf32, #tpu.memory_space<vmem>>, vector<1x1x32xf32>
    %638 = vector.shape_cast %637 : vector<1x1x32xf32> to vector<1x32xf32>
    %cst_268 = arith.constant dense<0.000000e+00> : vector<8xf32>
    %639 = vector.multi_reduction <add>, %634, %cst_268 [1] : vector<8x32xf32> to vector<8xf32>
    %640 = vector.shape_cast %639 : vector<8xf32> to vector<8x1xf32>
    %cst_269 = arith.constant 3.200000e+01 : f32
    %641 = vector.broadcast %cst_269 : f32 to vector<8x1xf32>
    %642 = arith.divf %640, %641 : vector<8x1xf32>
    %643 = vector.broadcast %642 : vector<8x1xf32> to vector<8x32xf32>
    %644 = arith.subf %634, %643 : vector<8x32xf32>
    %645 = arith.mulf %644, %644 : vector<8x32xf32>
    %cst_270 = arith.constant dense<0.000000e+00> : vector<8xf32>
    %646 = vector.multi_reduction <add>, %645, %cst_270 [1] : vector<8x32xf32> to vector<8xf32>
    %647 = vector.shape_cast %646 : vector<8xf32> to vector<8x1xf32>
    %cst_271 = arith.constant 0.0322580636 : f32
    %648 = vector.broadcast %cst_271 : f32 to vector<8x1xf32>
    %649 = arith.mulf %647, %648 : vector<8x1xf32>
    %650 = math.sqrt %649 : vector<8x1xf32>
    %cst_272 = arith.constant 9.99999997E-7 : f32
    %651 = vector.broadcast %cst_272 : f32 to vector<8x1xf32>
    %652 = arith.addf %650, %651 : vector<8x1xf32>
    %653 = tpu.reciprocal %652 : vector<8x1xf32> -> vector<8x1xf32>
    %654 = vector.broadcast %653 : vector<8x1xf32> to vector<8x32xf32>
    %655 = arith.mulf %644, %654 : vector<8x32xf32>
    %656 = vector.broadcast %636 : vector<1x32xf32> to vector<8x32xf32>
    %657 = arith.mulf %656, %655 : vector<8x32xf32>
    %658 = vector.broadcast %638 : vector<1x32xf32> to vector<8x32xf32>
    %659 = arith.addf %657, %658 : vector<8x32xf32>
    %c1_273 = arith.constant 1 : index
    %c0_274 = arith.constant 0 : index
    %c0_275 = arith.constant 0 : index
    %660 = vector.load %arg27[%c1_273, %c0_274, %c0_275] : memref<2x32x32xbf16, #tpu.memory_space<vmem>>, vector<1x32x32xbf16>
    %661 = vector.shape_cast %660 : vector<1x32x32xbf16> to vector<32x32xbf16>
    %c1_276 = arith.constant 1 : index
    %c0_277 = arith.constant 0 : index
    %c0_278 = arith.constant 0 : index
    %662 = vector.load %arg28[%c1_276, %c0_277, %c0_278] : memref<2x1x32xf32, #tpu.memory_space<vmem>>, vector<1x1x32xf32>
    %663 = vector.shape_cast %662 : vector<1x1x32xf32> to vector<1x32xf32>
    %c1_279 = arith.constant 1 : index
    %c0_280 = arith.constant 0 : index
    %c0_281 = arith.constant 0 : index
    %664 = vector.load %arg29[%c1_279, %c0_280, %c0_281] : memref<2x32x64xbf16, #tpu.memory_space<vmem>>, vector<1x32x64xbf16>
    %665 = vector.shape_cast %664 : vector<1x32x64xbf16> to vector<32x64xbf16>
    %c1_282 = arith.constant 1 : index
    %c0_283 = arith.constant 0 : index
    %c0_284 = arith.constant 0 : index
    %666 = vector.load %arg30[%c1_282, %c0_283, %c0_284] : memref<2x1x64xf32, #tpu.memory_space<vmem>>, vector<1x1x64xf32>
    %667 = vector.shape_cast %666 : vector<1x1x64xf32> to vector<1x64xf32>
    %c1_285 = arith.constant 1 : index
    %c0_286 = arith.constant 0 : index
    %c0_287 = arith.constant 0 : index
    %c0_288 = arith.constant 0 : index
    %668 = vector.load %arg31[%c1_285, %c0_286, %c0_287, %c0_288] : memref<2x4x8x32xbf16, #tpu.memory_space<vmem>>, vector<1x4x8x32xbf16>
    %669 = vector.shape_cast %668 : vector<1x4x8x32xbf16> to vector<4x8x32xbf16>
    %c1_289 = arith.constant 1 : index
    %c0_290 = arith.constant 0 : index
    %c0_291 = arith.constant 0 : index
    %670 = vector.load %arg32[%c1_289, %c0_290, %c0_291] : memref<2x1x32xf32, #tpu.memory_space<vmem>>, vector<1x1x32xf32>
    %671 = vector.shape_cast %670 : vector<1x1x32xf32> to vector<1x32xf32>
    %672 = arith.truncf %659 : vector<8x32xf32> to vector<8x32xbf16>
    %cst_292 = arith.constant dense<0.000000e+00> : vector<8x32xf32>
    %673 = tpu.matmul %672, %661, %cst_292 {dimension_numbers = #tpu.dot_dimension_numbers<[1], [0], [0], [1], [0, 0, 1, 1], [], []>} : vector<8x32xbf16>, vector<32x32xbf16>, vector<8x32xf32> -> vector<8x32xf32>
    %674 = vector.broadcast %663 : vector<1x32xf32> to vector<8x32xf32>
    %675 = arith.addf %673, %674 : vector<8x32xf32>
    %676 = arith.truncf %308 : vector<8x32xf32> to vector<8x32xbf16>
    %cst_293 = arith.constant dense<0.000000e+00> : vector<8x64xf32>
    %677 = tpu.matmul %676, %665, %cst_293 {dimension_numbers = #tpu.dot_dimension_numbers<[1], [0], [0], [1], [0, 0, 1, 1], [], []>} : vector<8x32xbf16>, vector<32x64xbf16>, vector<8x64xf32> -> vector<8x64xf32>
    %678 = vector.broadcast %667 : vector<1x64xf32> to vector<8x64xf32>
    %679 = arith.addf %677, %678 : vector<8x64xf32>
    %680 = vector.extract_strided_slice %675 {offsets = [0, 0], sizes = [8, 8], strides = [1, 1]} : vector<8x32xf32> to vector<8x8xf32>
    %681 = vector.extract_strided_slice %675 {offsets = [0, 8], sizes = [8, 8], strides = [1, 1]} : vector<8x32xf32> to vector<8x8xf32>
    %682 = vector.extract_strided_slice %675 {offsets = [0, 16], sizes = [8, 8], strides = [1, 1]} : vector<8x32xf32> to vector<8x8xf32>
    %683 = vector.extract_strided_slice %675 {offsets = [0, 24], sizes = [8, 8], strides = [1, 1]} : vector<8x32xf32> to vector<8x8xf32>
    %684 = vector.shape_cast %680 : vector<8x8xf32> to vector<1x8x8xf32>
    %685 = vector.shape_cast %681 : vector<8x8xf32> to vector<1x8x8xf32>
    %686 = vector.shape_cast %682 : vector<8x8xf32> to vector<1x8x8xf32>
    %687 = vector.shape_cast %683 : vector<8x8xf32> to vector<1x8x8xf32>
    %688 = tpu.concatenate %684, %685, %686, %687 in 0 : vector<1x8x8xf32>, vector<1x8x8xf32>, vector<1x8x8xf32>, vector<1x8x8xf32> -> vector<4x8x8xf32>
    %689 = vector.extract_strided_slice %679 {offsets = [0, 0], sizes = [8, 32], strides = [1, 1]} : vector<8x64xf32> to vector<8x32xf32>
    %690 = vector.extract_strided_slice %689 {offsets = [0, 0], sizes = [8, 8], strides = [1, 1]} : vector<8x32xf32> to vector<8x8xf32>
    %691 = vector.extract_strided_slice %689 {offsets = [0, 8], sizes = [8, 8], strides = [1, 1]} : vector<8x32xf32> to vector<8x8xf32>
    %692 = vector.extract_strided_slice %689 {offsets = [0, 16], sizes = [8, 8], strides = [1, 1]} : vector<8x32xf32> to vector<8x8xf32>
    %693 = vector.extract_strided_slice %689 {offsets = [0, 24], sizes = [8, 8], strides = [1, 1]} : vector<8x32xf32> to vector<8x8xf32>
    %694 = vector.shape_cast %690 : vector<8x8xf32> to vector<1x8x8xf32>
    %695 = vector.shape_cast %691 : vector<8x8xf32> to vector<1x8x8xf32>
    %696 = vector.shape_cast %692 : vector<8x8xf32> to vector<1x8x8xf32>
    %697 = vector.shape_cast %693 : vector<8x8xf32> to vector<1x8x8xf32>
    %698 = tpu.concatenate %694, %695, %696, %697 in 0 : vector<1x8x8xf32>, vector<1x8x8xf32>, vector<1x8x8xf32>, vector<1x8x8xf32> -> vector<4x8x8xf32>
    %699 = vector.extract_strided_slice %679 {offsets = [0, 32], sizes = [8, 32], strides = [1, 1]} : vector<8x64xf32> to vector<8x32xf32>
    %700 = vector.extract_strided_slice %699 {offsets = [0, 0], sizes = [8, 8], strides = [1, 1]} : vector<8x32xf32> to vector<8x8xf32>
    %701 = vector.extract_strided_slice %699 {offsets = [0, 8], sizes = [8, 8], strides = [1, 1]} : vector<8x32xf32> to vector<8x8xf32>
    %702 = vector.extract_strided_slice %699 {offsets = [0, 16], sizes = [8, 8], strides = [1, 1]} : vector<8x32xf32> to vector<8x8xf32>
    %703 = vector.extract_strided_slice %699 {offsets = [0, 24], sizes = [8, 8], strides = [1, 1]} : vector<8x32xf32> to vector<8x8xf32>
    %704 = vector.shape_cast %700 : vector<8x8xf32> to vector<1x8x8xf32>
    %705 = vector.shape_cast %701 : vector<8x8xf32> to vector<1x8x8xf32>
    %706 = vector.shape_cast %702 : vector<8x8xf32> to vector<1x8x8xf32>
    %707 = vector.shape_cast %703 : vector<8x8xf32> to vector<1x8x8xf32>
    %708 = tpu.concatenate %704, %705, %706, %707 in 0 : vector<1x8x8xf32>, vector<1x8x8xf32>, vector<1x8x8xf32>, vector<1x8x8xf32> -> vector<4x8x8xf32>
    %709 = arith.truncf %688 : vector<4x8x8xf32> to vector<4x8x8xbf16>
    %710 = arith.truncf %698 : vector<4x8x8xf32> to vector<4x8x8xbf16>
    "tpu.trace_start"() <{level = 10 : i32, message = "hqd,hkd->hqk"}> : () -> ()
    %cst_294 = arith.constant dense<0.000000e+00> : vector<4x8x8xf32>
    %711 = tpu.matmul %709, %710, %cst_294 {dimension_numbers = #tpu.dot_dimension_numbers<[2], [2], [1], [1], [0, 0, 0, 1, 1, 1], [0], [0]>} : vector<4x8x8xbf16>, vector<4x8x8xbf16>, vector<4x8x8xf32> -> vector<4x8x8xf32>
    "tpu.trace_stop"() : () -> ()
    %712 = vector.broadcast %6 : vector<1x1x8xf32> to vector<4x8x8xf32>
    %713 = arith.addf %711, %712 : vector<4x8x8xf32>
    %cst_295 = arith.constant dense<0xFF800000> : vector<4x8xf32>
    %714 = vector.multi_reduction <maximumf>, %713, %cst_295 [2] : vector<4x8x8xf32> to vector<4x8xf32>
    %715 = vector.shape_cast %714 : vector<4x8xf32> to vector<4x8x1xf32>
    %716 = vector.broadcast %715 : vector<4x8x1xf32> to vector<4x8x8xf32>
    %717 = arith.subf %713, %716 : vector<4x8x8xf32>
    %718 = math.exp %717 : vector<4x8x8xf32>
    %cst_296 = arith.constant dense<0.000000e+00> : vector<4x8xf32>
    %719 = vector.multi_reduction <add>, %718, %cst_296 [2] : vector<4x8x8xf32> to vector<4x8xf32>
    %720 = vector.shape_cast %719 : vector<4x8xf32> to vector<4x8x1xf32>
    %721 = tpu.reciprocal %720 : vector<4x8x1xf32> -> vector<4x8x1xf32>
    %722 = vector.broadcast %721 : vector<4x8x1xf32> to vector<4x8x8xf32>
    %723 = arith.mulf %718, %722 : vector<4x8x8xf32>
    %724 = arith.truncf %723 : vector<4x8x8xf32> to vector<4x8x8xbf16>
    %725 = arith.truncf %708 : vector<4x8x8xf32> to vector<4x8x8xbf16>
    "tpu.trace_start"() <{level = 10 : i32, message = "hqk,hkd->hqd"}> : () -> ()
    %cst_297 = arith.constant dense<0.000000e+00> : vector<4x8x8xf32>
    %726 = tpu.matmul %724, %725, %cst_297 {dimension_numbers = #tpu.dot_dimension_numbers<[2], [1], [1], [2], [0, 0, 0, 1, 1, 2], [0], [0]>} : vector<4x8x8xbf16>, vector<4x8x8xbf16>, vector<4x8x8xf32> -> vector<4x8x8xf32>
    "tpu.trace_stop"() : () -> ()
    %727 = arith.truncf %726 : vector<4x8x8xf32> to vector<4x8x8xbf16>
    "tpu.trace_start"() <{level = 10 : i32, message = "hqe,hed->hqd"}> : () -> ()
    %cst_298 = arith.constant dense<0.000000e+00> : vector<4x8x32xf32>
    %728 = tpu.matmul %727, %669, %cst_298 {dimension_numbers = #tpu.dot_dimension_numbers<[2], [1], [1], [2], [0, 0, 0, 1, 1, 2], [0], [0]>} : vector<4x8x8xbf16>, vector<4x8x32xbf16>, vector<4x8x32xf32> -> vector<4x8x32xf32>
    "tpu.trace_stop"() : () -> ()
    %cst_299 = arith.constant dense<0.000000e+00> : vector<8x32xf32>
    %729 = vector.multi_reduction <add>, %728, %cst_299 [0] : vector<4x8x32xf32> to vector<8x32xf32>
    %730 = vector.broadcast %671 : vector<1x32xf32> to vector<8x32xf32>
    %731 = arith.addf %729, %730 : vector<8x32xf32>
    %732 = arith.addf %634, %731 : vector<8x32xf32>
    %c1_300 = arith.constant 1 : index
    %c0_301 = arith.constant 0 : index
    %c0_302 = arith.constant 0 : index
    %733 = vector.load %arg33[%c1_300, %c0_301, %c0_302] : memref<2x1x32xf32, #tpu.memory_space<vmem>>, vector<1x1x32xf32>
    %734 = vector.shape_cast %733 : vector<1x1x32xf32> to vector<1x32xf32>
    %c1_303 = arith.constant 1 : index
    %c0_304 = arith.constant 0 : index
    %c0_305 = arith.constant 0 : index
    %735 = vector.load %arg34[%c1_303, %c0_304, %c0_305] : memref<2x1x32xf32, #tpu.memory_space<vmem>>, vector<1x1x32xf32>
    %736 = vector.shape_cast %735 : vector<1x1x32xf32> to vector<1x32xf32>
    %cst_306 = arith.constant dense<0.000000e+00> : vector<8xf32>
    %737 = vector.multi_reduction <add>, %732, %cst_306 [1] : vector<8x32xf32> to vector<8xf32>
    %738 = vector.shape_cast %737 : vector<8xf32> to vector<8x1xf32>
    %cst_307 = arith.constant 3.200000e+01 : f32
    %739 = vector.broadcast %cst_307 : f32 to vector<8x1xf32>
    %740 = arith.divf %738, %739 : vector<8x1xf32>
    %741 = vector.broadcast %740 : vector<8x1xf32> to vector<8x32xf32>
    %742 = arith.subf %732, %741 : vector<8x32xf32>
    %743 = arith.mulf %742, %742 : vector<8x32xf32>
    %cst_308 = arith.constant dense<0.000000e+00> : vector<8xf32>
    %744 = vector.multi_reduction <add>, %743, %cst_308 [1] : vector<8x32xf32> to vector<8xf32>
    %745 = vector.shape_cast %744 : vector<8xf32> to vector<8x1xf32>
    %cst_309 = arith.constant 0.0322580636 : f32
    %746 = vector.broadcast %cst_309 : f32 to vector<8x1xf32>
    %747 = arith.mulf %745, %746 : vector<8x1xf32>
    %748 = math.sqrt %747 : vector<8x1xf32>
    %cst_310 = arith.constant 9.99999997E-7 : f32
    %749 = vector.broadcast %cst_310 : f32 to vector<8x1xf32>
    %750 = arith.addf %748, %749 : vector<8x1xf32>
    %751 = tpu.reciprocal %750 : vector<8x1xf32> -> vector<8x1xf32>
    %752 = vector.broadcast %751 : vector<8x1xf32> to vector<8x32xf32>
    %753 = arith.mulf %742, %752 : vector<8x32xf32>
    %754 = vector.broadcast %734 : vector<1x32xf32> to vector<8x32xf32>
    %755 = arith.mulf %754, %753 : vector<8x32xf32>
    %756 = vector.broadcast %736 : vector<1x32xf32> to vector<8x32xf32>
    %757 = arith.addf %755, %756 : vector<8x32xf32>
    %c1_311 = arith.constant 1 : index
    %c0_312 = arith.constant 0 : index
    %c0_313 = arith.constant 0 : index
    %758 = vector.load %arg35[%c1_311, %c0_312, %c0_313] : memref<2x32x64xbf16, #tpu.memory_space<vmem>>, vector<1x32x64xbf16>
    %759 = vector.shape_cast %758 : vector<1x32x64xbf16> to vector<32x64xbf16>
    %c1_314 = arith.constant 1 : index
    %c0_315 = arith.constant 0 : index
    %c0_316 = arith.constant 0 : index
    %760 = vector.load %arg36[%c1_314, %c0_315, %c0_316] : memref<2x1x64xf32, #tpu.memory_space<vmem>>, vector<1x1x64xf32>
    %761 = vector.shape_cast %760 : vector<1x1x64xf32> to vector<1x64xf32>
    %c1_317 = arith.constant 1 : index
    %c0_318 = arith.constant 0 : index
    %c0_319 = arith.constant 0 : index
    %762 = vector.load %arg37[%c1_317, %c0_318, %c0_319] : memref<2x64x32xbf16, #tpu.memory_space<vmem>>, vector<1x64x32xbf16>
    %763 = vector.shape_cast %762 : vector<1x64x32xbf16> to vector<64x32xbf16>
    %c1_320 = arith.constant 1 : index
    %c0_321 = arith.constant 0 : index
    %c0_322 = arith.constant 0 : index
    %764 = vector.load %arg38[%c1_320, %c0_321, %c0_322] : memref<2x1x32xf32, #tpu.memory_space<vmem>>, vector<1x1x32xf32>
    %765 = vector.shape_cast %764 : vector<1x1x32xf32> to vector<1x32xf32>
    %766 = arith.truncf %757 : vector<8x32xf32> to vector<8x32xbf16>
    %cst_323 = arith.constant dense<0.000000e+00> : vector<8x64xf32>
    %767 = tpu.matmul %766, %759, %cst_323 {dimension_numbers = #tpu.dot_dimension_numbers<[1], [0], [0], [1], [0, 0, 1, 1], [], []>} : vector<8x32xbf16>, vector<32x64xbf16>, vector<8x64xf32> -> vector<8x64xf32>
    %768 = vector.broadcast %761 : vector<1x64xf32> to vector<8x64xf32>
    %769 = arith.addf %767, %768 : vector<8x64xf32>
    %cst_324 = arith.constant 0.000000e+00 : f32
    %770 = vector.broadcast %cst_324 : f32 to vector<8x64xf32>
    %771 = arith.maximumf %769, %770 : vector<8x64xf32>
    %772 = arith.truncf %771 : vector<8x64xf32> to vector<8x64xbf16>
    %cst_325 = arith.constant dense<0.000000e+00> : vector<8x32xf32>
    %773 = tpu.matmul %772, %763, %cst_325 {dimension_numbers = #tpu.dot_dimension_numbers<[1], [0], [0], [1], [0, 0, 1, 1], [], []>} : vector<8x64xbf16>, vector<64x32xbf16>, vector<8x32xf32> -> vector<8x32xf32>
    %774 = vector.broadcast %765 : vector<1x32xf32> to vector<8x32xf32>
    %775 = arith.addf %773, %774 : vector<8x32xf32>
    %776 = arith.addf %732, %775 : vector<8x32xf32>
    %c0_326 = arith.constant 0 : index
    %c0_327 = arith.constant 0 : index
    %777 = vector.load %arg39[%c0_326, %c0_327] : memref<1x32xf32, #tpu.memory_space<vmem>>, vector<1x32xf32>
    %c0_328 = arith.constant 0 : index
    %c0_329 = arith.constant 0 : index
    %778 = vector.load %arg40[%c0_328, %c0_329] : memref<1x32xf32, #tpu.memory_space<vmem>>, vector<1x32xf32>
    %cst_330 = arith.constant dense<0.000000e+00> : vector<8xf32>
    %779 = vector.multi_reduction <add>, %776, %cst_330 [1] : vector<8x32xf32> to vector<8xf32>
    %780 = vector.shape_cast %779 : vector<8xf32> to vector<8x1xf32>
    %cst_331 = arith.constant 3.200000e+01 : f32
    %781 = vector.broadcast %cst_331 : f32 to vector<8x1xf32>
    %782 = arith.divf %780, %781 : vector<8x1xf32>
    %783 = vector.broadcast %782 : vector<8x1xf32> to vector<8x32xf32>
    %784 = arith.subf %776, %783 : vector<8x32xf32>
    %785 = arith.mulf %784, %784 : vector<8x32xf32>
    %cst_332 = arith.constant dense<0.000000e+00> : vector<8xf32>
    %786 = vector.multi_reduction <add>, %785, %cst_332 [1] : vector<8x32xf32> to vector<8xf32>
    %787 = vector.shape_cast %786 : vector<8xf32> to vector<8x1xf32>
    %cst_333 = arith.constant 0.0322580636 : f32
    %788 = vector.broadcast %cst_333 : f32 to vector<8x1xf32>
    %789 = arith.mulf %787, %788 : vector<8x1xf32>
    %790 = math.sqrt %789 : vector<8x1xf32>
    %cst_334 = arith.constant 9.99999997E-7 : f32
    %791 = vector.broadcast %cst_334 : f32 to vector<8x1xf32>
    %792 = arith.addf %790, %791 : vector<8x1xf32>
    %793 = tpu.reciprocal %792 : vector<8x1xf32> -> vector<8x1xf32>
    %794 = vector.broadcast %793 : vector<8x1xf32> to vector<8x32xf32>
    %795 = arith.mulf %784, %794 : vector<8x32xf32>
    %796 = vector.broadcast %777 : vector<1x32xf32> to vector<8x32xf32>
    %797 = arith.mulf %796, %795 : vector<8x32xf32>
    %798 = vector.broadcast %778 : vector<1x32xf32> to vector<8x32xf32>
    %799 = arith.addf %797, %798 : vector<8x32xf32>
    %c0_335 = arith.constant 0 : index
    %c0_336 = arith.constant 0 : index
    %c0_337 = arith.constant 0 : index
    %800 = vector.load %arg41[%c0_335, %c0_336, %c0_337] : memref<1x8x32xf32, #tpu.memory_space<vmem>>, vector<1x8x32xf32>
    %801 = vector.shape_cast %800 : vector<1x8x32xf32> to vector<8x32xf32>
    %802 = vector.shape_cast %799 : vector<8x32xf32> to vector<1x8x32xf32>
    tpu.vector_store %arg41[%c0_335, %c0_336, %c0_337], %802 {strides = array<i32>} : memref<1x8x32xf32, #tpu.memory_space<vmem>>, vector<1x8x32xf32>,
    return
  }
  func.func @transform_0(%arg0: i32) -> (i32, i32, i32) {
    %c0_i32 = arith.constant 0 : i32
    %c0_i32_0 = arith.constant 0 : i32
    %c0_i32_1 = arith.constant 0 : i32
    return %arg0, %c0_i32, %c0_i32_0 : i32, i32, i32
  }
  func.func @transform_1(%arg0: i32) -> (i32, i32, i32) {
    %c0_i32 = arith.constant 0 : i32
    %c0_i32_0 = arith.constant 0 : i32
    %c0_i32_1 = arith.constant 0 : i32
    return %arg0, %c0_i32, %c0_i32_0 : i32, i32, i32
  }
  func.func @transform_2(%arg0: i32) -> (i32, i32, i32) {
    %c0_i32 = arith.constant 0 : i32
    %c0_i32_0 = arith.constant 0 : i32
    %c0_i32_1 = arith.constant 0 : i32
    return %arg0, %c0_i32, %c0_i32_0 : i32, i32, i32
  }
  func.func @transform_3(%arg0: i32) -> (i32, i32, i32) {
    %c0_i32 = arith.constant 0 : i32
    %c0_i32_0 = arith.constant 0 : i32
    %c0_i32_1 = arith.constant 0 : i32
    return %arg0, %c0_i32, %c0_i32_0 : i32, i32, i32
  }
  func.func @transform_4(%arg0: i32) -> (i32, i32, i32) {
    %c0_i32 = arith.constant 0 : i32
    %c0_i32_0 = arith.constant 0 : i32
    %c0_i32_1 = arith.constant 0 : i32
    %c0_i32_2 = arith.constant 0 : i32
    return %c0_i32, %c0_i32_0, %c0_i32_1 : i32, i32, i32
  }
  func.func @transform_5(%arg0: i32) -> (i32, i32, i32) {
    %c0_i32 = arith.constant 0 : i32
    %c0_i32_0 = arith.constant 0 : i32
    %c0_i32_1 = arith.constant 0 : i32
    %c0_i32_2 = arith.constant 0 : i32
    return %c0_i32, %c0_i32_0, %c0_i32_1 : i32, i32, i32
  }
  func.func @transform_6(%arg0: i32) -> (i32, i32, i32) {
    %c0_i32 = arith.constant 0 : i32
    %c0_i32_0 = arith.constant 0 : i32
    %c0_i32_1 = arith.constant 0 : i32
    %c0_i32_2 = arith.constant 0 : i32
    return %c0_i32, %c0_i32_0, %c0_i32_1 : i32, i32, i32
  }
  func.func @transform_7(%arg0: i32) -> (i32, i32, i32) {
    %c0_i32 = arith.constant 0 : i32
    %c0_i32_0 = arith.constant 0 : i32
    %c0_i32_1 = arith.constant 0 : i32
    %c0_i32_2 = arith.constant 0 : i32
    return %c0_i32, %c0_i32_0, %c0_i32_1 : i32, i32, i32
  }
  func.func @transform_8(%arg0: i32) -> (i32, i32, i32, i32) {
    %c0_i32 = arith.constant 0 : i32
    %c0_i32_0 = arith.constant 0 : i32
    %c0_i32_1 = arith.constant 0 : i32
    %c0_i32_2 = arith.constant 0 : i32
    %c0_i32_3 = arith.constant 0 : i32
    return %c0_i32, %c0_i32_0, %c0_i32_1, %c0_i32_2 : i32, i32, i32, i32
  }
  func.func @transform_9(%arg0: i32) -> (i32, i32, i32) {
    %c0_i32 = arith.constant 0 : i32
    %c0_i32_0 = arith.constant 0 : i32
    %c0_i32_1 = arith.constant 0 : i32
    %c0_i32_2 = arith.constant 0 : i32
    return %c0_i32, %c0_i32_0, %c0_i32_1 : i32, i32, i32
  }
  func.func @transform_10(%arg0: i32) -> (i32, i32, i32) {
    %c0_i32 = arith.constant 0 : i32
    %c0_i32_0 = arith.constant 0 : i32
    %c0_i32_1 = arith.constant 0 : i32
    %c0_i32_2 = arith.constant 0 : i32
    return %c0_i32, %c0_i32_0, %c0_i32_1 : i32, i32, i32
  }
  func.func @transform_11(%arg0: i32) -> (i32, i32, i32) {
    %c0_i32 = arith.constant 0 : i32
    %c0_i32_0 = arith.constant 0 : i32
    %c0_i32_1 = arith.constant 0 : i32
    %c0_i32_2 = arith.constant 0 : i32
    return %c0_i32, %c0_i32_0, %c0_i32_1 : i32, i32, i32
  }
  func.func @transform_12(%arg0: i32) -> (i32, i32, i32) {
    %c0_i32 = arith.constant 0 : i32
    %c0_i32_0 = arith.constant 0 : i32
    %c0_i32_1 = arith.constant 0 : i32
    %c0_i32_2 = arith.constant 0 : i32
    return %c0_i32, %c0_i32_0, %c0_i32_1 : i32, i32, i32
  }
  func.func @transform_13(%arg0: i32) -> (i32, i32, i32) {
    %c0_i32 = arith.constant 0 : i32
    %c0_i32_0 = arith.constant 0 : i32
    %c0_i32_1 = arith.constant 0 : i32
    %c0_i32_2 = arith.constant 0 : i32
    return %c0_i32, %c0_i32_0, %c0_i32_1 : i32, i32, i32
  }
  func.func @transform_14(%arg0: i32) -> (i32, i32, i32) {
    %c0_i32 = arith.constant 0 : i32
    %c0_i32_0 = arith.constant 0 : i32
    %c0_i32_1 = arith.constant 0 : i32
    %c0_i32_2 = arith.constant 0 : i32
    return %c0_i32, %c0_i32_0, %c0_i32_1 : i32, i32, i32
  }
  func.func @transform_15(%arg0: i32) -> (i32, i32, i32) {
    %c0_i32 = arith.constant 0 : i32
    %c0_i32_0 = arith.constant 0 : i32
    %c0_i32_1 = arith.constant 0 : i32
    %c0_i32_2 = arith.constant 0 : i32
    return %c0_i32, %c0_i32_0, %c0_i32_1 : i32, i32, i32
  }
  func.func @transform_16(%arg0: i32) -> (i32, i32) {
    %c0_i32 = arith.constant 0 : i32
    %c0_i32_0 = arith.constant 0 : i32
    %c0_i32_1 = arith.constant 0 : i32
    return %c0_i32, %c0_i32_0 : i32, i32
  }
  func.func @transform_17(%arg0: i32) -> (i32, i32) {
    %c0_i32 = arith.constant 0 : i32
    %c0_i32_0 = arith.constant 0 : i32
    %c0_i32_1 = arith.constant 0 : i32
    return %c0_i32, %c0_i32_0 : i32, i32
  }
  func.func @transform_18(%arg0: i32) -> (i32, i32, i32) {
    %c0_i32 = arith.constant 0 : i32
    %c0_i32_0 = arith.constant 0 : i32
    %c0_i32_1 = arith.constant 0 : i32
    %c0_i32_2 = arith.constant 0 : i32
    return %c0_i32, %c0_i32_0, %c0_i32_1 : i32, i32, i32
  }
  func.func @transform_19(%arg0: i32) -> (i32, i32, i32) {
    %c0_i32 = arith.constant 0 : i32
    %c0_i32_0 = arith.constant 0 : i32
    %c0_i32_1 = arith.constant 0 : i32
    %c0_i32_2 = arith.constant 0 : i32
    return %c0_i32, %c0_i32_0, %c0_i32_1 : i32, i32, i32
  }
  func.func @transform_20(%arg0: i32) -> (i32, i32, i32) {
    %c0_i32 = arith.constant 0 : i32
    %c0_i32_0 = arith.constant 0 : i32
    %c0_i32_1 = arith.constant 0 : i32
    %c0_i32_2 = arith.constant 0 : i32
    return %c0_i32, %c0_i32_0, %c0_i32_1 : i32, i32, i32
  }
  func.func @transform_21(%arg0: i32) -> (i32, i32, i32) {
    %c0_i32 = arith.constant 0 : i32
    %c0_i32_0 = arith.constant 0 : i32
    %c0_i32_1 = arith.constant 0 : i32
    %c0_i32_2 = arith.constant 0 : i32
    return %c0_i32, %c0_i32_0, %c0_i32_1 : i32, i32, i32
  }
  func.func @transform_22(%arg0: i32) -> (i32, i32, i32, i32) {
    %c0_i32 = arith.constant 0 : i32
    %c0_i32_0 = arith.constant 0 : i32
    %c0_i32_1 = arith.constant 0 : i32
    %c0_i32_2 = arith.constant 0 : i32
    %c0_i32_3 = arith.constant 0 : i32
    return %c0_i32, %c0_i32_0, %c0_i32_1, %c0_i32_2 : i32, i32, i32, i32
  }
  func.func @transform_23(%arg0: i32) -> (i32, i32, i32) {
    %c0_i32 = arith.constant 0 : i32
    %c0_i32_0 = arith.constant 0 : i32
    %c0_i32_1 = arith.constant 0 : i32
    %c0_i32_2 = arith.constant 0 : i32
    return %c0_i32, %c0_i32_0, %c0_i32_1 : i32, i32, i32
  }
  func.func @transform_24(%arg0: i32) -> (i32, i32, i32) {
    %c0_i32 = arith.constant 0 : i32
    %c0_i32_0 = arith.constant 0 : i32
    %c0_i32_1 = arith.constant 0 : i32
    %c0_i32_2 = arith.constant 0 : i32
    return %c0_i32, %c0_i32_0, %c0_i32_1 : i32, i32, i32
  }
  func.func @transform_25(%arg0: i32) -> (i32, i32, i32) {
    %c0_i32 = arith.constant 0 : i32
    %c0_i32_0 = arith.constant 0 : i32
    %c0_i32_1 = arith.constant 0 : i32
    %c0_i32_2 = arith.constant 0 : i32
    return %c0_i32, %c0_i32_0, %c0_i32_1 : i32, i32, i32
  }
  func.func @transform_26(%arg0: i32) -> (i32, i32, i32) {
    %c0_i32 = arith.constant 0 : i32
    %c0_i32_0 = arith.constant 0 : i32
    %c0_i32_1 = arith.constant 0 : i32
    %c0_i32_2 = arith.constant 0 : i32
    return %c0_i32, %c0_i32_0, %c0_i32_1 : i32, i32, i32
  }
  func.func @transform_27(%arg0: i32) -> (i32, i32, i32) {
    %c0_i32 = arith.constant 0 : i32
    %c0_i32_0 = arith.constant 0 : i32
    %c0_i32_1 = arith.constant 0 : i32
    %c0_i32_2 = arith.constant 0 : i32
    return %c0_i32, %c0_i32_0, %c0_i32_1 : i32, i32, i32
  }
  func.func @transform_28(%arg0: i32) -> (i32, i32, i32) {
    %c0_i32 = arith.constant 0 : i32
    %c0_i32_0 = arith.constant 0 : i32
    %c0_i32_1 = arith.constant 0 : i32
    %c0_i32_2 = arith.constant 0 : i32
    return %c0_i32, %c0_i32_0, %c0_i32_1 : i32, i32, i32
  }
  func.func @transform_29(%arg0: i32) -> (i32, i32, i32) {
    %c0_i32 = arith.constant 0 : i32
    %c0_i32_0 = arith.constant 0 : i32
    %c0_i32_1 = arith.constant 0 : i32
    %c0_i32_2 = arith.constant 0 : i32
    return %c0_i32, %c0_i32_0, %c0_i32_1 : i32, i32, i32
  }
  func.func @transform_30(%arg0: i32) -> (i32, i32, i32, i32) {
    %c0_i32 = arith.constant 0 : i32
    %c0_i32_0 = arith.constant 0 : i32
    %c0_i32_1 = arith.constant 0 : i32
    %c0_i32_2 = arith.constant 0 : i32
    %c0_i32_3 = arith.constant 0 : i32
    return %c0_i32, %c0_i32_0, %c0_i32_1, %c0_i32_2 : i32, i32, i32, i32
  }
  func.func @transform_31(%arg0: i32) -> (i32, i32, i32) {
    %c0_i32 = arith.constant 0 : i32
    %c0_i32_0 = arith.constant 0 : i32
    %c0_i32_1 = arith.constant 0 : i32
    %c0_i32_2 = arith.constant 0 : i32
    return %c0_i32, %c0_i32_0, %c0_i32_1 : i32, i32, i32
  }
  func.func @transform_32(%arg0: i32) -> (i32, i32, i32) {
    %c0_i32 = arith.constant 0 : i32
    %c0_i32_0 = arith.constant 0 : i32
    %c0_i32_1 = arith.constant 0 : i32
    %c0_i32_2 = arith.constant 0 : i32
    return %c0_i32, %c0_i32_0, %c0_i32_1 : i32, i32, i32
  }
  func.func @transform_33(%arg0: i32) -> (i32, i32, i32) {
    %c0_i32 = arith.constant 0 : i32
    %c0_i32_0 = arith.constant 0 : i32
    %c0_i32_1 = arith.constant 0 : i32
    %c0_i32_2 = arith.constant 0 : i32
    return %c0_i32, %c0_i32_0, %c0_i32_1 : i32, i32, i32
  }
  func.func @transform_34(%arg0: i32) -> (i32, i32, i32) {
    %c0_i32 = arith.constant 0 : i32
    %c0_i32_0 = arith.constant 0 : i32
    %c0_i32_1 = arith.constant 0 : i32
    %c0_i32_2 = arith.constant 0 : i32
    return %c0_i32, %c0_i32_0, %c0_i32_1 : i32, i32, i32
  }
  func.func @transform_35(%arg0: i32) -> (i32, i32, i32) {
    %c0_i32 = arith.constant 0 : i32
    %c0_i32_0 = arith.constant 0 : i32
    %c0_i32_1 = arith.constant 0 : i32
    %c0_i32_2 = arith.constant 0 : i32
    return %c0_i32, %c0_i32_0, %c0_i32_1 : i32, i32, i32
  }
  func.func @transform_36(%arg0: i32) -> (i32, i32, i32) {
    %c0_i32 = arith.constant 0 : i32
    %c0_i32_0 = arith.constant 0 : i32
    %c0_i32_1 = arith.constant 0 : i32
    %c0_i32_2 = arith.constant 0 : i32
    return %c0_i32, %c0_i32_0, %c0_i32_1 : i32, i32, i32
  }
  func.func @transform_37(%arg0: i32) -> (i32, i32, i32) {
    %c0_i32 = arith.constant 0 : i32
    %c0_i32_0 = arith.constant 0 : i32
    %c0_i32_1 = arith.constant 0 : i32
    %c0_i32_2 = arith.constant 0 : i32
    return %c0_i32, %c0_i32_0, %c0_i32_1 : i32, i32, i32
  }
  func.func @transform_38(%arg0: i32) -> (i32, i32) {
    %c0_i32 = arith.constant 0 : i32
    %c0_i32_0 = arith.constant 0 : i32
    %c0_i32_1 = arith.constant 0 : i32
    return %c0_i32, %c0_i32_0 : i32, i32
  }
  func.func @transform_39(%arg0: i32) -> (i32, i32) {
    %c0_i32 = arith.constant 0 : i32
    %c0_i32_0 = arith.constant 0 : i32
    %c0_i32_1 = arith.constant 0 : i32
    return %c0_i32, %c0_i32_0 : i32, i32
  }
  func.func @transform_40(%arg0: i32) -> (i32, i32, i32) {
    %c0_i32 = arith.constant 0 : i32
    %c0_i32_0 = arith.constant 0 : i32
    %c0_i32_1 = arith.constant 0 : i32
    return %arg0, %c0_i32, %c0_i32_0 : i32, i32, i32
  }
}

</mosaic_0001>

<llo_original>
// kernel: encoder_decoder_forward.1
$region0: #{encoder_decoder_forward.1}
  #allocation0 [shape = 'u32[]', space=smem, size = 0x4, offset = 0x4, fixed_abs, tag = 'smem constant byte address 0x4 - core index']
  #allocation1 [shape = 'u32[72,128]{1,0:T(1,128)}', space=vmem, size = 0x9000, scoped, tag = 'internal scratch']
  %s0 = inlined_call_operand.smem [shape: u32[41], index: -1, kind: input, shape index: {}]
  %s1 = sld [smem:[%s0]]
  %s2 = scalar_lea.smem %s0, 1
  %s3 = sld [smem:[%s2]]
  %s4 = scalar_lea.smem %s0, 2
  %s5 = sld [smem:[%s4]]
  %s6 = scalar_lea.smem %s0, 3
  %s7 = sld [smem:[%s6]]
  %s8 = scalar_lea.smem %s0, 4
  %s9 = sld [smem:[%s8]]
  %s10 = scalar_lea.smem %s0, 5
  %s11 = sld [smem:[%s10]]
  %s12 = scalar_lea.smem %s0, 6
  %s13 = sld [smem:[%s12]]
  %s14 = scalar_lea.smem %s0, 7
  %s15 = sld [smem:[%s14]]
  %s16 = scalar_lea.smem %s0, 8
  %s17 = sld [smem:[%s16]]
  %s18 = scalar_lea.smem %s0, 9
  %s19 = sld [smem:[%s18]]
  %s20 = scalar_lea.smem %s0, 10
  %s21 = sld [smem:[%s20]]
  %s22 = scalar_lea.smem %s0, 11
  %s23 = sld [smem:[%s22]]
  %s24 = scalar_lea.smem %s0, 12
  %s25 = sld [smem:[%s24]]
  %s26 = scalar_lea.smem %s0, 13
  %s27 = sld [smem:[%s26]]
  %s28 = scalar_lea.smem %s0, 14
  %s29 = sld [smem:[%s28]]
  %s30 = scalar_lea.smem %s0, 15
  %s31 = sld [smem:[%s30]]
  %s32 = scalar_lea.smem %s0, 16
  %s33 = sld [smem:[%s32]]
  %s34 = scalar_lea.smem %s0, 17
  %s35 = sld [smem:[%s34]]
  %s36 = scalar_lea.smem %s0, 18
  %s37 = sld [smem:[%s36]]
  %s38 = scalar_lea.smem %s0, 19
  %s39 = sld [smem:[%s38]]
  %s40 = scalar_lea.smem %s0, 20
  %s41 = sld [smem:[%s40]]
  %s42 = scalar_lea.smem %s0, 21
  %s43 = sld [smem:[%s42]]
  %s44 = scalar_lea.smem %s0, 22
  %s45 = sld [smem:[%s44]]
  %s46 = scalar_lea.smem %s0, 23
  %s47 = sld [smem:[%s46]]
  %s48 = scalar_lea.smem %s0, 24
  %s49 = sld [smem:[%s48]]
  %s50 = scalar_lea.smem %s0, 25
  %s51 = sld [smem:[%s50]]
  %s52 = scalar_lea.smem %s0, 26
  %s53 = sld [smem:[%s52]]
  %s54 = scalar_lea.smem %s0, 27
  %s55 = sld [smem:[%s54]]
  %s56 = scalar_lea.smem %s0, 28
  %s57 = sld [smem:[%s56]]
  %s58 = scalar_lea.smem %s0, 29
  %s59 = sld [smem:[%s58]]
  %s60 = scalar_lea.smem %s0, 30
  %s61 = sld [smem:[%s60]]
  %s62 = scalar_lea.smem %s0, 31
  %s63 = sld [smem:[%s62]]
  %s64 = scalar_lea.smem %s0, 32
  %s65 = sld [smem:[%s64]]
  %s66 = scalar_lea.smem %s0, 33
  %s67 = sld [smem:[%s66]]
  %s68 = scalar_lea.smem %s0, 34
  %s69 = sld [smem:[%s68]]
  %s70 = scalar_lea.smem %s0, 35
  %s71 = sld [smem:[%s70]]
  %s72 = scalar_lea.smem %s0, 36
  %s73 = sld [smem:[%s72]]
  %s74 = scalar_lea.smem %s0, 37
  %s75 = sld [smem:[%s74]]
  %s76 = scalar_lea.smem %s0, 38
  %s77 = sld [smem:[%s76]]
  %s78 = scalar_lea.smem %s0, 39
  %s79 = sld [smem:[%s78]]
  %s80 = scalar_lea.smem %s0, 40
  %s81 = sld [smem:[%s80]]
  %s82 = sld [smem:[#allocation0]]
  $region197: #{encoder_decoder_forward.1} parent=0
    _
  %s84 = ssub.s32 1, %s82
  %s85 = scalar_select 0, %s84, %s82
  $region1: #{encoder_decoder_forward.1} parent=0
    #allocation2 [shape = 'u8[512]{0}', space=vmem, size = 0x400, scoped, tag = 'input window, operand 39, single buffered']
    #allocation3 [shape = 's32[2]{0}', space=sflag, size = 0x8, scoped, tag = 'scoped memory for encoder_decoder_forward.1']
    #allocation4 [shape = 's32[2]{0}', space=sflag, size = 0x8, scoped, tag = 'scoped memory for encoder_decoder_forward.1']
    #allocation5 [shape = 'u8[8192]{0}', space=vmem, size = 0x2000, scoped, tag = 'output window, operand 0']
    %86 = vsyncpa [#allocation3], 0
    %87 = vsyncpa [#allocation4], 0
    %s88 = scalar_lea.sflag [#allocation4], 1
    %89 = vsyncpa %s88, 0
    loop: start=0, step=1, limit=4
    $region2: #{encoder_decoder_forward.1} parent=1 // loop_pre_header
      _
    $region3: #{encoder_decoder_forward.1} parent=1 // loop_header
      %s91 = sphi 0, %s95
      %p92 = scmp.ge.s32.totalorder %s91, 4
      %s101 = sphi 0, %s103
      %s104 = sphi 0, %s101
      %s105 = sphi 0, %s104
      %s121 = sphi 0, %s105
      %s127 = sphi 0, %s129
      %s130 = sphi 0, %s127
      %s131 = sphi 0, %s130
      %s147 = sphi 0, %s131
      %s153 = sphi 0, %s155
      %s156 = sphi 0, %s153
      %s157 = sphi 0, %s156
      %s173 = sphi 0, %s157
      %s179 = sphi 0, %s181
      %s182 = sphi 0, %s179
      %s183 = sphi 0, %s182
      %s199 = sphi 0, %s183
      %s203 = sphi 0, %s203
      %s205 = sphi 0, %s203
      %s206 = sphi 0, %s205
      %s220 = sphi 0, %s206
      %s224 = sphi 0, %s224
      %s226 = sphi 0, %s224
      %s227 = sphi 0, %s226
      %s241 = sphi 0, %s227
      %s245 = sphi 0, %s245
      %s247 = sphi 0, %s245
      %s248 = sphi 0, %s247
      %s262 = sphi 0, %s248
      %s266 = sphi 0, %s266
      %s268 = sphi 0, %s266
      %s269 = sphi 0, %s268
      %s283 = sphi 0, %s269
      %s287 = sphi 0, %s287
      %s289 = sphi 0, %s287
      %s290 = sphi 0, %s289
      %s304 = sphi 0, %s290
      %s308 = sphi 0, %s308
      %s310 = sphi 0, %s308
      %s311 = sphi 0, %s310
      %s325 = sphi 0, %s311
      %s329 = sphi 0, %s329
      %s331 = sphi 0, %s329
      %s332 = sphi 0, %s331
      %s346 = sphi 0, %s332
      %s350 = sphi 0, %s350
      %s352 = sphi 0, %s350
      %s353 = sphi 0, %s352
      %s367 = sphi 0, %s353
      %s371 = sphi 0, %s371
      %s373 = sphi 0, %s371
      %s374 = sphi 0, %s373
      %s388 = sphi 0, %s374
      %s392 = sphi 0, %s392
      %s394 = sphi 0, %s392
      %s395 = sphi 0, %s394
      %s409 = sphi 0, %s395
      %s413 = sphi 0, %s413
      %s415 = sphi 0, %s413
      %s416 = sphi 0, %s415
      %s430 = sphi 0, %s416
      %s434 = sphi 0, %s434
      %s436 = sphi 0, %s434
      %s437 = sphi 0, %s436
      %s451 = sphi 0, %s437
      %s455 = sphi 0, %s455
      %s457 = sphi 0, %s455
      %s458 = sphi 0, %s457
      %s472 = sphi 0, %s458
      %s476 = sphi 0, %s476
      %s478 = sphi 0, %s476
      %s479 = sphi 0, %s478
      %s493 = sphi 0, %s479
      %s497 = sphi 0, %s497
      %s499 = sphi 0, %s497
      %s500 = sphi 0, %s499
      %s514 = sphi 0, %s500
      %s518 = sphi 0, %s518
      %s520 = sphi 0, %s518
      %s521 = sphi 0, %s520
      %s535 = sphi 0, %s521
      %s539 = sphi 0, %s539
      %s541 = sphi 0, %s539
      %s542 = sphi 0, %s541
      %s556 = sphi 0, %s542
      %s560 = sphi 0, %s560
      %s562 = sphi 0, %s560
      %s563 = sphi 0, %s562
      %s577 = sphi 0, %s563
      %s581 = sphi 0, %s581
      %s583 = sphi 0, %s581
      %s584 = sphi 0, %s583
      %s598 = sphi 0, %s584
      %s602 = sphi 0, %s602
      %s604 = sphi 0, %s602
      %s605 = sphi 0, %s604
      %s619 = sphi 0, %s605
      %s623 = sphi 0, %s623
      %s625 = sphi 0, %s623
      %s626 = sphi 0, %s625
      %s640 = sphi 0, %s626
      %s644 = sphi 0, %s644
      %s646 = sphi 0, %s644
      %s647 = sphi 0, %s646
      %s661 = sphi 0, %s647
      %s665 = sphi 0, %s665
      %s667 = sphi 0, %s665
      %s668 = sphi 0, %s667
      %s682 = sphi 0, %s668
      %s686 = sphi 0, %s686
      %s688 = sphi 0, %s686
      %s689 = sphi 0, %s688
      %s703 = sphi 0, %s689
      %s707 = sphi 0, %s707
      %s709 = sphi 0, %s707
      %s710 = sphi 0, %s709
      %s724 = sphi 0, %s710
      %s728 = sphi 0, %s728
      %s730 = sphi 0, %s728
      %s731 = sphi 0, %s730
      %s745 = sphi 0, %s731
      %s749 = sphi 0, %s749
      %s751 = sphi 0, %s749
      %s752 = sphi 0, %s751
      %s766 = sphi 0, %s752
      %s770 = sphi 0, %s770
      %s772 = sphi 0, %s770
      %s773 = sphi 0, %s772
      %s787 = sphi 0, %s773
      %s791 = sphi 0, %s791
      %s793 = sphi 0, %s791
      %s794 = sphi 0, %s793
      %s808 = sphi 0, %s794
      %s812 = sphi 0, %s812
      %s814 = sphi 0, %s812
      %s815 = sphi 0, %s814
      %s829 = sphi 0, %s815
      %s833 = sphi 0, %s833
      %s835 = sphi 0, %s833
      %s836 = sphi 0, %s835
      %s850 = sphi 0, %s836
      %s854 = sphi 0, %s854
      %s856 = sphi 0, %s854
      %s857 = sphi 0, %s856
      %s871 = sphi 0, %s857
      %s875 = sphi 0, %s875
      %s877 = sphi 0, %s875
      %s878 = sphi 0, %s877
      %s892 = sphi 0, %s878
      %s896 = sphi 0, %s896
      %s898 = sphi 0, %s896
      %s899 = sphi 0, %s898
      %s913 = sphi 0, %s899
      %s917 = sphi 0, %s917
      %s919 = sphi 0, %s917
      %s920 = sphi 0, %s919
      %s934 = sphi 0, %s920
      %s938 = sphi 0, %s938
      %s940 = sphi 0, %s938
      %s941 = sphi 0, %s940
      %s955 = sphi 0, %s941
      %s961 = sphi 0, %s963
      %s964 = sphi 0, %s961
      %s965 = sphi 0, %s964
      %s981 = sphi 0, %s965
    $region4: #{encoder_decoder_forward.1} parent=1 // loop_header_branch
      %94 = sbr.rel (%p92) target = $region8
    $region5: #{encoder_decoder_forward.1} parent=1 // loop_body
      %s96 = ssub.s32 %s91, 1
      %s97 = ssub.s32 %s91, 2
      %s98 = sadd.s32 %s91, 1
      %s99 = ssub.s32 %s91, %s98
      %p100 = scmp.eq.s32.totalorder %s99, 0
      %s102 = sadd.s32 %s101, 1
      %s103 = scalar_select %p100, %s101, %s102
      %p106 = pneg %p100
      %p107 = scmp.eq.s32.totalorder %s91, 1
      %p108 = por %p106, %p107
      %p109 = scmp.ne.s32.totalorder %s101, %s104
      %p110 = scmp.eq.s32.totalorder %s91, 0
      %p111 = por %p109, %p110
      %p112 = scmp.ne.s32.totalorder %s101, %s104
      %p113 = scmp.eq.s32.totalorder %s96, 1
      %p114 = por %p112, %p113
      %p115 = scmp.ne.s32.totalorder %s104, %s105
      %p116 = scmp.eq.s32.totalorder %s96, 0
      %p117 = por %p115, %p116
      %p118 = scmp.ne.s32.totalorder %s104, %s105
      %p119 = scmp.eq.s32.totalorder %s97, 1
      %p120 = por %p118, %p119
      %p122 = scmp.ne.s32.totalorder %s105, %s121
      %p123 = scmp.eq.s32.totalorder %s97, 0
      %p124 = por %p122, %p123
      %s125 = ssub.s32 %s91, %s98
      %p126 = scmp.eq.s32.totalorder %s125, 0
      %s128 = sadd.s32 %s127, 1
      %s129 = scalar_select %p126, %s127, %s128
      %p132 = pneg %p126
      %p133 = scmp.eq.s32.totalorder %s91, 1
      %p134 = por %p132, %p133
      %p135 = scmp.ne.s32.totalorder %s127, %s130
      %p136 = scmp.eq.s32.totalorder %s91, 0
      %p137 = por %p135, %p136
      %p138 = scmp.ne.s32.totalorder %s127, %s130
      %p139 = scmp.eq.s32.totalorder %s96, 1
      %p140 = por %p138, %p139
      %p141 = scmp.ne.s32.totalorder %s130, %s131
      %p142 = scmp.eq.s32.totalorder %s96, 0
      %p143 = por %p141, %p142
      %p144 = scmp.ne.s32.totalorder %s130, %s131
      %p145 = scmp.eq.s32.totalorder %s97, 1
      %p146 = por %p144, %p145
      %p148 = scmp.ne.s32.totalorder %s131, %s147
      %p149 = scmp.eq.s32.totalorder %s97, 0
      %p150 = por %p148, %p149
      %s151 = ssub.s32 %s91, %s98
      %p152 = scmp.eq.s32.totalorder %s151, 0
      %s154 = sadd.s32 %s153, 1
      %s155 = scalar_select %p152, %s153, %s154
      %p158 = pneg %p152
      %p159 = scmp.eq.s32.totalorder %s91, 1
      %p160 = por %p158, %p159
      %p161 = scmp.ne.s32.totalorder %s153, %s156
      %p162 = scmp.eq.s32.totalorder %s91, 0
      %p163 = por %p161, %p162
      %p164 = scmp.ne.s32.totalorder %s153, %s156
      %p165 = scmp.eq.s32.totalorder %s96, 1
      %p166 = por %p164, %p165
      %p167 = scmp.ne.s32.totalorder %s156, %s157
      %p168 = scmp.eq.s32.totalorder %s96, 0
      %p169 = por %p167, %p168
      %p170 = scmp.ne.s32.totalorder %s156, %s157
      %p171 = scmp.eq.s32.totalorder %s97, 1
      %p172 = por %p170, %p171
      %p174 = scmp.ne.s32.totalorder %s157, %s173
      %p175 = scmp.eq.s32.totalorder %s97, 0
      %p176 = por %p174, %p175
      %s177 = ssub.s32 %s91, %s98
      %p178 = scmp.eq.s32.totalorder %s177, 0
      %s180 = sadd.s32 %s179, 1
      %s181 = scalar_select %p178, %s179, %s180
      %p184 = pneg %p178
      %p185 = scmp.eq.s32.totalorder %s91, 1
      %p186 = por %p184, %p185
      %p187 = scmp.ne.s32.totalorder %s179, %s182
      %p188 = scmp.eq.s32.totalorder %s91, 0
      %p189 = por %p187, %p188
      %p190 = scmp.ne.s32.totalorder %s179, %s182
      %p191 = scmp.eq.s32.totalorder %s96, 1
      %p192 = por %p190, %p191
      %p193 = scmp.ne.s32.totalorder %s182, %s183
      %p194 = scmp.eq.s32.totalorder %s96, 0
      %p195 = por %p193, %p194
      %p196 = scmp.ne.s32.totalorder %s182, %s183
      %p197 = scmp.eq.s32.totalorder %s97, 1
      %p198 = por %p196, %p197
      %p200 = scmp.ne.s32.totalorder %s183, %s199
      %p201 = scmp.eq.s32.totalorder %s97, 0
      %p202 = por %p200, %p201
      %s204 = sadd.s32 %s203, 1
      %p207 = scmp.eq.s32.totalorder %s91, 1
      %p208 = scmp.ne.s32.totalorder %s203, %s205
      %p209 = scmp.eq.s32.totalorder %s91, 0
      %p210 = por %p208, %p209
      %p211 = scmp.ne.s32.totalorder %s203, %s205
      %p212 = scmp.eq.s32.totalorder %s96, 1
      %p213 = por %p211, %p212
      %p214 = scmp.ne.s32.totalorder %s205, %s206
      %p215 = scmp.eq.s32.totalorder %s96, 0
      %p216 = por %p214, %p215
      %p217 = scmp.ne.s32.totalorder %s205, %s206
      %p218 = scmp.eq.s32.totalorder %s97, 1
      %p219 = por %p217, %p218
      %p221 = scmp.ne.s32.totalorder %s206, %s220
      %p222 = scmp.eq.s32.totalorder %s97, 0
      %p223 = por %p221, %p222
      %s225 = sadd.s32 %s224, 1
      %p228 = scmp.eq.s32.totalorder %s91, 1
      %p229 = scmp.ne.s32.totalorder %s224, %s226
      %p230 = scmp.eq.s32.totalorder %s91, 0
      %p231 = por %p229, %p230
      %p232 = scmp.ne.s32.totalorder %s224, %s226
      %p233 = scmp.eq.s32.totalorder %s96, 1
      %p234 = por %p232, %p233
      %p235 = scmp.ne.s32.totalorder %s226, %s227
      %p236 = scmp.eq.s32.totalorder %s96, 0
      %p237 = por %p235, %p236
      %p238 = scmp.ne.s32.totalorder %s226, %s227
      %p239 = scmp.eq.s32.totalorder %s97, 1
      %p240 = por %p238, %p239
      %p242 = scmp.ne.s32.totalorder %s227, %s241
      %p243 = scmp.eq.s32.totalorder %s97, 0
      %p244 = por %p242, %p243
      %s246 = sadd.s32 %s245, 1
      %p249 = scmp.eq.s32.totalorder %s91, 1
      %p250 = scmp.ne.s32.totalorder %s245, %s247
      %p251 = scmp.eq.s32.totalorder %s91, 0
      %p252 = por %p250, %p251
      %p253 = scmp.ne.s32.totalorder %s245, %s247
      %p254 = scmp.eq.s32.totalorder %s96, 1
      %p255 = por %p253, %p254
      %p256 = scmp.ne.s32.totalorder %s247, %s248
      %p257 = scmp.eq.s32.totalorder %s96, 0
      %p258 = por %p256, %p257
      %p259 = scmp.ne.s32.totalorder %s247, %s248
      %p260 = scmp.eq.s32.totalorder %s97, 1
      %p261 = por %p259, %p260
      %p263 = scmp.ne.s32.totalorder %s248, %s262
      %p264 = scmp.eq.s32.totalorder %s97, 0
      %p265 = por %p263, %p264
      %s267 = sadd.s32 %s266, 1
      %p270 = scmp.eq.s32.totalorder %s91, 1
      %p271 = scmp.ne.s32.totalorder %s266, %s268
      %p272 = scmp.eq.s32.totalorder %s91, 0
      %p273 = por %p271, %p272
      %p274 = scmp.ne.s32.totalorder %s266, %s268
      %p275 = scmp.eq.s32.totalorder %s96, 1
      %p276 = por %p274, %p275
      %p277 = scmp.ne.s32.totalorder %s268, %s269
      %p278 = scmp.eq.s32.totalorder %s96, 0
      %p279 = por %p277, %p278
      %p280 = scmp.ne.s32.totalorder %s268, %s269
      %p281 = scmp.eq.s32.totalorder %s97, 1
      %p282 = por %p280, %p281
      %p284 = scmp.ne.s32.totalorder %s269, %s283
      %p285 = scmp.eq.s32.totalorder %s97, 0
      %p286 = por %p284, %p285
      %s288 = sadd.s32 %s287, 1
      %p291 = scmp.eq.s32.totalorder %s91, 1
      %p292 = scmp.ne.s32.totalorder %s287, %s289
      %p293 = scmp.eq.s32.totalorder %s91, 0
      %p294 = por %p292, %p293
      %p295 = scmp.ne.s32.totalorder %s287, %s289
      %p296 = scmp.eq.s32.totalorder %s96, 1
      %p297 = por %p295, %p296
      %p298 = scmp.ne.s32.totalorder %s289, %s290
      %p299 = scmp.eq.s32.totalorder %s96, 0
      %p300 = por %p298, %p299
      %p301 = scmp.ne.s32.totalorder %s289, %s290
      %p302 = scmp.eq.s32.totalorder %s97, 1
      %p303 = por %p301, %p302
      %p305 = scmp.ne.s32.totalorder %s290, %s304
      %p306 = scmp.eq.s32.totalorder %s97, 0
      %p307 = por %p305, %p306
      %s309 = sadd.s32 %s308, 1
      %p312 = scmp.eq.s32.totalorder %s91, 1
      %p313 = scmp.ne.s32.totalorder %s308, %s310
      %p314 = scmp.eq.s32.totalorder %s91, 0
      %p315 = por %p313, %p314
      %p316 = scmp.ne.s32.totalorder %s308, %s310
      %p317 = scmp.eq.s32.totalorder %s96, 1
      %p318 = por %p316, %p317
      %p319 = scmp.ne.s32.totalorder %s310, %s311
      %p320 = scmp.eq.s32.totalorder %s96, 0
      %p321 = por %p319, %p320
      %p322 = scmp.ne.s32.totalorder %s310, %s311
      %p323 = scmp.eq.s32.totalorder %s97, 1
      %p324 = por %p322, %p323
      %p326 = scmp.ne.s32.totalorder %s311, %s325
      %p327 = scmp.eq.s32.totalorder %s97, 0
      %p328 = por %p326, %p327
      %s330 = sadd.s32 %s329, 1
      %p333 = scmp.eq.s32.totalorder %s91, 1
      %p334 = scmp.ne.s32.totalorder %s329, %s331
      %p335 = scmp.eq.s32.totalorder %s91, 0
      %p336 = por %p334, %p335
      %p337 = scmp.ne.s32.totalorder %s329, %s331
      %p338 = scmp.eq.s32.totalorder %s96, 1
      %p339 = por %p337, %p338
      %p340 = scmp.ne.s32.totalorder %s331, %s332
      %p341 = scmp.eq.s32.totalorder %s96, 0
      %p342 = por %p340, %p341
      %p343 = scmp.ne.s32.totalorder %s331, %s332
      %p344 = scmp.eq.s32.totalorder %s97, 1
      %p345 = por %p343, %p344
      %p347 = scmp.ne.s32.totalorder %s332, %s346
      %p348 = scmp.eq.s32.totalorder %s97, 0
      %p349 = por %p347, %p348
      %s351 = sadd.s32 %s350, 1
      %p354 = scmp.eq.s32.totalorder %s91, 1
      %p355 = scmp.ne.s32.totalorder %s350, %s352
      %p356 = scmp.eq.s32.totalorder %s91, 0
      %p357 = por %p355, %p356
      %p358 = scmp.ne.s32.totalorder %s350, %s352
      %p359 = scmp.eq.s32.totalorder %s96, 1
      %p360 = por %p358, %p359
      %p361 = scmp.ne.s32.totalorder %s352, %s353
      %p362 = scmp.eq.s32.totalorder %s96, 0
      %p363 = por %p361, %p362
      %p364 = scmp.ne.s32.totalorder %s352, %s353
      %p365 = scmp.eq.s32.totalorder %s97, 1
      %p366 = por %p364, %p365
      %p368 = scmp.ne.s32.totalorder %s353, %s367
      %p369 = scmp.eq.s32.totalorder %s97, 0
      %p370 = por %p368, %p369
      %s372 = sadd.s32 %s371, 1
      %p375 = scmp.eq.s32.totalorder %s91, 1
      %p376 = scmp.ne.s32.totalorder %s371, %s373
      %p377 = scmp.eq.s32.totalorder %s91, 0
      %p378 = por %p376, %p377
      %p379 = scmp.ne.s32.totalorder %s371, %s373
      %p380 = scmp.eq.s32.totalorder %s96, 1
      %p381 = por %p379, %p380
      %p382 = scmp.ne.s32.totalorder %s373, %s374
      %p383 = scmp.eq.s32.totalorder %s96, 0
      %p384 = por %p382, %p383
      %p385 = scmp.ne.s32.totalorder %s373, %s374
      %p386 = scmp.eq.s32.totalorder %s97, 1
      %p387 = por %p385, %p386
      %p389 = scmp.ne.s32.totalorder %s374, %s388
      %p390 = scmp.eq.s32.totalorder %s97, 0
      %p391 = por %p389, %p390
      %s393 = sadd.s32 %s392, 1
      %p396 = scmp.eq.s32.totalorder %s91, 1
      %p397 = scmp.ne.s32.totalorder %s392, %s394
      %p398 = scmp.eq.s32.totalorder %s91, 0
      %p399 = por %p397, %p398
      %p400 = scmp.ne.s32.totalorder %s392, %s394
      %p401 = scmp.eq.s32.totalorder %s96, 1
      %p402 = por %p400, %p401
      %p403 = scmp.ne.s32.totalorder %s394, %s395
      %p404 = scmp.eq.s32.totalorder %s96, 0
      %p405 = por %p403, %p404
      %p406 = scmp.ne.s32.totalorder %s394, %s395
      %p407 = scmp.eq.s32.totalorder %s97, 1
      %p408 = por %p406, %p407
      %p410 = scmp.ne.s32.totalorder %s395, %s409
      %p411 = scmp.eq.s32.totalorder %s97, 0
      %p412 = por %p410, %p411
      %s414 = sadd.s32 %s413, 1
      %p417 = scmp.eq.s32.totalorder %s91, 1
      %p418 = scmp.ne.s32.totalorder %s413, %s415
      %p419 = scmp.eq.s32.totalorder %s91, 0
      %p420 = por %p418, %p419
      %p421 = scmp.ne.s32.totalorder %s413, %s415
      %p422 = scmp.eq.s32.totalorder %s96, 1
      %p423 = por %p421, %p422
      %p424 = scmp.ne.s32.totalorder %s415, %s416
      %p425 = scmp.eq.s32.totalorder %s96, 0
      %p426 = por %p424, %p425
      %p427 = scmp.ne.s32.totalorder %s415, %s416
      %p428 = scmp.eq.s32.totalorder %s97, 1
      %p429 = por %p427, %p428
      %p431 = scmp.ne.s32.totalorder %s416, %s430
      %p432 = scmp.eq.s32.totalorder %s97, 0
      %p433 = por %p431, %p432
      %s435 = sadd.s32 %s434, 1
      %p438 = scmp.eq.s32.totalorder %s91, 1
      %p439 = scmp.ne.s32.totalorder %s434, %s436
      %p440 = scmp.eq.s32.totalorder %s91, 0
      %p441 = por %p439, %p440
      %p442 = scmp.ne.s32.totalorder %s434, %s436
      %p443 = scmp.eq.s32.totalorder %s96, 1
      %p444 = por %p442, %p443
      %p445 = scmp.ne.s32.totalorder %s436, %s437
      %p446 = scmp.eq.s32.totalorder %s96, 0
      %p447 = por %p445, %p446
      %p448 = scmp.ne.s32.totalorder %s436, %s437
      %p449 = scmp.eq.s32.totalorder %s97, 1
      %p450 = por %p448, %p449
      %p452 = scmp.ne.s32.totalorder %s437, %s451
      %p453 = scmp.eq.s32.totalorder %s97, 0
      %p454 = por %p452, %p453
      %s456 = sadd.s32 %s455, 1
      %p459 = scmp.eq.s32.totalorder %s91, 1
      %p460 = scmp.ne.s32.totalorder %s455, %s457
      %p461 = scmp.eq.s32.totalorder %s91, 0
      %p462 = por %p460, %p461
      %p463 = scmp.ne.s32.totalorder %s455, %s457
      %p464 = scmp.eq.s32.totalorder %s96, 1
      %p465 = por %p463, %p464
      %p466 = scmp.ne.s32.totalorder %s457, %s458
      %p467 = scmp.eq.s32.totalorder %s96, 0
      %p468 = por %p466, %p467
      %p469 = scmp.ne.s32.totalorder %s457, %s458
      %p470 = scmp.eq.s32.totalorder %s97, 1
      %p471 = por %p469, %p470
      %p473 = scmp.ne.s32.totalorder %s458, %s472
      %p474 = scmp.eq.s32.totalorder %s97, 0
      %p475 = por %p473, %p474
      %s477 = sadd.s32 %s476, 1
      %p480 = scmp.eq.s32.totalorder %s91, 1
      %p481 = scmp.ne.s32.totalorder %s476, %s478
      %p482 = scmp.eq.s32.totalorder %s91, 0
      %p483 = por %p481, %p482
      %p484 = scmp.ne.s32.totalorder %s476, %s478
      %p485 = scmp.eq.s32.totalorder %s96, 1
      %p486 = por %p484, %p485
      %p487 = scmp.ne.s32.totalorder %s478, %s479
      %p488 = scmp.eq.s32.totalorder %s96, 0
      %p489 = por %p487, %p488
      %p490 = scmp.ne.s32.totalorder %s478, %s479
      %p491 = scmp.eq.s32.totalorder %s97, 1
      %p492 = por %p490, %p491
      %p494 = scmp.ne.s32.totalorder %s479, %s493
      %p495 = scmp.eq.s32.totalorder %s97, 0
      %p496 = por %p494, %p495
      %s498 = sadd.s32 %s497, 1
      %p501 = scmp.eq.s32.totalorder %s91, 1
      %p502 = scmp.ne.s32.totalorder %s497, %s499
      %p503 = scmp.eq.s32.totalorder %s91, 0
      %p504 = por %p502, %p503
      %p505 = scmp.ne.s32.totalorder %s497, %s499
      %p506 = scmp.eq.s32.totalorder %s96, 1
      %p507 = por %p505, %p506
      %p508 = scmp.ne.s32.totalorder %s499, %s500
      %p509 = scmp.eq.s32.totalorder %s96, 0
      %p510 = por %p508, %p509
      %p511 = scmp.ne.s32.totalorder %s499, %s500
      %p512 = scmp.eq.s32.totalorder %s97, 1
      %p513 = por %p511, %p512
      %p515 = scmp.ne.s32.totalorder %s500, %s514
      %p516 = scmp.eq.s32.totalorder %s97, 0
      %p517 = por %p515, %p516
      %s519 = sadd.s32 %s518, 1
      %p522 = scmp.eq.s32.totalorder %s91, 1
      %p523 = scmp.ne.s32.totalorder %s518, %s520
      %p524 = scmp.eq.s32.totalorder %s91, 0
      %p525 = por %p523, %p524
      %p526 = scmp.ne.s32.totalorder %s518, %s520
      %p527 = scmp.eq.s32.totalorder %s96, 1
      %p528 = por %p526, %p527
      %p529 = scmp.ne.s32.totalorder %s520, %s521
      %p530 = scmp.eq.s32.totalorder %s96, 0
      %p531 = por %p529, %p530
      %p532 = scmp.ne.s32.totalorder %s520, %s521
      %p533 = scmp.eq.s32.totalorder %s97, 1
      %p534 = por %p532, %p533
      %p536 = scmp.ne.s32.totalorder %s521, %s535
      %p537 = scmp.eq.s32.totalorder %s97, 0
      %p538 = por %p536, %p537
      %s540 = sadd.s32 %s539, 1
      %p543 = scmp.eq.s32.totalorder %s91, 1
      %p544 = scmp.ne.s32.totalorder %s539, %s541
      %p545 = scmp.eq.s32.totalorder %s91, 0
      %p546 = por %p544, %p545
      %p547 = scmp.ne.s32.totalorder %s539, %s541
      %p548 = scmp.eq.s32.totalorder %s96, 1
      %p549 = por %p547, %p548
      %p550 = scmp.ne.s32.totalorder %s541, %s542
      %p551 = scmp.eq.s32.totalorder %s96, 0
      %p552 = por %p550, %p551
      %p553 = scmp.ne.s32.totalorder %s541, %s542
      %p554 = scmp.eq.s32.totalorder %s97, 1
      %p555 = por %p553, %p554
      %p557 = scmp.ne.s32.totalorder %s542, %s556
      %p558 = scmp.eq.s32.totalorder %s97, 0
      %p559 = por %p557, %p558
      %s561 = sadd.s32 %s560, 1
      %p564 = scmp.eq.s32.totalorder %s91, 1
      %p565 = scmp.ne.s32.totalorder %s560, %s562
      %p566 = scmp.eq.s32.totalorder %s91, 0
      %p567 = por %p565, %p566
      %p568 = scmp.ne.s32.totalorder %s560, %s562
      %p569 = scmp.eq.s32.totalorder %s96, 1
      %p570 = por %p568, %p569
      %p571 = scmp.ne.s32.totalorder %s562, %s563
      %p572 = scmp.eq.s32.totalorder %s96, 0
      %p573 = por %p571, %p572
      %p574 = scmp.ne.s32.totalorder %s562, %s563
      %p575 = scmp.eq.s32.totalorder %s97, 1
      %p576 = por %p574, %p575
      %p578 = scmp.ne.s32.totalorder %s563, %s577
      %p579 = scmp.eq.s32.totalorder %s97, 0
      %p580 = por %p578, %p579
      %s582 = sadd.s32 %s581, 1
      %p585 = scmp.eq.s32.totalorder %s91, 1
      %p586 = scmp.ne.s32.totalorder %s581, %s583
      %p587 = scmp.eq.s32.totalorder %s91, 0
      %p588 = por %p586, %p587
      %p589 = scmp.ne.s32.totalorder %s581, %s583
      %p590 = scmp.eq.s32.totalorder %s96, 1
      %p591 = por %p589, %p590
      %p592 = scmp.ne.s32.totalorder %s583, %s584
      %p593 = scmp.eq.s32.totalorder %s96, 0
      %p594 = por %p592, %p593
      %p595 = scmp.ne.s32.totalorder %s583, %s584
      %p596 = scmp.eq.s32.totalorder %s97, 1
      %p597 = por %p595, %p596
      %p599 = scmp.ne.s32.totalorder %s584, %s598
      %p600 = scmp.eq.s32.totalorder %s97, 0
      %p601 = por %p599, %p600
      %s603 = sadd.s32 %s602, 1
      %p606 = scmp.eq.s32.totalorder %s91, 1
      %p607 = scmp.ne.s32.totalorder %s602, %s604
      %p608 = scmp.eq.s32.totalorder %s91, 0
      %p609 = por %p607, %p608
      %p610 = scmp.ne.s32.totalorder %s602, %s604
      %p611 = scmp.eq.s32.totalorder %s96, 1
      %p612 = por %p610, %p611
      %p613 = scmp.ne.s32.totalorder %s604, %s605
      %p614 = scmp.eq.s32.totalorder %s96, 0
      %p615 = por %p613, %p614
      %p616 = scmp.ne.s32.totalorder %s604, %s605
      %p617 = scmp.eq.s32.totalorder %s97, 1
      %p618 = por %p616, %p617
      %p620 = scmp.ne.s32.totalorder %s605, %s619
      %p621 = scmp.eq.s32.totalorder %s97, 0
      %p622 = por %p620, %p621
      %s624 = sadd.s32 %s623, 1
      %p627 = scmp.eq.s32.totalorder %s91, 1
      %p628 = scmp.ne.s32.totalorder %s623, %s625
      %p629 = scmp.eq.s32.totalorder %s91, 0
      %p630 = por %p628, %p629
      %p631 = scmp.ne.s32.totalorder %s623, %s625
      %p632 = scmp.eq.s32.totalorder %s96, 1
      %p633 = por %p631, %p632
      %p634 = scmp.ne.s32.totalorder %s625, %s626
      %p635 = scmp.eq.s32.totalorder %s96, 0
      %p636 = por %p634, %p635
      %p637 = scmp.ne.s32.totalorder %s625, %s626
      %p638 = scmp.eq.s32.totalorder %s97, 1
      %p639 = por %p637, %p638
      %p641 = scmp.ne.s32.totalorder %s626, %s640
      %p642 = scmp.eq.s32.totalorder %s97, 0
      %p643 = por %p641, %p642
      %s645 = sadd.s32 %s644, 1
      %p648 = scmp.eq.s32.totalorder %s91, 1
      %p649 = scmp.ne.s32.totalorder %s644, %s646
      %p650 = scmp.eq.s32.totalorder %s91, 0
      %p651 = por %p649, %p650
      %p652 = scmp.ne.s32.totalorder %s644, %s646
      %p653 = scmp.eq.s32.totalorder %s96, 1
      %p654 = por %p652, %p653
      %p655 = scmp.ne.s32.totalorder %s646, %s647
      %p656 = scmp.eq.s32.totalorder %s96, 0
      %p657 = por %p655, %p656
      %p658 = scmp.ne.s32.totalorder %s646, %s647
      %p659 = scmp.eq.s32.totalorder %s97, 1
      %p660 = por %p658, %p659
      %p662 = scmp.ne.s32.totalorder %s647, %s661
      %p663 = scmp.eq.s32.totalorder %s97, 0
      %p664 = por %p662, %p663
      %s666 = sadd.s32 %s665, 1
      %p669 = scmp.eq.s32.totalorder %s91, 1
      %p670 = scmp.ne.s32.totalorder %s665, %s667
      %p671 = scmp.eq.s32.totalorder %s91, 0
      %p672 = por %p670, %p671
      %p673 = scmp.ne.s32.totalorder %s665, %s667
      %p674 = scmp.eq.s32.totalorder %s96, 1
      %p675 = por %p673, %p674
      %p676 = scmp.ne.s32.totalorder %s667, %s668
      %p677 = scmp.eq.s32.totalorder %s96, 0
      %p678 = por %p676, %p677
      %p679 = scmp.ne.s32.totalorder %s667, %s668
      %p680 = scmp.eq.s32.totalorder %s97, 1
      %p681 = por %p679, %p680
      %p683 = scmp.ne.s32.totalorder %s668, %s682
      %p684 = scmp.eq.s32.totalorder %s97, 0
      %p685 = por %p683, %p684
      %s687 = sadd.s32 %s686, 1
      %p690 = scmp.eq.s32.totalorder %s91, 1
      %p691 = scmp.ne.s32.totalorder %s686, %s688
      %p692 = scmp.eq.s32.totalorder %s91, 0
      %p693 = por %p691, %p692
      %p694 = scmp.ne.s32.totalorder %s686, %s688
      %p695 = scmp.eq.s32.totalorder %s96, 1
      %p696 = por %p694, %p695
      %p697 = scmp.ne.s32.totalorder %s688, %s689
      %p698 = scmp.eq.s32.totalorder %s96, 0
      %p699 = por %p697, %p698
      %p700 = scmp.ne.s32.totalorder %s688, %s689
      %p701 = scmp.eq.s32.totalorder %s97, 1
      %p702 = por %p700, %p701
      %p704 = scmp.ne.s32.totalorder %s689, %s703
      %p705 = scmp.eq.s32.totalorder %s97, 0
      %p706 = por %p704, %p705
      %s708 = sadd.s32 %s707, 1
      %p711 = scmp.eq.s32.totalorder %s91, 1
      %p712 = scmp.ne.s32.totalorder %s707, %s709
      %p713 = scmp.eq.s32.totalorder %s91, 0
      %p714 = por %p712, %p713
      %p715 = scmp.ne.s32.totalorder %s707, %s709
      %p716 = scmp.eq.s32.totalorder %s96, 1
      %p717 = por %p715, %p716
      %p718 = scmp.ne.s32.totalorder %s709, %s710
      %p719 = scmp.eq.s32.totalorder %s96, 0
      %p720 = por %p718, %p719
      %p721 = scmp.ne.s32.totalorder %s709, %s710
      %p722 = scmp.eq.s32.totalorder %s97, 1
      %p723 = por %p721, %p722
      %p725 = scmp.ne.s32.totalorder %s710, %s724
      %p726 = scmp.eq.s32.totalorder %s97, 0
      %p727 = por %p725, %p726
      %s729 = sadd.s32 %s728, 1
      %p732 = scmp.eq.s32.totalorder %s91, 1
      %p733 = scmp.ne.s32.totalorder %s728, %s730
      %p734 = scmp.eq.s32.totalorder %s91, 0
      %p735 = por %p733, %p734
      %p736 = scmp.ne.s32.totalorder %s728, %s730
      %p737 = scmp.eq.s32.totalorder %s96, 1
      %p738 = por %p736, %p737
      %p739 = scmp.ne.s32.totalorder %s730, %s731
      %p740 = scmp.eq.s32.totalorder %s96, 0
      %p741 = por %p739, %p740
      %p742 = scmp.ne.s32.totalorder %s730, %s731
      %p743 = scmp.eq.s32.totalorder %s97, 1
      %p744 = por %p742, %p743
      %p746 = scmp.ne.s32.totalorder %s731, %s745
      %p747 = scmp.eq.s32.totalorder %s97, 0
      %p748 = por %p746, %p747
      %s750 = sadd.s32 %s749, 1
      %p753 = scmp.eq.s32.totalorder %s91, 1
      %p754 = scmp.ne.s32.totalorder %s749, %s751
      %p755 = scmp.eq.s32.totalorder %s91, 0
      %p756 = por %p754, %p755
      %p757 = scmp.ne.s32.totalorder %s749, %s751
      %p758 = scmp.eq.s32.totalorder %s96, 1
      %p759 = por %p757, %p758
      %p760 = scmp.ne.s32.totalorder %s751, %s752
      %p761 = scmp.eq.s32.totalorder %s96, 0
      %p762 = por %p760, %p761
      %p763 = scmp.ne.s32.totalorder %s751, %s752
      %p764 = scmp.eq.s32.totalorder %s97, 1
      %p765 = por %p763, %p764
      %p767 = scmp.ne.s32.totalorder %s752, %s766
      %p768 = scmp.eq.s32.totalorder %s97, 0
      %p769 = por %p767, %p768
      %s771 = sadd.s32 %s770, 1
      %p774 = scmp.eq.s32.totalorder %s91, 1
      %p775 = scmp.ne.s32.totalorder %s770, %s772
      %p776 = scmp.eq.s32.totalorder %s91, 0
      %p777 = por %p775, %p776
      %p778 = scmp.ne.s32.totalorder %s770, %s772
      %p779 = scmp.eq.s32.totalorder %s96, 1
      %p780 = por %p778, %p779
      %p781 = scmp.ne.s32.totalorder %s772, %s773
      %p782 = scmp.eq.s32.totalorder %s96, 0
      %p783 = por %p781, %p782
      %p784 = scmp.ne.s32.totalorder %s772, %s773
      %p785 = scmp.eq.s32.totalorder %s97, 1
      %p786 = por %p784, %p785
      %p788 = scmp.ne.s32.totalorder %s773, %s787
      %p789 = scmp.eq.s32.totalorder %s97, 0
      %p790 = por %p788, %p789
      %s792 = sadd.s32 %s791, 1
      %p795 = scmp.eq.s32.totalorder %s91, 1
      %p796 = scmp.ne.s32.totalorder %s791, %s793
      %p797 = scmp.eq.s32.totalorder %s91, 0
      %p798 = por %p796, %p797
      %p799 = scmp.ne.s32.totalorder %s791, %s793
      %p800 = scmp.eq.s32.totalorder %s96, 1
      %p801 = por %p799, %p800
      %p802 = scmp.ne.s32.totalorder %s793, %s794
      %p803 = scmp.eq.s32.totalorder %s96, 0
      %p804 = por %p802, %p803
      %p805 = scmp.ne.s32.totalorder %s793, %s794
      %p806 = scmp.eq.s32.totalorder %s97, 1
      %p807 = por %p805, %p806
      %p809 = scmp.ne.s32.totalorder %s794, %s808
      %p810 = scmp.eq.s32.totalorder %s97, 0
      %p811 = por %p809, %p810
      %s813 = sadd.s32 %s812, 1
      %p816 = scmp.eq.s32.totalorder %s91, 1
      %p817 = scmp.ne.s32.totalorder %s812, %s814
      %p818 = scmp.eq.s32.totalorder %s91, 0
      %p819 = por %p817, %p818
      %p820 = scmp.ne.s32.totalorder %s812, %s814
      %p821 = scmp.eq.s32.totalorder %s96, 1
      %p822 = por %p820, %p821
      %p823 = scmp.ne.s32.totalorder %s814, %s815
      %p824 = scmp.eq.s32.totalorder %s96, 0
      %p825 = por %p823, %p824
      %p826 = scmp.ne.s32.totalorder %s814, %s815
      %p827 = scmp.eq.s32.totalorder %s97, 1
      %p828 = por %p826, %p827
      %p830 = scmp.ne.s32.totalorder %s815, %s829
      %p831 = scmp.eq.s32.totalorder %s97, 0
      %p832 = por %p830, %p831
      %s834 = sadd.s32 %s833, 1
      %p837 = scmp.eq.s32.totalorder %s91, 1
      %p838 = scmp.ne.s32.totalorder %s833, %s835
      %p839 = scmp.eq.s32.totalorder %s91, 0
      %p840 = por %p838, %p839
      %p841 = scmp.ne.s32.totalorder %s833, %s835
      %p842 = scmp.eq.s32.totalorder %s96, 1
      %p843 = por %p841, %p842
      %p844 = scmp.ne.s32.totalorder %s835, %s836
      %p845 = scmp.eq.s32.totalorder %s96, 0
      %p846 = por %p844, %p845
      %p847 = scmp.ne.s32.totalorder %s835, %s836
      %p848 = scmp.eq.s32.totalorder %s97, 1
      %p849 = por %p847, %p848
      %p851 = scmp.ne.s32.totalorder %s836, %s850
      %p852 = scmp.eq.s32.totalorder %s97, 0
      %p853 = por %p851, %p852
      %s855 = sadd.s32 %s854, 1
      %p858 = scmp.eq.s32.totalorder %s91, 1
      %p859 = scmp.ne.s32.totalorder %s854, %s856
      %p860 = scmp.eq.s32.totalorder %s91, 0
      %p861 = por %p859, %p860
      %p862 = scmp.ne.s32.totalorder %s854, %s856
      %p863 = scmp.eq.s32.totalorder %s96, 1
      %p864 = por %p862, %p863
      %p865 = scmp.ne.s32.totalorder %s856, %s857
      %p866 = scmp.eq.s32.totalorder %s96, 0
      %p867 = por %p865, %p866
      %p868 = scmp.ne.s32.totalorder %s856, %s857
      %p869 = scmp.eq.s32.totalorder %s97, 1
      %p870 = por %p868, %p869
      %p872 = scmp.ne.s32.totalorder %s857, %s871
      %p873 = scmp.eq.s32.totalorder %s97, 0
      %p874 = por %p872, %p873
      %s876 = sadd.s32 %s875, 1
      %p879 = scmp.eq.s32.totalorder %s91, 1
      %p880 = scmp.ne.s32.totalorder %s875, %s877
      %p881 = scmp.eq.s32.totalorder %s91, 0
      %p882 = por %p880, %p881
      %p883 = scmp.ne.s32.totalorder %s875, %s877
      %p884 = scmp.eq.s32.totalorder %s96, 1
      %p885 = por %p883, %p884
      %p886 = scmp.ne.s32.totalorder %s877, %s878
      %p887 = scmp.eq.s32.totalorder %s96, 0
      %p888 = por %p886, %p887
      %p889 = scmp.ne.s32.totalorder %s877, %s878
      %p890 = scmp.eq.s32.totalorder %s97, 1
      %p891 = por %p889, %p890
      %p893 = scmp.ne.s32.totalorder %s878, %s892
      %p894 = scmp.eq.s32.totalorder %s97, 0
      %p895 = por %p893, %p894
      %s897 = sadd.s32 %s896, 1
      %p900 = scmp.eq.s32.totalorder %s91, 1
      %p901 = scmp.ne.s32.totalorder %s896, %s898
      %p902 = scmp.eq.s32.totalorder %s91, 0
      %p903 = por %p901, %p902
      %p904 = scmp.ne.s32.totalorder %s896, %s898
      %p905 = scmp.eq.s32.totalorder %s96, 1
      %p906 = por %p904, %p905
      %p907 = scmp.ne.s32.totalorder %s898, %s899
      %p908 = scmp.eq.s32.totalorder %s96, 0
      %p909 = por %p907, %p908
      %p910 = scmp.ne.s32.totalorder %s898, %s899
      %p911 = scmp.eq.s32.totalorder %s97, 1
      %p912 = por %p910, %p911
      %p914 = scmp.ne.s32.totalorder %s899, %s913
      %p915 = scmp.eq.s32.totalorder %s97, 0
      %p916 = por %p914, %p915
      %s918 = sadd.s32 %s917, 1
      %p921 = scmp.eq.s32.totalorder %s91, 1
      %p922 = scmp.ne.s32.totalorder %s917, %s919
      %p923 = scmp.eq.s32.totalorder %s91, 0
      %p924 = por %p922, %p923
      %p925 = scmp.ne.s32.totalorder %s917, %s919
      %p926 = scmp.eq.s32.totalorder %s96, 1
      %p927 = por %p925, %p926
      %p928 = scmp.ne.s32.totalorder %s919, %s920
      %p929 = scmp.eq.s32.totalorder %s96, 0
      %p930 = por %p928, %p929
      %p931 = scmp.ne.s32.totalorder %s919, %s920
      %p932 = scmp.eq.s32.totalorder %s97, 1
      %p933 = por %p931, %p932
      %p935 = scmp.ne.s32.totalorder %s920, %s934
      %p936 = scmp.eq.s32.totalorder %s97, 0
      %p937 = por %p935, %p936
      %s939 = sadd.s32 %s938, 1
      %p942 = scmp.eq.s32.totalorder %s91, 1
      %p943 = scmp.ne.s32.totalorder %s938, %s940
      %p944 = scmp.eq.s32.totalorder %s91, 0
      %p945 = por %p943, %p944
      %p946 = scmp.ne.s32.totalorder %s938, %s940
      %p947 = scmp.eq.s32.totalorder %s96, 1
      %p948 = por %p946, %p947
      %p949 = scmp.ne.s32.totalorder %s940, %s941
      %p950 = scmp.eq.s32.totalorder %s96, 0
      %p951 = por %p949, %p950
      %p952 = scmp.ne.s32.totalorder %s940, %s941
      %p953 = scmp.eq.s32.totalorder %s97, 1
      %p954 = por %p952, %p953
      %p956 = scmp.ne.s32.totalorder %s941, %s955
      %p957 = scmp.eq.s32.totalorder %s97, 0
      %p958 = por %p956, %p957
      %s959 = ssub.s32 %s91, %s98
      %p960 = scmp.eq.s32.totalorder %s959, 0
      %s962 = sadd.s32 %s961, 1
      %s963 = scalar_select %p960, %s961, %s962
      %p966 = pneg %p960
      %p967 = scmp.eq.s32.totalorder %s91, 1
      %p968 = por %p966, %p967
      %p969 = scmp.ne.s32.totalorder %s961, %s964
      %p970 = scmp.eq.s32.totalorder %s91, 0
      %p971 = por %p969, %p970
      %p972 = scmp.ne.s32.totalorder %s961, %s964
      %p973 = scmp.eq.s32.totalorder %s96, 1
      %p974 = por %p972, %p973
      %p975 = scmp.ne.s32.totalorder %s964, %s965
      %p976 = scmp.eq.s32.totalorder %s96, 0
      %p977 = por %p975, %p976
      %p978 = scmp.ne.s32.totalorder %s964, %s965
      %p979 = scmp.eq.s32.totalorder %s97, 1
      %p980 = por %p978, %p979
      %p982 = scmp.ne.s32.totalorder %s965, %s981
      %p983 = scmp.eq.s32.totalorder %s97, 0
      %p984 = por %p982, %p983
      %p985 = scmp.le.s32.totalorder 1, %s91
      %p986 = scmp.lt.s32.totalorder %s91, 3
      %p987 = pnand %p985, %p986
      %p988 = pneg %p987
      // Predicated region
      $region9: #{encoder_decoder_forward.1} parent=5 // pred_check
        _
      $region10: #{encoder_decoder_forward.1} parent=5 // pred_check_branch
        %990 = sbr.rel (%p987) target = $region12
      $region11: #{encoder_decoder_forward.1} parent=5 // pred_region
        %s991 = ssub.s32 %s91, 1
        // Predicated region
        $region13: #{encoder_decoder_forward.1} parent=11 // pred_check
          %p992 = pneg %p216
        $region14: #{encoder_decoder_forward.1} parent=11 // pred_check_branch
          %994 = sbr.rel (%p992) target = $region16
        $region15: #{encoder_decoder_forward.1} parent=11 // pred_region
          _
        $region16: #{encoder_decoder_forward.1} parent=11 // pred_fallthru
          _
        // Predicated region
        $region17: #{encoder_decoder_forward.1} parent=11 // pred_check
          %p995 = pneg %p237
        $region18: #{encoder_decoder_forward.1} parent=11 // pred_check_branch
          %997 = sbr.rel (%p995) target = $region20
        $region19: #{encoder_decoder_forward.1} parent=11 // pred_region
          _
        $region20: #{encoder_decoder_forward.1} parent=11 // pred_fallthru
          _
        // Predicated region
        $region21: #{encoder_decoder_forward.1} parent=11 // pred_check
          %p998 = pneg %p258
        $region22: #{encoder_decoder_forward.1} parent=11 // pred_check_branch
          %1000 = sbr.rel (%p998) target = $region24
        $region23: #{encoder_decoder_forward.1} parent=11 // pred_region
          _
        $region24: #{encoder_decoder_forward.1} parent=11 // pred_fallthru
          _
        // Predicated region
        $region25: #{encoder_decoder_forward.1} parent=11 // pred_check
          %p1001 = pneg %p279
        $region26: #{encoder_decoder_forward.1} parent=11 // pred_check_branch
          %1003 = sbr.rel (%p1001) target = $region28
        $region27: #{encoder_decoder_forward.1} parent=11 // pred_region
          _
        $region28: #{encoder_decoder_forward.1} parent=11 // pred_fallthru
          _
        // Predicated region
        $region29: #{encoder_decoder_forward.1} parent=11 // pred_check
          %p1004 = pneg %p300
        $region30: #{encoder_decoder_forward.1} parent=11 // pred_check_branch
          %1006 = sbr.rel (%p1004) target = $region32
        $region31: #{encoder_decoder_forward.1} parent=11 // pred_region
          _
        $region32: #{encoder_decoder_forward.1} parent=11 // pred_fallthru
          _
        // Predicated region
        $region33: #{encoder_decoder_forward.1} parent=11 // pred_check
          %p1007 = pneg %p321
        $region34: #{encoder_decoder_forward.1} parent=11 // pred_check_branch
          %1009 = sbr.rel (%p1007) target = $region36
        $region35: #{encoder_decoder_forward.1} parent=11 // pred_region
          _
        $region36: #{encoder_decoder_forward.1} parent=11 // pred_fallthru
          _
        // Predicated region
        $region37: #{encoder_decoder_forward.1} parent=11 // pred_check
          %p1010 = pneg %p342
        $region38: #{encoder_decoder_forward.1} parent=11 // pred_check_branch
          %1012 = sbr.rel (%p1010) target = $region40
        $region39: #{encoder_decoder_forward.1} parent=11 // pred_region
          _
        $region40: #{encoder_decoder_forward.1} parent=11 // pred_fallthru
          _
        // Predicated region
        $region41: #{encoder_decoder_forward.1} parent=11 // pred_check
          %p1013 = pneg %p363
        $region42: #{encoder_decoder_forward.1} parent=11 // pred_check_branch
          %1015 = sbr.rel (%p1013) target = $region44
        $region43: #{encoder_decoder_forward.1} parent=11 // pred_region
          _
        $region44: #{encoder_decoder_forward.1} parent=11 // pred_fallthru
          _
        // Predicated region
        $region45: #{encoder_decoder_forward.1} parent=11 // pred_check
          %p1016 = pneg %p384
        $region46: #{encoder_decoder_forward.1} parent=11 // pred_check_branch
          %1018 = sbr.rel (%p1016) target = $region48
        $region47: #{encoder_decoder_forward.1} parent=11 // pred_region
          _
        $region48: #{encoder_decoder_forward.1} parent=11 // pred_fallthru
          _
        // Predicated region
        $region49: #{encoder_decoder_forward.1} parent=11 // pred_check
          %p1019 = pneg %p405
        $region50: #{encoder_decoder_forward.1} parent=11 // pred_check_branch
          %1021 = sbr.rel (%p1019) target = $region52
        $region51: #{encoder_decoder_forward.1} parent=11 // pred_region
          _
        $region52: #{encoder_decoder_forward.1} parent=11 // pred_fallthru
          _
        // Predicated region
        $region53: #{encoder_decoder_forward.1} parent=11 // pred_check
          %p1022 = pneg %p426
        $region54: #{encoder_decoder_forward.1} parent=11 // pred_check_branch
          %1024 = sbr.rel (%p1022) target = $region56
        $region55: #{encoder_decoder_forward.1} parent=11 // pred_region
          _
        $region56: #{encoder_decoder_forward.1} parent=11 // pred_fallthru
          _
        // Predicated region
        $region57: #{encoder_decoder_forward.1} parent=11 // pred_check
          %p1025 = pneg %p447
        $region58: #{encoder_decoder_forward.1} parent=11 // pred_check_branch
          %1027 = sbr.rel (%p1025) target = $region60
        $region59: #{encoder_decoder_forward.1} parent=11 // pred_region
          _
        $region60: #{encoder_decoder_forward.1} parent=11 // pred_fallthru
          _
        // Predicated region
        $region61: #{encoder_decoder_forward.1} parent=11 // pred_check
          %p1028 = pneg %p468
        $region62: #{encoder_decoder_forward.1} parent=11 // pred_check_branch
          %1030 = sbr.rel (%p1028) target = $region64
        $region63: #{encoder_decoder_forward.1} parent=11 // pred_region
          _
        $region64: #{encoder_decoder_forward.1} parent=11 // pred_fallthru
          _
        // Predicated region
        $region65: #{encoder_decoder_forward.1} parent=11 // pred_check
          %p1031 = pneg %p489
        $region66: #{encoder_decoder_forward.1} parent=11 // pred_check_branch
          %1033 = sbr.rel (%p1031) target = $region68
        $region67: #{encoder_decoder_forward.1} parent=11 // pred_region
          _
        $region68: #{encoder_decoder_forward.1} parent=11 // pred_fallthru
          _
        // Predicated region
        $region69: #{encoder_decoder_forward.1} parent=11 // pred_check
          %p1034 = pneg %p510
        $region70: #{encoder_decoder_forward.1} parent=11 // pred_check_branch
          %1036 = sbr.rel (%p1034) target = $region72
        $region71: #{encoder_decoder_forward.1} parent=11 // pred_region
          _
        $region72: #{encoder_decoder_forward.1} parent=11 // pred_fallthru
          _
        // Predicated region
        $region73: #{encoder_decoder_forward.1} parent=11 // pred_check
          %p1037 = pneg %p531
        $region74: #{encoder_decoder_forward.1} parent=11 // pred_check_branch
          %1039 = sbr.rel (%p1037) target = $region76
        $region75: #{encoder_decoder_forward.1} parent=11 // pred_region
          _
        $region76: #{encoder_decoder_forward.1} parent=11 // pred_fallthru
          _
        // Predicated region
        $region77: #{encoder_decoder_forward.1} parent=11 // pred_check
          %p1040 = pneg %p552
        $region78: #{encoder_decoder_forward.1} parent=11 // pred_check_branch
          %1042 = sbr.rel (%p1040) target = $region80
        $region79: #{encoder_decoder_forward.1} parent=11 // pred_region
          _
        $region80: #{encoder_decoder_forward.1} parent=11 // pred_fallthru
          _
        // Predicated region
        $region81: #{encoder_decoder_forward.1} parent=11 // pred_check
          %p1043 = pneg %p573
        $region82: #{encoder_decoder_forward.1} parent=11 // pred_check_branch
          %1045 = sbr.rel (%p1043) target = $region84
        $region83: #{encoder_decoder_forward.1} parent=11 // pred_region
          _
        $region84: #{encoder_decoder_forward.1} parent=11 // pred_fallthru
          _
        // Predicated region
        $region85: #{encoder_decoder_forward.1} parent=11 // pred_check
          %p1046 = pneg %p594
        $region86: #{encoder_decoder_forward.1} parent=11 // pred_check_branch
          %1048 = sbr.rel (%p1046) target = $region88
        $region87: #{encoder_decoder_forward.1} parent=11 // pred_region
          _
        $region88: #{encoder_decoder_forward.1} parent=11 // pred_fallthru
          _
        // Predicated region
        $region89: #{encoder_decoder_forward.1} parent=11 // pred_check
          %p1049 = pneg %p615
        $region90: #{encoder_decoder_forward.1} parent=11 // pred_check_branch
          %1051 = sbr.rel (%p1049) target = $region92
        $region91: #{encoder_decoder_forward.1} parent=11 // pred_region
          _
        $region92: #{encoder_decoder_forward.1} parent=11 // pred_fallthru
          _
        // Predicated region
        $region93: #{encoder_decoder_forward.1} parent=11 // pred_check
          %p1052 = pneg %p636
        $region94: #{encoder_decoder_forward.1} parent=11 // pred_check_branch
          %1054 = sbr.rel (%p1052) target = $region96
        $region95: #{encoder_decoder_forward.1} parent=11 // pred_region
          _
        $region96: #{encoder_decoder_forward.1} parent=11 // pred_fallthru
          _
        // Predicated region
        $region97: #{encoder_decoder_forward.1} parent=11 // pred_check
          %p1055 = pneg %p657
        $region98: #{encoder_decoder_forward.1} parent=11 // pred_check_branch
          %1057 = sbr.rel (%p1055) target = $region100
        $region99: #{encoder_decoder_forward.1} parent=11 // pred_region
          _
        $region100: #{encoder_decoder_forward.1} parent=11 // pred_fallthru
          _
        // Predicated region
        $region101: #{encoder_decoder_forward.1} parent=11 // pred_check
          %p1058 = pneg %p678
        $region102: #{encoder_decoder_forward.1} parent=11 // pred_check_branch
          %1060 = sbr.rel (%p1058) target = $region104
        $region103: #{encoder_decoder_forward.1} parent=11 // pred_region
          _
        $region104: #{encoder_decoder_forward.1} parent=11 // pred_fallthru
          _
        // Predicated region
        $region105: #{encoder_decoder_forward.1} parent=11 // pred_check
          %p1061 = pneg %p699
        $region106: #{encoder_decoder_forward.1} parent=11 // pred_check_branch
          %1063 = sbr.rel (%p1061) target = $region108
        $region107: #{encoder_decoder_forward.1} parent=11 // pred_region
          _
        $region108: #{encoder_decoder_forward.1} parent=11 // pred_fallthru
          _
        // Predicated region
        $region109: #{encoder_decoder_forward.1} parent=11 // pred_check
          %p1064 = pneg %p720
        $region110: #{encoder_decoder_forward.1} parent=11 // pred_check_branch
          %1066 = sbr.rel (%p1064) target = $region112
        $region111: #{encoder_decoder_forward.1} parent=11 // pred_region
          _
        $region112: #{encoder_decoder_forward.1} parent=11 // pred_fallthru
          _
        // Predicated region
        $region113: #{encoder_decoder_forward.1} parent=11 // pred_check
          %p1067 = pneg %p741
        $region114: #{encoder_decoder_forward.1} parent=11 // pred_check_branch
          %1069 = sbr.rel (%p1067) target = $region116
        $region115: #{encoder_decoder_forward.1} parent=11 // pred_region
          _
        $region116: #{encoder_decoder_forward.1} parent=11 // pred_fallthru
          _
        // Predicated region
        $region117: #{encoder_decoder_forward.1} parent=11 // pred_check
          %p1070 = pneg %p762
        $region118: #{encoder_decoder_forward.1} parent=11 // pred_check_branch
          %1072 = sbr.rel (%p1070) target = $region120
        $region119: #{encoder_decoder_forward.1} parent=11 // pred_region
          _
        $region120: #{encoder_decoder_forward.1} parent=11 // pred_fallthru
          _
        // Predicated region
        $region121: #{encoder_decoder_forward.1} parent=11 // pred_check
          %p1073 = pneg %p783
        $region122: #{encoder_decoder_forward.1} parent=11 // pred_check_branch
          %1075 = sbr.rel (%p1073) target = $region124
        $region123: #{encoder_decoder_forward.1} parent=11 // pred_region
          _
        $region124: #{encoder_decoder_forward.1} parent=11 // pred_fallthru
          _
        // Predicated region
        $region125: #{encoder_decoder_forward.1} parent=11 // pred_check
          %p1076 = pneg %p804
        $region126: #{encoder_decoder_forward.1} parent=11 // pred_check_branch
          %1078 = sbr.rel (%p1076) target = $region128
        $region127: #{encoder_decoder_forward.1} parent=11 // pred_region
          _
        $region128: #{encoder_decoder_forward.1} parent=11 // pred_fallthru
          _
        // Predicated region
        $region129: #{encoder_decoder_forward.1} parent=11 // pred_check
          %p1079 = pneg %p825
        $region130: #{encoder_decoder_forward.1} parent=11 // pred_check_branch
          %1081 = sbr.rel (%p1079) target = $region132
        $region131: #{encoder_decoder_forward.1} parent=11 // pred_region
          _
        $region132: #{encoder_decoder_forward.1} parent=11 // pred_fallthru
          _
        // Predicated region
        $region133: #{encoder_decoder_forward.1} parent=11 // pred_check
          %p1082 = pneg %p846
        $region134: #{encoder_decoder_forward.1} parent=11 // pred_check_branch
          %1084 = sbr.rel (%p1082) target = $region136
        $region135: #{encoder_decoder_forward.1} parent=11 // pred_region
          _
        $region136: #{encoder_decoder_forward.1} parent=11 // pred_fallthru
          _
        // Predicated region
        $region137: #{encoder_decoder_forward.1} parent=11 // pred_check
          %p1085 = pneg %p867
        $region138: #{encoder_decoder_forward.1} parent=11 // pred_check_branch
          %1087 = sbr.rel (%p1085) target = $region140
        $region139: #{encoder_decoder_forward.1} parent=11 // pred_region
          _
        $region140: #{encoder_decoder_forward.1} parent=11 // pred_fallthru
          _
        // Predicated region
        $region141: #{encoder_decoder_forward.1} parent=11 // pred_check
          %p1088 = pneg %p888
        $region142: #{encoder_decoder_forward.1} parent=11 // pred_check_branch
          %1090 = sbr.rel (%p1088) target = $region144
        $region143: #{encoder_decoder_forward.1} parent=11 // pred_region
          _
        $region144: #{encoder_decoder_forward.1} parent=11 // pred_fallthru
          _
        // Predicated region
        $region145: #{encoder_decoder_forward.1} parent=11 // pred_check
          %p1091 = pneg %p909
        $region146: #{encoder_decoder_forward.1} parent=11 // pred_check_branch
          %1093 = sbr.rel (%p1091) target = $region148
        $region147: #{encoder_decoder_forward.1} parent=11 // pred_region
          _
        $region148: #{encoder_decoder_forward.1} parent=11 // pred_fallthru
          _
        // Predicated region
        $region149: #{encoder_decoder_forward.1} parent=11 // pred_check
          %p1094 = pneg %p930
        $region150: #{encoder_decoder_forward.1} parent=11 // pred_check_branch
          %1096 = sbr.rel (%p1094) target = $region152
        $region151: #{encoder_decoder_forward.1} parent=11 // pred_region
          _
        $region152: #{encoder_decoder_forward.1} parent=11 // pred_fallthru
          _
        // Predicated region
        $region153: #{encoder_decoder_forward.1} parent=11 // pred_check
          %p1097 = pneg %p951
        $region154: #{encoder_decoder_forward.1} parent=11 // pred_check_branch
          %1099 = sbr.rel (%p1097) target = $region156
        $region155: #{encoder_decoder_forward.1} parent=11 // pred_region
          %1101 = vsyncadd [#allocation3], 0
          %s1103 = sshll.u32 %s79, 4
          %s1104 = int_to_ptr.hbm [resolvable:$true] %s1103
          %s1105 = sshll.u32 [#allocation2], 4
          %s1106 = int_to_ptr.vmem [resolvable:$true] %s1105
          %1108 = dma.hbm_to_vmem [thread:$0]  %s1104, 16, %s1106, [#allocation3]
        $region156: #{encoder_decoder_forward.1} parent=11 // pred_fallthru
          _
      $region12: #{encoder_decoder_forward.1} parent=5 // pred_fallthru
        _
      %p1109 = scmp.lt.s32.totalorder %s91, 2
      // Predicated region
      $region157: #{encoder_decoder_forward.1} parent=5 // pred_check
        %p1110 = pneg %p1109
      $region158: #{encoder_decoder_forward.1} parent=5 // pred_check_branch
        %1112 = sbr.rel (%p1110) target = $region160
      $region159: #{encoder_decoder_forward.1} parent=5 // pred_region
        // Predicated region
        $region161: #{encoder_decoder_forward.1} parent=159 // pred_check
          %p1113 = pneg %p111
        $region162: #{encoder_decoder_forward.1} parent=159 // pred_check_branch
          %1115 = sbr.rel (%p1113) target = $region164
        $region163: #{encoder_decoder_forward.1} parent=159 // pred_region
          %p1116 = scmp.lt.s32.totalorder %s91, 1
          %s1117 = scalar_select %p1116, %s91, 1
          %s1118 = smul.addr %s1117, 8
          %s1119 = scalar_lea.vmem %s1, %s1118
        $region164: #{encoder_decoder_forward.1} parent=159 // pred_fallthru
          _
        // Predicated region
        $region165: #{encoder_decoder_forward.1} parent=159 // pred_check
          %p1120 = pneg %p137
        $region166: #{encoder_decoder_forward.1} parent=159 // pred_check_branch
          %1122 = sbr.rel (%p1120) target = $region168
        $region167: #{encoder_decoder_forward.1} parent=159 // pred_region
          %p1123 = scmp.lt.s32.totalorder %s91, 1
          %s1124 = scalar_select %p1123, %s91, 1
          %s1125 = smul.addr %s1124, 8
          %s1126 = scalar_lea.vmem %s3, %s1125
        $region168: #{encoder_decoder_forward.1} parent=159 // pred_fallthru
          _
        // Predicated region
        $region169: #{encoder_decoder_forward.1} parent=159 // pred_check
          %p1127 = pneg %p163
        $region170: #{encoder_decoder_forward.1} parent=159 // pred_check_branch
          %1129 = sbr.rel (%p1127) target = $region172
        $region171: #{encoder_decoder_forward.1} parent=159 // pred_region
          %p1130 = scmp.lt.s32.totalorder %s91, 1
          %s1131 = scalar_select %p1130, %s91, 1
          %s1132 = scalar_lea.vmem %s5, %s1131
        $region172: #{encoder_decoder_forward.1} parent=159 // pred_fallthru
          _
        // Predicated region
        $region173: #{encoder_decoder_forward.1} parent=159 // pred_check
          %p1133 = pneg %p189
        $region174: #{encoder_decoder_forward.1} parent=159 // pred_check_branch
          %1135 = sbr.rel (%p1133) target = $region176
        $region175: #{encoder_decoder_forward.1} parent=159 // pred_region
          %p1136 = scmp.lt.s32.totalorder %s91, 1
          %s1137 = scalar_select %p1136, %s91, 1
          %s1138 = smul.addr %s1137, 8
          %s1139 = scalar_lea.vmem %s7, %s1138
        $region176: #{encoder_decoder_forward.1} parent=159 // pred_fallthru
          _
      $region160: #{encoder_decoder_forward.1} parent=5 // pred_fallthru
        _
      %p1140 = scmp.le.s32.totalorder 1, %s91
      %p1141 = scmp.lt.s32.totalorder %s91, 3
      %p1142 = pnand %p1140, %p1141
      %p1143 = pneg %p1142
      // Predicated region
      $region177: #{encoder_decoder_forward.1} parent=5 // pred_check
        _
      $region178: #{encoder_decoder_forward.1} parent=5 // pred_check_branch
        %1145 = sbr.rel (%p1142) target = $region180
      $region179: #{encoder_decoder_forward.1} parent=5 // pred_region
        %s1146 = ssub.s32 %s91, 1
        // Predicated region
        $region181: #{encoder_decoder_forward.1} parent=179 // pred_check
          %p1147 = pneg %p951
        $region182: #{encoder_decoder_forward.1} parent=179 // pred_check_branch
          %1149 = sbr.rel (%p1147) target = $region184
        $region183: #{encoder_decoder_forward.1} parent=179 // pred_region
          %1151 = dma.done [#allocation3], 16
        $region184: #{encoder_decoder_forward.1} parent=179 // pred_fallthru
          _
        %p1152 = scmp.lt.s32.totalorder %s96, 1
        %s1153 = scalar_select %p1152, %s96, 1
        %s1154 = smul.addr %s1153, 8
        %s1155 = scalar_lea.vmem %s1, %s1154
        %p1156 = pneg %p117
        %p1157 = pneg %p114
        %p1158 = scmp.lt.s32.totalorder %s96, 1
        %s1159 = scalar_select %p1158, %s96, 1
        %s1160 = smul.addr %s1159, 8
        %s1161 = scalar_lea.vmem %s3, %s1160
        %p1162 = pneg %p143
        %p1163 = pneg %p140
        %p1164 = scmp.lt.s32.totalorder %s96, 1
        %s1165 = scalar_select %p1164, %s96, 1
        %s1166 = scalar_lea.vmem %s5, %s1165
        %p1167 = pneg %p169
        %p1168 = pneg %p166
        %p1169 = scmp.lt.s32.totalorder %s96, 1
        %s1170 = scalar_select %p1169, %s96, 1
        %s1171 = smul.addr %s1170, 8
        %s1172 = scalar_lea.vmem %s7, %s1171
        %p1173 = pneg %p195
        %p1174 = pneg %p192
        %p1175 = pneg %p216
        %p1176 = pneg %p213
        %p1177 = pneg %p237
        %p1178 = pneg %p234
        %p1179 = pneg %p258
        %p1180 = pneg %p255
        %p1181 = pneg %p279
        %p1182 = pneg %p276
        %p1183 = pneg %p300
        %p1184 = pneg %p297
        %p1185 = pneg %p321
        %p1186 = pneg %p318
        %p1187 = pneg %p342
        %p1188 = pneg %p339
        %p1189 = pneg %p363
        %p1190 = pneg %p360
        %p1191 = pneg %p384
        %p1192 = pneg %p381
        %p1193 = pneg %p405
        %p1194 = pneg %p402
        %p1195 = pneg %p426
        %p1196 = pneg %p423
        %p1197 = pneg %p447
        %p1198 = pneg %p444
        %p1199 = pneg %p468
        %p1200 = pneg %p465
        %p1201 = pneg %p489
        %p1202 = pneg %p486
        %p1203 = pneg %p510
        %p1204 = pneg %p507
        %p1205 = pneg %p531
        %p1206 = pneg %p528
        %p1207 = pneg %p552
        %p1208 = pneg %p549
        %p1209 = pneg %p573
        %p1210 = pneg %p570
        %p1211 = pneg %p594
        %p1212 = pneg %p591
        %p1213 = pneg %p615
        %p1214 = pneg %p612
        %p1215 = pneg %p636
        %p1216 = pneg %p633
        %p1217 = pneg %p657
        %p1218 = pneg %p654
        %p1219 = pneg %p678
        %p1220 = pneg %p675
        %p1221 = pneg %p699
        %p1222 = pneg %p696
        %p1223 = pneg %p720
        %p1224 = pneg %p717
        %p1225 = pneg %p741
        %p1226 = pneg %p738
        %p1227 = pneg %p762
        %p1228 = pneg %p759
        %p1229 = pneg %p783
        %p1230 = pneg %p780
        %p1231 = pneg %p804
        %p1232 = pneg %p801
        %p1233 = pneg %p825
        %p1234 = pneg %p822
        %p1235 = pneg %p846
        %p1236 = pneg %p843
        %p1237 = pneg %p867
        %p1238 = pneg %p864
        %p1239 = pneg %p888
        %p1240 = pneg %p885
        %p1241 = pneg %p909
        %p1242 = pneg %p906
        %p1243 = pneg %p930
        %p1244 = pneg %p927
        %p1245 = pneg %p951
        %p1246 = pneg %p948
        %p1247 = pneg %p977
        %p1248 = pneg %p974
        %s1249 = sand.u32 %s964, 1
        %s1250 = scalar_lea.sflag [#allocation4], %s1249
        %s1251 = sand.u32 %s964, 1
        %s1252 = smul.addr %s1251, 8
        %s1253 = scalar_lea.vmem [#allocation5], %s1252
        %p1254 = scmp.lt.s32.totalorder %s96, 1
        %s1255 = scalar_select %p1254, %s96, 1
        %s1256 = smul.addr %s1255, 8
        %s1257 = scalar_lea.vmem %s1, %s1256
        %p1258 = scmp.lt.s32.totalorder %s96, 1
        %s1259 = scalar_select %p1258, %s96, 1
        %s1260 = smul.addr %s1259, 8
        %s1261 = scalar_lea.vmem %s3, %s1260
        %p1262 = scmp.lt.s32.totalorder %s96, 1
        %s1263 = scalar_select %p1262, %s96, 1
        %s1264 = scalar_lea.vmem %s5, %s1263
        %p1265 = scmp.lt.s32.totalorder %s96, 1
        %s1266 = scalar_select %p1265, %s96, 1
        %s1267 = smul.addr %s1266, 8
        %s1268 = scalar_lea.vmem %s7, %s1267
        %v1270 = vld [vmem:[%s1264] sm:$0x1]
        %v1271 = vsub.f32 %v1270, 1.0
        %v1272 = vmul.f32 %v1271, 1e+09
        %v1273 = vld [vmem:[%s1268] sm:$0xff]
        %v1274 = vsub.f32 %v1273, 1.0
        %v1275 = vmul.f32 %v1274, 1e+09
        %v1276 = vld [vmem:[%s1257] sm:$0xff]
        %v1277 = vld [vmem:[%s9] sm:$0x1]
        %v1278 = vld [vmem:[%s11] sm:$0x1]
        %vm1279 = vcmask 261120
        %v1280 = vsel %vm1279, %v1276, 0.0
        %1281 = vadd.xlane.f32.xlu0 %v1280
        %v1282 = vpop.xlane.xlu0 %1281
        %v1283 = vrcp.pop 32.0
        %v1284 = vmul.f32 32.0, %v1283
        %v1285 = vsub.f32 1.0, %v1284
        %v1286 = vmul.f32 %v1283, %v1285
        %v1287 = vadd.f32 %v1283, %v1286
        %vm1288 = vweird.f32 %v1283
        %v1289 = vsel %vm1288, %v1283, %v1287
        %v1290 = vmul.f32 %v1282, %v1289
        %v1291 = vsub.f32 %v1276, %v1290
        %v1292 = vmul.f32 %v1291, %v1291
        %v1293 = vsel %vm1279, %v1292, 0.0
        %1294 = vadd.xlane.f32.xlu0 %v1293
        %v1295 = vpop.xlane.xlu0 %1294
        %v1296 = vmul.f32 %v1295, 0.032258064
        %v1297 = vrsqrt.pop %v1296
        %v1298 = vmul.f32 %v1297, %v1296
        %v1299 = vmul.f32 %v1298, %v1297
        %v1300 = vmul.f32 0.5, %v1299
        %v1301 = vsub.f32 1.5, %v1300
        %v1302 = vmul.f32 %v1297, %v1301
        %v1303 = vmul.f32 %v1296, %v1302
        %vm1304 = vcmp.eq.f32.partialorder %v1296, inf
        %v1305 = vsel %vm1304, %v1296, %v1303
        %vm1306 = vcmp.eq.f32.partialorder %v1296, 0.0
        %v1307 = vand.u32 %v1296, 2147483648
        %v1308 = vsel %vm1306, %v1307, %v1305
        %v1309 = vadd.f32 %v1308, 1e-06
        %v1310 = vrcp.pop %v1309
        %v1311 = vmul.f32 %v1309, %v1310
        %v1312 = vsub.f32 1.0, %v1311
        %v1313 = vmul.f32 %v1310, %v1312
        %v1314 = vadd.f32 %v1310, %v1313
        %vm1315 = vweird.f32 %v1309
        %vm1316 = vweird.f32 %v1310
        %vm1317 = vmor %vm1315, %vm1316
        %v1318 = vsel %vm1317, %v1310, %v1314
        %v1319 = vand.u32 2147483647, %v1309
        %vm1320 = vcmp.eq.f32.partialorder %v1319, 8.507059e+37
        %v1321 = vand.u32 %v1309, 2147483648
        %v1322 = vor.u32 1.1754944e-38, %v1321
        %v1323 = vsel %vm1320, %v1322, %v1318
        %v1324 = vmul.f32 %v1291, %v1323
        %v1326 = vperm.slane %v1277, 0
        %v1328 = vmul.f32 %v1326, %v1324
        %v1330 = vperm.slane %v1278, 0
        %v1332 = vadd.f32 %v1328, %v1330
        %v1333 = vld [vmem:[%s13] sm:$0xf]
        %v1334 = vld [vmem:[%s13 + $0x4] sm:$0xf]
        %v1335 = vld [vmem:[%s13 + $0x8] sm:$0xf]
        %v1336 = vld [vmem:[%s13 + $0xc] sm:$0xf]
        %v1337 = vld [vmem:[%s15] sm:$0x1]
        %v1338 = vld [vmem:[%s17] sm:$0xf]
        %v1339 = vld [vmem:[%s17 + $0x4] sm:$0xf]
        %v1340 = vld [vmem:[%s17 + $0x8] sm:$0xf]
        %v1341 = vld [vmem:[%s17 + $0xc] sm:$0xf]
        %v1342 = vld [vmem:[%s19] sm:$0x1]
        %v1343 = vpack.c.bf16 %v1332, %v1332
        %v1345 = vperm.slane %v1337, 0
        %v1351 = vunpack.c.l.b16 %v1333
        %v1352 = vunpack.c.l.b16 %v1334
        %v1353 = vunpack.c.l.b16 %v1335
        %v1354 = vunpack.c.l.b16 %v1336
        %v1355 = vpack.c.b16 %v1352, %v1351
        %v1356 = vpack.c.b16 %v1354, %v1353
        %v1360 = vsel %vm1279, %v1343, 0
        %1362 = vmatpush.bf16.msra.mxu0 0
        %1363 = vmatpush.bf16.msra.mxu0 0
        %1364 = vmatpush.bf16.msra.mxu0 0
        %1365 = vmatpush.bf16.msra.mxu0 0
        %1366 = vmatpush.bf16.msra.mxu0 0
        %1367 = vmatpush.bf16.msra.mxu0 0
        %1368 = vmatpush.bf16.msra.mxu0 %v1356
        %1369 = vmatpush.bf16.msra.mxu0 %v1355
        %1370 = vmatmul.bf16.gmra.mxu0 %v1360
        %v1371 = vpop.f32.mrf.mxu0
        %v1372 = vadd.f32 %v1345, %v1371
        %v1373 = vpop.f32.mrf.mxu0
        %1374 = vdwg.mxu0
        %1376 = vrot.lane.b32.xlu0 %v1372, 120
        %v1377 = vpop.permute.xlu0 %1376
        %1379 = vrot.lane.b32.xlu0 %v1372, 112
        %v1380 = vpop.permute.xlu0 %1379
        %1382 = vrot.lane.b32.xlu0 %v1372, 104
        %v1383 = vpop.permute.xlu0 %1382
        %v1385 = vpack.c.bf16 %v1372, %v1372
        %v1386 = vpack.c.bf16 %v1377, %v1377
        %v1387 = vpack.c.bf16 %v1380, %v1380
        %v1388 = vpack.c.bf16 %v1383, %v1383
        %v1390 = vperm.slane %v1272, 0
        %v1393 = vunpack.c.l.b16 %v1385
        %v1394 = vpack.c.b16 %v1393, %v1393
        %1395 = vrot.lane.b32.xlu0 %v1394, 96
        %v1396 = vpop.permute.xlu0 %1395
        %vm1397 = vcmask 64512
        %v1399 = vsel %vm1397, %v1385, 0
        %v1402 = vsel %vm1397, %v1396, 0
        %1404 = vmatpush.bf16.xpose.msra.mxu0 0
        %1405 = vmatpush.bf16.xpose.msra.mxu0 0
        %1406 = vmatpush.bf16.xpose.msra.mxu0 0
        %1407 = vmatpush.bf16.xpose.msra.mxu0 0
        %1408 = vmatpush.bf16.xpose.msra.mxu0 0
        %1409 = vmatpush.bf16.xpose.msra.mxu0 0
        %1410 = vmatpush.bf16.xpose.msra.mxu0 0
        %1411 = vmatpush.bf16.xpose.msra.mxu0 %v1402
        %1412 = vmatmul.bf16.gmra.mxu0 %v1399
        %v1413 = vpop.f32.mrf.mxu0
        %v1414 = vadd.f32 %v1390, %v1413
        %v1415 = vpop.f32.mrf.mxu0
        %1416 = vdwg.mxu0
        %v1418 = vunpack.c.l.b16 %v1386
        %v1419 = vpack.c.b16 %v1418, %v1418
        %1420 = vrot.lane.b32.xlu0 %v1419, 96
        %v1421 = vpop.permute.xlu0 %1420
        %v1423 = vsel %vm1397, %v1386, 0
        %v1426 = vsel %vm1397, %v1421, 0
        %1428 = vmatpush.bf16.xpose.msra.mxu0 0
        %1429 = vmatpush.bf16.xpose.msra.mxu0 0
        %1430 = vmatpush.bf16.xpose.msra.mxu0 0
        %1431 = vmatpush.bf16.xpose.msra.mxu0 0
        %1432 = vmatpush.bf16.xpose.msra.mxu0 0
        %1433 = vmatpush.bf16.xpose.msra.mxu0 0
        %1434 = vmatpush.bf16.xpose.msra.mxu0 0
        %1435 = vmatpush.bf16.xpose.msra.mxu0 %v1426
        %1436 = vmatmul.bf16.gmra.mxu0 %v1423
        %v1437 = vpop.f32.mrf.mxu0
        %v1438 = vadd.f32 %v1390, %v1437
        %v1439 = vpop.f32.mrf.mxu0
        %1440 = vdwg.mxu0
        %v1442 = vunpack.c.l.b16 %v1387
        %v1443 = vpack.c.b16 %v1442, %v1442
        %1444 = vrot.lane.b32.xlu0 %v1443, 96
        %v1445 = vpop.permute.xlu0 %1444
        %v1447 = vsel %vm1397, %v1387, 0
        %v1450 = vsel %vm1397, %v1445, 0
        %1452 = vmatpush.bf16.xpose.msra.mxu0 0
        %1453 = vmatpush.bf16.xpose.msra.mxu0 0
        %1454 = vmatpush.bf16.xpose.msra.mxu0 0
        %1455 = vmatpush.bf16.xpose.msra.mxu0 0
        %1456 = vmatpush.bf16.xpose.msra.mxu0 0
        %1457 = vmatpush.bf16.xpose.msra.mxu0 0
        %1458 = vmatpush.bf16.xpose.msra.mxu0 0
        %1459 = vmatpush.bf16.xpose.msra.mxu0 %v1450
        %1460 = vmatmul.bf16.gmra.mxu0 %v1447
        %v1461 = vpop.f32.mrf.mxu0
        %v1462 = vadd.f32 %v1390, %v1461
        %v1463 = vpop.f32.mrf.mxu0
        %1464 = vdwg.mxu0
        %v1466 = vunpack.c.l.b16 %v1388
        %v1467 = vpack.c.b16 %v1466, %v1466
        %1468 = vrot.lane.b32.xlu0 %v1467, 96
        %v1469 = vpop.permute.xlu0 %1468
        %v1471 = vsel %vm1397, %v1388, 0
        %v1474 = vsel %vm1397, %v1469, 0
        %1476 = vmatpush.bf16.xpose.msra.mxu0 0
        %1477 = vmatpush.bf16.xpose.msra.mxu0 0
        %1478 = vmatpush.bf16.xpose.msra.mxu0 0
        %1479 = vmatpush.bf16.xpose.msra.mxu0 0
        %1480 = vmatpush.bf16.xpose.msra.mxu0 0
        %1481 = vmatpush.bf16.xpose.msra.mxu0 0
        %1482 = vmatpush.bf16.xpose.msra.mxu0 0
        %1483 = vmatpush.bf16.xpose.msra.mxu0 %v1474
        %1484 = vmatmul.bf16.gmra.mxu0 %v1471
        %v1485 = vpop.f32.mrf.mxu0
        %v1486 = vadd.f32 %v1390, %v1485
        %v1487 = vpop.f32.mrf.mxu0
        %1488 = vdwg.mxu0
        %v1489 = vsel %vm1397, %v1414, -inf
        %1490 = vmax.xlane.f32.xlu0 %v1489
        %v1491 = vpop.xlane.xlu0 %1490
        %v1492 = vsel %vm1397, %v1438, -inf
        %1493 = vmax.xlane.f32.xlu0 %v1492
        %v1494 = vpop.xlane.xlu0 %1493
        %v1495 = vsel %vm1397, %v1462, -inf
        %1496 = vmax.xlane.f32.xlu0 %v1495
        %v1497 = vpop.xlane.xlu0 %1496
        %v1498 = vsel %vm1397, %v1486, -inf
        %1499 = vmax.xlane.f32.xlu0 %v1498
        %v1500 = vpop.xlane.xlu0 %1499
        %v1501 = vsub.f32 %v1414, %v1491
        %v1502 = vsub.f32 %v1438, %v1494
        %v1503 = vsub.f32 %v1462, %v1497
        %v1504 = vsub.f32 %v1486, %v1500
        %v1505 = vmul.f32 %v1501, 1.442695
        %v1506 = vpow.pop %v1505
        %v1507 = vmul.f32 %v1502, 1.442695
        %v1508 = vpow.pop %v1507
        %v1509 = vmul.f32 %v1503, 1.442695
        %v1510 = vpow.pop %v1509
        %v1511 = vmul.f32 %v1504, 1.442695
        %v1512 = vpow.pop %v1511
        %v1513 = vsel %vm1397, %v1506, 0.0
        %1514 = vadd.xlane.f32.xlu0 %v1513
        %v1515 = vpop.xlane.xlu0 %1514
        %v1516 = vsel %vm1397, %v1508, 0.0
        %1517 = vadd.xlane.f32.xlu0 %v1516
        %v1518 = vpop.xlane.xlu0 %1517
        %v1519 = vsel %vm1397, %v1510, 0.0
        %1520 = vadd.xlane.f32.xlu0 %v1519
        %v1521 = vpop.xlane.xlu0 %1520
        %v1522 = vsel %vm1397, %v1512, 0.0
        %1523 = vadd.xlane.f32.xlu0 %v1522
        %v1524 = vpop.xlane.xlu0 %1523
        %v1525 = vrcp.pop %v1515
        %v1526 = vmul.f32 %v1515, %v1525
        %v1527 = vsub.f32 1.0, %v1526
        %v1528 = vmul.f32 %v1525, %v1527
        %v1529 = vadd.f32 %v1525, %v1528
        %vm1530 = vweird.f32 %v1515
        %vm1531 = vweird.f32 %v1525
        %vm1532 = vmor %vm1530, %vm1531
        %v1533 = vsel %vm1532, %v1525, %v1529
        %v1534 = vand.u32 2147483647, %v1515
        %vm1535 = vcmp.eq.f32.partialorder %v1534, 8.507059e+37
        %v1536 = vand.u32 %v1515, 2147483648
        %v1537 = vor.u32 1.1754944e-38, %v1536
        %v1538 = vsel %vm1535, %v1537, %v1533
        %v1539 = vrcp.pop %v1518
        %v1540 = vmul.f32 %v1518, %v1539
        %v1541 = vsub.f32 1.0, %v1540
        %v1542 = vmul.f32 %v1539, %v1541
        %v1543 = vadd.f32 %v1539, %v1542
        %vm1544 = vweird.f32 %v1518
        %vm1545 = vweird.f32 %v1539
        %vm1546 = vmor %vm1544, %vm1545
        %v1547 = vsel %vm1546, %v1539, %v1543
        %v1548 = vand.u32 2147483647, %v1518
        %vm1549 = vcmp.eq.f32.partialorder %v1548, 8.507059e+37
        %v1550 = vand.u32 %v1518, 2147483648
        %v1551 = vor.u32 1.1754944e-38, %v1550
        %v1552 = vsel %vm1549, %v1551, %v1547
        %v1553 = vrcp.pop %v1521
        %v1554 = vmul.f32 %v1521, %v1553
        %v1555 = vsub.f32 1.0, %v1554
        %v1556 = vmul.f32 %v1553, %v1555
        %v1557 = vadd.f32 %v1553, %v1556
        %vm1558 = vweird.f32 %v1521
        %vm1559 = vweird.f32 %v1553
        %vm1560 = vmor %vm1558, %vm1559
        %v1561 = vsel %vm1560, %v1553, %v1557
        %v1562 = vand.u32 2147483647, %v1521
        %vm1563 = vcmp.eq.f32.partialorder %v1562, 8.507059e+37
        %v1564 = vand.u32 %v1521, 2147483648
        %v1565 = vor.u32 1.1754944e-38, %v1564
        %v1566 = vsel %vm1563, %v1565, %v1561
        %v1567 = vrcp.pop %v1524
        %v1568 = vmul.f32 %v1524, %v1567
        %v1569 = vsub.f32 1.0, %v1568
        %v1570 = vmul.f32 %v1567, %v1569
        %v1571 = vadd.f32 %v1567, %v1570
        %vm1572 = vweird.f32 %v1524
        %vm1573 = vweird.f32 %v1567
        %vm1574 = vmor %vm1572, %vm1573
        %v1575 = vsel %vm1574, %v1567, %v1571
        %v1576 = vand.u32 2147483647, %v1524
        %vm1577 = vcmp.eq.f32.partialorder %v1576, 8.507059e+37
        %v1578 = vand.u32 %v1524, 2147483648
        %v1579 = vor.u32 1.1754944e-38, %v1578
        %v1580 = vsel %vm1577, %v1579, %v1575
        %v1581 = vmul.f32 %v1506, %v1538
        %v1582 = vmul.f32 %v1508, %v1552
        %v1583 = vmul.f32 %v1510, %v1566
        %v1584 = vmul.f32 %v1512, %v1580
        %v1585 = vpack.c.bf16 %v1581, %v1581
        %v1586 = vpack.c.bf16 %v1582, %v1582
        %v1587 = vpack.c.bf16 %v1583, %v1583
        %v1588 = vpack.c.bf16 %v1584, %v1584
        %1589 = vrot.lane.b32.xlu0 %v1394, 64
        %v1590 = vpop.permute.xlu0 %1589
        %v1592 = vsel %vm1397, %v1585, 0
        %vm1594 = vcmask 1043456
        %v1596 = vsel %vm1594, %v1590, 0
        %1598 = vmatpush.bf16.msra.mxu0 0
        %1599 = vmatpush.bf16.msra.mxu0 0
        %1600 = vmatpush.bf16.msra.mxu0 0
        %1601 = vmatpush.bf16.msra.mxu0 0
        %1602 = vmatpush.bf16.msra.mxu0 0
        %1603 = vmatpush.bf16.msra.mxu0 0
        %1604 = vmatpush.bf16.msra.mxu0 0
        %1605 = vmatpush.bf16.msra.mxu0 %v1596
        %1606 = vmatmul.bf16.gmra.mxu0 %v1592
        %v1607 = vpop.f32.mrf.mxu0
        %v1608 = vadd.f32 0.0, %v1607
        %v1609 = vpop.f32.mrf.mxu0
        %1610 = vdwg.mxu0
        %1611 = vrot.lane.b32.xlu0 %v1419, 64
        %v1612 = vpop.permute.xlu0 %1611
        %v1614 = vsel %vm1397, %v1586, 0
        %v1617 = vsel %vm1594, %v1612, 0
        %1619 = vmatpush.bf16.msra.mxu0 0
        %1620 = vmatpush.bf16.msra.mxu0 0
        %1621 = vmatpush.bf16.msra.mxu0 0
        %1622 = vmatpush.bf16.msra.mxu0 0
        %1623 = vmatpush.bf16.msra.mxu0 0
        %1624 = vmatpush.bf16.msra.mxu0 0
        %1625 = vmatpush.bf16.msra.mxu0 0
        %1626 = vmatpush.bf16.msra.mxu0 %v1617
        %1627 = vmatmul.bf16.gmra.mxu0 %v1614
        %v1628 = vpop.f32.mrf.mxu0
        %v1629 = vadd.f32 0.0, %v1628
        %v1630 = vpop.f32.mrf.mxu0
        %1631 = vdwg.mxu0
        %1632 = vrot.lane.b32.xlu0 %v1443, 64
        %v1633 = vpop.permute.xlu0 %1632
        %v1635 = vsel %vm1397, %v1587, 0
        %v1638 = vsel %vm1594, %v1633, 0
        %1640 = vmatpush.bf16.msra.mxu0 0
        %1641 = vmatpush.bf16.msra.mxu0 0
        %1642 = vmatpush.bf16.msra.mxu0 0
        %1643 = vmatpush.bf16.msra.mxu0 0
        %1644 = vmatpush.bf16.msra.mxu0 0
        %1645 = vmatpush.bf16.msra.mxu0 0
        %1646 = vmatpush.bf16.msra.mxu0 0
        %1647 = vmatpush.bf16.msra.mxu0 %v1638
        %1648 = vmatmul.bf16.gmra.mxu0 %v1635
        %v1649 = vpop.f32.mrf.mxu0
        %v1650 = vadd.f32 0.0, %v1649
        %v1651 = vpop.f32.mrf.mxu0
        %1652 = vdwg.mxu0
        %1653 = vrot.lane.b32.xlu0 %v1467, 64
        %v1654 = vpop.permute.xlu0 %1653
        %v1656 = vsel %vm1397, %v1588, 0
        %v1659 = vsel %vm1594, %v1654, 0
        %1661 = vmatpush.bf16.msra.mxu0 0
        %1662 = vmatpush.bf16.msra.mxu0 0
        %1663 = vmatpush.bf16.msra.mxu0 0
        %1664 = vmatpush.bf16.msra.mxu0 0
        %1665 = vmatpush.bf16.msra.mxu0 0
        %1666 = vmatpush.bf16.msra.mxu0 0
        %1667 = vmatpush.bf16.msra.mxu0 0
        %1668 = vmatpush.bf16.msra.mxu0 %v1659
        %1669 = vmatmul.bf16.gmra.mxu0 %v1656
        %v1670 = vpop.f32.mrf.mxu0
        %v1671 = vadd.f32 0.0, %v1670
        %v1672 = vpop.f32.mrf.mxu0
        %1673 = vdwg.mxu0
        %v1674 = vpack.c.bf16 %v1608, %v1608
        %v1675 = vpack.c.bf16 %v1629, %v1629
        %v1676 = vpack.c.bf16 %v1650, %v1650
        %v1677 = vpack.c.bf16 %v1671, %v1671
        %v1679 = vsel %vm1397, %v1674, 0
        %v1682 = vsel %vm1594, %v1338, 0
        %1684 = vmatpush.bf16.msra.mxu0 0
        %1685 = vmatpush.bf16.msra.mxu0 0
        %1686 = vmatpush.bf16.msra.mxu0 0
        %1687 = vmatpush.bf16.msra.mxu0 0
        %1688 = vmatpush.bf16.msra.mxu0 0
        %1689 = vmatpush.bf16.msra.mxu0 0
        %1690 = vmatpush.bf16.msra.mxu0 0
        %1691 = vmatpush.bf16.msra.mxu0 %v1682
        %1692 = vmatmul.bf16.gmra.mxu0 %v1679
        %v1693 = vpop.f32.mrf.mxu0
        %v1694 = vadd.f32 0.0, %v1693
        %v1695 = vpop.f32.mrf.mxu0
        %1696 = vdwg.mxu0
        %v1698 = vsel %vm1397, %v1675, 0
        %v1701 = vsel %vm1594, %v1339, 0
        %1703 = vmatpush.bf16.msra.mxu0 0
        %1704 = vmatpush.bf16.msra.mxu0 0
        %1705 = vmatpush.bf16.msra.mxu0 0
        %1706 = vmatpush.bf16.msra.mxu0 0
        %1707 = vmatpush.bf16.msra.mxu0 0
        %1708 = vmatpush.bf16.msra.mxu0 0
        %1709 = vmatpush.bf16.msra.mxu0 0
        %1710 = vmatpush.bf16.msra.mxu0 %v1701
        %1711 = vmatmul.bf16.gmra.mxu0 %v1698
        %v1712 = vpop.f32.mrf.mxu0
        %v1713 = vadd.f32 0.0, %v1712
        %v1714 = vpop.f32.mrf.mxu0
        %1715 = vdwg.mxu0
        %v1717 = vsel %vm1397, %v1676, 0
        %v1720 = vsel %vm1594, %v1340, 0
        %1722 = vmatpush.bf16.msra.mxu0 0
        %1723 = vmatpush.bf16.msra.mxu0 0
        %1724 = vmatpush.bf16.msra.mxu0 0
        %1725 = vmatpush.bf16.msra.mxu0 0
        %1726 = vmatpush.bf16.msra.mxu0 0
        %1727 = vmatpush.bf16.msra.mxu0 0
        %1728 = vmatpush.bf16.msra.mxu0 0
        %1729 = vmatpush.bf16.msra.mxu0 %v1720
        %1730 = vmatmul.bf16.gmra.mxu0 %v1717
        %v1731 = vpop.f32.mrf.mxu0
        %v1732 = vadd.f32 0.0, %v1731
        %v1733 = vpop.f32.mrf.mxu0
        %1734 = vdwg.mxu0
        %v1736 = vsel %vm1397, %v1677, 0
        %v1739 = vsel %vm1594, %v1341, 0
        %1741 = vmatpush.bf16.msra.mxu0 0
        %1742 = vmatpush.bf16.msra.mxu0 0
        %1743 = vmatpush.bf16.msra.mxu0 0
        %1744 = vmatpush.bf16.msra.mxu0 0
        %1745 = vmatpush.bf16.msra.mxu0 0
        %1746 = vmatpush.bf16.msra.mxu0 0
        %1747 = vmatpush.bf16.msra.mxu0 0
        %1748 = vmatpush.bf16.msra.mxu0 %v1739
        %1749 = vmatmul.bf16.gmra.mxu0 %v1736
        %v1750 = vpop.f32.mrf.mxu0
        %v1751 = vadd.f32 0.0, %v1750
        %v1752 = vpop.f32.mrf.mxu0
        %1753 = vdwg.mxu0
        %v1754 = vsel %vm1279, %v1694, 0.0
        %v1755 = vsel %vm1279, %v1713, 0.0
        %v1756 = vadd.f32 %v1754, %v1755
        %v1757 = vsel %vm1279, %v1732, 0.0
        %v1758 = vadd.f32 %v1756, %v1757
        %v1759 = vsel %vm1279, %v1751, 0.0
        %v1760 = vadd.f32 %v1758, %v1759
        %v1762 = vperm.slane %v1342, 0
        %v1764 = vadd.f32 %v1760, %v1762
        %v1765 = vadd.f32 %v1276, %v1764
        %v1766 = vld [vmem:[%s21] sm:$0x1]
        %v1767 = vld [vmem:[%s23] sm:$0x1]
        %v1768 = vsel %vm1279, %v1765, 0.0
        %1769 = vadd.xlane.f32.xlu0 %v1768
        %v1770 = vpop.xlane.xlu0 %1769
        %v1771 = vmul.f32 %v1770, %v1289
        %v1772 = vsub.f32 %v1765, %v1771
        %v1773 = vmul.f32 %v1772, %v1772
        %v1774 = vsel %vm1279, %v1773, 0.0
        %1775 = vadd.xlane.f32.xlu0 %v1774
        %v1776 = vpop.xlane.xlu0 %1775
        %v1777 = vmul.f32 %v1776, 0.032258064
        %v1778 = vrsqrt.pop %v1777
        %v1779 = vmul.f32 %v1778, %v1777
        %v1780 = vmul.f32 %v1779, %v1778
        %v1781 = vmul.f32 0.5, %v1780
        %v1782 = vsub.f32 1.5, %v1781
        %v1783 = vmul.f32 %v1778, %v1782
        %v1784 = vmul.f32 %v1777, %v1783
        %vm1785 = vcmp.eq.f32.partialorder %v1777, inf
        %v1786 = vsel %vm1785, %v1777, %v1784
        %vm1787 = vcmp.eq.f32.partialorder %v1777, 0.0
        %v1788 = vand.u32 %v1777, 2147483648
        %v1789 = vsel %vm1787, %v1788, %v1786
        %v1790 = vadd.f32 %v1789, 1e-06
        %v1791 = vrcp.pop %v1790
        %v1792 = vmul.f32 %v1790, %v1791
        %v1793 = vsub.f32 1.0, %v1792
        %v1794 = vmul.f32 %v1791, %v1793
        %v1795 = vadd.f32 %v1791, %v1794
        %vm1796 = vweird.f32 %v1790
        %vm1797 = vweird.f32 %v1791
        %vm1798 = vmor %vm1796, %vm1797
        %v1799 = vsel %vm1798, %v1791, %v1795
        %v1800 = vand.u32 2147483647, %v1790
        %vm1801 = vcmp.eq.f32.partialorder %v1800, 8.507059e+37
        %v1802 = vand.u32 %v1790, 2147483648
        %v1803 = vor.u32 1.1754944e-38, %v1802
        %v1804 = vsel %vm1801, %v1803, %v1799
        %v1805 = vmul.f32 %v1772, %v1804
        %v1807 = vperm.slane %v1766, 0
        %v1809 = vmul.f32 %v1807, %v1805
        %v1811 = vperm.slane %v1767, 0
        %v1813 = vadd.f32 %v1809, %v1811
        %v1814 = vld [vmem:[%s25] sm:$0xf]
        %v1815 = vld [vmem:[%s25 + $0x4] sm:$0xf]
        %v1816 = vld [vmem:[%s25 + $0x8] sm:$0xf]
        %v1817 = vld [vmem:[%s25 + $0xc] sm:$0xf]
        %v1818 = vld [vmem:[%s27] sm:$0x1]
        %v1819 = vld [vmem:[%s29] sm:$0xf]
        %v1820 = vld [vmem:[%s29 + $0x4] sm:$0xf]
        %v1821 = vld [vmem:[%s29 + $0x8] sm:$0xf]
        %v1822 = vld [vmem:[%s29 + $0xc] sm:$0xf]
        %v1823 = vld [vmem:[%s29 + $0x10] sm:$0xf]
        %v1824 = vld [vmem:[%s29 + $0x14] sm:$0xf]
        %v1825 = vld [vmem:[%s29 + $0x18] sm:$0xf]
        %v1826 = vld [vmem:[%s29 + $0x1c] sm:$0xf]
        %v1827 = vld [vmem:[%s31] sm:$0x1]
        %v1828 = vpack.c.bf16 %v1813, %v1813
        %v1830 = vperm.slane %v1818, 0
        %v1836 = vunpack.c.l.b16 %v1814
        %v1837 = vunpack.c.l.b16 %v1815
        %v1838 = vunpack.c.l.b16 %v1816
        %v1839 = vunpack.c.l.b16 %v1817
        %v1840 = vpack.c.b16 %v1837, %v1836
        %v1841 = vpack.c.b16 %v1839, %v1838
        %v1845 = vsel %vm1279, %v1828, 0
        %1847 = vmatpush.bf16.msra.mxu0 0
        %1848 = vmatpush.bf16.msra.mxu0 0
        %1849 = vmatpush.bf16.msra.mxu0 0
        %1850 = vmatpush.bf16.msra.mxu0 0
        %1851 = vmatpush.bf16.msra.mxu0 0
        %1852 = vmatpush.bf16.msra.mxu0 0
        %1853 = vmatpush.bf16.msra.mxu0 %v1841
        %1854 = vmatpush.bf16.msra.mxu0 %v1840
        %1855 = vmatmul.bf16.gmra.mxu0 %v1845
        %v1856 = vpop.f32.mrf.mxu0
        %v1857 = vadd.f32 %v1830, %v1856
        %v1858 = vpop.f32.mrf.mxu0
        %1859 = vdwg.mxu0
        %v1860 = vmax.f32 %v1857, 0.0
        %v1861 = vpack.c.bf16 %v1860, %v1860
        %v1863 = vperm.slane %v1827, 0
        %v1873 = vunpack.c.l.b16 %v1819
        %v1874 = vunpack.c.l.b16 %v1820
        %v1875 = vunpack.c.l.b16 %v1821
        %v1876 = vunpack.c.l.b16 %v1822
        %v1877 = vunpack.c.l.b16 %v1823
        %v1878 = vunpack.c.l.b16 %v1824
        %v1879 = vunpack.c.l.b16 %v1825
        %v1880 = vunpack.c.l.b16 %v1826
        %v1881 = vpack.c.b16 %v1874, %v1873
        %v1882 = vpack.c.b16 %v1876, %v1875
        %v1883 = vpack.c.b16 %v1878, %v1877
        %v1884 = vpack.c.b16 %v1880, %v1879
        %vm1889 = vcmask 523264
        %v1891 = vsel %vm1889, %v1861, 0
        %1893 = vmatpush.bf16.msra.mxu0 0
        %1894 = vmatpush.bf16.msra.mxu0 0
        %1895 = vmatpush.bf16.msra.mxu0 0
        %1896 = vmatpush.bf16.msra.mxu0 0
        %1897 = vmatpush.bf16.msra.mxu0 %v1884
        %1898 = vmatpush.bf16.msra.mxu0 %v1883
        %1899 = vmatpush.bf16.msra.mxu0 %v1882
        %1900 = vmatpush.bf16.msra.mxu0 %v1881
        %1901 = vmatmul.bf16.gmra.mxu0 %v1891
        %v1902 = vpop.f32.mrf.mxu0
        %v1903 = vadd.f32 %v1863, %v1902
        %v1904 = vpop.f32.mrf.mxu0
        %1905 = vdwg.mxu0
        %v1906 = vadd.f32 %v1765, %v1903
        %s1907 = scalar_lea.vmem %s9, 1
        %v1908 = vld [vmem:[%s1907] sm:$0x1]
        %s1909 = scalar_lea.vmem %s11, 1
        %v1910 = vld [vmem:[%s1909] sm:$0x1]
        %v1911 = vsel %vm1279, %v1906, 0.0
        %1912 = vadd.xlane.f32.xlu0 %v1911
        %v1913 = vpop.xlane.xlu0 %1912
        %v1914 = vmul.f32 %v1913, %v1289
        %v1915 = vsub.f32 %v1906, %v1914
        %v1916 = vmul.f32 %v1915, %v1915
        %v1917 = vsel %vm1279, %v1916, 0.0
        %1918 = vadd.xlane.f32.xlu0 %v1917
        %v1919 = vpop.xlane.xlu0 %1918
        %v1920 = vmul.f32 %v1919, 0.032258064
        %v1921 = vrsqrt.pop %v1920
        %v1922 = vmul.f32 %v1921, %v1920
        %v1923 = vmul.f32 %v1922, %v1921
        %v1924 = vmul.f32 0.5, %v1923
        %v1925 = vsub.f32 1.5, %v1924
        %v1926 = vmul.f32 %v1921, %v1925
        %v1927 = vmul.f32 %v1920, %v1926
        %vm1928 = vcmp.eq.f32.partialorder %v1920, inf
        %v1929 = vsel %vm1928, %v1920, %v1927
        %vm1930 = vcmp.eq.f32.partialorder %v1920, 0.0
        %v1931 = vand.u32 %v1920, 2147483648
        %v1932 = vsel %vm1930, %v1931, %v1929
        %v1933 = vadd.f32 %v1932, 1e-06
        %v1934 = vrcp.pop %v1933
        %v1935 = vmul.f32 %v1933, %v1934
        %v1936 = vsub.f32 1.0, %v1935
        %v1937 = vmul.f32 %v1934, %v1936
        %v1938 = vadd.f32 %v1934, %v1937
        %vm1939 = vweird.f32 %v1933
        %vm1940 = vweird.f32 %v1934
        %vm1941 = vmor %vm1939, %vm1940
        %v1942 = vsel %vm1941, %v1934, %v1938
        %v1943 = vand.u32 2147483647, %v1933
        %vm1944 = vcmp.eq.f32.partialorder %v1943, 8.507059e+37
        %v1945 = vand.u32 %v1933, 2147483648
        %v1946 = vor.u32 1.1754944e-38, %v1945
        %v1947 = vsel %vm1944, %v1946, %v1942
        %v1948 = vmul.f32 %v1915, %v1947
        %v1950 = vperm.slane %v1908, 0
        %v1952 = vmul.f32 %v1950, %v1948
        %v1954 = vperm.slane %v1910, 0
        %v1956 = vadd.f32 %v1952, %v1954
        %s1957 = scalar_lea.vmem %s13, 16
        %v1958 = vld [vmem:[%s1957] sm:$0xf]
        %v1959 = vld [vmem:[%s1957 + $0x4] sm:$0xf]
        %v1960 = vld [vmem:[%s1957 + $0x8] sm:$0xf]
        %v1961 = vld [vmem:[%s1957 + $0xc] sm:$0xf]
        %s1962 = scalar_lea.vmem %s15, 1
        %v1963 = vld [vmem:[%s1962] sm:$0x1]
        %s1964 = scalar_lea.vmem %s17, 16
        %v1965 = vld [vmem:[%s1964] sm:$0xf]
        %v1966 = vld [vmem:[%s1964 + $0x4] sm:$0xf]
        %v1967 = vld [vmem:[%s1964 + $0x8] sm:$0xf]
        %v1968 = vld [vmem:[%s1964 + $0xc] sm:$0xf]
        %s1969 = scalar_lea.vmem %s19, 1
        %v1970 = vld [vmem:[%s1969] sm:$0x1]
        %v1971 = vpack.c.bf16 %v1956, %v1956
        %v1973 = vperm.slane %v1963, 0
        %v1979 = vunpack.c.l.b16 %v1958
        %v1980 = vunpack.c.l.b16 %v1959
        %v1981 = vunpack.c.l.b16 %v1960
        %v1982 = vunpack.c.l.b16 %v1961
        %v1983 = vpack.c.b16 %v1980, %v1979
        %v1984 = vpack.c.b16 %v1982, %v1981
        %v1988 = vsel %vm1279, %v1971, 0
        %1990 = vmatpush.bf16.msra.mxu0 0
        %1991 = vmatpush.bf16.msra.mxu0 0
        %1992 = vmatpush.bf16.msra.mxu0 0
        %1993 = vmatpush.bf16.msra.mxu0 0
        %1994 = vmatpush.bf16.msra.mxu0 0
        %1995 = vmatpush.bf16.msra.mxu0 0
        %1996 = vmatpush.bf16.msra.mxu0 %v1984
        %1997 = vmatpush.bf16.msra.mxu0 %v1983
        %1998 = vmatmul.bf16.gmra.mxu0 %v1988
        %v1999 = vpop.f32.mrf.mxu0
        %v2000 = vadd.f32 %v1973, %v1999
        %v2001 = vpop.f32.mrf.mxu0
        %2002 = vdwg.mxu0
        %2004 = vrot.lane.b32.xlu0 %v2000, 120
        %v2005 = vpop.permute.xlu0 %2004
        %2007 = vrot.lane.b32.xlu0 %v2000, 112
        %v2008 = vpop.permute.xlu0 %2007
        %2010 = vrot.lane.b32.xlu0 %v2000, 104
        %v2011 = vpop.permute.xlu0 %2010
        %v2013 = vpack.c.bf16 %v2000, %v2000
        %v2014 = vpack.c.bf16 %v2005, %v2005
        %v2015 = vpack.c.bf16 %v2008, %v2008
        %v2016 = vpack.c.bf16 %v2011, %v2011
        %v2018 = vunpack.c.l.b16 %v2013
        %v2019 = vpack.c.b16 %v2018, %v2018
        %2020 = vrot.lane.b32.xlu0 %v2019, 96
        %v2021 = vpop.permute.xlu0 %2020
        %v2023 = vsel %vm1397, %v2013, 0
        %v2026 = vsel %vm1397, %v2021, 0
        %2028 = vmatpush.bf16.xpose.msra.mxu0 0
        %2029 = vmatpush.bf16.xpose.msra.mxu0 0
        %2030 = vmatpush.bf16.xpose.msra.mxu0 0
        %2031 = vmatpush.bf16.xpose.msra.mxu0 0
        %2032 = vmatpush.bf16.xpose.msra.mxu0 0
        %2033 = vmatpush.bf16.xpose.msra.mxu0 0
        %2034 = vmatpush.bf16.xpose.msra.mxu0 0
        %2035 = vmatpush.bf16.xpose.msra.mxu0 %v2026
        %2036 = vmatmul.bf16.gmra.mxu0 %v2023
        %v2037 = vpop.f32.mrf.mxu0
        %v2038 = vadd.f32 %v1390, %v2037
        %v2039 = vpop.f32.mrf.mxu0
        %2040 = vdwg.mxu0
        %v2042 = vunpack.c.l.b16 %v2014
        %v2043 = vpack.c.b16 %v2042, %v2042
        %2044 = vrot.lane.b32.xlu0 %v2043, 96
        %v2045 = vpop.permute.xlu0 %2044
        %v2047 = vsel %vm1397, %v2014, 0
        %v2050 = vsel %vm1397, %v2045, 0
        %2052 = vmatpush.bf16.xpose.msra.mxu0 0
        %2053 = vmatpush.bf16.xpose.msra.mxu0 0
        %2054 = vmatpush.bf16.xpose.msra.mxu0 0
        %2055 = vmatpush.bf16.xpose.msra.mxu0 0
        %2056 = vmatpush.bf16.xpose.msra.mxu0 0
        %2057 = vmatpush.bf16.xpose.msra.mxu0 0
        %2058 = vmatpush.bf16.xpose.msra.mxu0 0
        %2059 = vmatpush.bf16.xpose.msra.mxu0 %v2050
        %2060 = vmatmul.bf16.gmra.mxu0 %v2047
        %v2061 = vpop.f32.mrf.mxu0
        %v2062 = vadd.f32 %v1390, %v2061
        %v2063 = vpop.f32.mrf.mxu0
        %2064 = vdwg.mxu0
        %v2066 = vunpack.c.l.b16 %v2015
        %v2067 = vpack.c.b16 %v2066, %v2066
        %2068 = vrot.lane.b32.xlu0 %v2067, 96
        %v2069 = vpop.permute.xlu0 %2068
        %v2071 = vsel %vm1397, %v2015, 0
        %v2074 = vsel %vm1397, %v2069, 0
        %2076 = vmatpush.bf16.xpose.msra.mxu0 0
        %2077 = vmatpush.bf16.xpose.msra.mxu0 0
        %2078 = vmatpush.bf16.xpose.msra.mxu0 0
        %2079 = vmatpush.bf16.xpose.msra.mxu0 0
        %2080 = vmatpush.bf16.xpose.msra.mxu0 0
        %2081 = vmatpush.bf16.xpose.msra.mxu0 0
        %2082 = vmatpush.bf16.xpose.msra.mxu0 0
        %2083 = vmatpush.bf16.xpose.msra.mxu0 %v2074
        %2084 = vmatmul.bf16.gmra.mxu0 %v2071
        %v2085 = vpop.f32.mrf.mxu0
        %v2086 = vadd.f32 %v1390, %v2085
        %v2087 = vpop.f32.mrf.mxu0
        %2088 = vdwg.mxu0
        %v2090 = vunpack.c.l.b16 %v2016
        %v2091 = vpack.c.b16 %v2090, %v2090
        %2092 = vrot.lane.b32.xlu0 %v2091, 96
        %v2093 = vpop.permute.xlu0 %2092
        %v2095 = vsel %vm1397, %v2016, 0
        %v2098 = vsel %vm1397, %v2093, 0
        %2100 = vmatpush.bf16.xpose.msra.mxu0 0
        %2101 = vmatpush.bf16.xpose.msra.mxu0 0
        %2102 = vmatpush.bf16.xpose.msra.mxu0 0
        %2103 = vmatpush.bf16.xpose.msra.mxu0 0
        %2104 = vmatpush.bf16.xpose.msra.mxu0 0
        %2105 = vmatpush.bf16.xpose.msra.mxu0 0
        %2106 = vmatpush.bf16.xpose.msra.mxu0 0
        %2107 = vmatpush.bf16.xpose.msra.mxu0 %v2098
        %2108 = vmatmul.bf16.gmra.mxu0 %v2095
        %v2109 = vpop.f32.mrf.mxu0
        %v2110 = vadd.f32 %v1390, %v2109
        %v2111 = vpop.f32.mrf.mxu0
        %2112 = vdwg.mxu0
        %v2113 = vsel %vm1397, %v2038, -inf
        %2114 = vmax.xlane.f32.xlu0 %v2113
        %v2115 = vpop.xlane.xlu0 %2114
        %v2116 = vsel %vm1397, %v2062, -inf
        %2117 = vmax.xlane.f32.xlu0 %v2116
        %v2118 = vpop.xlane.xlu0 %2117
        %v2119 = vsel %vm1397, %v2086, -inf
        %2120 = vmax.xlane.f32.xlu0 %v2119
        %v2121 = vpop.xlane.xlu0 %2120
        %v2122 = vsel %vm1397, %v2110, -inf
        %2123 = vmax.xlane.f32.xlu0 %v2122
        %v2124 = vpop.xlane.xlu0 %2123
        %v2125 = vsub.f32 %v2038, %v2115
        %v2126 = vsub.f32 %v2062, %v2118
        %v2127 = vsub.f32 %v2086, %v2121
        %v2128 = vsub.f32 %v2110, %v2124
        %v2129 = vmul.f32 %v2125, 1.442695
        %v2130 = vpow.pop %v2129
        %v2131 = vmul.f32 %v2126, 1.442695
        %v2132 = vpow.pop %v2131
        %v2133 = vmul.f32 %v2127, 1.442695
        %v2134 = vpow.pop %v2133
        %v2135 = vmul.f32 %v2128, 1.442695
        %v2136 = vpow.pop %v2135
        %v2137 = vsel %vm1397, %v2130, 0.0
        %2138 = vadd.xlane.f32.xlu0 %v2137
        %v2139 = vpop.xlane.xlu0 %2138
        %v2140 = vsel %vm1397, %v2132, 0.0
        %2141 = vadd.xlane.f32.xlu0 %v2140
        %v2142 = vpop.xlane.xlu0 %2141
        %v2143 = vsel %vm1397, %v2134, 0.0
        %2144 = vadd.xlane.f32.xlu0 %v2143
        %v2145 = vpop.xlane.xlu0 %2144
        %v2146 = vsel %vm1397, %v2136, 0.0
        %2147 = vadd.xlane.f32.xlu0 %v2146
        %v2148 = vpop.xlane.xlu0 %2147
        %v2149 = vrcp.pop %v2139
        %v2150 = vmul.f32 %v2139, %v2149
        %v2151 = vsub.f32 1.0, %v2150
        %v2152 = vmul.f32 %v2149, %v2151
        %v2153 = vadd.f32 %v2149, %v2152
        %vm2154 = vweird.f32 %v2139
        %vm2155 = vweird.f32 %v2149
        %vm2156 = vmor %vm2154, %vm2155
        %v2157 = vsel %vm2156, %v2149, %v2153
        %v2158 = vand.u32 2147483647, %v2139
        %vm2159 = vcmp.eq.f32.partialorder %v2158, 8.507059e+37
        %v2160 = vand.u32 %v2139, 2147483648
        %v2161 = vor.u32 1.1754944e-38, %v2160
        %v2162 = vsel %vm2159, %v2161, %v2157
        %v2163 = vrcp.pop %v2142
        %v2164 = vmul.f32 %v2142, %v2163
        %v2165 = vsub.f32 1.0, %v2164
        %v2166 = vmul.f32 %v2163, %v2165
        %v2167 = vadd.f32 %v2163, %v2166
        %vm2168 = vweird.f32 %v2142
        %vm2169 = vweird.f32 %v2163
        %vm2170 = vmor %vm2168, %vm2169
        %v2171 = vsel %vm2170, %v2163, %v2167
        %v2172 = vand.u32 2147483647, %v2142
        %vm2173 = vcmp.eq.f32.partialorder %v2172, 8.507059e+37
        %v2174 = vand.u32 %v2142, 2147483648
        %v2175 = vor.u32 1.1754944e-38, %v2174
        %v2176 = vsel %vm2173, %v2175, %v2171
        %v2177 = vrcp.pop %v2145
        %v2178 = vmul.f32 %v2145, %v2177
        %v2179 = vsub.f32 1.0, %v2178
        %v2180 = vmul.f32 %v2177, %v2179
        %v2181 = vadd.f32 %v2177, %v2180
        %vm2182 = vweird.f32 %v2145
        %vm2183 = vweird.f32 %v2177
        %vm2184 = vmor %vm2182, %vm2183
        %v2185 = vsel %vm2184, %v2177, %v2181
        %v2186 = vand.u32 2147483647, %v2145
        %vm2187 = vcmp.eq.f32.partialorder %v2186, 8.507059e+37
        %v2188 = vand.u32 %v2145, 2147483648
        %v2189 = vor.u32 1.1754944e-38, %v2188
        %v2190 = vsel %vm2187, %v2189, %v2185
        %v2191 = vrcp.pop %v2148
        %v2192 = vmul.f32 %v2148, %v2191
        %v2193 = vsub.f32 1.0, %v2192
        %v2194 = vmul.f32 %v2191, %v2193
        %v2195 = vadd.f32 %v2191, %v2194
        %vm2196 = vweird.f32 %v2148
        %vm2197 = vweird.f32 %v2191
        %vm2198 = vmor %vm2196, %vm2197
        %v2199 = vsel %vm2198, %v2191, %v2195
        %v2200 = vand.u32 2147483647, %v2148
        %vm2201 = vcmp.eq.f32.partialorder %v2200, 8.507059e+37
        %v2202 = vand.u32 %v2148, 2147483648
        %v2203 = vor.u32 1.1754944e-38, %v2202
        %v2204 = vsel %vm2201, %v2203, %v2199
        %v2205 = vmul.f32 %v2130, %v2162
        %v2206 = vmul.f32 %v2132, %v2176
        %v2207 = vmul.f32 %v2134, %v2190
        %v2208 = vmul.f32 %v2136, %v2204
        %v2209 = vpack.c.bf16 %v2205, %v2205
        %v2210 = vpack.c.bf16 %v2206, %v2206
        %v2211 = vpack.c.bf16 %v2207, %v2207
        %v2212 = vpack.c.bf16 %v2208, %v2208
        %2213 = vrot.lane.b32.xlu0 %v2019, 64
        %v2214 = vpop.permute.xlu0 %2213
        %v2216 = vsel %vm1397, %v2209, 0
        %v2219 = vsel %vm1594, %v2214, 0
        %2221 = vmatpush.bf16.msra.mxu0 0
        %2222 = vmatpush.bf16.msra.mxu0 0
        %2223 = vmatpush.bf16.msra.mxu0 0
        %2224 = vmatpush.bf16.msra.mxu0 0
        %2225 = vmatpush.bf16.msra.mxu0 0
        %2226 = vmatpush.bf16.msra.mxu0 0
        %2227 = vmatpush.bf16.msra.mxu0 0
        %2228 = vmatpush.bf16.msra.mxu0 %v2219
        %2229 = vmatmul.bf16.gmra.mxu0 %v2216
        %v2230 = vpop.f32.mrf.mxu0
        %v2231 = vadd.f32 0.0, %v2230
        %v2232 = vpop.f32.mrf.mxu0
        %2233 = vdwg.mxu0
        %2234 = vrot.lane.b32.xlu0 %v2043, 64
        %v2235 = vpop.permute.xlu0 %2234
        %v2237 = vsel %vm1397, %v2210, 0
        %v2240 = vsel %vm1594, %v2235, 0
        %2242 = vmatpush.bf16.msra.mxu0 0
        %2243 = vmatpush.bf16.msra.mxu0 0
        %2244 = vmatpush.bf16.msra.mxu0 0
        %2245 = vmatpush.bf16.msra.mxu0 0
        %2246 = vmatpush.bf16.msra.mxu0 0
        %2247 = vmatpush.bf16.msra.mxu0 0
        %2248 = vmatpush.bf16.msra.mxu0 0
        %2249 = vmatpush.bf16.msra.mxu0 %v2240
        %2250 = vmatmul.bf16.gmra.mxu0 %v2237
        %v2251 = vpop.f32.mrf.mxu0
        %v2252 = vadd.f32 0.0, %v2251
        %v2253 = vpop.f32.mrf.mxu0
        %2254 = vdwg.mxu0
        %2255 = vrot.lane.b32.xlu0 %v2067, 64
        %v2256 = vpop.permute.xlu0 %2255
        %v2258 = vsel %vm1397, %v2211, 0
        %v2261 = vsel %vm1594, %v2256, 0
        %2263 = vmatpush.bf16.msra.mxu0 0
        %2264 = vmatpush.bf16.msra.mxu0 0
        %2265 = vmatpush.bf16.msra.mxu0 0
        %2266 = vmatpush.bf16.msra.mxu0 0
        %2267 = vmatpush.bf16.msra.mxu0 0
        %2268 = vmatpush.bf16.msra.mxu0 0
        %2269 = vmatpush.bf16.msra.mxu0 0
        %2270 = vmatpush.bf16.msra.mxu0 %v2261
        %2271 = vmatmul.bf16.gmra.mxu0 %v2258
        %v2272 = vpop.f32.mrf.mxu0
        %v2273 = vadd.f32 0.0, %v2272
        %v2274 = vpop.f32.mrf.mxu0
        %2275 = vdwg.mxu0
        %2276 = vrot.lane.b32.xlu0 %v2091, 64
        %v2277 = vpop.permute.xlu0 %2276
        %v2279 = vsel %vm1397, %v2212, 0
        %v2282 = vsel %vm1594, %v2277, 0
        %2284 = vmatpush.bf16.msra.mxu0 0
        %2285 = vmatpush.bf16.msra.mxu0 0
        %2286 = vmatpush.bf16.msra.mxu0 0
        %2287 = vmatpush.bf16.msra.mxu0 0
        %2288 = vmatpush.bf16.msra.mxu0 0
        %2289 = vmatpush.bf16.msra.mxu0 0
        %2290 = vmatpush.bf16.msra.mxu0 0
        %2291 = vmatpush.bf16.msra.mxu0 %v2282
        %2292 = vmatmul.bf16.gmra.mxu0 %v2279
        %v2293 = vpop.f32.mrf.mxu0
        %v2294 = vadd.f32 0.0, %v2293
        %v2295 = vpop.f32.mrf.mxu0
        %2296 = vdwg.mxu0
        %v2297 = vpack.c.bf16 %v2231, %v2231
        %v2298 = vpack.c.bf16 %v2252, %v2252
        %v2299 = vpack.c.bf16 %v2273, %v2273
        %v2300 = vpack.c.bf16 %v2294, %v2294
        %v2302 = vsel %vm1397, %v2297, 0
        %v2305 = vsel %vm1594, %v1965, 0
        %2307 = vmatpush.bf16.msra.mxu0 0
        %2308 = vmatpush.bf16.msra.mxu0 0
        %2309 = vmatpush.bf16.msra.mxu0 0
        %2310 = vmatpush.bf16.msra.mxu0 0
        %2311 = vmatpush.bf16.msra.mxu0 0
        %2312 = vmatpush.bf16.msra.mxu0 0
        %2313 = vmatpush.bf16.msra.mxu0 0
        %2314 = vmatpush.bf16.msra.mxu0 %v2305
        %2315 = vmatmul.bf16.gmra.mxu0 %v2302
        %v2316 = vpop.f32.mrf.mxu0
        %v2317 = vadd.f32 0.0, %v2316
        %v2318 = vpop.f32.mrf.mxu0
        %2319 = vdwg.mxu0
        %v2321 = vsel %vm1397, %v2298, 0
        %v2324 = vsel %vm1594, %v1966, 0
        %2326 = vmatpush.bf16.msra.mxu0 0
        %2327 = vmatpush.bf16.msra.mxu0 0
        %2328 = vmatpush.bf16.msra.mxu0 0
        %2329 = vmatpush.bf16.msra.mxu0 0
        %2330 = vmatpush.bf16.msra.mxu0 0
        %2331 = vmatpush.bf16.msra.mxu0 0
        %2332 = vmatpush.bf16.msra.mxu0 0
        %2333 = vmatpush.bf16.msra.mxu0 %v2324
        %2334 = vmatmul.bf16.gmra.mxu0 %v2321
        %v2335 = vpop.f32.mrf.mxu0
        %v2336 = vadd.f32 0.0, %v2335
        %v2337 = vpop.f32.mrf.mxu0
        %2338 = vdwg.mxu0
        %v2340 = vsel %vm1397, %v2299, 0
        %v2343 = vsel %vm1594, %v1967, 0
        %2345 = vmatpush.bf16.msra.mxu0 0
        %2346 = vmatpush.bf16.msra.mxu0 0
        %2347 = vmatpush.bf16.msra.mxu0 0
        %2348 = vmatpush.bf16.msra.mxu0 0
        %2349 = vmatpush.bf16.msra.mxu0 0
        %2350 = vmatpush.bf16.msra.mxu0 0
        %2351 = vmatpush.bf16.msra.mxu0 0
        %2352 = vmatpush.bf16.msra.mxu0 %v2343
        %2353 = vmatmul.bf16.gmra.mxu0 %v2340
        %v2354 = vpop.f32.mrf.mxu0
        %v2355 = vadd.f32 0.0, %v2354
        %v2356 = vpop.f32.mrf.mxu0
        %2357 = vdwg.mxu0
        %v2359 = vsel %vm1397, %v2300, 0
        %v2362 = vsel %vm1594, %v1968, 0
        %2364 = vmatpush.bf16.msra.mxu0 0
        %2365 = vmatpush.bf16.msra.mxu0 0
        %2366 = vmatpush.bf16.msra.mxu0 0
        %2367 = vmatpush.bf16.msra.mxu0 0
        %2368 = vmatpush.bf16.msra.mxu0 0
        %2369 = vmatpush.bf16.msra.mxu0 0
        %2370 = vmatpush.bf16.msra.mxu0 0
        %2371 = vmatpush.bf16.msra.mxu0 %v2362
        %2372 = vmatmul.bf16.gmra.mxu0 %v2359
        %v2373 = vpop.f32.mrf.mxu0
        %v2374 = vadd.f32 0.0, %v2373
        %v2375 = vpop.f32.mrf.mxu0
        %2376 = vdwg.mxu0
        %v2377 = vsel %vm1279, %v2317, 0.0
        %v2378 = vsel %vm1279, %v2336, 0.0
        %v2379 = vadd.f32 %v2377, %v2378
        %v2380 = vsel %vm1279, %v2355, 0.0
        %v2381 = vadd.f32 %v2379, %v2380
        %v2382 = vsel %vm1279, %v2374, 0.0
        %v2383 = vadd.f32 %v2381, %v2382
        %v2385 = vperm.slane %v1970, 0
        %v2387 = vadd.f32 %v2383, %v2385
        %v2388 = vadd.f32 %v1906, %v2387
        %s2389 = scalar_lea.vmem %s21, 1
        %v2390 = vld [vmem:[%s2389] sm:$0x1]
        %s2391 = scalar_lea.vmem %s23, 1
        %v2392 = vld [vmem:[%s2391] sm:$0x1]
        %v2393 = vsel %vm1279, %v2388, 0.0
        %2394 = vadd.xlane.f32.xlu0 %v2393
        %v2395 = vpop.xlane.xlu0 %2394
        %v2396 = vmul.f32 %v2395, %v1289
        %v2397 = vsub.f32 %v2388, %v2396
        %v2398 = vmul.f32 %v2397, %v2397
        %v2399 = vsel %vm1279, %v2398, 0.0
        %2400 = vadd.xlane.f32.xlu0 %v2399
        %v2401 = vpop.xlane.xlu0 %2400
        %v2402 = vmul.f32 %v2401, 0.032258064
        %v2403 = vrsqrt.pop %v2402
        %v2404 = vmul.f32 %v2403, %v2402
        %v2405 = vmul.f32 %v2404, %v2403
        %v2406 = vmul.f32 0.5, %v2405
        %v2407 = vsub.f32 1.5, %v2406
        %v2408 = vmul.f32 %v2403, %v2407
        %v2409 = vmul.f32 %v2402, %v2408
        %vm2410 = vcmp.eq.f32.partialorder %v2402, inf
        %v2411 = vsel %vm2410, %v2402, %v2409
        %vm2412 = vcmp.eq.f32.partialorder %v2402, 0.0
        %v2413 = vand.u32 %v2402, 2147483648
        %v2414 = vsel %vm2412, %v2413, %v2411
        %v2415 = vadd.f32 %v2414, 1e-06
        %v2416 = vrcp.pop %v2415
        %v2417 = vmul.f32 %v2415, %v2416
        %v2418 = vsub.f32 1.0, %v2417
        %v2419 = vmul.f32 %v2416, %v2418
        %v2420 = vadd.f32 %v2416, %v2419
        %vm2421 = vweird.f32 %v2415
        %vm2422 = vweird.f32 %v2416
        %vm2423 = vmor %vm2421, %vm2422
        %v2424 = vsel %vm2423, %v2416, %v2420
        %v2425 = vand.u32 2147483647, %v2415
        %vm2426 = vcmp.eq.f32.partialorder %v2425, 8.507059e+37
        %v2427 = vand.u32 %v2415, 2147483648
        %v2428 = vor.u32 1.1754944e-38, %v2427
        %v2429 = vsel %vm2426, %v2428, %v2424
        %v2430 = vmul.f32 %v2397, %v2429
        %v2432 = vperm.slane %v2390, 0
        %v2434 = vmul.f32 %v2432, %v2430
        %v2436 = vperm.slane %v2392, 0
        %v2438 = vadd.f32 %v2434, %v2436
        %s2439 = scalar_lea.vmem %s25, 16
        %v2440 = vld [vmem:[%s2439] sm:$0xf]
        %v2441 = vld [vmem:[%s2439 + $0x4] sm:$0xf]
        %v2442 = vld [vmem:[%s2439 + $0x8] sm:$0xf]
        %v2443 = vld [vmem:[%s2439 + $0xc] sm:$0xf]
        %s2444 = scalar_lea.vmem %s27, 1
        %v2445 = vld [vmem:[%s2444] sm:$0x1]
        %s2446 = scalar_lea.vmem %s29, 32
        %v2447 = vld [vmem:[%s2446] sm:$0xf]
        %v2448 = vld [vmem:[%s2446 + $0x4] sm:$0xf]
        %v2449 = vld [vmem:[%s2446 + $0x8] sm:$0xf]
        %v2450 = vld [vmem:[%s2446 + $0xc] sm:$0xf]
        %v2451 = vld [vmem:[%s2446 + $0x10] sm:$0xf]
        %v2452 = vld [vmem:[%s2446 + $0x14] sm:$0xf]
        %v2453 = vld [vmem:[%s2446 + $0x18] sm:$0xf]
        %v2454 = vld [vmem:[%s2446 + $0x1c] sm:$0xf]
        %s2455 = scalar_lea.vmem %s31, 1
        %v2456 = vld [vmem:[%s2455] sm:$0x1]
        %v2457 = vpack.c.bf16 %v2438, %v2438
        %v2459 = vperm.slane %v2445, 0
        %v2465 = vunpack.c.l.b16 %v2440
        %v2466 = vunpack.c.l.b16 %v2441
        %v2467 = vunpack.c.l.b16 %v2442
        %v2468 = vunpack.c.l.b16 %v2443
        %v2469 = vpack.c.b16 %v2466, %v2465
        %v2470 = vpack.c.b16 %v2468, %v2467
        %v2474 = vsel %vm1279, %v2457, 0
        %2476 = vmatpush.bf16.msra.mxu0 0
        %2477 = vmatpush.bf16.msra.mxu0 0
        %2478 = vmatpush.bf16.msra.mxu0 0
        %2479 = vmatpush.bf16.msra.mxu0 0
        %2480 = vmatpush.bf16.msra.mxu0 0
        %2481 = vmatpush.bf16.msra.mxu0 0
        %2482 = vmatpush.bf16.msra.mxu0 %v2470
        %2483 = vmatpush.bf16.msra.mxu0 %v2469
        %2484 = vmatmul.bf16.gmra.mxu0 %v2474
        %v2485 = vpop.f32.mrf.mxu0
        %v2486 = vadd.f32 %v2459, %v2485
        %v2487 = vpop.f32.mrf.mxu0
        %2488 = vdwg.mxu0
        %v2489 = vmax.f32 %v2486, 0.0
        %v2490 = vpack.c.bf16 %v2489, %v2489
        %v2492 = vperm.slane %v2456, 0
        %v2502 = vunpack.c.l.b16 %v2447
        %v2503 = vunpack.c.l.b16 %v2448
        %v2504 = vunpack.c.l.b16 %v2449
        %v2505 = vunpack.c.l.b16 %v2450
        %v2506 = vunpack.c.l.b16 %v2451
        %v2507 = vunpack.c.l.b16 %v2452
        %v2508 = vunpack.c.l.b16 %v2453
        %v2509 = vunpack.c.l.b16 %v2454
        %v2510 = vpack.c.b16 %v2503, %v2502
        %v2511 = vpack.c.b16 %v2505, %v2504
        %v2512 = vpack.c.b16 %v2507, %v2506
        %v2513 = vpack.c.b16 %v2509, %v2508
        %v2519 = vsel %vm1889, %v2490, 0
        %2521 = vmatpush.bf16.msra.mxu0 0
        %2522 = vmatpush.bf16.msra.mxu0 0
        %2523 = vmatpush.bf16.msra.mxu0 0
        %2524 = vmatpush.bf16.msra.mxu0 0
        %2525 = vmatpush.bf16.msra.mxu0 %v2513
        %2526 = vmatpush.bf16.msra.mxu0 %v2512
        %2527 = vmatpush.bf16.msra.mxu0 %v2511
        %2528 = vmatpush.bf16.msra.mxu0 %v2510
        %2529 = vmatmul.bf16.gmra.mxu0 %v2519
        %v2530 = vpop.f32.mrf.mxu0
        %v2531 = vadd.f32 %v2492, %v2530
        %v2532 = vpop.f32.mrf.mxu0
        %2533 = vdwg.mxu0
        %v2534 = vadd.f32 %v2388, %v2531
        %v2535 = vld [vmem:[%s33] sm:$0x1]
        %v2536 = vld [vmem:[%s35] sm:$0x1]
        %v2537 = vsel %vm1279, %v2534, 0.0
        %2538 = vadd.xlane.f32.xlu0 %v2537
        %v2539 = vpop.xlane.xlu0 %2538
        %v2540 = vmul.f32 %v2539, %v1289
        %v2541 = vsub.f32 %v2534, %v2540
        %v2542 = vmul.f32 %v2541, %v2541
        %v2543 = vsel %vm1279, %v2542, 0.0
        %2544 = vadd.xlane.f32.xlu0 %v2543
        %v2545 = vpop.xlane.xlu0 %2544
        %v2546 = vmul.f32 %v2545, 0.032258064
        %v2547 = vrsqrt.pop %v2546
        %v2548 = vmul.f32 %v2547, %v2546
        %v2549 = vmul.f32 %v2548, %v2547
        %v2550 = vmul.f32 0.5, %v2549
        %v2551 = vsub.f32 1.5, %v2550
        %v2552 = vmul.f32 %v2547, %v2551
        %v2553 = vmul.f32 %v2546, %v2552
        %vm2554 = vcmp.eq.f32.partialorder %v2546, inf
        %v2555 = vsel %vm2554, %v2546, %v2553
        %vm2556 = vcmp.eq.f32.partialorder %v2546, 0.0
        %v2557 = vand.u32 %v2546, 2147483648
        %v2558 = vsel %vm2556, %v2557, %v2555
        %v2559 = vadd.f32 %v2558, 1e-06
        %v2560 = vrcp.pop %v2559
        %v2561 = vmul.f32 %v2559, %v2560
        %v2562 = vsub.f32 1.0, %v2561
        %v2563 = vmul.f32 %v2560, %v2562
        %v2564 = vadd.f32 %v2560, %v2563
        %vm2565 = vweird.f32 %v2559
        %vm2566 = vweird.f32 %v2560
        %vm2567 = vmor %vm2565, %vm2566
        %v2568 = vsel %vm2567, %v2560, %v2564
        %v2569 = vand.u32 2147483647, %v2559
        %vm2570 = vcmp.eq.f32.partialorder %v2569, 8.507059e+37
        %v2571 = vand.u32 %v2559, 2147483648
        %v2572 = vor.u32 1.1754944e-38, %v2571
        %v2573 = vsel %vm2570, %v2572, %v2568
        %v2574 = vmul.f32 %v2541, %v2573
        %v2576 = vperm.slane %v2535, 0
        %v2578 = vmul.f32 %v2576, %v2574
        %v2580 = vperm.slane %v2536, 0
        %v2582 = vadd.f32 %v2578, %v2580
        %v2583 = vld [vmem:[%s1261] sm:$0xff]
        %v2584 = vld [vmem:[%s37] sm:$0x1]
        %v2585 = vld [vmem:[%s39] sm:$0x1]
        %v2586 = vsel %vm1279, %v2583, 0.0
        %2587 = vadd.xlane.f32.xlu0 %v2586
        %v2588 = vpop.xlane.xlu0 %2587
        %v2589 = vmul.f32 %v2588, %v1289
        %v2590 = vsub.f32 %v2583, %v2589
        %v2591 = vmul.f32 %v2590, %v2590
        %v2592 = vsel %vm1279, %v2591, 0.0
        %2593 = vadd.xlane.f32.xlu0 %v2592
        %v2594 = vpop.xlane.xlu0 %2593
        %v2595 = vmul.f32 %v2594, 0.032258064
        %v2596 = vrsqrt.pop %v2595
        %v2597 = vmul.f32 %v2596, %v2595
        %v2598 = vmul.f32 %v2597, %v2596
        %v2599 = vmul.f32 0.5, %v2598
        %v2600 = vsub.f32 1.5, %v2599
        %v2601 = vmul.f32 %v2596, %v2600
        %v2602 = vmul.f32 %v2595, %v2601
        %vm2603 = vcmp.eq.f32.partialorder %v2595, inf
        %v2604 = vsel %vm2603, %v2595, %v2602
        %vm2605 = vcmp.eq.f32.partialorder %v2595, 0.0
        %v2606 = vand.u32 %v2595, 2147483648
        %v2607 = vsel %vm2605, %v2606, %v2604
        %v2608 = vadd.f32 %v2607, 1e-06
        %v2609 = vrcp.pop %v2608
        %v2610 = vmul.f32 %v2608, %v2609
        %v2611 = vsub.f32 1.0, %v2610
        %v2612 = vmul.f32 %v2609, %v2611
        %v2613 = vadd.f32 %v2609, %v2612
        %vm2614 = vweird.f32 %v2608
        %vm2615 = vweird.f32 %v2609
        %vm2616 = vmor %vm2614, %vm2615
        %v2617 = vsel %vm2616, %v2609, %v2613
        %v2618 = vand.u32 2147483647, %v2608
        %vm2619 = vcmp.eq.f32.partialorder %v2618, 8.507059e+37
        %v2620 = vand.u32 %v2608, 2147483648
        %v2621 = vor.u32 1.1754944e-38, %v2620
        %v2622 = vsel %vm2619, %v2621, %v2617
        %v2623 = vmul.f32 %v2590, %v2622
        %v2625 = vperm.slane %v2584, 0
        %v2627 = vmul.f32 %v2625, %v2623
        %v2629 = vperm.slane %v2585, 0
        %v2631 = vadd.f32 %v2627, %v2629
        %v2632 = vld [vmem:[%s41] sm:$0xf]
        %v2633 = vld [vmem:[%s41 + $0x4] sm:$0xf]
        %v2634 = vld [vmem:[%s41 + $0x8] sm:$0xf]
        %v2635 = vld [vmem:[%s41 + $0xc] sm:$0xf]
        %v2636 = vld [vmem:[%s43] sm:$0x1]
        %v2637 = vld [vmem:[%s45] sm:$0xf]
        %v2638 = vld [vmem:[%s45 + $0x4] sm:$0xf]
        %v2639 = vld [vmem:[%s45 + $0x8] sm:$0xf]
        %v2640 = vld [vmem:[%s45 + $0xc] sm:$0xf]
        %v2641 = vld [vmem:[%s47] sm:$0x1]
        %v2642 = vpack.c.bf16 %v2631, %v2631
        %v2644 = vperm.slane %v2636, 0
        %v2650 = vunpack.c.l.b16 %v2632
        %v2651 = vunpack.c.l.b16 %v2633
        %v2652 = vunpack.c.l.b16 %v2634
        %v2653 = vunpack.c.l.b16 %v2635
        %v2654 = vpack.c.b16 %v2651, %v2650
        %v2655 = vpack.c.b16 %v2653, %v2652
        %v2659 = vsel %vm1279, %v2642, 0
        %2661 = vmatpush.bf16.msra.mxu0 0
        %2662 = vmatpush.bf16.msra.mxu0 0
        %2663 = vmatpush.bf16.msra.mxu0 0
        %2664 = vmatpush.bf16.msra.mxu0 0
        %2665 = vmatpush.bf16.msra.mxu0 0
        %2666 = vmatpush.bf16.msra.mxu0 0
        %2667 = vmatpush.bf16.msra.mxu0 %v2655
        %2668 = vmatpush.bf16.msra.mxu0 %v2654
        %2669 = vmatmul.bf16.gmra.mxu0 %v2659
        %v2670 = vpop.f32.mrf.mxu0
        %v2671 = vadd.f32 %v2644, %v2670
        %v2672 = vpop.f32.mrf.mxu0
        %2673 = vdwg.mxu0
        %2675 = vrot.lane.b32.xlu0 %v2671, 120
        %v2676 = vpop.permute.xlu0 %2675
        %2678 = vrot.lane.b32.xlu0 %v2671, 112
        %v2679 = vpop.permute.xlu0 %2678
        %2681 = vrot.lane.b32.xlu0 %v2671, 104
        %v2682 = vpop.permute.xlu0 %2681
        %v2684 = vpack.c.bf16 %v2671, %v2671
        %v2685 = vpack.c.bf16 %v2676, %v2676
        %v2686 = vpack.c.bf16 %v2679, %v2679
        %v2687 = vpack.c.bf16 %v2682, %v2682
        %v2689 = vunpack.c.l.b16 %v2684
        %v2690 = vpack.c.b16 %v2689, %v2689
        %2691 = vrot.lane.b32.xlu0 %v2690, 96
        %v2692 = vpop.permute.xlu0 %2691
        %v2694 = vsel %vm1397, %v2684, 0
        %v2697 = vsel %vm1397, %v2692, 0
        %2699 = vmatpush.bf16.xpose.msra.mxu0 0
        %2700 = vmatpush.bf16.xpose.msra.mxu0 0
        %2701 = vmatpush.bf16.xpose.msra.mxu0 0
        %2702 = vmatpush.bf16.xpose.msra.mxu0 0
        %2703 = vmatpush.bf16.xpose.msra.mxu0 0
        %2704 = vmatpush.bf16.xpose.msra.mxu0 0
        %2705 = vmatpush.bf16.xpose.msra.mxu0 0
        %2706 = vmatpush.bf16.xpose.msra.mxu0 %v2697
        %2707 = vmatmul.bf16.gmra.mxu0 %v2694
        %v2708 = vpop.f32.mrf.mxu0
        %v2709 = vadd.f32 %v1275, %v2708
        %v2710 = vpop.f32.mrf.mxu0
        %2711 = vdwg.mxu0
        %v2713 = vunpack.c.l.b16 %v2685
        %v2714 = vpack.c.b16 %v2713, %v2713
        %2715 = vrot.lane.b32.xlu0 %v2714, 96
        %v2716 = vpop.permute.xlu0 %2715
        %v2718 = vsel %vm1397, %v2685, 0
        %v2721 = vsel %vm1397, %v2716, 0
        %2723 = vmatpush.bf16.xpose.msra.mxu0 0
        %2724 = vmatpush.bf16.xpose.msra.mxu0 0
        %2725 = vmatpush.bf16.xpose.msra.mxu0 0
        %2726 = vmatpush.bf16.xpose.msra.mxu0 0
        %2727 = vmatpush.bf16.xpose.msra.mxu0 0
        %2728 = vmatpush.bf16.xpose.msra.mxu0 0
        %2729 = vmatpush.bf16.xpose.msra.mxu0 0
        %2730 = vmatpush.bf16.xpose.msra.mxu0 %v2721
        %2731 = vmatmul.bf16.gmra.mxu0 %v2718
        %v2732 = vpop.f32.mrf.mxu0
        %v2733 = vadd.f32 %v1275, %v2732
        %v2734 = vpop.f32.mrf.mxu0
        %2735 = vdwg.mxu0
        %v2737 = vunpack.c.l.b16 %v2686
        %v2738 = vpack.c.b16 %v2737, %v2737
        %2739 = vrot.lane.b32.xlu0 %v2738, 96
        %v2740 = vpop.permute.xlu0 %2739
        %v2742 = vsel %vm1397, %v2686, 0
        %v2745 = vsel %vm1397, %v2740, 0
        %2747 = vmatpush.bf16.xpose.msra.mxu0 0
        %2748 = vmatpush.bf16.xpose.msra.mxu0 0
        %2749 = vmatpush.bf16.xpose.msra.mxu0 0
        %2750 = vmatpush.bf16.xpose.msra.mxu0 0
        %2751 = vmatpush.bf16.xpose.msra.mxu0 0
        %2752 = vmatpush.bf16.xpose.msra.mxu0 0
        %2753 = vmatpush.bf16.xpose.msra.mxu0 0
        %2754 = vmatpush.bf16.xpose.msra.mxu0 %v2745
        %2755 = vmatmul.bf16.gmra.mxu0 %v2742
        %v2756 = vpop.f32.mrf.mxu0
        %v2757 = vadd.f32 %v1275, %v2756
        %v2758 = vpop.f32.mrf.mxu0
        %2759 = vdwg.mxu0
        %v2761 = vunpack.c.l.b16 %v2687
        %v2762 = vpack.c.b16 %v2761, %v2761
        %2763 = vrot.lane.b32.xlu0 %v2762, 96
        %v2764 = vpop.permute.xlu0 %2763
        %v2766 = vsel %vm1397, %v2687, 0
        %v2769 = vsel %vm1397, %v2764, 0
        %2771 = vmatpush.bf16.xpose.msra.mxu0 0
        %2772 = vmatpush.bf16.xpose.msra.mxu0 0
        %2773 = vmatpush.bf16.xpose.msra.mxu0 0
        %2774 = vmatpush.bf16.xpose.msra.mxu0 0
        %2775 = vmatpush.bf16.xpose.msra.mxu0 0
        %2776 = vmatpush.bf16.xpose.msra.mxu0 0
        %2777 = vmatpush.bf16.xpose.msra.mxu0 0
        %2778 = vmatpush.bf16.xpose.msra.mxu0 %v2769
        %2779 = vmatmul.bf16.gmra.mxu0 %v2766
        %v2780 = vpop.f32.mrf.mxu0
        %v2781 = vadd.f32 %v1275, %v2780
        %v2782 = vpop.f32.mrf.mxu0
        %2783 = vdwg.mxu0
        %v2784 = vsel %vm1397, %v2709, -inf
        %2785 = vmax.xlane.f32.xlu0 %v2784
        %v2786 = vpop.xlane.xlu0 %2785
        %v2787 = vsel %vm1397, %v2733, -inf
        %2788 = vmax.xlane.f32.xlu0 %v2787
        %v2789 = vpop.xlane.xlu0 %2788
        %v2790 = vsel %vm1397, %v2757, -inf
        %2791 = vmax.xlane.f32.xlu0 %v2790
        %v2792 = vpop.xlane.xlu0 %2791
        %v2793 = vsel %vm1397, %v2781, -inf
        %2794 = vmax.xlane.f32.xlu0 %v2793
        %v2795 = vpop.xlane.xlu0 %2794
        %v2796 = vsub.f32 %v2709, %v2786
        %v2797 = vsub.f32 %v2733, %v2789
        %v2798 = vsub.f32 %v2757, %v2792
        %v2799 = vsub.f32 %v2781, %v2795
        %v2800 = vmul.f32 %v2796, 1.442695
        %v2801 = vpow.pop %v2800
        %v2802 = vmul.f32 %v2797, 1.442695
        %v2803 = vpow.pop %v2802
        %v2804 = vmul.f32 %v2798, 1.442695
        %v2805 = vpow.pop %v2804
        %v2806 = vmul.f32 %v2799, 1.442695
        %v2807 = vpow.pop %v2806
        %v2808 = vsel %vm1397, %v2801, 0.0
        %2809 = vadd.xlane.f32.xlu0 %v2808
        %v2810 = vpop.xlane.xlu0 %2809
        %v2811 = vsel %vm1397, %v2803, 0.0
        %2812 = vadd.xlane.f32.xlu0 %v2811
        %v2813 = vpop.xlane.xlu0 %2812
        %v2814 = vsel %vm1397, %v2805, 0.0
        %2815 = vadd.xlane.f32.xlu0 %v2814
        %v2816 = vpop.xlane.xlu0 %2815
        %v2817 = vsel %vm1397, %v2807, 0.0
        %2818 = vadd.xlane.f32.xlu0 %v2817
        %v2819 = vpop.xlane.xlu0 %2818
        %v2820 = vrcp.pop %v2810
        %v2821 = vmul.f32 %v2810, %v2820
        %v2822 = vsub.f32 1.0, %v2821
        %v2823 = vmul.f32 %v2820, %v2822
        %v2824 = vadd.f32 %v2820, %v2823
        %vm2825 = vweird.f32 %v2810
        %vm2826 = vweird.f32 %v2820
        %vm2827 = vmor %vm2825, %vm2826
        %v2828 = vsel %vm2827, %v2820, %v2824
        %v2829 = vand.u32 2147483647, %v2810
        %vm2830 = vcmp.eq.f32.partialorder %v2829, 8.507059e+37
        %v2831 = vand.u32 %v2810, 2147483648
        %v2832 = vor.u32 1.1754944e-38, %v2831
        %v2833 = vsel %vm2830, %v2832, %v2828
        %v2834 = vrcp.pop %v2813
        %v2835 = vmul.f32 %v2813, %v2834
        %v2836 = vsub.f32 1.0, %v2835
        %v2837 = vmul.f32 %v2834, %v2836
        %v2838 = vadd.f32 %v2834, %v2837
        %vm2839 = vweird.f32 %v2813
        %vm2840 = vweird.f32 %v2834
        %vm2841 = vmor %vm2839, %vm2840
        %v2842 = vsel %vm2841, %v2834, %v2838
        %v2843 = vand.u32 2147483647, %v2813
        %vm2844 = vcmp.eq.f32.partialorder %v2843, 8.507059e+37
        %v2845 = vand.u32 %v2813, 2147483648
        %v2846 = vor.u32 1.1754944e-38, %v2845
        %v2847 = vsel %vm2844, %v2846, %v2842
        %v2848 = vrcp.pop %v2816
        %v2849 = vmul.f32 %v2816, %v2848
        %v2850 = vsub.f32 1.0, %v2849
        %v2851 = vmul.f32 %v2848, %v2850
        %v2852 = vadd.f32 %v2848, %v2851
        %vm2853 = vweird.f32 %v2816
        %vm2854 = vweird.f32 %v2848
        %vm2855 = vmor %vm2853, %vm2854
        %v2856 = vsel %vm2855, %v2848, %v2852
        %v2857 = vand.u32 2147483647, %v2816
        %vm2858 = vcmp.eq.f32.partialorder %v2857, 8.507059e+37
        %v2859 = vand.u32 %v2816, 2147483648
        %v2860 = vor.u32 1.1754944e-38, %v2859
        %v2861 = vsel %vm2858, %v2860, %v2856
        %v2862 = vrcp.pop %v2819
        %v2863 = vmul.f32 %v2819, %v2862
        %v2864 = vsub.f32 1.0, %v2863
        %v2865 = vmul.f32 %v2862, %v2864
        %v2866 = vadd.f32 %v2862, %v2865
        %vm2867 = vweird.f32 %v2819
        %vm2868 = vweird.f32 %v2862
        %vm2869 = vmor %vm2867, %vm2868
        %v2870 = vsel %vm2869, %v2862, %v2866
        %v2871 = vand.u32 2147483647, %v2819
        %vm2872 = vcmp.eq.f32.partialorder %v2871, 8.507059e+37
        %v2873 = vand.u32 %v2819, 2147483648
        %v2874 = vor.u32 1.1754944e-38, %v2873
        %v2875 = vsel %vm2872, %v2874, %v2870
        %v2876 = vmul.f32 %v2801, %v2833
        %v2877 = vmul.f32 %v2803, %v2847
        %v2878 = vmul.f32 %v2805, %v2861
        %v2879 = vmul.f32 %v2807, %v2875
        %v2880 = vpack.c.bf16 %v2876, %v2876
        %v2881 = vpack.c.bf16 %v2877, %v2877
        %v2882 = vpack.c.bf16 %v2878, %v2878
        %v2883 = vpack.c.bf16 %v2879, %v2879
        %2884 = vrot.lane.b32.xlu0 %v2690, 64
        %v2885 = vpop.permute.xlu0 %2884
        %v2887 = vsel %vm1397, %v2880, 0
        %v2890 = vsel %vm1594, %v2885, 0
        %2892 = vmatpush.bf16.msra.mxu0 0
        %2893 = vmatpush.bf16.msra.mxu0 0
        %2894 = vmatpush.bf16.msra.mxu0 0
        %2895 = vmatpush.bf16.msra.mxu0 0
        %2896 = vmatpush.bf16.msra.mxu0 0
        %2897 = vmatpush.bf16.msra.mxu0 0
        %2898 = vmatpush.bf16.msra.mxu0 0
        %2899 = vmatpush.bf16.msra.mxu0 %v2890
        %2900 = vmatmul.bf16.gmra.mxu0 %v2887
        %v2901 = vpop.f32.mrf.mxu0
        %v2902 = vadd.f32 0.0, %v2901
        %v2903 = vpop.f32.mrf.mxu0
        %2904 = vdwg.mxu0
        %2905 = vrot.lane.b32.xlu0 %v2714, 64
        %v2906 = vpop.permute.xlu0 %2905
        %v2908 = vsel %vm1397, %v2881, 0
        %v2911 = vsel %vm1594, %v2906, 0
        %2913 = vmatpush.bf16.msra.mxu0 0
        %2914 = vmatpush.bf16.msra.mxu0 0
        %2915 = vmatpush.bf16.msra.mxu0 0
        %2916 = vmatpush.bf16.msra.mxu0 0
        %2917 = vmatpush.bf16.msra.mxu0 0
        %2918 = vmatpush.bf16.msra.mxu0 0
        %2919 = vmatpush.bf16.msra.mxu0 0
        %2920 = vmatpush.bf16.msra.mxu0 %v2911
        %2921 = vmatmul.bf16.gmra.mxu0 %v2908
        %v2922 = vpop.f32.mrf.mxu0
        %v2923 = vadd.f32 0.0, %v2922
        %v2924 = vpop.f32.mrf.mxu0
        %2925 = vdwg.mxu0
        %2926 = vrot.lane.b32.xlu0 %v2738, 64
        %v2927 = vpop.permute.xlu0 %2926
        %v2929 = vsel %vm1397, %v2882, 0
        %v2932 = vsel %vm1594, %v2927, 0
        %2934 = vmatpush.bf16.msra.mxu0 0
        %2935 = vmatpush.bf16.msra.mxu0 0
        %2936 = vmatpush.bf16.msra.mxu0 0
        %2937 = vmatpush.bf16.msra.mxu0 0
        %2938 = vmatpush.bf16.msra.mxu0 0
        %2939 = vmatpush.bf16.msra.mxu0 0
        %2940 = vmatpush.bf16.msra.mxu0 0
        %2941 = vmatpush.bf16.msra.mxu0 %v2932
        %2942 = vmatmul.bf16.gmra.mxu0 %v2929
        %v2943 = vpop.f32.mrf.mxu0
        %v2944 = vadd.f32 0.0, %v2943
        %v2945 = vpop.f32.mrf.mxu0
        %2946 = vdwg.mxu0
        %2947 = vrot.lane.b32.xlu0 %v2762, 64
        %v2948 = vpop.permute.xlu0 %2947
        %v2950 = vsel %vm1397, %v2883, 0
        %v2953 = vsel %vm1594, %v2948, 0
        %2955 = vmatpush.bf16.msra.mxu0 0
        %2956 = vmatpush.bf16.msra.mxu0 0
        %2957 = vmatpush.bf16.msra.mxu0 0
        %2958 = vmatpush.bf16.msra.mxu0 0
        %2959 = vmatpush.bf16.msra.mxu0 0
        %2960 = vmatpush.bf16.msra.mxu0 0
        %2961 = vmatpush.bf16.msra.mxu0 0
        %2962 = vmatpush.bf16.msra.mxu0 %v2953
        %2963 = vmatmul.bf16.gmra.mxu0 %v2950
        %v2964 = vpop.f32.mrf.mxu0
        %v2965 = vadd.f32 0.0, %v2964
        %v2966 = vpop.f32.mrf.mxu0
        %2967 = vdwg.mxu0
        %v2968 = vpack.c.bf16 %v2902, %v2902
        %v2969 = vpack.c.bf16 %v2923, %v2923
        %v2970 = vpack.c.bf16 %v2944, %v2944
        %v2971 = vpack.c.bf16 %v2965, %v2965
        %v2973 = vsel %vm1397, %v2968, 0
        %v2976 = vsel %vm1594, %v2637, 0
        %2978 = vmatpush.bf16.msra.mxu0 0
        %2979 = vmatpush.bf16.msra.mxu0 0
        %2980 = vmatpush.bf16.msra.mxu0 0
        %2981 = vmatpush.bf16.msra.mxu0 0
        %2982 = vmatpush.bf16.msra.mxu0 0
        %2983 = vmatpush.bf16.msra.mxu0 0
        %2984 = vmatpush.bf16.msra.mxu0 0
        %2985 = vmatpush.bf16.msra.mxu0 %v2976
        %2986 = vmatmul.bf16.gmra.mxu0 %v2973
        %v2987 = vpop.f32.mrf.mxu0
        %v2988 = vadd.f32 0.0, %v2987
        %v2989 = vpop.f32.mrf.mxu0
        %2990 = vdwg.mxu0
        %v2992 = vsel %vm1397, %v2969, 0
        %v2995 = vsel %vm1594, %v2638, 0
        %2997 = vmatpush.bf16.msra.mxu0 0
        %2998 = vmatpush.bf16.msra.mxu0 0
        %2999 = vmatpush.bf16.msra.mxu0 0
        %3000 = vmatpush.bf16.msra.mxu0 0
        %3001 = vmatpush.bf16.msra.mxu0 0
        %3002 = vmatpush.bf16.msra.mxu0 0
        %3003 = vmatpush.bf16.msra.mxu0 0
        %3004 = vmatpush.bf16.msra.mxu0 %v2995
        %3005 = vmatmul.bf16.gmra.mxu0 %v2992
        %v3006 = vpop.f32.mrf.mxu0
        %v3007 = vadd.f32 0.0, %v3006
        %v3008 = vpop.f32.mrf.mxu0
        %3009 = vdwg.mxu0
        %v3011 = vsel %vm1397, %v2970, 0
        %v3014 = vsel %vm1594, %v2639, 0
        %3016 = vmatpush.bf16.msra.mxu0 0
        %3017 = vmatpush.bf16.msra.mxu0 0
        %3018 = vmatpush.bf16.msra.mxu0 0
        %3019 = vmatpush.bf16.msra.mxu0 0
        %3020 = vmatpush.bf16.msra.mxu0 0
        %3021 = vmatpush.bf16.msra.mxu0 0
        %3022 = vmatpush.bf16.msra.mxu0 0
        %3023 = vmatpush.bf16.msra.mxu0 %v3014
        %3024 = vmatmul.bf16.gmra.mxu0 %v3011
        %v3025 = vpop.f32.mrf.mxu0
        %v3026 = vadd.f32 0.0, %v3025
        %v3027 = vpop.f32.mrf.mxu0
        %3028 = vdwg.mxu0
        %v3030 = vsel %vm1397, %v2971, 0
        %v3033 = vsel %vm1594, %v2640, 0
        %3035 = vmatpush.bf16.msra.mxu0 0
        %3036 = vmatpush.bf16.msra.mxu0 0
        %3037 = vmatpush.bf16.msra.mxu0 0
        %3038 = vmatpush.bf16.msra.mxu0 0
        %3039 = vmatpush.bf16.msra.mxu0 0
        %3040 = vmatpush.bf16.msra.mxu0 0
        %3041 = vmatpush.bf16.msra.mxu0 0
        %3042 = vmatpush.bf16.msra.mxu0 %v3033
        %3043 = vmatmul.bf16.gmra.mxu0 %v3030
        %v3044 = vpop.f32.mrf.mxu0
        %v3045 = vadd.f32 0.0, %v3044
        %v3046 = vpop.f32.mrf.mxu0
        %3047 = vdwg.mxu0
        %v3048 = vsel %vm1279, %v2988, 0.0
        %v3049 = vsel %vm1279, %v3007, 0.0
        %v3050 = vadd.f32 %v3048, %v3049
        %v3051 = vsel %vm1279, %v3026, 0.0
        %v3052 = vadd.f32 %v3050, %v3051
        %v3053 = vsel %vm1279, %v3045, 0.0
        %v3054 = vadd.f32 %v3052, %v3053
        %v3056 = vperm.slane %v2641, 0
        %v3058 = vadd.f32 %v3054, %v3056
        %v3059 = vadd.f32 %v2583, %v3058
        %v3060 = vld [vmem:[%s49] sm:$0x1]
        %v3061 = vld [vmem:[%s51] sm:$0x1]
        %v3062 = vsel %vm1279, %v3059, 0.0
        %3063 = vadd.xlane.f32.xlu0 %v3062
        %v3064 = vpop.xlane.xlu0 %3063
        %v3065 = vmul.f32 %v3064, %v1289
        %v3066 = vsub.f32 %v3059, %v3065
        %v3067 = vmul.f32 %v3066, %v3066
        %v3068 = vsel %vm1279, %v3067, 0.0
        %3069 = vadd.xlane.f32.xlu0 %v3068
        %v3070 = vpop.xlane.xlu0 %3069
        %v3071 = vmul.f32 %v3070, 0.032258064
        %v3072 = vrsqrt.pop %v3071
        %v3073 = vmul.f32 %v3072, %v3071
        %v3074 = vmul.f32 %v3073, %v3072
        %v3075 = vmul.f32 0.5, %v3074
        %v3076 = vsub.f32 1.5, %v3075
        %v3077 = vmul.f32 %v3072, %v3076
        %v3078 = vmul.f32 %v3071, %v3077
        %vm3079 = vcmp.eq.f32.partialorder %v3071, inf
        %v3080 = vsel %vm3079, %v3071, %v3078
        %vm3081 = vcmp.eq.f32.partialorder %v3071, 0.0
        %v3082 = vand.u32 %v3071, 2147483648
        %v3083 = vsel %vm3081, %v3082, %v3080
        %v3084 = vadd.f32 %v3083, 1e-06
        %v3085 = vrcp.pop %v3084
        %v3086 = vmul.f32 %v3084, %v3085
        %v3087 = vsub.f32 1.0, %v3086
        %v3088 = vmul.f32 %v3085, %v3087
        %v3089 = vadd.f32 %v3085, %v3088
        %vm3090 = vweird.f32 %v3084
        %vm3091 = vweird.f32 %v3085
        %vm3092 = vmor %vm3090, %vm3091
        %v3093 = vsel %vm3092, %v3085, %v3089
        %v3094 = vand.u32 2147483647, %v3084
        %vm3095 = vcmp.eq.f32.partialorder %v3094, 8.507059e+37
        %v3096 = vand.u32 %v3084, 2147483648
        %v3097 = vor.u32 1.1754944e-38, %v3096
        %v3098 = vsel %vm3095, %v3097, %v3093
        %v3099 = vmul.f32 %v3066, %v3098
        %v3101 = vperm.slane %v3060, 0
        %v3103 = vmul.f32 %v3101, %v3099
        %v3105 = vperm.slane %v3061, 0
        %v3107 = vadd.f32 %v3103, %v3105
        %v3108 = vld [vmem:[%s53] sm:$0xf]
        %v3109 = vld [vmem:[%s53 + $0x4] sm:$0xf]
        %v3110 = vld [vmem:[%s53 + $0x8] sm:$0xf]
        %v3111 = vld [vmem:[%s53 + $0xc] sm:$0xf]
        %v3112 = vld [vmem:[%s55] sm:$0x1]
        %v3113 = vld [vmem:[%s57] sm:$0xf]
        %v3114 = vld [vmem:[%s57 + $0x4] sm:$0xf]
        %v3115 = vld [vmem:[%s57 + $0x8] sm:$0xf]
        %v3116 = vld [vmem:[%s57 + $0xc] sm:$0xf]
        %v3117 = vld [vmem:[%s59] sm:$0x1]
        %v3118 = vld [vmem:[%s61] sm:$0xf]
        %v3119 = vld [vmem:[%s61 + $0x4] sm:$0xf]
        %v3120 = vld [vmem:[%s61 + $0x8] sm:$0xf]
        %v3121 = vld [vmem:[%s61 + $0xc] sm:$0xf]
        %v3122 = vld [vmem:[%s63] sm:$0x1]
        %v3123 = vpack.c.bf16 %v3107, %v3107
        %v3125 = vperm.slane %v3112, 0
        %v3131 = vunpack.c.l.b16 %v3108
        %v3132 = vunpack.c.l.b16 %v3109
        %v3133 = vunpack.c.l.b16 %v3110
        %v3134 = vunpack.c.l.b16 %v3111
        %v3135 = vpack.c.b16 %v3132, %v3131
        %v3136 = vpack.c.b16 %v3134, %v3133
        %v3140 = vsel %vm1279, %v3123, 0
        %3142 = vmatpush.bf16.msra.mxu0 0
        %3143 = vmatpush.bf16.msra.mxu0 0
        %3144 = vmatpush.bf16.msra.mxu0 0
        %3145 = vmatpush.bf16.msra.mxu0 0
        %3146 = vmatpush.bf16.msra.mxu0 0
        %3147 = vmatpush.bf16.msra.mxu0 0
        %3148 = vmatpush.bf16.msra.mxu0 %v3136
        %3149 = vmatpush.bf16.msra.mxu0 %v3135
        %3150 = vmatmul.bf16.gmra.mxu0 %v3140
        %v3151 = vpop.f32.mrf.mxu0
        %v3152 = vadd.f32 %v3125, %v3151
        %v3153 = vpop.f32.mrf.mxu0
        %3154 = vdwg.mxu0
        %v3155 = vpack.c.bf16 %v2582, %v2582
        %v3157 = vperm.slane %v3117, 0
        %v3163 = vunpack.c.l.b16 %v3113
        %v3164 = vunpack.c.l.b16 %v3114
        %v3165 = vunpack.c.l.b16 %v3115
        %v3166 = vunpack.c.l.b16 %v3116
        %v3167 = vpack.c.b16 %v3164, %v3163
        %v3168 = vpack.c.b16 %v3166, %v3165
        %v3172 = vsel %vm1279, %v3155, 0
        %3174 = vmatpush.bf16.msra.mxu0 0
        %3175 = vmatpush.bf16.msra.mxu0 0
        %3176 = vmatpush.bf16.msra.mxu0 0
        %3177 = vmatpush.bf16.msra.mxu0 0
        %3178 = vmatpush.bf16.msra.mxu0 0
        %3179 = vmatpush.bf16.msra.mxu0 0
        %3180 = vmatpush.bf16.msra.mxu0 %v3168
        %3181 = vmatpush.bf16.msra.mxu0 %v3167
        %3182 = vmatmul.bf16.gmra.mxu0 %v3172
        %v3183 = vpop.f32.mrf.mxu0
        %v3184 = vadd.f32 %v3157, %v3183
        %v3185 = vpop.f32.mrf.mxu0
        %3186 = vdwg.mxu0
        %3188 = vrot.lane.b32.xlu0 %v3152, 120
        %v3189 = vpop.permute.xlu0 %3188
        %3191 = vrot.lane.b32.xlu0 %v3152, 112
        %v3192 = vpop.permute.xlu0 %3191
        %3194 = vrot.lane.b32.xlu0 %v3152, 104
        %v3195 = vpop.permute.xlu0 %3194
        %3198 = vrot.lane.b32.xlu0 %v3184, 120
        %v3199 = vpop.permute.xlu0 %3198
        %3201 = vrot.lane.b32.xlu0 %v3184, 112
        %v3202 = vpop.permute.xlu0 %3201
        %3204 = vrot.lane.b32.xlu0 %v3184, 104
        %v3205 = vpop.permute.xlu0 %3204
        %v3207 = vpack.c.bf16 %v3152, %v3152
        %v3208 = vpack.c.bf16 %v3189, %v3189
        %v3209 = vpack.c.bf16 %v3192, %v3192
        %v3210 = vpack.c.bf16 %v3195, %v3195
        %v3211 = vpack.c.bf16 %v3184, %v3184
        %v3212 = vpack.c.bf16 %v3199, %v3199
        %v3213 = vpack.c.bf16 %v3202, %v3202
        %v3214 = vpack.c.bf16 %v3205, %v3205
        %v3216 = vsel %vm1397, %v3207, 0
        %v3219 = vsel %vm1397, %v3211, 0
        %3221 = vmatpush.bf16.xpose.msra.mxu0 0
        %3222 = vmatpush.bf16.xpose.msra.mxu0 0
        %3223 = vmatpush.bf16.xpose.msra.mxu0 0
        %3224 = vmatpush.bf16.xpose.msra.mxu0 0
        %3225 = vmatpush.bf16.xpose.msra.mxu0 0
        %3226 = vmatpush.bf16.xpose.msra.mxu0 0
        %3227 = vmatpush.bf16.xpose.msra.mxu0 0
        %3228 = vmatpush.bf16.xpose.msra.mxu0 %v3219
        %3229 = vmatmul.bf16.gmra.mxu0 %v3216
        %v3230 = vpop.f32.mrf.mxu0
        %v3231 = vadd.f32 %v1390, %v3230
        %v3232 = vpop.f32.mrf.mxu0
        %3233 = vdwg.mxu0
        %v3235 = vsel %vm1397, %v3208, 0
        %v3238 = vsel %vm1397, %v3212, 0
        %3240 = vmatpush.bf16.xpose.msra.mxu0 0
        %3241 = vmatpush.bf16.xpose.msra.mxu0 0
        %3242 = vmatpush.bf16.xpose.msra.mxu0 0
        %3243 = vmatpush.bf16.xpose.msra.mxu0 0
        %3244 = vmatpush.bf16.xpose.msra.mxu0 0
        %3245 = vmatpush.bf16.xpose.msra.mxu0 0
        %3246 = vmatpush.bf16.xpose.msra.mxu0 0
        %3247 = vmatpush.bf16.xpose.msra.mxu0 %v3238
        %3248 = vmatmul.bf16.gmra.mxu0 %v3235
        %v3249 = vpop.f32.mrf.mxu0
        %v3250 = vadd.f32 %v1390, %v3249
        %v3251 = vpop.f32.mrf.mxu0
        %3252 = vdwg.mxu0
        %v3254 = vsel %vm1397, %v3209, 0
        %v3257 = vsel %vm1397, %v3213, 0
        %3259 = vmatpush.bf16.xpose.msra.mxu0 0
        %3260 = vmatpush.bf16.xpose.msra.mxu0 0
        %3261 = vmatpush.bf16.xpose.msra.mxu0 0
        %3262 = vmatpush.bf16.xpose.msra.mxu0 0
        %3263 = vmatpush.bf16.xpose.msra.mxu0 0
        %3264 = vmatpush.bf16.xpose.msra.mxu0 0
        %3265 = vmatpush.bf16.xpose.msra.mxu0 0
        %3266 = vmatpush.bf16.xpose.msra.mxu0 %v3257
        %3267 = vmatmul.bf16.gmra.mxu0 %v3254
        %v3268 = vpop.f32.mrf.mxu0
        %v3269 = vadd.f32 %v1390, %v3268
        %v3270 = vpop.f32.mrf.mxu0
        %3271 = vdwg.mxu0
        %v3273 = vsel %vm1397, %v3210, 0
        %v3276 = vsel %vm1397, %v3214, 0
        %3278 = vmatpush.bf16.xpose.msra.mxu0 0
        %3279 = vmatpush.bf16.xpose.msra.mxu0 0
        %3280 = vmatpush.bf16.xpose.msra.mxu0 0
        %3281 = vmatpush.bf16.xpose.msra.mxu0 0
        %3282 = vmatpush.bf16.xpose.msra.mxu0 0
        %3283 = vmatpush.bf16.xpose.msra.mxu0 0
        %3284 = vmatpush.bf16.xpose.msra.mxu0 0
        %3285 = vmatpush.bf16.xpose.msra.mxu0 %v3276
        %3286 = vmatmul.bf16.gmra.mxu0 %v3273
        %v3287 = vpop.f32.mrf.mxu0
        %v3288 = vadd.f32 %v1390, %v3287
        %v3289 = vpop.f32.mrf.mxu0
        %3290 = vdwg.mxu0
        %v3291 = vsel %vm1397, %v3231, -inf
        %3292 = vmax.xlane.f32.xlu0 %v3291
        %v3293 = vpop.xlane.xlu0 %3292
        %v3294 = vsel %vm1397, %v3250, -inf
        %3295 = vmax.xlane.f32.xlu0 %v3294
        %v3296 = vpop.xlane.xlu0 %3295
        %v3297 = vsel %vm1397, %v3269, -inf
        %3298 = vmax.xlane.f32.xlu0 %v3297
        %v3299 = vpop.xlane.xlu0 %3298
        %v3300 = vsel %vm1397, %v3288, -inf
        %3301 = vmax.xlane.f32.xlu0 %v3300
        %v3302 = vpop.xlane.xlu0 %3301
        %v3303 = vsub.f32 %v3231, %v3293
        %v3304 = vsub.f32 %v3250, %v3296
        %v3305 = vsub.f32 %v3269, %v3299
        %v3306 = vsub.f32 %v3288, %v3302
        %v3307 = vmul.f32 %v3303, 1.442695
        %v3308 = vpow.pop %v3307
        %v3309 = vmul.f32 %v3304, 1.442695
        %v3310 = vpow.pop %v3309
        %v3311 = vmul.f32 %v3305, 1.442695
        %v3312 = vpow.pop %v3311
        %v3313 = vmul.f32 %v3306, 1.442695
        %v3314 = vpow.pop %v3313
        %v3315 = vsel %vm1397, %v3308, 0.0
        %3316 = vadd.xlane.f32.xlu0 %v3315
        %v3317 = vpop.xlane.xlu0 %3316
        %v3318 = vsel %vm1397, %v3310, 0.0
        %3319 = vadd.xlane.f32.xlu0 %v3318
        %v3320 = vpop.xlane.xlu0 %3319
        %v3321 = vsel %vm1397, %v3312, 0.0
        %3322 = vadd.xlane.f32.xlu0 %v3321
        %v3323 = vpop.xlane.xlu0 %3322
        %v3324 = vsel %vm1397, %v3314, 0.0
        %3325 = vadd.xlane.f32.xlu0 %v3324
        %v3326 = vpop.xlane.xlu0 %3325
        %v3327 = vrcp.pop %v3317
        %v3328 = vmul.f32 %v3317, %v3327
        %v3329 = vsub.f32 1.0, %v3328
        %v3330 = vmul.f32 %v3327, %v3329
        %v3331 = vadd.f32 %v3327, %v3330
        %vm3332 = vweird.f32 %v3317
        %vm3333 = vweird.f32 %v3327
        %vm3334 = vmor %vm3332, %vm3333
        %v3335 = vsel %vm3334, %v3327, %v3331
        %v3336 = vand.u32 2147483647, %v3317
        %vm3337 = vcmp.eq.f32.partialorder %v3336, 8.507059e+37
        %v3338 = vand.u32 %v3317, 2147483648
        %v3339 = vor.u32 1.1754944e-38, %v3338
        %v3340 = vsel %vm3337, %v3339, %v3335
        %v3341 = vrcp.pop %v3320
        %v3342 = vmul.f32 %v3320, %v3341
        %v3343 = vsub.f32 1.0, %v3342
        %v3344 = vmul.f32 %v3341, %v3343
        %v3345 = vadd.f32 %v3341, %v3344
        %vm3346 = vweird.f32 %v3320
        %vm3347 = vweird.f32 %v3341
        %vm3348 = vmor %vm3346, %vm3347
        %v3349 = vsel %vm3348, %v3341, %v3345
        %v3350 = vand.u32 2147483647, %v3320
        %vm3351 = vcmp.eq.f32.partialorder %v3350, 8.507059e+37
        %v3352 = vand.u32 %v3320, 2147483648
        %v3353 = vor.u32 1.1754944e-38, %v3352
        %v3354 = vsel %vm3351, %v3353, %v3349
        %v3355 = vrcp.pop %v3323
        %v3356 = vmul.f32 %v3323, %v3355
        %v3357 = vsub.f32 1.0, %v3356
        %v3358 = vmul.f32 %v3355, %v3357
        %v3359 = vadd.f32 %v3355, %v3358
        %vm3360 = vweird.f32 %v3323
        %vm3361 = vweird.f32 %v3355
        %vm3362 = vmor %vm3360, %vm3361
        %v3363 = vsel %vm3362, %v3355, %v3359
        %v3364 = vand.u32 2147483647, %v3323
        %vm3365 = vcmp.eq.f32.partialorder %v3364, 8.507059e+37
        %v3366 = vand.u32 %v3323, 2147483648
        %v3367 = vor.u32 1.1754944e-38, %v3366
        %v3368 = vsel %vm3365, %v3367, %v3363
        %v3369 = vrcp.pop %v3326
        %v3370 = vmul.f32 %v3326, %v3369
        %v3371 = vsub.f32 1.0, %v3370
        %v3372 = vmul.f32 %v3369, %v3371
        %v3373 = vadd.f32 %v3369, %v3372
        %vm3374 = vweird.f32 %v3326
        %vm3375 = vweird.f32 %v3369
        %vm3376 = vmor %vm3374, %vm3375
        %v3377 = vsel %vm3376, %v3369, %v3373
        %v3378 = vand.u32 2147483647, %v3326
        %vm3379 = vcmp.eq.f32.partialorder %v3378, 8.507059e+37
        %v3380 = vand.u32 %v3326, 2147483648
        %v3381 = vor.u32 1.1754944e-38, %v3380
        %v3382 = vsel %vm3379, %v3381, %v3377
        %v3383 = vmul.f32 %v3308, %v3340
        %v3384 = vmul.f32 %v3310, %v3354
        %v3385 = vmul.f32 %v3312, %v3368
        %v3386 = vmul.f32 %v3314, %v3382
        %v3387 = vpack.c.bf16 %v3383, %v3383
        %v3388 = vpack.c.bf16 %v3384, %v3384
        %v3389 = vpack.c.bf16 %v3385, %v3385
        %v3390 = vpack.c.bf16 %v3386, %v3386
        %v3392 = vunpack.c.l.b16 %v3211
        %v3393 = vpack.c.b16 %v3392, %v3392
        %3394 = vrot.lane.b32.xlu0 %v3393, 96
        %v3395 = vpop.permute.xlu0 %3394
        %v3397 = vsel %vm1397, %v3387, 0
        %v3400 = vsel %vm1594, %v3395, 0
        %3402 = vmatpush.bf16.msra.mxu0 0
        %3403 = vmatpush.bf16.msra.mxu0 0
        %3404 = vmatpush.bf16.msra.mxu0 0
        %3405 = vmatpush.bf16.msra.mxu0 0
        %3406 = vmatpush.bf16.msra.mxu0 0
        %3407 = vmatpush.bf16.msra.mxu0 0
        %3408 = vmatpush.bf16.msra.mxu0 0
        %3409 = vmatpush.bf16.msra.mxu0 %v3400
        %3410 = vmatmul.bf16.gmra.mxu0 %v3397
        %v3411 = vpop.f32.mrf.mxu0
        %v3412 = vadd.f32 0.0, %v3411
        %v3413 = vpop.f32.mrf.mxu0
        %3414 = vdwg.mxu0
        %v3416 = vunpack.c.l.b16 %v3212
        %v3417 = vpack.c.b16 %v3416, %v3416
        %3418 = vrot.lane.b32.xlu0 %v3417, 96
        %v3419 = vpop.permute.xlu0 %3418
        %v3421 = vsel %vm1397, %v3388, 0
        %v3424 = vsel %vm1594, %v3419, 0
        %3426 = vmatpush.bf16.msra.mxu0 0
        %3427 = vmatpush.bf16.msra.mxu0 0
        %3428 = vmatpush.bf16.msra.mxu0 0
        %3429 = vmatpush.bf16.msra.mxu0 0
        %3430 = vmatpush.bf16.msra.mxu0 0
        %3431 = vmatpush.bf16.msra.mxu0 0
        %3432 = vmatpush.bf16.msra.mxu0 0
        %3433 = vmatpush.bf16.msra.mxu0 %v3424
        %3434 = vmatmul.bf16.gmra.mxu0 %v3421
        %v3435 = vpop.f32.mrf.mxu0
        %v3436 = vadd.f32 0.0, %v3435
        %v3437 = vpop.f32.mrf.mxu0
        %3438 = vdwg.mxu0
        %v3440 = vunpack.c.l.b16 %v3213
        %v3441 = vpack.c.b16 %v3440, %v3440
        %3442 = vrot.lane.b32.xlu0 %v3441, 96
        %v3443 = vpop.permute.xlu0 %3442
        %v3445 = vsel %vm1397, %v3389, 0
        %v3448 = vsel %vm1594, %v3443, 0
        %3450 = vmatpush.bf16.msra.mxu0 0
        %3451 = vmatpush.bf16.msra.mxu0 0
        %3452 = vmatpush.bf16.msra.mxu0 0
        %3453 = vmatpush.bf16.msra.mxu0 0
        %3454 = vmatpush.bf16.msra.mxu0 0
        %3455 = vmatpush.bf16.msra.mxu0 0
        %3456 = vmatpush.bf16.msra.mxu0 0
        %3457 = vmatpush.bf16.msra.mxu0 %v3448
        %3458 = vmatmul.bf16.gmra.mxu0 %v3445
        %v3459 = vpop.f32.mrf.mxu0
        %v3460 = vadd.f32 0.0, %v3459
        %v3461 = vpop.f32.mrf.mxu0
        %3462 = vdwg.mxu0
        %v3464 = vunpack.c.l.b16 %v3214
        %v3465 = vpack.c.b16 %v3464, %v3464
        %3466 = vrot.lane.b32.xlu0 %v3465, 96
        %v3467 = vpop.permute.xlu0 %3466
        %v3469 = vsel %vm1397, %v3390, 0
        %v3472 = vsel %vm1594, %v3467, 0
        %3474 = vmatpush.bf16.msra.mxu0 0
        %3475 = vmatpush.bf16.msra.mxu0 0
        %3476 = vmatpush.bf16.msra.mxu0 0
        %3477 = vmatpush.bf16.msra.mxu0 0
        %3478 = vmatpush.bf16.msra.mxu0 0
        %3479 = vmatpush.bf16.msra.mxu0 0
        %3480 = vmatpush.bf16.msra.mxu0 0
        %3481 = vmatpush.bf16.msra.mxu0 %v3472
        %3482 = vmatmul.bf16.gmra.mxu0 %v3469
        %v3483 = vpop.f32.mrf.mxu0
        %v3484 = vadd.f32 0.0, %v3483
        %v3485 = vpop.f32.mrf.mxu0
        %3486 = vdwg.mxu0
        %v3487 = vpack.c.bf16 %v3412, %v3412
        %v3488 = vpack.c.bf16 %v3436, %v3436
        %v3489 = vpack.c.bf16 %v3460, %v3460
        %v3490 = vpack.c.bf16 %v3484, %v3484
        %v3492 = vsel %vm1397, %v3487, 0
        %v3495 = vsel %vm1594, %v3118, 0
        %3497 = vmatpush.bf16.msra.mxu0 0
        %3498 = vmatpush.bf16.msra.mxu0 0
        %3499 = vmatpush.bf16.msra.mxu0 0
        %3500 = vmatpush.bf16.msra.mxu0 0
        %3501 = vmatpush.bf16.msra.mxu0 0
        %3502 = vmatpush.bf16.msra.mxu0 0
        %3503 = vmatpush.bf16.msra.mxu0 0
        %3504 = vmatpush.bf16.msra.mxu0 %v3495
        %3505 = vmatmul.bf16.gmra.mxu0 %v3492
        %v3506 = vpop.f32.mrf.mxu0
        %v3507 = vadd.f32 0.0, %v3506
        %v3508 = vpop.f32.mrf.mxu0
        %3509 = vdwg.mxu0
        %v3511 = vsel %vm1397, %v3488, 0
        %v3514 = vsel %vm1594, %v3119, 0
        %3516 = vmatpush.bf16.msra.mxu0 0
        %3517 = vmatpush.bf16.msra.mxu0 0
        %3518 = vmatpush.bf16.msra.mxu0 0
        %3519 = vmatpush.bf16.msra.mxu0 0
        %3520 = vmatpush.bf16.msra.mxu0 0
        %3521 = vmatpush.bf16.msra.mxu0 0
        %3522 = vmatpush.bf16.msra.mxu0 0
        %3523 = vmatpush.bf16.msra.mxu0 %v3514
        %3524 = vmatmul.bf16.gmra.mxu0 %v3511
        %v3525 = vpop.f32.mrf.mxu0
        %v3526 = vadd.f32 0.0, %v3525
        %v3527 = vpop.f32.mrf.mxu0
        %3528 = vdwg.mxu0
        %v3530 = vsel %vm1397, %v3489, 0
        %v3533 = vsel %vm1594, %v3120, 0
        %3535 = vmatpush.bf16.msra.mxu0 0
        %3536 = vmatpush.bf16.msra.mxu0 0
        %3537 = vmatpush.bf16.msra.mxu0 0
        %3538 = vmatpush.bf16.msra.mxu0 0
        %3539 = vmatpush.bf16.msra.mxu0 0
        %3540 = vmatpush.bf16.msra.mxu0 0
        %3541 = vmatpush.bf16.msra.mxu0 0
        %3542 = vmatpush.bf16.msra.mxu0 %v3533
        %3543 = vmatmul.bf16.gmra.mxu0 %v3530
        %v3544 = vpop.f32.mrf.mxu0
        %v3545 = vadd.f32 0.0, %v3544
        %v3546 = vpop.f32.mrf.mxu0
        %3547 = vdwg.mxu0
        %v3549 = vsel %vm1397, %v3490, 0
        %v3552 = vsel %vm1594, %v3121, 0
        %3554 = vmatpush.bf16.msra.mxu0 0
        %3555 = vmatpush.bf16.msra.mxu0 0
        %3556 = vmatpush.bf16.msra.mxu0 0
        %3557 = vmatpush.bf16.msra.mxu0 0
        %3558 = vmatpush.bf16.msra.mxu0 0
        %3559 = vmatpush.bf16.msra.mxu0 0
        %3560 = vmatpush.bf16.msra.mxu0 0
        %3561 = vmatpush.bf16.msra.mxu0 %v3552
        %3562 = vmatmul.bf16.gmra.mxu0 %v3549
        %v3563 = vpop.f32.mrf.mxu0
        %v3564 = vadd.f32 0.0, %v3563
        %v3565 = vpop.f32.mrf.mxu0
        %3566 = vdwg.mxu0
        %v3567 = vsel %vm1279, %v3507, 0.0
        %v3568 = vsel %vm1279, %v3526, 0.0
        %v3569 = vadd.f32 %v3567, %v3568
        %v3570 = vsel %vm1279, %v3545, 0.0
        %v3571 = vadd.f32 %v3569, %v3570
        %v3572 = vsel %vm1279, %v3564, 0.0
        %v3573 = vadd.f32 %v3571, %v3572
        %v3575 = vperm.slane %v3122, 0
        %v3577 = vadd.f32 %v3573, %v3575
        %v3578 = vadd.f32 %v3059, %v3577
        %v3579 = vld [vmem:[%s65] sm:$0x1]
        %v3580 = vld [vmem:[%s67] sm:$0x1]
        %v3581 = vsel %vm1279, %v3578, 0.0
        %3582 = vadd.xlane.f32.xlu0 %v3581
        %v3583 = vpop.xlane.xlu0 %3582
        %v3584 = vmul.f32 %v3583, %v1289
        %v3585 = vsub.f32 %v3578, %v3584
        %v3586 = vmul.f32 %v3585, %v3585
        %v3587 = vsel %vm1279, %v3586, 0.0
        %3588 = vadd.xlane.f32.xlu0 %v3587
        %v3589 = vpop.xlane.xlu0 %3588
        %v3590 = vmul.f32 %v3589, 0.032258064
        %v3591 = vrsqrt.pop %v3590
        %v3592 = vmul.f32 %v3591, %v3590
        %v3593 = vmul.f32 %v3592, %v3591
        %v3594 = vmul.f32 0.5, %v3593
        %v3595 = vsub.f32 1.5, %v3594
        %v3596 = vmul.f32 %v3591, %v3595
        %v3597 = vmul.f32 %v3590, %v3596
        %vm3598 = vcmp.eq.f32.partialorder %v3590, inf
        %v3599 = vsel %vm3598, %v3590, %v3597
        %vm3600 = vcmp.eq.f32.partialorder %v3590, 0.0
        %v3601 = vand.u32 %v3590, 2147483648
        %v3602 = vsel %vm3600, %v3601, %v3599
        %v3603 = vadd.f32 %v3602, 1e-06
        %v3604 = vrcp.pop %v3603
        %v3605 = vmul.f32 %v3603, %v3604
        %v3606 = vsub.f32 1.0, %v3605
        %v3607 = vmul.f32 %v3604, %v3606
        %v3608 = vadd.f32 %v3604, %v3607
        %vm3609 = vweird.f32 %v3603
        %vm3610 = vweird.f32 %v3604
        %vm3611 = vmor %vm3609, %vm3610
        %v3612 = vsel %vm3611, %v3604, %v3608
        %v3613 = vand.u32 2147483647, %v3603
        %vm3614 = vcmp.eq.f32.partialorder %v3613, 8.507059e+37
        %v3615 = vand.u32 %v3603, 2147483648
        %v3616 = vor.u32 1.1754944e-38, %v3615
        %v3617 = vsel %vm3614, %v3616, %v3612
        %v3618 = vmul.f32 %v3585, %v3617
        %v3620 = vperm.slane %v3579, 0
        %v3622 = vmul.f32 %v3620, %v3618
        %v3624 = vperm.slane %v3580, 0
        %v3626 = vadd.f32 %v3622, %v3624
        %v3627 = vld [vmem:[%s69] sm:$0xf]
        %v3628 = vld [vmem:[%s69 + $0x4] sm:$0xf]
        %v3629 = vld [vmem:[%s69 + $0x8] sm:$0xf]
        %v3630 = vld [vmem:[%s69 + $0xc] sm:$0xf]
        %v3631 = vld [vmem:[%s71] sm:$0x1]
        %v3632 = vld [vmem:[%s73] sm:$0xf]
        %v3633 = vld [vmem:[%s73 + $0x4] sm:$0xf]
        %v3634 = vld [vmem:[%s73 + $0x8] sm:$0xf]
        %v3635 = vld [vmem:[%s73 + $0xc] sm:$0xf]
        %v3636 = vld [vmem:[%s73 + $0x10] sm:$0xf]
        %v3637 = vld [vmem:[%s73 + $0x14] sm:$0xf]
        %v3638 = vld [vmem:[%s73 + $0x18] sm:$0xf]
        %v3639 = vld [vmem:[%s73 + $0x1c] sm:$0xf]
        %v3640 = vld [vmem:[%s75] sm:$0x1]
        %v3641 = vpack.c.bf16 %v3626, %v3626
        %v3643 = vperm.slane %v3631, 0
        %v3649 = vunpack.c.l.b16 %v3627
        %v3650 = vunpack.c.l.b16 %v3628
        %v3651 = vunpack.c.l.b16 %v3629
        %v3652 = vunpack.c.l.b16 %v3630
        %v3653 = vpack.c.b16 %v3650, %v3649
        %v3654 = vpack.c.b16 %v3652, %v3651
        %v3658 = vsel %vm1279, %v3641, 0
        %3660 = vmatpush.bf16.msra.mxu0 0
        %3661 = vmatpush.bf16.msra.mxu0 0
        %3662 = vmatpush.bf16.msra.mxu0 0
        %3663 = vmatpush.bf16.msra.mxu0 0
        %3664 = vmatpush.bf16.msra.mxu0 0
        %3665 = vmatpush.bf16.msra.mxu0 0
        %3666 = vmatpush.bf16.msra.mxu0 %v3654
        %3667 = vmatpush.bf16.msra.mxu0 %v3653
        %3668 = vmatmul.bf16.gmra.mxu0 %v3658
        %v3669 = vpop.f32.mrf.mxu0
        %v3670 = vadd.f32 %v3643, %v3669
        %v3671 = vpop.f32.mrf.mxu0
        %3672 = vdwg.mxu0
        %v3673 = vmax.f32 %v3670, 0.0
        %v3674 = vpack.c.bf16 %v3673, %v3673
        %v3676 = vperm.slane %v3640, 0
        %v3686 = vunpack.c.l.b16 %v3632
        %v3687 = vunpack.c.l.b16 %v3633
        %v3688 = vunpack.c.l.b16 %v3634
        %v3689 = vunpack.c.l.b16 %v3635
        %v3690 = vunpack.c.l.b16 %v3636
        %v3691 = vunpack.c.l.b16 %v3637
        %v3692 = vunpack.c.l.b16 %v3638
        %v3693 = vunpack.c.l.b16 %v3639
        %v3694 = vpack.c.b16 %v3687, %v3686
        %v3695 = vpack.c.b16 %v3689, %v3688
        %v3696 = vpack.c.b16 %v3691, %v3690
        %v3697 = vpack.c.b16 %v3693, %v3692
        %v3703 = vsel %vm1889, %v3674, 0
        %3705 = vmatpush.bf16.msra.mxu0 0
        %3706 = vmatpush.bf16.msra.mxu0 0
        %3707 = vmatpush.bf16.msra.mxu0 0
        %3708 = vmatpush.bf16.msra.mxu0 0
        %3709 = vmatpush.bf16.msra.mxu0 %v3697
        %3710 = vmatpush.bf16.msra.mxu0 %v3696
        %3711 = vmatpush.bf16.msra.mxu0 %v3695
        %3712 = vmatpush.bf16.msra.mxu0 %v3694
        %3713 = vmatmul.bf16.gmra.mxu0 %v3703
        %v3714 = vpop.f32.mrf.mxu0
        %v3715 = vadd.f32 %v3676, %v3714
        %v3716 = vpop.f32.mrf.mxu0
        %3717 = vdwg.mxu0
        %v3718 = vadd.f32 %v3578, %v3715
        %s3719 = scalar_lea.vmem %s37, 1
        %v3720 = vld [vmem:[%s3719] sm:$0x1]
        %s3721 = scalar_lea.vmem %s39, 1
        %v3722 = vld [vmem:[%s3721] sm:$0x1]
        %v3723 = vsel %vm1279, %v3718, 0.0
        %3724 = vadd.xlane.f32.xlu0 %v3723
        %v3725 = vpop.xlane.xlu0 %3724
        %v3726 = vmul.f32 %v3725, %v1289
        %v3727 = vsub.f32 %v3718, %v3726
        %v3728 = vmul.f32 %v3727, %v3727
        %v3729 = vsel %vm1279, %v3728, 0.0
        %3730 = vadd.xlane.f32.xlu0 %v3729
        %v3731 = vpop.xlane.xlu0 %3730
        %v3732 = vmul.f32 %v3731, 0.032258064
        %v3733 = vrsqrt.pop %v3732
        %v3734 = vmul.f32 %v3733, %v3732
        %v3735 = vmul.f32 %v3734, %v3733
        %v3736 = vmul.f32 0.5, %v3735
        %v3737 = vsub.f32 1.5, %v3736
        %v3738 = vmul.f32 %v3733, %v3737
        %v3739 = vmul.f32 %v3732, %v3738
        %vm3740 = vcmp.eq.f32.partialorder %v3732, inf
        %v3741 = vsel %vm3740, %v3732, %v3739
        %vm3742 = vcmp.eq.f32.partialorder %v3732, 0.0
        %v3743 = vand.u32 %v3732, 2147483648
        %v3744 = vsel %vm3742, %v3743, %v3741
        %v3745 = vadd.f32 %v3744, 1e-06
        %v3746 = vrcp.pop %v3745
        %v3747 = vmul.f32 %v3745, %v3746
        %v3748 = vsub.f32 1.0, %v3747
        %v3749 = vmul.f32 %v3746, %v3748
        %v3750 = vadd.f32 %v3746, %v3749
        %vm3751 = vweird.f32 %v3745
        %vm3752 = vweird.f32 %v3746
        %vm3753 = vmor %vm3751, %vm3752
        %v3754 = vsel %vm3753, %v3746, %v3750
        %v3755 = vand.u32 2147483647, %v3745
        %vm3756 = vcmp.eq.f32.partialorder %v3755, 8.507059e+37
        %v3757 = vand.u32 %v3745, 2147483648
        %v3758 = vor.u32 1.1754944e-38, %v3757
        %v3759 = vsel %vm3756, %v3758, %v3754
        %v3760 = vmul.f32 %v3727, %v3759
        %v3762 = vperm.slane %v3720, 0
        %v3764 = vmul.f32 %v3762, %v3760
        %v3766 = vperm.slane %v3722, 0
        %v3768 = vadd.f32 %v3764, %v3766
        %s3769 = scalar_lea.vmem %s41, 16
        %v3770 = vld [vmem:[%s3769] sm:$0xf]
        %v3771 = vld [vmem:[%s3769 + $0x4] sm:$0xf]
        %v3772 = vld [vmem:[%s3769 + $0x8] sm:$0xf]
        %v3773 = vld [vmem:[%s3769 + $0xc] sm:$0xf]
        %s3774 = scalar_lea.vmem %s43, 1
        %v3775 = vld [vmem:[%s3774] sm:$0x1]
        %s3776 = scalar_lea.vmem %s45, 16
        %v3777 = vld [vmem:[%s3776] sm:$0xf]
        %v3778 = vld [vmem:[%s3776 + $0x4] sm:$0xf]
        %v3779 = vld [vmem:[%s3776 + $0x8] sm:$0xf]
        %v3780 = vld [vmem:[%s3776 + $0xc] sm:$0xf]
        %s3781 = scalar_lea.vmem %s47, 1
        %v3782 = vld [vmem:[%s3781] sm:$0x1]
        %v3783 = vpack.c.bf16 %v3768, %v3768
        %v3785 = vperm.slane %v3775, 0
        %v3791 = vunpack.c.l.b16 %v3770
        %v3792 = vunpack.c.l.b16 %v3771
        %v3793 = vunpack.c.l.b16 %v3772
        %v3794 = vunpack.c.l.b16 %v3773
        %v3795 = vpack.c.b16 %v3792, %v3791
        %v3796 = vpack.c.b16 %v3794, %v3793
        %v3800 = vsel %vm1279, %v3783, 0
        %3802 = vmatpush.bf16.msra.mxu0 0
        %3803 = vmatpush.bf16.msra.mxu0 0
        %3804 = vmatpush.bf16.msra.mxu0 0
        %3805 = vmatpush.bf16.msra.mxu0 0
        %3806 = vmatpush.bf16.msra.mxu0 0
        %3807 = vmatpush.bf16.msra.mxu0 0
        %3808 = vmatpush.bf16.msra.mxu0 %v3796
        %3809 = vmatpush.bf16.msra.mxu0 %v3795
        %3810 = vmatmul.bf16.gmra.mxu0 %v3800
        %v3811 = vpop.f32.mrf.mxu0
        %v3812 = vadd.f32 %v3785, %v3811
        %v3813 = vpop.f32.mrf.mxu0
        %3814 = vdwg.mxu0
        %3816 = vrot.lane.b32.xlu0 %v3812, 120
        %v3817 = vpop.permute.xlu0 %3816
        %3819 = vrot.lane.b32.xlu0 %v3812, 112
        %v3820 = vpop.permute.xlu0 %3819
        %3822 = vrot.lane.b32.xlu0 %v3812, 104
        %v3823 = vpop.permute.xlu0 %3822
        %v3825 = vpack.c.bf16 %v3812, %v3812
        %v3826 = vpack.c.bf16 %v3817, %v3817
        %v3827 = vpack.c.bf16 %v3820, %v3820
        %v3828 = vpack.c.bf16 %v3823, %v3823
        %v3830 = vunpack.c.l.b16 %v3825
        %v3831 = vpack.c.b16 %v3830, %v3830
        %3832 = vrot.lane.b32.xlu0 %v3831, 96
        %v3833 = vpop.permute.xlu0 %3832
        %v3835 = vsel %vm1397, %v3825, 0
        %v3838 = vsel %vm1397, %v3833, 0
        %3840 = vmatpush.bf16.xpose.msra.mxu0 0
        %3841 = vmatpush.bf16.xpose.msra.mxu0 0
        %3842 = vmatpush.bf16.xpose.msra.mxu0 0
        %3843 = vmatpush.bf16.xpose.msra.mxu0 0
        %3844 = vmatpush.bf16.xpose.msra.mxu0 0
        %3845 = vmatpush.bf16.xpose.msra.mxu0 0
        %3846 = vmatpush.bf16.xpose.msra.mxu0 0
        %3847 = vmatpush.bf16.xpose.msra.mxu0 %v3838
        %3848 = vmatmul.bf16.gmra.mxu0 %v3835
        %v3849 = vpop.f32.mrf.mxu0
        %v3850 = vadd.f32 %v1275, %v3849
        %v3851 = vpop.f32.mrf.mxu0
        %3852 = vdwg.mxu0
        %v3854 = vunpack.c.l.b16 %v3826
        %v3855 = vpack.c.b16 %v3854, %v3854
        %3856 = vrot.lane.b32.xlu0 %v3855, 96
        %v3857 = vpop.permute.xlu0 %3856
        %v3859 = vsel %vm1397, %v3826, 0
        %v3862 = vsel %vm1397, %v3857, 0
        %3864 = vmatpush.bf16.xpose.msra.mxu0 0
        %3865 = vmatpush.bf16.xpose.msra.mxu0 0
        %3866 = vmatpush.bf16.xpose.msra.mxu0 0
        %3867 = vmatpush.bf16.xpose.msra.mxu0 0
        %3868 = vmatpush.bf16.xpose.msra.mxu0 0
        %3869 = vmatpush.bf16.xpose.msra.mxu0 0
        %3870 = vmatpush.bf16.xpose.msra.mxu0 0
        %3871 = vmatpush.bf16.xpose.msra.mxu0 %v3862
        %3872 = vmatmul.bf16.gmra.mxu0 %v3859
        %v3873 = vpop.f32.mrf.mxu0
        %v3874 = vadd.f32 %v1275, %v3873
        %v3875 = vpop.f32.mrf.mxu0
        %3876 = vdwg.mxu0
        %v3878 = vunpack.c.l.b16 %v3827
        %v3879 = vpack.c.b16 %v3878, %v3878
        %3880 = vrot.lane.b32.xlu0 %v3879, 96
        %v3881 = vpop.permute.xlu0 %3880
        %v3883 = vsel %vm1397, %v3827, 0
        %v3886 = vsel %vm1397, %v3881, 0
        %3888 = vmatpush.bf16.xpose.msra.mxu0 0
        %3889 = vmatpush.bf16.xpose.msra.mxu0 0
        %3890 = vmatpush.bf16.xpose.msra.mxu0 0
        %3891 = vmatpush.bf16.xpose.msra.mxu0 0
        %3892 = vmatpush.bf16.xpose.msra.mxu0 0
        %3893 = vmatpush.bf16.xpose.msra.mxu0 0
        %3894 = vmatpush.bf16.xpose.msra.mxu0 0
        %3895 = vmatpush.bf16.xpose.msra.mxu0 %v3886
        %3896 = vmatmul.bf16.gmra.mxu0 %v3883
        %v3897 = vpop.f32.mrf.mxu0
        %v3898 = vadd.f32 %v1275, %v3897
        %v3899 = vpop.f32.mrf.mxu0
        %3900 = vdwg.mxu0
        %v3902 = vunpack.c.l.b16 %v3828
        %v3903 = vpack.c.b16 %v3902, %v3902
        %3904 = vrot.lane.b32.xlu0 %v3903, 96
        %v3905 = vpop.permute.xlu0 %3904
        %v3907 = vsel %vm1397, %v3828, 0
        %v3910 = vsel %vm1397, %v3905, 0
        %3912 = vmatpush.bf16.xpose.msra.mxu0 0
        %3913 = vmatpush.bf16.xpose.msra.mxu0 0
        %3914 = vmatpush.bf16.xpose.msra.mxu0 0
        %3915 = vmatpush.bf16.xpose.msra.mxu0 0
        %3916 = vmatpush.bf16.xpose.msra.mxu0 0
        %3917 = vmatpush.bf16.xpose.msra.mxu0 0
        %3918 = vmatpush.bf16.xpose.msra.mxu0 0
        %3919 = vmatpush.bf16.xpose.msra.mxu0 %v3910
        %3920 = vmatmul.bf16.gmra.mxu0 %v3907
        %v3921 = vpop.f32.mrf.mxu0
        %v3922 = vadd.f32 %v1275, %v3921
        %v3923 = vpop.f32.mrf.mxu0
        %3924 = vdwg.mxu0
        %v3925 = vsel %vm1397, %v3850, -inf
        %3926 = vmax.xlane.f32.xlu0 %v3925
        %v3927 = vpop.xlane.xlu0 %3926
        %v3928 = vsel %vm1397, %v3874, -inf
        %3929 = vmax.xlane.f32.xlu0 %v3928
        %v3930 = vpop.xlane.xlu0 %3929
        %v3931 = vsel %vm1397, %v3898, -inf
        %3932 = vmax.xlane.f32.xlu0 %v3931
        %v3933 = vpop.xlane.xlu0 %3932
        %v3934 = vsel %vm1397, %v3922, -inf
        %3935 = vmax.xlane.f32.xlu0 %v3934
        %v3936 = vpop.xlane.xlu0 %3935
        %v3937 = vsub.f32 %v3850, %v3927
        %v3938 = vsub.f32 %v3874, %v3930
        %v3939 = vsub.f32 %v3898, %v3933
        %v3940 = vsub.f32 %v3922, %v3936
        %v3941 = vmul.f32 %v3937, 1.442695
        %v3942 = vpow.pop %v3941
        %v3943 = vmul.f32 %v3938, 1.442695
        %v3944 = vpow.pop %v3943
        %v3945 = vmul.f32 %v3939, 1.442695
        %v3946 = vpow.pop %v3945
        %v3947 = vmul.f32 %v3940, 1.442695
        %v3948 = vpow.pop %v3947
        %v3949 = vsel %vm1397, %v3942, 0.0
        %3950 = vadd.xlane.f32.xlu0 %v3949
        %v3951 = vpop.xlane.xlu0 %3950
        %v3952 = vsel %vm1397, %v3944, 0.0
        %3953 = vadd.xlane.f32.xlu0 %v3952
        %v3954 = vpop.xlane.xlu0 %3953
        %v3955 = vsel %vm1397, %v3946, 0.0
        %3956 = vadd.xlane.f32.xlu0 %v3955
        %v3957 = vpop.xlane.xlu0 %3956
        %v3958 = vsel %vm1397, %v3948, 0.0
        %3959 = vadd.xlane.f32.xlu0 %v3958
        %v3960 = vpop.xlane.xlu0 %3959
        %v3961 = vrcp.pop %v3951
        %v3962 = vmul.f32 %v3951, %v3961
        %v3963 = vsub.f32 1.0, %v3962
        %v3964 = vmul.f32 %v3961, %v3963
        %v3965 = vadd.f32 %v3961, %v3964
        %vm3966 = vweird.f32 %v3951
        %vm3967 = vweird.f32 %v3961
        %vm3968 = vmor %vm3966, %vm3967
        %v3969 = vsel %vm3968, %v3961, %v3965
        %v3970 = vand.u32 2147483647, %v3951
        %vm3971 = vcmp.eq.f32.partialorder %v3970, 8.507059e+37
        %v3972 = vand.u32 %v3951, 2147483648
        %v3973 = vor.u32 1.1754944e-38, %v3972
        %v3974 = vsel %vm3971, %v3973, %v3969
        %v3975 = vrcp.pop %v3954
        %v3976 = vmul.f32 %v3954, %v3975
        %v3977 = vsub.f32 1.0, %v3976
        %v3978 = vmul.f32 %v3975, %v3977
        %v3979 = vadd.f32 %v3975, %v3978
        %vm3980 = vweird.f32 %v3954
        %vm3981 = vweird.f32 %v3975
        %vm3982 = vmor %vm3980, %vm3981
        %v3983 = vsel %vm3982, %v3975, %v3979
        %v3984 = vand.u32 2147483647, %v3954
        %vm3985 = vcmp.eq.f32.partialorder %v3984, 8.507059e+37
        %v3986 = vand.u32 %v3954, 2147483648
        %v3987 = vor.u32 1.1754944e-38, %v3986
        %v3988 = vsel %vm3985, %v3987, %v3983
        %v3989 = vrcp.pop %v3957
        %v3990 = vmul.f32 %v3957, %v3989
        %v3991 = vsub.f32 1.0, %v3990
        %v3992 = vmul.f32 %v3989, %v3991
        %v3993 = vadd.f32 %v3989, %v3992
        %vm3994 = vweird.f32 %v3957
        %vm3995 = vweird.f32 %v3989
        %vm3996 = vmor %vm3994, %vm3995
        %v3997 = vsel %vm3996, %v3989, %v3993
        %v3998 = vand.u32 2147483647, %v3957
        %vm3999 = vcmp.eq.f32.partialorder %v3998, 8.507059e+37
        %v4000 = vand.u32 %v3957, 2147483648
        %v4001 = vor.u32 1.1754944e-38, %v4000
        %v4002 = vsel %vm3999, %v4001, %v3997
        %v4003 = vrcp.pop %v3960
        %v4004 = vmul.f32 %v3960, %v4003
        %v4005 = vsub.f32 1.0, %v4004
        %v4006 = vmul.f32 %v4003, %v4005
        %v4007 = vadd.f32 %v4003, %v4006
        %vm4008 = vweird.f32 %v3960
        %vm4009 = vweird.f32 %v4003
        %vm4010 = vmor %vm4008, %vm4009
        %v4011 = vsel %vm4010, %v4003, %v4007
        %v4012 = vand.u32 2147483647, %v3960
        %vm4013 = vcmp.eq.f32.partialorder %v4012, 8.507059e+37
        %v4014 = vand.u32 %v3960, 2147483648
        %v4015 = vor.u32 1.1754944e-38, %v4014
        %v4016 = vsel %vm4013, %v4015, %v4011
        %v4017 = vmul.f32 %v3942, %v3974
        %v4018 = vmul.f32 %v3944, %v3988
        %v4019 = vmul.f32 %v3946, %v4002
        %v4020 = vmul.f32 %v3948, %v4016
        %v4021 = vpack.c.bf16 %v4017, %v4017
        %v4022 = vpack.c.bf16 %v4018, %v4018
        %v4023 = vpack.c.bf16 %v4019, %v4019
        %v4024 = vpack.c.bf16 %v4020, %v4020
        %4025 = vrot.lane.b32.xlu0 %v3831, 64
        %v4026 = vpop.permute.xlu0 %4025
        %v4028 = vsel %vm1397, %v4021, 0
        %v4031 = vsel %vm1594, %v4026, 0
        %4033 = vmatpush.bf16.msra.mxu0 0
        %4034 = vmatpush.bf16.msra.mxu0 0
        %4035 = vmatpush.bf16.msra.mxu0 0
        %4036 = vmatpush.bf16.msra.mxu0 0
        %4037 = vmatpush.bf16.msra.mxu0 0
        %4038 = vmatpush.bf16.msra.mxu0 0
        %4039 = vmatpush.bf16.msra.mxu0 0
        %4040 = vmatpush.bf16.msra.mxu0 %v4031
        %4041 = vmatmul.bf16.gmra.mxu0 %v4028
        %v4042 = vpop.f32.mrf.mxu0
        %v4043 = vadd.f32 0.0, %v4042
        %v4044 = vpop.f32.mrf.mxu0
        %4045 = vdwg.mxu0
        %4046 = vrot.lane.b32.xlu0 %v3855, 64
        %v4047 = vpop.permute.xlu0 %4046
        %v4049 = vsel %vm1397, %v4022, 0
        %v4052 = vsel %vm1594, %v4047, 0
        %4054 = vmatpush.bf16.msra.mxu0 0
        %4055 = vmatpush.bf16.msra.mxu0 0
        %4056 = vmatpush.bf16.msra.mxu0 0
        %4057 = vmatpush.bf16.msra.mxu0 0
        %4058 = vmatpush.bf16.msra.mxu0 0
        %4059 = vmatpush.bf16.msra.mxu0 0
        %4060 = vmatpush.bf16.msra.mxu0 0
        %4061 = vmatpush.bf16.msra.mxu0 %v4052
        %4062 = vmatmul.bf16.gmra.mxu0 %v4049
        %v4063 = vpop.f32.mrf.mxu0
        %v4064 = vadd.f32 0.0, %v4063
        %v4065 = vpop.f32.mrf.mxu0
        %4066 = vdwg.mxu0
        %4067 = vrot.lane.b32.xlu0 %v3879, 64
        %v4068 = vpop.permute.xlu0 %4067
        %v4070 = vsel %vm1397, %v4023, 0
        %v4073 = vsel %vm1594, %v4068, 0
        %4075 = vmatpush.bf16.msra.mxu0 0
        %4076 = vmatpush.bf16.msra.mxu0 0
        %4077 = vmatpush.bf16.msra.mxu0 0
        %4078 = vmatpush.bf16.msra.mxu0 0
        %4079 = vmatpush.bf16.msra.mxu0 0
        %4080 = vmatpush.bf16.msra.mxu0 0
        %4081 = vmatpush.bf16.msra.mxu0 0
        %4082 = vmatpush.bf16.msra.mxu0 %v4073
        %4083 = vmatmul.bf16.gmra.mxu0 %v4070
        %v4084 = vpop.f32.mrf.mxu0
        %v4085 = vadd.f32 0.0, %v4084
        %v4086 = vpop.f32.mrf.mxu0
        %4087 = vdwg.mxu0
        %4088 = vrot.lane.b32.xlu0 %v3903, 64
        %v4089 = vpop.permute.xlu0 %4088
        %v4091 = vsel %vm1397, %v4024, 0
        %v4094 = vsel %vm1594, %v4089, 0
        %4096 = vmatpush.bf16.msra.mxu0 0
        %4097 = vmatpush.bf16.msra.mxu0 0
        %4098 = vmatpush.bf16.msra.mxu0 0
        %4099 = vmatpush.bf16.msra.mxu0 0
        %4100 = vmatpush.bf16.msra.mxu0 0
        %4101 = vmatpush.bf16.msra.mxu0 0
        %4102 = vmatpush.bf16.msra.mxu0 0
        %4103 = vmatpush.bf16.msra.mxu0 %v4094
        %4104 = vmatmul.bf16.gmra.mxu0 %v4091
        %v4105 = vpop.f32.mrf.mxu0
        %v4106 = vadd.f32 0.0, %v4105
        %v4107 = vpop.f32.mrf.mxu0
        %4108 = vdwg.mxu0
        %v4109 = vpack.c.bf16 %v4043, %v4043
        %v4110 = vpack.c.bf16 %v4064, %v4064
        %v4111 = vpack.c.bf16 %v4085, %v4085
        %v4112 = vpack.c.bf16 %v4106, %v4106
        %v4114 = vsel %vm1397, %v4109, 0
        %v4117 = vsel %vm1594, %v3777, 0
        %4119 = vmatpush.bf16.msra.mxu0 0
        %4120 = vmatpush.bf16.msra.mxu0 0
        %4121 = vmatpush.bf16.msra.mxu0 0
        %4122 = vmatpush.bf16.msra.mxu0 0
        %4123 = vmatpush.bf16.msra.mxu0 0
        %4124 = vmatpush.bf16.msra.mxu0 0
        %4125 = vmatpush.bf16.msra.mxu0 0
        %4126 = vmatpush.bf16.msra.mxu0 %v4117
        %4127 = vmatmul.bf16.gmra.mxu0 %v4114
        %v4128 = vpop.f32.mrf.mxu0
        %v4129 = vadd.f32 0.0, %v4128
        %v4130 = vpop.f32.mrf.mxu0
        %4131 = vdwg.mxu0
        %v4133 = vsel %vm1397, %v4110, 0
        %v4136 = vsel %vm1594, %v3778, 0
        %4138 = vmatpush.bf16.msra.mxu0 0
        %4139 = vmatpush.bf16.msra.mxu0 0
        %4140 = vmatpush.bf16.msra.mxu0 0
        %4141 = vmatpush.bf16.msra.mxu0 0
        %4142 = vmatpush.bf16.msra.mxu0 0
        %4143 = vmatpush.bf16.msra.mxu0 0
        %4144 = vmatpush.bf16.msra.mxu0 0
        %4145 = vmatpush.bf16.msra.mxu0 %v4136
        %4146 = vmatmul.bf16.gmra.mxu0 %v4133
        %v4147 = vpop.f32.mrf.mxu0
        %v4148 = vadd.f32 0.0, %v4147
        %v4149 = vpop.f32.mrf.mxu0
        %4150 = vdwg.mxu0
        %v4152 = vsel %vm1397, %v4111, 0
        %v4155 = vsel %vm1594, %v3779, 0
        %4157 = vmatpush.bf16.msra.mxu0 0
        %4158 = vmatpush.bf16.msra.mxu0 0
        %4159 = vmatpush.bf16.msra.mxu0 0
        %4160 = vmatpush.bf16.msra.mxu0 0
        %4161 = vmatpush.bf16.msra.mxu0 0
        %4162 = vmatpush.bf16.msra.mxu0 0
        %4163 = vmatpush.bf16.msra.mxu0 0
        %4164 = vmatpush.bf16.msra.mxu0 %v4155
        %4165 = vmatmul.bf16.gmra.mxu0 %v4152
        %v4166 = vpop.f32.mrf.mxu0
        %v4167 = vadd.f32 0.0, %v4166
        %v4168 = vpop.f32.mrf.mxu0
        %4169 = vdwg.mxu0
        %v4171 = vsel %vm1397, %v4112, 0
        %v4174 = vsel %vm1594, %v3780, 0
        %4176 = vmatpush.bf16.msra.mxu0 0
        %4177 = vmatpush.bf16.msra.mxu0 0
        %4178 = vmatpush.bf16.msra.mxu0 0
        %4179 = vmatpush.bf16.msra.mxu0 0
        %4180 = vmatpush.bf16.msra.mxu0 0
        %4181 = vmatpush.bf16.msra.mxu0 0
        %4182 = vmatpush.bf16.msra.mxu0 0
        %4183 = vmatpush.bf16.msra.mxu0 %v4174
        %4184 = vmatmul.bf16.gmra.mxu0 %v4171
        %v4185 = vpop.f32.mrf.mxu0
        %v4186 = vadd.f32 0.0, %v4185
        %v4187 = vpop.f32.mrf.mxu0
        %4188 = vdwg.mxu0
        %v4189 = vsel %vm1279, %v4129, 0.0
        %v4190 = vsel %vm1279, %v4148, 0.0
        %v4191 = vadd.f32 %v4189, %v4190
        %v4192 = vsel %vm1279, %v4167, 0.0
        %v4193 = vadd.f32 %v4191, %v4192
        %v4194 = vsel %vm1279, %v4186, 0.0
        %v4195 = vadd.f32 %v4193, %v4194
        %v4197 = vperm.slane %v3782, 0
        %v4199 = vadd.f32 %v4195, %v4197
        %v4200 = vadd.f32 %v3718, %v4199
        %s4201 = scalar_lea.vmem %s49, 1
        %v4202 = vld [vmem:[%s4201] sm:$0x1]
        %s4203 = scalar_lea.vmem %s51, 1
        %v4204 = vld [vmem:[%s4203] sm:$0x1]
        %v4205 = vsel %vm1279, %v4200, 0.0
        %4206 = vadd.xlane.f32.xlu0 %v4205
        %v4207 = vpop.xlane.xlu0 %4206
        %v4208 = vmul.f32 %v4207, %v1289
        %v4209 = vsub.f32 %v4200, %v4208
        %v4210 = vmul.f32 %v4209, %v4209
        %v4211 = vsel %vm1279, %v4210, 0.0
        %4212 = vadd.xlane.f32.xlu0 %v4211
        %v4213 = vpop.xlane.xlu0 %4212
        %v4214 = vmul.f32 %v4213, 0.032258064
        %v4215 = vrsqrt.pop %v4214
        %v4216 = vmul.f32 %v4215, %v4214
        %v4217 = vmul.f32 %v4216, %v4215
        %v4218 = vmul.f32 0.5, %v4217
        %v4219 = vsub.f32 1.5, %v4218
        %v4220 = vmul.f32 %v4215, %v4219
        %v4221 = vmul.f32 %v4214, %v4220
        %vm4222 = vcmp.eq.f32.partialorder %v4214, inf
        %v4223 = vsel %vm4222, %v4214, %v4221
        %vm4224 = vcmp.eq.f32.partialorder %v4214, 0.0
        %v4225 = vand.u32 %v4214, 2147483648
        %v4226 = vsel %vm4224, %v4225, %v4223
        %v4227 = vadd.f32 %v4226, 1e-06
        %v4228 = vrcp.pop %v4227
        %v4229 = vmul.f32 %v4227, %v4228
        %v4230 = vsub.f32 1.0, %v4229
        %v4231 = vmul.f32 %v4228, %v4230
        %v4232 = vadd.f32 %v4228, %v4231
        %vm4233 = vweird.f32 %v4227
        %vm4234 = vweird.f32 %v4228
        %vm4235 = vmor %vm4233, %vm4234
        %v4236 = vsel %vm4235, %v4228, %v4232
        %v4237 = vand.u32 2147483647, %v4227
        %vm4238 = vcmp.eq.f32.partialorder %v4237, 8.507059e+37
        %v4239 = vand.u32 %v4227, 2147483648
        %v4240 = vor.u32 1.1754944e-38, %v4239
        %v4241 = vsel %vm4238, %v4240, %v4236
        %v4242 = vmul.f32 %v4209, %v4241
        %v4244 = vperm.slane %v4202, 0
        %v4246 = vmul.f32 %v4244, %v4242
        %v4248 = vperm.slane %v4204, 0
        %v4250 = vadd.f32 %v4246, %v4248
        %s4251 = scalar_lea.vmem %s53, 16
        %v4252 = vld [vmem:[%s4251] sm:$0xf]
        %v4253 = vld [vmem:[%s4251 + $0x4] sm:$0xf]
        %v4254 = vld [vmem:[%s4251 + $0x8] sm:$0xf]
        %v4255 = vld [vmem:[%s4251 + $0xc] sm:$0xf]
        %s4256 = scalar_lea.vmem %s55, 1
        %v4257 = vld [vmem:[%s4256] sm:$0x1]
        %s4258 = scalar_lea.vmem %s57, 16
        %v4259 = vld [vmem:[%s4258] sm:$0xf]
        %v4260 = vld [vmem:[%s4258 + $0x4] sm:$0xf]
        %v4261 = vld [vmem:[%s4258 + $0x8] sm:$0xf]
        %v4262 = vld [vmem:[%s4258 + $0xc] sm:$0xf]
        %s4263 = scalar_lea.vmem %s59, 1
        %v4264 = vld [vmem:[%s4263] sm:$0x1]
        %s4265 = scalar_lea.vmem %s61, 16
        %v4266 = vld [vmem:[%s4265] sm:$0xf]
        %v4267 = vld [vmem:[%s4265 + $0x4] sm:$0xf]
        %v4268 = vld [vmem:[%s4265 + $0x8] sm:$0xf]
        %v4269 = vld [vmem:[%s4265 + $0xc] sm:$0xf]
        %s4270 = scalar_lea.vmem %s63, 1
        %v4271 = vld [vmem:[%s4270] sm:$0x1]
        %v4272 = vpack.c.bf16 %v4250, %v4250
        %v4274 = vperm.slane %v4257, 0
        %v4280 = vunpack.c.l.b16 %v4252
        %v4281 = vunpack.c.l.b16 %v4253
        %v4282 = vunpack.c.l.b16 %v4254
        %v4283 = vunpack.c.l.b16 %v4255
        %v4284 = vpack.c.b16 %v4281, %v4280
        %v4285 = vpack.c.b16 %v4283, %v4282
        %v4289 = vsel %vm1279, %v4272, 0
        %4291 = vmatpush.bf16.msra.mxu0 0
        %4292 = vmatpush.bf16.msra.mxu0 0
        %4293 = vmatpush.bf16.msra.mxu0 0
        %4294 = vmatpush.bf16.msra.mxu0 0
        %4295 = vmatpush.bf16.msra.mxu0 0
        %4296 = vmatpush.bf16.msra.mxu0 0
        %4297 = vmatpush.bf16.msra.mxu0 %v4285
        %4298 = vmatpush.bf16.msra.mxu0 %v4284
        %4299 = vmatmul.bf16.gmra.mxu0 %v4289
        %v4300 = vpop.f32.mrf.mxu0
        %v4301 = vadd.f32 %v4274, %v4300
        %v4302 = vpop.f32.mrf.mxu0
        %4303 = vdwg.mxu0
        %v4305 = vperm.slane %v4264, 0
        %v4311 = vunpack.c.l.b16 %v4259
        %v4312 = vunpack.c.l.b16 %v4260
        %v4313 = vunpack.c.l.b16 %v4261
        %v4314 = vunpack.c.l.b16 %v4262
        %v4315 = vpack.c.b16 %v4312, %v4311
        %v4316 = vpack.c.b16 %v4314, %v4313
        %4319 = vmatpush.bf16.msra.mxu0 0
        %4320 = vmatpush.bf16.msra.mxu0 0
        %4321 = vmatpush.bf16.msra.mxu0 0
        %4322 = vmatpush.bf16.msra.mxu0 0
        %4323 = vmatpush.bf16.msra.mxu0 0
        %4324 = vmatpush.bf16.msra.mxu0 0
        %4325 = vmatpush.bf16.msra.mxu0 %v4316
        %4326 = vmatpush.bf16.msra.mxu0 %v4315
        %4327 = vmatmul.bf16.gmra.mxu0 %v3172
        %v4328 = vpop.f32.mrf.mxu0
        %v4329 = vadd.f32 %v4305, %v4328
        %v4330 = vpop.f32.mrf.mxu0
        %4331 = vdwg.mxu0
        %4333 = vrot.lane.b32.xlu0 %v4301, 120
        %v4334 = vpop.permute.xlu0 %4333
        %4336 = vrot.lane.b32.xlu0 %v4301, 112
        %v4337 = vpop.permute.xlu0 %4336
        %4339 = vrot.lane.b32.xlu0 %v4301, 104
        %v4340 = vpop.permute.xlu0 %4339
        %4343 = vrot.lane.b32.xlu0 %v4329, 120
        %v4344 = vpop.permute.xlu0 %4343
        %4346 = vrot.lane.b32.xlu0 %v4329, 112
        %v4347 = vpop.permute.xlu0 %4346
        %4349 = vrot.lane.b32.xlu0 %v4329, 104
        %v4350 = vpop.permute.xlu0 %4349
        %v4352 = vpack.c.bf16 %v4301, %v4301
        %v4353 = vpack.c.bf16 %v4334, %v4334
        %v4354 = vpack.c.bf16 %v4337, %v4337
        %v4355 = vpack.c.bf16 %v4340, %v4340
        %v4356 = vpack.c.bf16 %v4329, %v4329
        %v4357 = vpack.c.bf16 %v4344, %v4344
        %v4358 = vpack.c.bf16 %v4347, %v4347
        %v4359 = vpack.c.bf16 %v4350, %v4350
        %v4361 = vsel %vm1397, %v4352, 0
        %v4364 = vsel %vm1397, %v4356, 0
        %4366 = vmatpush.bf16.xpose.msra.mxu0 0
        %4367 = vmatpush.bf16.xpose.msra.mxu0 0
        %4368 = vmatpush.bf16.xpose.msra.mxu0 0
        %4369 = vmatpush.bf16.xpose.msra.mxu0 0
        %4370 = vmatpush.bf16.xpose.msra.mxu0 0
        %4371 = vmatpush.bf16.xpose.msra.mxu0 0
        %4372 = vmatpush.bf16.xpose.msra.mxu0 0
        %4373 = vmatpush.bf16.xpose.msra.mxu0 %v4364
        %4374 = vmatmul.bf16.gmra.mxu0 %v4361
        %v4375 = vpop.f32.mrf.mxu0
        %v4376 = vadd.f32 %v1390, %v4375
        %v4377 = vpop.f32.mrf.mxu0
        %4378 = vdwg.mxu0
        %v4380 = vsel %vm1397, %v4353, 0
        %v4383 = vsel %vm1397, %v4357, 0
        %4385 = vmatpush.bf16.xpose.msra.mxu0 0
        %4386 = vmatpush.bf16.xpose.msra.mxu0 0
        %4387 = vmatpush.bf16.xpose.msra.mxu0 0
        %4388 = vmatpush.bf16.xpose.msra.mxu0 0
        %4389 = vmatpush.bf16.xpose.msra.mxu0 0
        %4390 = vmatpush.bf16.xpose.msra.mxu0 0
        %4391 = vmatpush.bf16.xpose.msra.mxu0 0
        %4392 = vmatpush.bf16.xpose.msra.mxu0 %v4383
        %4393 = vmatmul.bf16.gmra.mxu0 %v4380
        %v4394 = vpop.f32.mrf.mxu0
        %v4395 = vadd.f32 %v1390, %v4394
        %v4396 = vpop.f32.mrf.mxu0
        %4397 = vdwg.mxu0
        %v4399 = vsel %vm1397, %v4354, 0
        %v4402 = vsel %vm1397, %v4358, 0
        %4404 = vmatpush.bf16.xpose.msra.mxu0 0
        %4405 = vmatpush.bf16.xpose.msra.mxu0 0
        %4406 = vmatpush.bf16.xpose.msra.mxu0 0
        %4407 = vmatpush.bf16.xpose.msra.mxu0 0
        %4408 = vmatpush.bf16.xpose.msra.mxu0 0
        %4409 = vmatpush.bf16.xpose.msra.mxu0 0
        %4410 = vmatpush.bf16.xpose.msra.mxu0 0
        %4411 = vmatpush.bf16.xpose.msra.mxu0 %v4402
        %4412 = vmatmul.bf16.gmra.mxu0 %v4399
        %v4413 = vpop.f32.mrf.mxu0
        %v4414 = vadd.f32 %v1390, %v4413
        %v4415 = vpop.f32.mrf.mxu0
        %4416 = vdwg.mxu0
        %v4418 = vsel %vm1397, %v4355, 0
        %v4421 = vsel %vm1397, %v4359, 0
        %4423 = vmatpush.bf16.xpose.msra.mxu0 0
        %4424 = vmatpush.bf16.xpose.msra.mxu0 0
        %4425 = vmatpush.bf16.xpose.msra.mxu0 0
        %4426 = vmatpush.bf16.xpose.msra.mxu0 0
        %4427 = vmatpush.bf16.xpose.msra.mxu0 0
        %4428 = vmatpush.bf16.xpose.msra.mxu0 0
        %4429 = vmatpush.bf16.xpose.msra.mxu0 0
        %4430 = vmatpush.bf16.xpose.msra.mxu0 %v4421
        %4431 = vmatmul.bf16.gmra.mxu0 %v4418
        %v4432 = vpop.f32.mrf.mxu0
        %v4433 = vadd.f32 %v1390, %v4432
        %v4434 = vpop.f32.mrf.mxu0
        %4435 = vdwg.mxu0
        %v4436 = vsel %vm1397, %v4376, -inf
        %4437 = vmax.xlane.f32.xlu0 %v4436
        %v4438 = vpop.xlane.xlu0 %4437
        %v4439 = vsel %vm1397, %v4395, -inf
        %4440 = vmax.xlane.f32.xlu0 %v4439
        %v4441 = vpop.xlane.xlu0 %4440
        %v4442 = vsel %vm1397, %v4414, -inf
        %4443 = vmax.xlane.f32.xlu0 %v4442
        %v4444 = vpop.xlane.xlu0 %4443
        %v4445 = vsel %vm1397, %v4433, -inf
        %4446 = vmax.xlane.f32.xlu0 %v4445
        %v4447 = vpop.xlane.xlu0 %4446
        %v4448 = vsub.f32 %v4376, %v4438
        %v4449 = vsub.f32 %v4395, %v4441
        %v4450 = vsub.f32 %v4414, %v4444
        %v4451 = vsub.f32 %v4433, %v4447
        %v4452 = vmul.f32 %v4448, 1.442695
        %v4453 = vpow.pop %v4452
        %v4454 = vmul.f32 %v4449, 1.442695
        %v4455 = vpow.pop %v4454
        %v4456 = vmul.f32 %v4450, 1.442695
        %v4457 = vpow.pop %v4456
        %v4458 = vmul.f32 %v4451, 1.442695
        %v4459 = vpow.pop %v4458
        %v4460 = vsel %vm1397, %v4453, 0.0
        %4461 = vadd.xlane.f32.xlu0 %v4460
        %v4462 = vpop.xlane.xlu0 %4461
        %v4463 = vsel %vm1397, %v4455, 0.0
        %4464 = vadd.xlane.f32.xlu0 %v4463
        %v4465 = vpop.xlane.xlu0 %4464
        %v4466 = vsel %vm1397, %v4457, 0.0
        %4467 = vadd.xlane.f32.xlu0 %v4466
        %v4468 = vpop.xlane.xlu0 %4467
        %v4469 = vsel %vm1397, %v4459, 0.0
        %4470 = vadd.xlane.f32.xlu0 %v4469
        %v4471 = vpop.xlane.xlu0 %4470
        %v4472 = vrcp.pop %v4462
        %v4473 = vmul.f32 %v4462, %v4472
        %v4474 = vsub.f32 1.0, %v4473
        %v4475 = vmul.f32 %v4472, %v4474
        %v4476 = vadd.f32 %v4472, %v4475
        %vm4477 = vweird.f32 %v4462
        %vm4478 = vweird.f32 %v4472
        %vm4479 = vmor %vm4477, %vm4478
        %v4480 = vsel %vm4479, %v4472, %v4476
        %v4481 = vand.u32 2147483647, %v4462
        %vm4482 = vcmp.eq.f32.partialorder %v4481, 8.507059e+37
        %v4483 = vand.u32 %v4462, 2147483648
        %v4484 = vor.u32 1.1754944e-38, %v4483
        %v4485 = vsel %vm4482, %v4484, %v4480
        %v4486 = vrcp.pop %v4465
        %v4487 = vmul.f32 %v4465, %v4486
        %v4488 = vsub.f32 1.0, %v4487
        %v4489 = vmul.f32 %v4486, %v4488
        %v4490 = vadd.f32 %v4486, %v4489
        %vm4491 = vweird.f32 %v4465
        %vm4492 = vweird.f32 %v4486
        %vm4493 = vmor %vm4491, %vm4492
        %v4494 = vsel %vm4493, %v4486, %v4490
        %v4495 = vand.u32 2147483647, %v4465
        %vm4496 = vcmp.eq.f32.partialorder %v4495, 8.507059e+37
        %v4497 = vand.u32 %v4465, 2147483648
        %v4498 = vor.u32 1.1754944e-38, %v4497
        %v4499 = vsel %vm4496, %v4498, %v4494
        %v4500 = vrcp.pop %v4468
        %v4501 = vmul.f32 %v4468, %v4500
        %v4502 = vsub.f32 1.0, %v4501
        %v4503 = vmul.f32 %v4500, %v4502
        %v4504 = vadd.f32 %v4500, %v4503
        %vm4505 = vweird.f32 %v4468
        %vm4506 = vweird.f32 %v4500
        %vm4507 = vmor %vm4505, %vm4506
        %v4508 = vsel %vm4507, %v4500, %v4504
        %v4509 = vand.u32 2147483647, %v4468
        %vm4510 = vcmp.eq.f32.partialorder %v4509, 8.507059e+37
        %v4511 = vand.u32 %v4468, 2147483648
        %v4512 = vor.u32 1.1754944e-38, %v4511
        %v4513 = vsel %vm4510, %v4512, %v4508
        %v4514 = vrcp.pop %v4471
        %v4515 = vmul.f32 %v4471, %v4514
        %v4516 = vsub.f32 1.0, %v4515
        %v4517 = vmul.f32 %v4514, %v4516
        %v4518 = vadd.f32 %v4514, %v4517
        %vm4519 = vweird.f32 %v4471
        %vm4520 = vweird.f32 %v4514
        %vm4521 = vmor %vm4519, %vm4520
        %v4522 = vsel %vm4521, %v4514, %v4518
        %v4523 = vand.u32 2147483647, %v4471
        %vm4524 = vcmp.eq.f32.partialorder %v4523, 8.507059e+37
        %v4525 = vand.u32 %v4471, 2147483648
        %v4526 = vor.u32 1.1754944e-38, %v4525
        %v4527 = vsel %vm4524, %v4526, %v4522
        %v4528 = vmul.f32 %v4453, %v4485
        %v4529 = vmul.f32 %v4455, %v4499
        %v4530 = vmul.f32 %v4457, %v4513
        %v4531 = vmul.f32 %v4459, %v4527
        %v4532 = vpack.c.bf16 %v4528, %v4528
        %v4533 = vpack.c.bf16 %v4529, %v4529
        %v4534 = vpack.c.bf16 %v4530, %v4530
        %v4535 = vpack.c.bf16 %v4531, %v4531
        %v4537 = vunpack.c.l.b16 %v4356
        %v4538 = vpack.c.b16 %v4537, %v4537
        %4539 = vrot.lane.b32.xlu0 %v4538, 96
        %v4540 = vpop.permute.xlu0 %4539
        %v4542 = vsel %vm1397, %v4532, 0
        %v4545 = vsel %vm1594, %v4540, 0
        %4547 = vmatpush.bf16.msra.mxu0 0
        %4548 = vmatpush.bf16.msra.mxu0 0
        %4549 = vmatpush.bf16.msra.mxu0 0
        %4550 = vmatpush.bf16.msra.mxu0 0
        %4551 = vmatpush.bf16.msra.mxu0 0
        %4552 = vmatpush.bf16.msra.mxu0 0
        %4553 = vmatpush.bf16.msra.mxu0 0
        %4554 = vmatpush.bf16.msra.mxu0 %v4545
        %4555 = vmatmul.bf16.gmra.mxu0 %v4542
        %v4556 = vpop.f32.mrf.mxu0
        %v4557 = vadd.f32 0.0, %v4556
        %v4558 = vpop.f32.mrf.mxu0
        %4559 = vdwg.mxu0
        %v4561 = vunpack.c.l.b16 %v4357
        %v4562 = vpack.c.b16 %v4561, %v4561
        %4563 = vrot.lane.b32.xlu0 %v4562, 96
        %v4564 = vpop.permute.xlu0 %4563
        %v4566 = vsel %vm1397, %v4533, 0
        %v4569 = vsel %vm1594, %v4564, 0
        %4571 = vmatpush.bf16.msra.mxu0 0
        %4572 = vmatpush.bf16.msra.mxu0 0
        %4573 = vmatpush.bf16.msra.mxu0 0
        %4574 = vmatpush.bf16.msra.mxu0 0
        %4575 = vmatpush.bf16.msra.mxu0 0
        %4576 = vmatpush.bf16.msra.mxu0 0
        %4577 = vmatpush.bf16.msra.mxu0 0
        %4578 = vmatpush.bf16.msra.mxu0 %v4569
        %4579 = vmatmul.bf16.gmra.mxu0 %v4566
        %v4580 = vpop.f32.mrf.mxu0
        %v4581 = vadd.f32 0.0, %v4580
        %v4582 = vpop.f32.mrf.mxu0
        %4583 = vdwg.mxu0
        %v4585 = vunpack.c.l.b16 %v4358
        %v4586 = vpack.c.b16 %v4585, %v4585
        %4587 = vrot.lane.b32.xlu0 %v4586, 96
        %v4588 = vpop.permute.xlu0 %4587
        %v4590 = vsel %vm1397, %v4534, 0
        %v4593 = vsel %vm1594, %v4588, 0
        %4595 = vmatpush.bf16.msra.mxu0 0
        %4596 = vmatpush.bf16.msra.mxu0 0
        %4597 = vmatpush.bf16.msra.mxu0 0
        %4598 = vmatpush.bf16.msra.mxu0 0
        %4599 = vmatpush.bf16.msra.mxu0 0
        %4600 = vmatpush.bf16.msra.mxu0 0
        %4601 = vmatpush.bf16.msra.mxu0 0
        %4602 = vmatpush.bf16.msra.mxu0 %v4593
        %4603 = vmatmul.bf16.gmra.mxu0 %v4590
        %v4604 = vpop.f32.mrf.mxu0
        %v4605 = vadd.f32 0.0, %v4604
        %v4606 = vpop.f32.mrf.mxu0
        %4607 = vdwg.mxu0
        %v4609 = vunpack.c.l.b16 %v4359
        %v4610 = vpack.c.b16 %v4609, %v4609
        %4611 = vrot.lane.b32.xlu0 %v4610, 96
        %v4612 = vpop.permute.xlu0 %4611
        %v4614 = vsel %vm1397, %v4535, 0
        %v4617 = vsel %vm1594, %v4612, 0
        %4619 = vmatpush.bf16.msra.mxu0 0
        %4620 = vmatpush.bf16.msra.mxu0 0
        %4621 = vmatpush.bf16.msra.mxu0 0
        %4622 = vmatpush.bf16.msra.mxu0 0
        %4623 = vmatpush.bf16.msra.mxu0 0
        %4624 = vmatpush.bf16.msra.mxu0 0
        %4625 = vmatpush.bf16.msra.mxu0 0
        %4626 = vmatpush.bf16.msra.mxu0 %v4617
        %4627 = vmatmul.bf16.gmra.mxu0 %v4614
        %v4628 = vpop.f32.mrf.mxu0
        %v4629 = vadd.f32 0.0, %v4628
        %v4630 = vpop.f32.mrf.mxu0
        %4631 = vdwg.mxu0
        %v4632 = vpack.c.bf16 %v4557, %v4557
        %v4633 = vpack.c.bf16 %v4581, %v4581
        %v4634 = vpack.c.bf16 %v4605, %v4605
        %v4635 = vpack.c.bf16 %v4629, %v4629
        %v4637 = vsel %vm1397, %v4632, 0
        %v4640 = vsel %vm1594, %v4266, 0
        %4642 = vmatpush.bf16.msra.mxu0 0
        %4643 = vmatpush.bf16.msra.mxu0 0
        %4644 = vmatpush.bf16.msra.mxu0 0
        %4645 = vmatpush.bf16.msra.mxu0 0
        %4646 = vmatpush.bf16.msra.mxu0 0
        %4647 = vmatpush.bf16.msra.mxu0 0
        %4648 = vmatpush.bf16.msra.mxu0 0
        %4649 = vmatpush.bf16.msra.mxu0 %v4640
        %4650 = vmatmul.bf16.gmra.mxu0 %v4637
        %v4651 = vpop.f32.mrf.mxu0
        %v4652 = vadd.f32 0.0, %v4651
        %v4653 = vpop.f32.mrf.mxu0
        %4654 = vdwg.mxu0
        %v4656 = vsel %vm1397, %v4633, 0
        %v4659 = vsel %vm1594, %v4267, 0
        %4661 = vmatpush.bf16.msra.mxu0 0
        %4662 = vmatpush.bf16.msra.mxu0 0
        %4663 = vmatpush.bf16.msra.mxu0 0
        %4664 = vmatpush.bf16.msra.mxu0 0
        %4665 = vmatpush.bf16.msra.mxu0 0
        %4666 = vmatpush.bf16.msra.mxu0 0
        %4667 = vmatpush.bf16.msra.mxu0 0
        %4668 = vmatpush.bf16.msra.mxu0 %v4659
        %4669 = vmatmul.bf16.gmra.mxu0 %v4656
        %v4670 = vpop.f32.mrf.mxu0
        %v4671 = vadd.f32 0.0, %v4670
        %v4672 = vpop.f32.mrf.mxu0
        %4673 = vdwg.mxu0
        %v4675 = vsel %vm1397, %v4634, 0
        %v4678 = vsel %vm1594, %v4268, 0
        %4680 = vmatpush.bf16.msra.mxu0 0
        %4681 = vmatpush.bf16.msra.mxu0 0
        %4682 = vmatpush.bf16.msra.mxu0 0
        %4683 = vmatpush.bf16.msra.mxu0 0
        %4684 = vmatpush.bf16.msra.mxu0 0
        %4685 = vmatpush.bf16.msra.mxu0 0
        %4686 = vmatpush.bf16.msra.mxu0 0
        %4687 = vmatpush.bf16.msra.mxu0 %v4678
        %4688 = vmatmul.bf16.gmra.mxu0 %v4675
        %v4689 = vpop.f32.mrf.mxu0
        %v4690 = vadd.f32 0.0, %v4689
        %v4691 = vpop.f32.mrf.mxu0
        %4692 = vdwg.mxu0
        %v4694 = vsel %vm1397, %v4635, 0
        %v4697 = vsel %vm1594, %v4269, 0
        %4699 = vmatpush.bf16.msra.mxu0 0
        %4700 = vmatpush.bf16.msra.mxu0 0
        %4701 = vmatpush.bf16.msra.mxu0 0
        %4702 = vmatpush.bf16.msra.mxu0 0
        %4703 = vmatpush.bf16.msra.mxu0 0
        %4704 = vmatpush.bf16.msra.mxu0 0
        %4705 = vmatpush.bf16.msra.mxu0 0
        %4706 = vmatpush.bf16.msra.mxu0 %v4697
        %4707 = vmatmul.bf16.gmra.mxu0 %v4694
        %v4708 = vpop.f32.mrf.mxu0
        %v4709 = vadd.f32 0.0, %v4708
        %v4710 = vpop.f32.mrf.mxu0
        %4711 = vdwg.mxu0
        %v4712 = vsel %vm1279, %v4652, 0.0
        %v4713 = vsel %vm1279, %v4671, 0.0
        %v4714 = vadd.f32 %v4712, %v4713
        %v4715 = vsel %vm1279, %v4690, 0.0
        %v4716 = vadd.f32 %v4714, %v4715
        %v4717 = vsel %vm1279, %v4709, 0.0
        %v4718 = vadd.f32 %v4716, %v4717
        %v4720 = vperm.slane %v4271, 0
        %v4722 = vadd.f32 %v4718, %v4720
        %v4723 = vadd.f32 %v4200, %v4722
        %s4724 = scalar_lea.vmem %s65, 1
        %v4725 = vld [vmem:[%s4724] sm:$0x1]
        %s4726 = scalar_lea.vmem %s67, 1
        %v4727 = vld [vmem:[%s4726] sm:$0x1]
        %v4728 = vsel %vm1279, %v4723, 0.0
        %4729 = vadd.xlane.f32.xlu0 %v4728
        %v4730 = vpop.xlane.xlu0 %4729
        %v4731 = vmul.f32 %v4730, %v1289
        %v4732 = vsub.f32 %v4723, %v4731
        %v4733 = vmul.f32 %v4732, %v4732
        %v4734 = vsel %vm1279, %v4733, 0.0
        %4735 = vadd.xlane.f32.xlu0 %v4734
        %v4736 = vpop.xlane.xlu0 %4735
        %v4737 = vmul.f32 %v4736, 0.032258064
        %v4738 = vrsqrt.pop %v4737
        %v4739 = vmul.f32 %v4738, %v4737
        %v4740 = vmul.f32 %v4739, %v4738
        %v4741 = vmul.f32 0.5, %v4740
        %v4742 = vsub.f32 1.5, %v4741
        %v4743 = vmul.f32 %v4738, %v4742
        %v4744 = vmul.f32 %v4737, %v4743
        %vm4745 = vcmp.eq.f32.partialorder %v4737, inf
        %v4746 = vsel %vm4745, %v4737, %v4744
        %vm4747 = vcmp.eq.f32.partialorder %v4737, 0.0
        %v4748 = vand.u32 %v4737, 2147483648
        %v4749 = vsel %vm4747, %v4748, %v4746
        %v4750 = vadd.f32 %v4749, 1e-06
        %v4751 = vrcp.pop %v4750
        %v4752 = vmul.f32 %v4750, %v4751
        %v4753 = vsub.f32 1.0, %v4752
        %v4754 = vmul.f32 %v4751, %v4753
        %v4755 = vadd.f32 %v4751, %v4754
        %vm4756 = vweird.f32 %v4750
        %vm4757 = vweird.f32 %v4751
        %vm4758 = vmor %vm4756, %vm4757
        %v4759 = vsel %vm4758, %v4751, %v4755
        %v4760 = vand.u32 2147483647, %v4750
        %vm4761 = vcmp.eq.f32.partialorder %v4760, 8.507059e+37
        %v4762 = vand.u32 %v4750, 2147483648
        %v4763 = vor.u32 1.1754944e-38, %v4762
        %v4764 = vsel %vm4761, %v4763, %v4759
        %v4765 = vmul.f32 %v4732, %v4764
        %v4767 = vperm.slane %v4725, 0
        %v4769 = vmul.f32 %v4767, %v4765
        %v4771 = vperm.slane %v4727, 0
        %v4773 = vadd.f32 %v4769, %v4771
        %s4774 = scalar_lea.vmem %s69, 16
        %v4775 = vld [vmem:[%s4774] sm:$0xf]
        %v4776 = vld [vmem:[%s4774 + $0x4] sm:$0xf]
        %v4777 = vld [vmem:[%s4774 + $0x8] sm:$0xf]
        %v4778 = vld [vmem:[%s4774 + $0xc] sm:$0xf]
        %s4779 = scalar_lea.vmem %s71, 1
        %v4780 = vld [vmem:[%s4779] sm:$0x1]
        %s4781 = scalar_lea.vmem %s73, 32
        %v4782 = vld [vmem:[%s4781] sm:$0xf]
        %v4783 = vld [vmem:[%s4781 + $0x4] sm:$0xf]
        %v4784 = vld [vmem:[%s4781 + $0x8] sm:$0xf]
        %v4785 = vld [vmem:[%s4781 + $0xc] sm:$0xf]
        %v4786 = vld [vmem:[%s4781 + $0x10] sm:$0xf]
        %v4787 = vld [vmem:[%s4781 + $0x14] sm:$0xf]
        %v4788 = vld [vmem:[%s4781 + $0x18] sm:$0xf]
        %v4789 = vld [vmem:[%s4781 + $0x1c] sm:$0xf]
        %s4790 = scalar_lea.vmem %s75, 1
        %v4791 = vld [vmem:[%s4790] sm:$0x1]
        %v4792 = vpack.c.bf16 %v4773, %v4773
        %v4794 = vperm.slane %v4780, 0
        %v4800 = vunpack.c.l.b16 %v4775
        %v4801 = vunpack.c.l.b16 %v4776
        %v4802 = vunpack.c.l.b16 %v4777
        %v4803 = vunpack.c.l.b16 %v4778
        %v4804 = vpack.c.b16 %v4801, %v4800
        %v4805 = vpack.c.b16 %v4803, %v4802
        %v4809 = vsel %vm1279, %v4792, 0
        %4811 = vmatpush.bf16.msra.mxu0 0
        %4812 = vmatpush.bf16.msra.mxu0 0
        %4813 = vmatpush.bf16.msra.mxu0 0
        %4814 = vmatpush.bf16.msra.mxu0 0
        %4815 = vmatpush.bf16.msra.mxu0 0
        %4816 = vmatpush.bf16.msra.mxu0 0
        %4817 = vmatpush.bf16.msra.mxu0 %v4805
        %4818 = vmatpush.bf16.msra.mxu0 %v4804
        %4819 = vmatmul.bf16.gmra.mxu0 %v4809
        %v4820 = vpop.f32.mrf.mxu0
        %v4821 = vadd.f32 %v4794, %v4820
        %v4822 = vpop.f32.mrf.mxu0
        %4823 = vdwg.mxu0
        %v4824 = vmax.f32 %v4821, 0.0
        %v4825 = vpack.c.bf16 %v4824, %v4824
        %v4827 = vperm.slane %v4791, 0
        %v4837 = vunpack.c.l.b16 %v4782
        %v4838 = vunpack.c.l.b16 %v4783
        %v4839 = vunpack.c.l.b16 %v4784
        %v4840 = vunpack.c.l.b16 %v4785
        %v4841 = vunpack.c.l.b16 %v4786
        %v4842 = vunpack.c.l.b16 %v4787
        %v4843 = vunpack.c.l.b16 %v4788
        %v4844 = vunpack.c.l.b16 %v4789
        %v4845 = vpack.c.b16 %v4838, %v4837
        %v4846 = vpack.c.b16 %v4840, %v4839
        %v4847 = vpack.c.b16 %v4842, %v4841
        %v4848 = vpack.c.b16 %v4844, %v4843
        %v4854 = vsel %vm1889, %v4825, 0
        %4856 = vmatpush.bf16.msra.mxu0 0
        %4857 = vmatpush.bf16.msra.mxu0 0
        %4858 = vmatpush.bf16.msra.mxu0 0
        %4859 = vmatpush.bf16.msra.mxu0 0
        %4860 = vmatpush.bf16.msra.mxu0 %v4848
        %4861 = vmatpush.bf16.msra.mxu0 %v4847
        %4862 = vmatpush.bf16.msra.mxu0 %v4846
        %4863 = vmatpush.bf16.msra.mxu0 %v4845
        %4864 = vmatmul.bf16.gmra.mxu0 %v4854
        %v4865 = vpop.f32.mrf.mxu0
        %v4866 = vadd.f32 %v4827, %v4865
        %v4867 = vpop.f32.mrf.mxu0
        %4868 = vdwg.mxu0
        %v4869 = vadd.f32 %v4723, %v4866
        %v4870 = vld [vmem:[%s77] sm:$0x1]
        %v4871 = vld [vmem:[#allocation2] sm:$0x1]
        %v4872 = vsel %vm1279, %v4869, 0.0
        %4873 = vadd.xlane.f32.xlu0 %v4872
        %v4874 = vpop.xlane.xlu0 %4873
        %v4875 = vmul.f32 %v4874, %v1289
        %v4876 = vsub.f32 %v4869, %v4875
        %v4877 = vmul.f32 %v4876, %v4876
        %v4878 = vsel %vm1279, %v4877, 0.0
        %4879 = vadd.xlane.f32.xlu0 %v4878
        %v4880 = vpop.xlane.xlu0 %4879
        %v4881 = vmul.f32 %v4880, 0.032258064
        %v4882 = vrsqrt.pop %v4881
        %v4883 = vmul.f32 %v4882, %v4881
        %v4884 = vmul.f32 %v4883, %v4882
        %v4885 = vmul.f32 0.5, %v4884
        %v4886 = vsub.f32 1.5, %v4885
        %v4887 = vmul.f32 %v4882, %v4886
        %v4888 = vmul.f32 %v4881, %v4887
        %vm4889 = vcmp.eq.f32.partialorder %v4881, inf
        %v4890 = vsel %vm4889, %v4881, %v4888
        %vm4891 = vcmp.eq.f32.partialorder %v4881, 0.0
        %v4892 = vand.u32 %v4881, 2147483648
        %v4893 = vsel %vm4891, %v4892, %v4890
        %v4894 = vadd.f32 %v4893, 1e-06
        %v4895 = vrcp.pop %v4894
        %v4896 = vmul.f32 %v4894, %v4895
        %v4897 = vsub.f32 1.0, %v4896
        %v4898 = vmul.f32 %v4895, %v4897
        %v4899 = vadd.f32 %v4895, %v4898
        %vm4900 = vweird.f32 %v4894
        %vm4901 = vweird.f32 %v4895
        %vm4902 = vmor %vm4900, %vm4901
        %v4903 = vsel %vm4902, %v4895, %v4899
        %v4904 = vand.u32 2147483647, %v4894
        %vm4905 = vcmp.eq.f32.partialorder %v4904, 8.507059e+37
        %v4906 = vand.u32 %v4894, 2147483648
        %v4907 = vor.u32 1.1754944e-38, %v4906
        %v4908 = vsel %vm4905, %v4907, %v4903
        %v4909 = vmul.f32 %v4876, %v4908
        %v4911 = vperm.slane %v4870, 0
        %v4913 = vmul.f32 %v4911, %v4909
        %v4915 = vperm.slane %v4871, 0
        %v4917 = vadd.f32 %v4913, %v4915
        %4918 = vst.msk [vmem:[%s1253] sm:$0xff] %vm1279, %v4917
        %s4919 = sand.u32 %s964, 1
        %s4920 = scalar_lea.sflag [#allocation4], %s4919
        %s4921 = sand.u32 %s964, 1
        %s4922 = smul.addr %s4921, 8
        %s4923 = scalar_lea.vmem [#allocation5], %s4922
        // Predicated region
        $region185: #{encoder_decoder_forward.1} parent=179 // pred_check
          %p4924 = pneg %p974
        $region186: #{encoder_decoder_forward.1} parent=179 // pred_check_branch
          %4926 = sbr.rel (%p4924) target = $region188
        $region187: #{encoder_decoder_forward.1} parent=179 // pred_region
          %4928 = vsyncadd %s4920, 0
          %s4929 = smul.addr %s96, 8
          %s4930 = scalar_lea.hbm %s81, %s4929
          %s4932 = sshll.u32 %s4923, 4
          %s4933 = int_to_ptr.vmem [resolvable:$true] %s4932
          %s4934 = sshll.u32 %s4930, 4
          %s4935 = int_to_ptr.hbm [resolvable:$true] %s4934
          %4937 = dma.vmem_to_hbm [thread:$0]  %s4933, 128, %s4935, %s4920
        $region188: #{encoder_decoder_forward.1} parent=179 // pred_fallthru
          _
      $region180: #{encoder_decoder_forward.1} parent=5 // pred_fallthru
        _
      %p4938 = scmp.le.s32.totalorder 2, %s91
      // Predicated region
      $region189: #{encoder_decoder_forward.1} parent=5 // pred_check
        %p4939 = pneg %p4938
      $region190: #{encoder_decoder_forward.1} parent=5 // pred_check_branch
        %4941 = sbr.rel (%p4939) target = $region192
      $region191: #{encoder_decoder_forward.1} parent=5 // pred_region
        %s4942 = ssub.s32 %s91, 2
        // Predicated region
        $region193: #{encoder_decoder_forward.1} parent=191 // pred_check
          %p4943 = pneg %p980
        $region194: #{encoder_decoder_forward.1} parent=191 // pred_check_branch
          %4945 = sbr.rel (%p4943) target = $region196
        $region195: #{encoder_decoder_forward.1} parent=191 // pred_region
          %s4946 = sand.u32 %s965, 1
          %s4947 = scalar_lea.sflag [#allocation4], %s4946
          %s4948 = sand.u32 %s965, 1
          %s4949 = smul.addr %s4948, 8
          %s4950 = scalar_lea.vmem [#allocation5], %s4949
          %4952 = dma.done %s4947, 128
        $region196: #{encoder_decoder_forward.1} parent=191 // pred_fallthru
          _
      $region192: #{encoder_decoder_forward.1} parent=5 // pred_fallthru
        _
    $region6: #{encoder_decoder_forward.1} parent=1 // loop_footer
      %s95 = sadd.s32 1, %s91
    $region7: #{encoder_decoder_forward.1} parent=1 // loop_footer_branch
      %90 = sbr.rel target = $region3
    $region8: #{encoder_decoder_forward.1} parent=1 // loop_exit
      _
    %4953 = vsyncpa [#allocation3], 1
    %s4954 = scalar_lea.sflag [#allocation3], 1
    %4955 = vsyncpa %s4954, 1
    %4956 = vsyncpa [#allocation4], 1
    %s4957 = scalar_lea.sflag [#allocation4], 1
    %4958 = vsyncpa %s4957, 1

</llo_original>
